<compile_context>
chip_gen: v6e
topology: v6e:2x2x1
jax: 0.10.0
libtpu: 0.0.40
codegen_flags: <defaults>
</compile_context>

<pallas_src>
import functools

import jax
import jax.numpy as jnp
import numpy as np
from jax.experimental import pallas as pl
from jax.experimental.pallas import tpu as pltpu

_SUBLANE = 8  # pad batch to 8 sublanes -> all per-step accesses tile-aligned


# ----------------------------------------------------------------------------
# Fused kernel: layer-1 input projection + 2-layer LSTM recurrence + Linear.
# No grid: weights (~1.8 MB bf16) + activations fit trivially in VMEM.
# ----------------------------------------------------------------------------
def _fused_forward_kernel(x2d_ref, wih1_ref, b1_ref, whh1_ref,
                          wih2_hbm, whh2_hbm, b2_ref, wout_ref, bout_ref,
                          h10_ref, c10_ref, h20_ref, c20_ref,
                          logits_ref, h1T_ref, c1T_ref, h2T_ref, c2T_ref,
                          xg_sc, wih2_vmem, whh2_vmem, dma_sem,
                          *, T, BP, H1, H2):
    # Kick off the ~1 MB layer-2 weight DMA immediately so it hides behind the
    # hoisted projection and the first layer-1 step (manual overlap, P4).
    cp_ih2 = pltpu.make_async_copy(wih2_hbm, wih2_vmem, dma_sem.at[0])
    cp_hh2 = pltpu.make_async_copy(whh2_hbm, whh2_vmem, dma_sem.at[1])
    cp_ih2.start()
    cp_hh2.start()

    # Hoisted layer-1 input projection: one MXU matmul over all T*BP rows.
    # x2d is already bf16 (pre-cast table), accumulate in f32.
    xg_sc[...] = (jnp.dot(x2d_ref[...], wih1_ref[...],
                          preferred_element_type=jnp.float32)
                  + b1_ref[...])                        # (T*BP, 4*H1) f32

    h1 = h10_ref[...]
    c1 = c10_ref[...]
    h2 = h20_ref[...]
    c2 = c20_ref[...]

    def lstm_cell(gates, c, H):
        # torch.nn.LSTM gate order [i, f, g, o]; elementwise math stays f32
        # (v5e has no bf16 VPU/EUP).
        i_g = jax.nn.sigmoid(gates[:, 0 * H:1 * H])
        f_g = jax.nn.sigmoid(gates[:, 1 * H:2 * H])
        g_g = jnp.tanh(gates[:, 2 * H:3 * H])
        o_g = jax.nn.sigmoid(gates[:, 3 * H:4 * H])
        c_new = f_g * c + i_g * g_g
        h_new = o_g * jnp.tanh(c_new)
        return h_new, c_new

    # Static unroll over time; h/c carried in vregs, no per-step stores.
    for t in range(T):
        # xg slice start t*BP is a static multiple of 8 -> tile-aligned read.
        g1 = (xg_sc[t * BP:(t + 1) * BP, :]
              + jnp.dot(h1.astype(jnp.bfloat16), whh1_ref[...],
                        preferred_element_type=jnp.float32))
        h1, c1 = lstm_cell(g1, c1, H1)

        if t == 0:
            # First use of the layer-2 weights; DMA has been in flight since
            # kernel entry.
            cp_ih2.wait()
            cp_hh2.wait()

        # Layer 2: two independent dots (no concat) so h2 @ Whh2 (which only
        # needs the previous step's h2) can overlap layer-1's matmul.
        g2 = (jnp.dot(h1.astype(jnp.bfloat16), wih2_vmem[...],
                      preferred_element_type=jnp.float32)
              + jnp.dot(h2.astype(jnp.bfloat16), whh2_vmem[...],
                        preferred_element_type=jnp.float32)
              + b2_ref[...])
        h2, c2 = lstm_cell(g2, c2, H2)

    # Final states written once (tile-aligned, unmasked stores).
    h1T_ref[...] = h1
    c1T_ref[...] = c1
    h2T_ref[...] = h2
    c2T_ref[...] = c2

    # Fused output Linear on the last hidden state: bf16 operands, f32 accum,
    # V padded to 128 lanes (lane-dense store).
    logits_ref[...] = (jnp.dot(h2.astype(jnp.bfloat16), wout_ref[...],
                               preferred_element_type=jnp.float32)
                       + bout_ref[...])


def _fused_forward_call(x2d, wih1_t, b1, whh1_t, wih2_t, whh2_t, b2,
                        wout_pad, bout_pad, h10, c10, h20, c20, *, T, BP):
    H1 = whh1_t.shape[0]
    H2 = h20.shape[-1]
    Vp = wout_pad.shape[-1]
    kernel = functools.partial(_fused_forward_kernel, T=T, BP=BP, H1=H1, H2=H2)

    vmem = lambda: pl.BlockSpec(memory_space=pltpu.MemorySpace.VMEM)
    hbm = lambda: pl.BlockSpec(memory_space=pl.ANY)   # manual DMA inside kernel

    return pl.pallas_call(
        kernel,
        in_specs=[vmem(), vmem(), vmem(), vmem(),   # x2d, wih1_t, b1, whh1_t
                  hbm(), hbm(),                     # wih2_t, whh2_t (manual DMA)
                  vmem(), vmem(), vmem(),           # b2, wout_pad, bout_pad
                  vmem(), vmem(), vmem(), vmem()],  # h10, c10, h20, c20
        out_specs=(vmem(), vmem(), vmem(), vmem(), vmem()),
        out_shape=(
            jax.ShapeDtypeStruct((BP, Vp), jnp.float32),   # padded logits
            jax.ShapeDtypeStruct((BP, H1), jnp.float32),   # h1_T
            jax.ShapeDtypeStruct((BP, H1), jnp.float32),   # c1_T
            jax.ShapeDtypeStruct((BP, H2), jnp.float32),   # h2_T
            jax.ShapeDtypeStruct((BP, H2), jnp.float32),   # c2_T
        ),
        scratch_shapes=[
            pltpu.VMEM((T * BP, 4 * H1), jnp.float32),     # hoisted projection
            pltpu.VMEM(wih2_t.shape, wih2_t.dtype),        # layer-2 W_ih (DMA dst)
            pltpu.VMEM(whh2_t.shape, whh2_t.dtype),        # layer-2 W_hh (DMA dst)
            pltpu.SemaphoreType.DMA((2,)),
        ],
    )(x2d, wih1_t, b1, whh1_t, wih2_t, whh2_t, b2, wout_pad, bout_pad,
      h10, c10, h20, c20)


# ----------------------------------------------------------------------------
# Parameters: raw (PyTorch-layout) params + one-time kernel-ready preparation.
# ----------------------------------------------------------------------------
def init_params(key, n_vocab=80, embedding_dim=64, hidden_1=256, hidden_2=256):
    ks = jax.random.split(key, 12)

    def u(k, shape, scale):
        return jax.random.uniform(k, shape, jnp.float32, -scale, scale)

    s1 = 1.0 / np.sqrt(hidden_1)
    s2 = 1.0 / np.sqrt(hidden_2)
    return {
        "emb": jax.random.normal(ks[0], (n_vocab, embedding_dim), jnp.float32),
        "l1": {
            "w_ih": u(ks[1], (4 * hidden_1, embedding_dim), s1),
            "w_hh": u(ks[2], (4 * hidden_1, hidden_1), s1),
            "b_ih": u(ks[3], (4 * hidden_1,), s1),
            "b_hh": u(ks[4], (4 * hidden_1,), s1),
        },
        "l2": {
            "w_ih": u(ks[5], (4 * hidden_2, hidden_1), s2),
            "w_hh": u(ks[6], (4 * hidden_2, hidden_2), s2),
            "b_ih": u(ks[7], (4 * hidden_2,), s2),
            "b_hh": u(ks[8], (4 * hidden_2,), s2),
        },
        "out": {
            "w": u(ks[9], (n_vocab, hidden_2), s2),
            "b": u(ks[10], (n_vocab,), s2),
        },
    }


def prepare_params(params):
    """Pre-transpose / pre-cast weights once (not per forward call)."""
    E = params["emb"].shape[1]
    H1 = params["l1"]["w_hh"].shape[-1]
    H2 = params["l2"]["w_hh"].shape[-1]
    V = params["out"]["w"].shape[0]
    Vp = ((V + 127) // 128) * 128                       # lane-dense logits

    l1, l2, out = params["l1"], params["l2"], params["out"]

    wih1_t = l1["w_ih"].T.astype(jnp.bfloat16)          # (E, 4H1)
    b1 = (l1["b_ih"] + l1["b_hh"]).reshape(1, 4 * H1).astype(jnp.float32)
    whh1_t = l1["w_hh"].T.astype(jnp.bfloat16)          # (H1, 4H1)

    wih2_t = l2["w_ih"].T.astype(jnp.bfloat16)          # (H1, 4H2)
    whh2_t = l2["w_hh"].T.astype(jnp.bfloat16)          # (H2, 4H2)
    b2 = (l2["b_ih"] + l2["b_hh"]).reshape(1, 4 * H2).astype(jnp.float32)

    wout_pad = jnp.zeros((H2, Vp), jnp.bfloat16).at[:, :V].set(
        out["w"].T.astype(jnp.bfloat16))
    bout_pad = jnp.zeros((1, Vp), jnp.float32).at[:, :V].set(
        out["b"].astype(jnp.float32))

    return {
        "emb": params["emb"].astype(jnp.bfloat16),      # pre-cast: bf16 x2d
        "wih1_t": wih1_t, "b1": b1, "whh1_t": whh1_t,
        "wih2_t": wih2_t, "whh2_t": whh2_t, "b2": b2,
        "wout_pad": wout_pad, "bout_pad": bout_pad,
        "dims": (E, H1, H2, V, Vp),
    }


def forward(prepared, seq_in, state=None):
    """seq_in: (batch, seq_len) int32.
    Returns (logits (batch, n_vocab), state dict like the PyTorch module)."""
    B, T = seq_in.shape
    E, H1, H2, V, Vp = prepared["dims"]
    BP = ((B + _SUBLANE - 1) // _SUBLANE) * _SUBLANE    # pad batch to 8 sublanes

    # seq_in.t() -> time-major ids, embedding gather (plain-JAX glue), pad B.
    emb = prepared["emb"][seq_in.T]                     # (T, B, E) bf16
    emb_pad = jnp.zeros((T, BP, E), emb.dtype).at[:, :B, :].set(emb)
    x2d = emb_pad.reshape(T * BP, E)

    def pad_rows(s, H):
        return jnp.zeros((BP, H), jnp.float32).at[:B].set(s.astype(jnp.float32))

    if state is None:
        h10 = jnp.zeros((BP, H1), jnp.float32)
        c10 = jnp.zeros((BP, H1), jnp.float32)
        h20 = jnp.zeros((BP, H2), jnp.float32)
        c20 = jnp.zeros((BP, H2), jnp.float32)
    else:
        h10 = pad_rows(state["h1"][0][0], H1)
        c10 = pad_rows(state["h1"][1][0], H1)
        h20 = pad_rows(state["h2"][0][0], H2)
        c20 = pad_rows(state["h2"][1][0], H2)

    logits_pad, h1T, c1T, h2T, c2T = _fused_forward_call(
        x2d, prepared["wih1_t"], prepared["b1"], prepared["whh1_t"],
        prepared["wih2_t"], prepared["whh2_t"], prepared["b2"],
        prepared["wout_pad"], prepared["bout_pad"],
        h10, c10, h20, c20, T=T, BP=BP)

    logits = logits_pad[:B, :V]
    new_state = {
        "h1": (h1T[:B][None], c1T[:B][None]),           # (1, B, H) like torch
        "h2": (h2T[:B][None], c2T[:B][None]),
    }
    return logits, new_state


# ----------------------------------------------------------------------------
# Pure-JAX references (lax.scan).  matmul_dtype=bf16 reproduces the kernel's
# mixed-precision policy; matmul_dtype=f32 is the exact PyTorch-semantics ref.
# ----------------------------------------------------------------------------
def _ref_forward(params, seq_in, state=None, matmul_dtype=jnp.float32):
    B, T = seq_in.shape
    H1 = params["l1"]["w_hh"].shape[-1]
    H2 = params["l2"]["w_hh"].shape[-1]
    emb = params["emb"][seq_in.T]

    def run_layer(x, lp, h0, c0):
        H = h0.shape[-1]
        w_ih_t = lp["w_ih"].T.astype(matmul_dtype)
        w_hh_t = lp["w_hh"].T.astype(matmul_dtype)
        b = (lp["b_ih"] + lp["b_hh"])[None, :]

        def step(carry, xt):
            h, c = carry
            g = (jnp.dot(xt.astype(matmul_dtype), w_ih_t,
                         preferred_element_type=jnp.float32)
                 + jnp.dot(h.astype(matmul_dtype), w_hh_t,
                           preferred_element_type=jnp.float32) + b)
            i = jax.nn.sigmoid(g[:, :H])
            f = jax.nn.sigmoid(g[:, H:2 * H])
            gg = jnp.tanh(g[:, 2 * H:3 * H])
            o = jax.nn.sigmoid(g[:, 3 * H:])
            c = f * c + i * gg
            h = o * jnp.tanh(c)
            return (h, c), h

        (hT, cT), ys = jax.lax.scan(step, (h0, c0), x)
        return ys, hT, cT

    if state is None:
        h10 = jnp.zeros((B, H1), jnp.float32); c10 = jnp.zeros((B, H1), jnp.float32)
        h20 = jnp.zeros((B, H2), jnp.float32); c20 = jnp.zeros((B, H2), jnp.float32)
    else:
        h10, c10 = state["h1"][0][0], state["h1"][1][0]
        h20, c20 = state["h2"][0][0], state["h2"][1][0]

    y1, _, _ = run_layer(emb, params["l1"], h10, c10)
    y2, _, _ = run_layer(y1, params["l2"], h20, c20)
    logits = (jnp.dot(y2[-1].astype(matmul_dtype),
                      params["out"]["w"].T.astype(matmul_dtype),
                      preferred_element_type=jnp.float32)
              + params["out"]["b"])
    return logits


if __name__ == "__main__":
    key = jax.random.PRNGKey(0)
    pkey, dkey = jax.random.split(key)

    n_vocab, emb_dim, hidden = 80, 64, 256
    batch, seq_len = 2, 8

    params = init_params(pkey, n_vocab, emb_dim, hidden, hidden)
    prepared = prepare_params(params)
    seq_in = jax.random.randint(dkey, (batch, seq_len), 0, n_vocab, jnp.int32)

    logits, state = forward(prepared, seq_in)
    logits = jax.block_until_ready(logits)
    jax.block_until_ready(state)

    # Matched-precision reference (bf16 matmul operands, f32 everything else).
    ref_bf16 = _ref_forward(params, seq_in, matmul_dtype=jnp.bfloat16)
    np.testing.assert_allclose(np.asarray(logits), np.asarray(ref_bf16),
                               rtol=5e-3, atol=5e-3)

    # Full-f32 PyTorch-semantics reference (loose tolerance: bf16 matmuls).
    ref_f32 = _ref_forward(params, seq_in, matmul_dtype=jnp.float32)
    np.testing.assert_allclose(np.asarray(logits), np.asarray(ref_f32),
                               rtol=5e-2, atol=5e-2)

    # Exercise the carried-state path (second call with returned state).
    logits2, state2 = forward(prepared, seq_in, state)
    logits2 = jax.block_until_ready(logits2)
    ref2_bf16 = _ref_forward(params, seq_in, state=state, matmul_dtype=jnp.bfloat16)
    np.testing.assert_allclose(np.asarray(logits2), np.asarray(ref2_bf16),
                               rtol=5e-3, atol=5e-3)

    assert logits.shape == (batch, n_vocab)
    assert logits2.shape == (batch, n_vocab)
    assert state["h1"][0].shape == (1, batch, hidden)
    assert state["h2"][1].shape == (1, batch, hidden)
    assert state2["h1"][1].shape == (1, batch, hidden)

    print("KERNEL_OK")
</pallas_src>

<mosaic_0001>
module attributes {stable_mosaic.version = 11 : i64} {
  func.func @_fused_forward_kernel(%arg0: memref<64x64xbf16, #tpu.memory_space<vmem>>, %arg1: memref<64x1024xbf16, #tpu.memory_space<vmem>>, %arg2: memref<1x1024xf32, #tpu.memory_space<vmem>>, %arg3: memref<256x1024xbf16, #tpu.memory_space<vmem>>, %arg4: memref<256x1024xbf16, #tpu.memory_space<any>>, %arg5: memref<256x1024xbf16, #tpu.memory_space<any>>, %arg6: memref<1x1024xf32, #tpu.memory_space<vmem>>, %arg7: memref<256x128xbf16, #tpu.memory_space<vmem>>, %arg8: memref<1x128xf32, #tpu.memory_space<vmem>>, %arg9: memref<8x256xf32, #tpu.memory_space<vmem>>, %arg10: memref<8x256xf32, #tpu.memory_space<vmem>>, %arg11: memref<8x256xf32, #tpu.memory_space<vmem>>, %arg12: memref<8x256xf32, #tpu.memory_space<vmem>>, %arg13: memref<8x128xf32, #tpu.memory_space<vmem>>, %arg14: memref<8x256xf32, #tpu.memory_space<vmem>>, %arg15: memref<8x256xf32, #tpu.memory_space<vmem>>, %arg16: memref<8x256xf32, #tpu.memory_space<vmem>>, %arg17: memref<8x256xf32, #tpu.memory_space<vmem>>, %arg18: memref<64x1024xf32, #tpu.memory_space<vmem>>, %arg19: memref<256x1024xbf16, #tpu.memory_space<vmem>>, %arg20: memref<256x1024xbf16, #tpu.memory_space<vmem>>, %arg21: memref<2x!tpu.dma_semaphore, #tpu.memory_space<semaphore_mem>>) attributes {dimension_semantics = [], scalar_prefetch = 0 : i64, scratch_operands = 4 : i64, tpu.core_type = #tpu.core_type<tc>} {
    %c0_i32 = arith.constant 0 : i32
    %0 = tpu.memref_slice %arg21[%c0_i32] : memref<2x!tpu.dma_semaphore, #tpu.memory_space<semaphore_mem>> -> memref<1x!tpu.dma_semaphore, #tpu.memory_space<semaphore_mem>>
    %1 = tpu.memref_squeeze %0 : memref<1x!tpu.dma_semaphore, #tpu.memory_space<semaphore_mem>> -> memref<!tpu.dma_semaphore, #tpu.memory_space<semaphore_mem>>
    tpu.enqueue_dma source(%arg4 : memref<256x1024xbf16, #tpu.memory_space<any>>) target(%arg19 : memref<256x1024xbf16, #tpu.memory_space<vmem>>) target_semaphore(%1 : memref<!tpu.dma_semaphore, #tpu.memory_space<semaphore_mem>>)
    %c1_i32 = arith.constant 1 : i32
    %2 = tpu.memref_slice %arg21[%c1_i32] : memref<2x!tpu.dma_semaphore, #tpu.memory_space<semaphore_mem>> -> memref<1x!tpu.dma_semaphore, #tpu.memory_space<semaphore_mem>>
    %3 = tpu.memref_squeeze %2 : memref<1x!tpu.dma_semaphore, #tpu.memory_space<semaphore_mem>> -> memref<!tpu.dma_semaphore, #tpu.memory_space<semaphore_mem>>
    tpu.enqueue_dma source(%arg5 : memref<256x1024xbf16, #tpu.memory_space<any>>) target(%arg20 : memref<256x1024xbf16, #tpu.memory_space<vmem>>) target_semaphore(%3 : memref<!tpu.dma_semaphore, #tpu.memory_space<semaphore_mem>>)
    %c0 = arith.constant 0 : index
    %c0_0 = arith.constant 0 : index
    %4 = vector.load %arg0[%c0, %c0_0] : memref<64x64xbf16, #tpu.memory_space<vmem>>, vector<64x64xbf16>
    %c0_1 = arith.constant 0 : index
    %c0_2 = arith.constant 0 : index
    %5 = vector.load %arg1[%c0_1, %c0_2] : memref<64x1024xbf16, #tpu.memory_space<vmem>>, vector<64x1024xbf16>
    %cst = arith.constant dense<0.000000e+00> : vector<64x1024xf32>
    %6 = tpu.matmul %4, %5, %cst {dimension_numbers = #tpu.dot_dimension_numbers<[1], [0], [0], [1], [0, 0, 1, 1], [], []>} : vector<64x64xbf16>, vector<64x1024xbf16>, vector<64x1024xf32> -> vector<64x1024xf32>
    %c0_3 = arith.constant 0 : index
    %c0_4 = arith.constant 0 : index
    %7 = vector.load %arg2[%c0_3, %c0_4] : memref<1x1024xf32, #tpu.memory_space<vmem>>, vector<1x1024xf32>
    %8 = vector.broadcast %7 : vector<1x1024xf32> to vector<64x1024xf32>
    %9 = arith.addf %6, %8 : vector<64x1024xf32>
    %c0_5 = arith.constant 0 : index
    %c0_6 = arith.constant 0 : index
    %10 = vector.load %arg18[%c0_5, %c0_6] : memref<64x1024xf32, #tpu.memory_space<vmem>>, vector<64x1024xf32>
    tpu.vector_store %arg18[%c0_5, %c0_6], %9 {strides = array<i32>} : memref<64x1024xf32, #tpu.memory_space<vmem>>, vector<64x1024xf32>,
    %c0_7 = arith.constant 0 : index
    %c0_8 = arith.constant 0 : index
    %11 = vector.load %arg9[%c0_7, %c0_8] : memref<8x256xf32, #tpu.memory_space<vmem>>, vector<8x256xf32>
    %c0_9 = arith.constant 0 : index
    %c0_10 = arith.constant 0 : index
    %12 = vector.load %arg10[%c0_9, %c0_10] : memref<8x256xf32, #tpu.memory_space<vmem>>, vector<8x256xf32>
    %c0_11 = arith.constant 0 : index
    %c0_12 = arith.constant 0 : index
    %13 = vector.load %arg11[%c0_11, %c0_12] : memref<8x256xf32, #tpu.memory_space<vmem>>, vector<8x256xf32>
    %c0_13 = arith.constant 0 : index
    %c0_14 = arith.constant 0 : index
    %14 = vector.load %arg12[%c0_13, %c0_14] : memref<8x256xf32, #tpu.memory_space<vmem>>, vector<8x256xf32>
    %c0_15 = arith.constant 0 : index
    %c0_16 = arith.constant 0 : index
    %15 = vector.load %arg18[%c0_15, %c0_16] : memref<64x1024xf32, #tpu.memory_space<vmem>>, vector<8x1024xf32>
    %16 = arith.truncf %11 : vector<8x256xf32> to vector<8x256xbf16>
    %c0_17 = arith.constant 0 : index
    %c0_18 = arith.constant 0 : index
    %17 = vector.load %arg3[%c0_17, %c0_18] : memref<256x1024xbf16, #tpu.memory_space<vmem>>, vector<256x1024xbf16>
    %cst_19 = arith.constant dense<0.000000e+00> : vector<8x1024xf32>
    %18 = tpu.matmul %16, %17, %cst_19 {dimension_numbers = #tpu.dot_dimension_numbers<[1], [0], [0], [1], [0, 0, 1, 1], [], []>} : vector<8x256xbf16>, vector<256x1024xbf16>, vector<8x1024xf32> -> vector<8x1024xf32>
    %19 = arith.addf %15, %18 : vector<8x1024xf32>
    %20 = vector.extract_strided_slice %19 {offsets = [0, 0], sizes = [8, 256], strides = [1, 1]} : vector<8x1024xf32> to vector<8x256xf32>
    %21 = arith.negf %20 : vector<8x256xf32>
    %22 = math.exp %21 : vector<8x256xf32>
    %cst_20 = arith.constant 1.000000e+00 : f32
    %23 = vector.broadcast %cst_20 : f32 to vector<8x256xf32>
    %24 = arith.addf %23, %22 : vector<8x256xf32>
    %25 = arith.divf %23, %24 : vector<8x256xf32>
    %26 = vector.extract_strided_slice %19 {offsets = [0, 256], sizes = [8, 256], strides = [1, 1]} : vector<8x1024xf32> to vector<8x256xf32>
    %27 = arith.negf %26 : vector<8x256xf32>
    %28 = math.exp %27 : vector<8x256xf32>
    %cst_21 = arith.constant 1.000000e+00 : f32
    %29 = vector.broadcast %cst_21 : f32 to vector<8x256xf32>
    %30 = arith.addf %29, %28 : vector<8x256xf32>
    %31 = arith.divf %29, %30 : vector<8x256xf32>
    %32 = vector.extract_strided_slice %19 {offsets = [0, 512], sizes = [8, 256], strides = [1, 1]} : vector<8x1024xf32> to vector<8x256xf32>
    %33 = math.tanh %32 : vector<8x256xf32>
    %34 = vector.extract_strided_slice %19 {offsets = [0, 768], sizes = [8, 256], strides = [1, 1]} : vector<8x1024xf32> to vector<8x256xf32>
    %35 = arith.negf %34 : vector<8x256xf32>
    %36 = math.exp %35 : vector<8x256xf32>
    %cst_22 = arith.constant 1.000000e+00 : f32
    %37 = vector.broadcast %cst_22 : f32 to vector<8x256xf32>
    %38 = arith.addf %37, %36 : vector<8x256xf32>
    %39 = arith.divf %37, %38 : vector<8x256xf32>
    %40 = arith.mulf %31, %12 : vector<8x256xf32>
    %41 = arith.mulf %25, %33 : vector<8x256xf32>
    %42 = arith.addf %40, %41 : vector<8x256xf32>
    %43 = math.tanh %42 : vector<8x256xf32>
    %44 = arith.mulf %39, %43 : vector<8x256xf32>
    %c0_i32_23 = arith.constant 0 : i32
    %45 = tpu.memref_slice %arg21[%c0_i32_23] : memref<2x!tpu.dma_semaphore, #tpu.memory_space<semaphore_mem>> -> memref<1x!tpu.dma_semaphore, #tpu.memory_space<semaphore_mem>>
    %46 = tpu.memref_squeeze %45 : memref<1x!tpu.dma_semaphore, #tpu.memory_space<semaphore_mem>> -> memref<!tpu.dma_semaphore, #tpu.memory_space<semaphore_mem>>
    tpu.wait_dma2 semaphore(%46 : memref<!tpu.dma_semaphore, #tpu.memory_space<semaphore_mem>>) src(%arg4 : memref<256x1024xbf16, #tpu.memory_space<any>>) dst(%arg19 : memref<256x1024xbf16, #tpu.memory_space<vmem>>)
    %c1_i32_24 = arith.constant 1 : i32
    %47 = tpu.memref_slice %arg21[%c1_i32_24] : memref<2x!tpu.dma_semaphore, #tpu.memory_space<semaphore_mem>> -> memref<1x!tpu.dma_semaphore, #tpu.memory_space<semaphore_mem>>
    %48 = tpu.memref_squeeze %47 : memref<1x!tpu.dma_semaphore, #tpu.memory_space<semaphore_mem>> -> memref<!tpu.dma_semaphore, #tpu.memory_space<semaphore_mem>>
    tpu.wait_dma2 semaphore(%48 : memref<!tpu.dma_semaphore, #tpu.memory_space<semaphore_mem>>) src(%arg5 : memref<256x1024xbf16, #tpu.memory_space<any>>) dst(%arg20 : memref<256x1024xbf16, #tpu.memory_space<vmem>>)
    %49 = arith.truncf %44 : vector<8x256xf32> to vector<8x256xbf16>
    %c0_25 = arith.constant 0 : index
    %c0_26 = arith.constant 0 : index
    %50 = vector.load %arg19[%c0_25, %c0_26] : memref<256x1024xbf16, #tpu.memory_space<vmem>>, vector<256x1024xbf16>
    %cst_27 = arith.constant dense<0.000000e+00> : vector<8x1024xf32>
    %51 = tpu.matmul %49, %50, %cst_27 {dimension_numbers = #tpu.dot_dimension_numbers<[1], [0], [0], [1], [0, 0, 1, 1], [], []>} : vector<8x256xbf16>, vector<256x1024xbf16>, vector<8x1024xf32> -> vector<8x1024xf32>
    %52 = arith.truncf %13 : vector<8x256xf32> to vector<8x256xbf16>
    %c0_28 = arith.constant 0 : index
    %c0_29 = arith.constant 0 : index
    %53 = vector.load %arg20[%c0_28, %c0_29] : memref<256x1024xbf16, #tpu.memory_space<vmem>>, vector<256x1024xbf16>
    %cst_30 = arith.constant dense<0.000000e+00> : vector<8x1024xf32>
    %54 = tpu.matmul %52, %53, %cst_30 {dimension_numbers = #tpu.dot_dimension_numbers<[1], [0], [0], [1], [0, 0, 1, 1], [], []>} : vector<8x256xbf16>, vector<256x1024xbf16>, vector<8x1024xf32> -> vector<8x1024xf32>
    %55 = arith.addf %51, %54 : vector<8x1024xf32>
    %c0_31 = arith.constant 0 : index
    %c0_32 = arith.constant 0 : index
    %56 = vector.load %arg6[%c0_31, %c0_32] : memref<1x1024xf32, #tpu.memory_space<vmem>>, vector<1x1024xf32>
    %57 = vector.broadcast %56 : vector<1x1024xf32> to vector<8x1024xf32>
    %58 = arith.addf %55, %57 : vector<8x1024xf32>
    %59 = vector.extract_strided_slice %58 {offsets = [0, 0], sizes = [8, 256], strides = [1, 1]} : vector<8x1024xf32> to vector<8x256xf32>
    %60 = arith.negf %59 : vector<8x256xf32>
    %61 = math.exp %60 : vector<8x256xf32>
    %cst_33 = arith.constant 1.000000e+00 : f32
    %62 = vector.broadcast %cst_33 : f32 to vector<8x256xf32>
    %63 = arith.addf %62, %61 : vector<8x256xf32>
    %64 = arith.divf %62, %63 : vector<8x256xf32>
    %65 = vector.extract_strided_slice %58 {offsets = [0, 256], sizes = [8, 256], strides = [1, 1]} : vector<8x1024xf32> to vector<8x256xf32>
    %66 = arith.negf %65 : vector<8x256xf32>
    %67 = math.exp %66 : vector<8x256xf32>
    %cst_34 = arith.constant 1.000000e+00 : f32
    %68 = vector.broadcast %cst_34 : f32 to vector<8x256xf32>
    %69 = arith.addf %68, %67 : vector<8x256xf32>
    %70 = arith.divf %68, %69 : vector<8x256xf32>
    %71 = vector.extract_strided_slice %58 {offsets = [0, 512], sizes = [8, 256], strides = [1, 1]} : vector<8x1024xf32> to vector<8x256xf32>
    %72 = math.tanh %71 : vector<8x256xf32>
    %73 = vector.extract_strided_slice %58 {offsets = [0, 768], sizes = [8, 256], strides = [1, 1]} : vector<8x1024xf32> to vector<8x256xf32>
    %74 = arith.negf %73 : vector<8x256xf32>
    %75 = math.exp %74 : vector<8x256xf32>
    %cst_35 = arith.constant 1.000000e+00 : f32
    %76 = vector.broadcast %cst_35 : f32 to vector<8x256xf32>
    %77 = arith.addf %76, %75 : vector<8x256xf32>
    %78 = arith.divf %76, %77 : vector<8x256xf32>
    %79 = arith.mulf %70, %14 : vector<8x256xf32>
    %80 = arith.mulf %64, %72 : vector<8x256xf32>
    %81 = arith.addf %79, %80 : vector<8x256xf32>
    %82 = math.tanh %81 : vector<8x256xf32>
    %83 = arith.mulf %78, %82 : vector<8x256xf32>
    %c8 = arith.constant 8 : index
    %c0_36 = arith.constant 0 : index
    %84 = vector.load %arg18[%c8, %c0_36] : memref<64x1024xf32, #tpu.memory_space<vmem>>, vector<8x1024xf32>
    %85 = arith.truncf %44 : vector<8x256xf32> to vector<8x256xbf16>
    %c0_37 = arith.constant 0 : index
    %c0_38 = arith.constant 0 : index
    %86 = vector.load %arg3[%c0_37, %c0_38] : memref<256x1024xbf16, #tpu.memory_space<vmem>>, vector<256x1024xbf16>
    %cst_39 = arith.constant dense<0.000000e+00> : vector<8x1024xf32>
    %87 = tpu.matmul %85, %86, %cst_39 {dimension_numbers = #tpu.dot_dimension_numbers<[1], [0], [0], [1], [0, 0, 1, 1], [], []>} : vector<8x256xbf16>, vector<256x1024xbf16>, vector<8x1024xf32> -> vector<8x1024xf32>
    %88 = arith.addf %84, %87 : vector<8x1024xf32>
    %89 = vector.extract_strided_slice %88 {offsets = [0, 0], sizes = [8, 256], strides = [1, 1]} : vector<8x1024xf32> to vector<8x256xf32>
    %90 = arith.negf %89 : vector<8x256xf32>
    %91 = math.exp %90 : vector<8x256xf32>
    %cst_40 = arith.constant 1.000000e+00 : f32
    %92 = vector.broadcast %cst_40 : f32 to vector<8x256xf32>
    %93 = arith.addf %92, %91 : vector<8x256xf32>
    %94 = arith.divf %92, %93 : vector<8x256xf32>
    %95 = vector.extract_strided_slice %88 {offsets = [0, 256], sizes = [8, 256], strides = [1, 1]} : vector<8x1024xf32> to vector<8x256xf32>
    %96 = arith.negf %95 : vector<8x256xf32>
    %97 = math.exp %96 : vector<8x256xf32>
    %cst_41 = arith.constant 1.000000e+00 : f32
    %98 = vector.broadcast %cst_41 : f32 to vector<8x256xf32>
    %99 = arith.addf %98, %97 : vector<8x256xf32>
    %100 = arith.divf %98, %99 : vector<8x256xf32>
    %101 = vector.extract_strided_slice %88 {offsets = [0, 512], sizes = [8, 256], strides = [1, 1]} : vector<8x1024xf32> to vector<8x256xf32>
    %102 = math.tanh %101 : vector<8x256xf32>
    %103 = vector.extract_strided_slice %88 {offsets = [0, 768], sizes = [8, 256], strides = [1, 1]} : vector<8x1024xf32> to vector<8x256xf32>
    %104 = arith.negf %103 : vector<8x256xf32>
    %105 = math.exp %104 : vector<8x256xf32>
    %cst_42 = arith.constant 1.000000e+00 : f32
    %106 = vector.broadcast %cst_42 : f32 to vector<8x256xf32>
    %107 = arith.addf %106, %105 : vector<8x256xf32>
    %108 = arith.divf %106, %107 : vector<8x256xf32>
    %109 = arith.mulf %100, %42 : vector<8x256xf32>
    %110 = arith.mulf %94, %102 : vector<8x256xf32>
    %111 = arith.addf %109, %110 : vector<8x256xf32>
    %112 = math.tanh %111 : vector<8x256xf32>
    %113 = arith.mulf %108, %112 : vector<8x256xf32>
    %114 = arith.truncf %113 : vector<8x256xf32> to vector<8x256xbf16>
    %c0_43 = arith.constant 0 : index
    %c0_44 = arith.constant 0 : index
    %115 = vector.load %arg19[%c0_43, %c0_44] : memref<256x1024xbf16, #tpu.memory_space<vmem>>, vector<256x1024xbf16>
    %cst_45 = arith.constant dense<0.000000e+00> : vector<8x1024xf32>
    %116 = tpu.matmul %114, %115, %cst_45 {dimension_numbers = #tpu.dot_dimension_numbers<[1], [0], [0], [1], [0, 0, 1, 1], [], []>} : vector<8x256xbf16>, vector<256x1024xbf16>, vector<8x1024xf32> -> vector<8x1024xf32>
    %117 = arith.truncf %83 : vector<8x256xf32> to vector<8x256xbf16>
    %c0_46 = arith.constant 0 : index
    %c0_47 = arith.constant 0 : index
    %118 = vector.load %arg20[%c0_46, %c0_47] : memref<256x1024xbf16, #tpu.memory_space<vmem>>, vector<256x1024xbf16>
    %cst_48 = arith.constant dense<0.000000e+00> : vector<8x1024xf32>
    %119 = tpu.matmul %117, %118, %cst_48 {dimension_numbers = #tpu.dot_dimension_numbers<[1], [0], [0], [1], [0, 0, 1, 1], [], []>} : vector<8x256xbf16>, vector<256x1024xbf16>, vector<8x1024xf32> -> vector<8x1024xf32>
    %120 = arith.addf %116, %119 : vector<8x1024xf32>
    %c0_49 = arith.constant 0 : index
    %c0_50 = arith.constant 0 : index
    %121 = vector.load %arg6[%c0_49, %c0_50] : memref<1x1024xf32, #tpu.memory_space<vmem>>, vector<1x1024xf32>
    %122 = vector.broadcast %121 : vector<1x1024xf32> to vector<8x1024xf32>
    %123 = arith.addf %120, %122 : vector<8x1024xf32>
    %124 = vector.extract_strided_slice %123 {offsets = [0, 0], sizes = [8, 256], strides = [1, 1]} : vector<8x1024xf32> to vector<8x256xf32>
    %125 = arith.negf %124 : vector<8x256xf32>
    %126 = math.exp %125 : vector<8x256xf32>
    %cst_51 = arith.constant 1.000000e+00 : f32
    %127 = vector.broadcast %cst_51 : f32 to vector<8x256xf32>
    %128 = arith.addf %127, %126 : vector<8x256xf32>
    %129 = arith.divf %127, %128 : vector<8x256xf32>
    %130 = vector.extract_strided_slice %123 {offsets = [0, 256], sizes = [8, 256], strides = [1, 1]} : vector<8x1024xf32> to vector<8x256xf32>
    %131 = arith.negf %130 : vector<8x256xf32>
    %132 = math.exp %131 : vector<8x256xf32>
    %cst_52 = arith.constant 1.000000e+00 : f32
    %133 = vector.broadcast %cst_52 : f32 to vector<8x256xf32>
    %134 = arith.addf %133, %132 : vector<8x256xf32>
    %135 = arith.divf %133, %134 : vector<8x256xf32>
    %136 = vector.extract_strided_slice %123 {offsets = [0, 512], sizes = [8, 256], strides = [1, 1]} : vector<8x1024xf32> to vector<8x256xf32>
    %137 = math.tanh %136 : vector<8x256xf32>
    %138 = vector.extract_strided_slice %123 {offsets = [0, 768], sizes = [8, 256], strides = [1, 1]} : vector<8x1024xf32> to vector<8x256xf32>
    %139 = arith.negf %138 : vector<8x256xf32>
    %140 = math.exp %139 : vector<8x256xf32>
    %cst_53 = arith.constant 1.000000e+00 : f32
    %141 = vector.broadcast %cst_53 : f32 to vector<8x256xf32>
    %142 = arith.addf %141, %140 : vector<8x256xf32>
    %143 = arith.divf %141, %142 : vector<8x256xf32>
    %144 = arith.mulf %135, %81 : vector<8x256xf32>
    %145 = arith.mulf %129, %137 : vector<8x256xf32>
    %146 = arith.addf %144, %145 : vector<8x256xf32>
    %147 = math.tanh %146 : vector<8x256xf32>
    %148 = arith.mulf %143, %147 : vector<8x256xf32>
    %c16 = arith.constant 16 : index
    %c0_54 = arith.constant 0 : index
    %149 = vector.load %arg18[%c16, %c0_54] : memref<64x1024xf32, #tpu.memory_space<vmem>>, vector<8x1024xf32>
    %150 = arith.truncf %113 : vector<8x256xf32> to vector<8x256xbf16>
    %c0_55 = arith.constant 0 : index
    %c0_56 = arith.constant 0 : index
    %151 = vector.load %arg3[%c0_55, %c0_56] : memref<256x1024xbf16, #tpu.memory_space<vmem>>, vector<256x1024xbf16>
    %cst_57 = arith.constant dense<0.000000e+00> : vector<8x1024xf32>
    %152 = tpu.matmul %150, %151, %cst_57 {dimension_numbers = #tpu.dot_dimension_numbers<[1], [0], [0], [1], [0, 0, 1, 1], [], []>} : vector<8x256xbf16>, vector<256x1024xbf16>, vector<8x1024xf32> -> vector<8x1024xf32>
    %153 = arith.addf %149, %152 : vector<8x1024xf32>
    %154 = vector.extract_strided_slice %153 {offsets = [0, 0], sizes = [8, 256], strides = [1, 1]} : vector<8x1024xf32> to vector<8x256xf32>
    %155 = arith.negf %154 : vector<8x256xf32>
    %156 = math.exp %155 : vector<8x256xf32>
    %cst_58 = arith.constant 1.000000e+00 : f32
    %157 = vector.broadcast %cst_58 : f32 to vector<8x256xf32>
    %158 = arith.addf %157, %156 : vector<8x256xf32>
    %159 = arith.divf %157, %158 : vector<8x256xf32>
    %160 = vector.extract_strided_slice %153 {offsets = [0, 256], sizes = [8, 256], strides = [1, 1]} : vector<8x1024xf32> to vector<8x256xf32>
    %161 = arith.negf %160 : vector<8x256xf32>
    %162 = math.exp %161 : vector<8x256xf32>
    %cst_59 = arith.constant 1.000000e+00 : f32
    %163 = vector.broadcast %cst_59 : f32 to vector<8x256xf32>
    %164 = arith.addf %163, %162 : vector<8x256xf32>
    %165 = arith.divf %163, %164 : vector<8x256xf32>
    %166 = vector.extract_strided_slice %153 {offsets = [0, 512], sizes = [8, 256], strides = [1, 1]} : vector<8x1024xf32> to vector<8x256xf32>
    %167 = math.tanh %166 : vector<8x256xf32>
    %168 = vector.extract_strided_slice %153 {offsets = [0, 768], sizes = [8, 256], strides = [1, 1]} : vector<8x1024xf32> to vector<8x256xf32>
    %169 = arith.negf %168 : vector<8x256xf32>
    %170 = math.exp %169 : vector<8x256xf32>
    %cst_60 = arith.constant 1.000000e+00 : f32
    %171 = vector.broadcast %cst_60 : f32 to vector<8x256xf32>
    %172 = arith.addf %171, %170 : vector<8x256xf32>
    %173 = arith.divf %171, %172 : vector<8x256xf32>
    %174 = arith.mulf %165, %111 : vector<8x256xf32>
    %175 = arith.mulf %159, %167 : vector<8x256xf32>
    %176 = arith.addf %174, %175 : vector<8x256xf32>
    %177 = math.tanh %176 : vector<8x256xf32>
    %178 = arith.mulf %173, %177 : vector<8x256xf32>
    %179 = arith.truncf %178 : vector<8x256xf32> to vector<8x256xbf16>
    %c0_61 = arith.constant 0 : index
    %c0_62 = arith.constant 0 : index
    %180 = vector.load %arg19[%c0_61, %c0_62] : memref<256x1024xbf16, #tpu.memory_space<vmem>>, vector<256x1024xbf16>
    %cst_63 = arith.constant dense<0.000000e+00> : vector<8x1024xf32>
    %181 = tpu.matmul %179, %180, %cst_63 {dimension_numbers = #tpu.dot_dimension_numbers<[1], [0], [0], [1], [0, 0, 1, 1], [], []>} : vector<8x256xbf16>, vector<256x1024xbf16>, vector<8x1024xf32> -> vector<8x1024xf32>
    %182 = arith.truncf %148 : vector<8x256xf32> to vector<8x256xbf16>
    %c0_64 = arith.constant 0 : index
    %c0_65 = arith.constant 0 : index
    %183 = vector.load %arg20[%c0_64, %c0_65] : memref<256x1024xbf16, #tpu.memory_space<vmem>>, vector<256x1024xbf16>
    %cst_66 = arith.constant dense<0.000000e+00> : vector<8x1024xf32>
    %184 = tpu.matmul %182, %183, %cst_66 {dimension_numbers = #tpu.dot_dimension_numbers<[1], [0], [0], [1], [0, 0, 1, 1], [], []>} : vector<8x256xbf16>, vector<256x1024xbf16>, vector<8x1024xf32> -> vector<8x1024xf32>
    %185 = arith.addf %181, %184 : vector<8x1024xf32>
    %c0_67 = arith.constant 0 : index
    %c0_68 = arith.constant 0 : index
    %186 = vector.load %arg6[%c0_67, %c0_68] : memref<1x1024xf32, #tpu.memory_space<vmem>>, vector<1x1024xf32>
    %187 = vector.broadcast %186 : vector<1x1024xf32> to vector<8x1024xf32>
    %188 = arith.addf %185, %187 : vector<8x1024xf32>
    %189 = vector.extract_strided_slice %188 {offsets = [0, 0], sizes = [8, 256], strides = [1, 1]} : vector<8x1024xf32> to vector<8x256xf32>
    %190 = arith.negf %189 : vector<8x256xf32>
    %191 = math.exp %190 : vector<8x256xf32>
    %cst_69 = arith.constant 1.000000e+00 : f32
    %192 = vector.broadcast %cst_69 : f32 to vector<8x256xf32>
    %193 = arith.addf %192, %191 : vector<8x256xf32>
    %194 = arith.divf %192, %193 : vector<8x256xf32>
    %195 = vector.extract_strided_slice %188 {offsets = [0, 256], sizes = [8, 256], strides = [1, 1]} : vector<8x1024xf32> to vector<8x256xf32>
    %196 = arith.negf %195 : vector<8x256xf32>
    %197 = math.exp %196 : vector<8x256xf32>
    %cst_70 = arith.constant 1.000000e+00 : f32
    %198 = vector.broadcast %cst_70 : f32 to vector<8x256xf32>
    %199 = arith.addf %198, %197 : vector<8x256xf32>
    %200 = arith.divf %198, %199 : vector<8x256xf32>
    %201 = vector.extract_strided_slice %188 {offsets = [0, 512], sizes = [8, 256], strides = [1, 1]} : vector<8x1024xf32> to vector<8x256xf32>
    %202 = math.tanh %201 : vector<8x256xf32>
    %203 = vector.extract_strided_slice %188 {offsets = [0, 768], sizes = [8, 256], strides = [1, 1]} : vector<8x1024xf32> to vector<8x256xf32>
    %204 = arith.negf %203 : vector<8x256xf32>
    %205 = math.exp %204 : vector<8x256xf32>
    %cst_71 = arith.constant 1.000000e+00 : f32
    %206 = vector.broadcast %cst_71 : f32 to vector<8x256xf32>
    %207 = arith.addf %206, %205 : vector<8x256xf32>
    %208 = arith.divf %206, %207 : vector<8x256xf32>
    %209 = arith.mulf %200, %146 : vector<8x256xf32>
    %210 = arith.mulf %194, %202 : vector<8x256xf32>
    %211 = arith.addf %209, %210 : vector<8x256xf32>
    %212 = math.tanh %211 : vector<8x256xf32>
    %213 = arith.mulf %208, %212 : vector<8x256xf32>
    %c24 = arith.constant 24 : index
    %c0_72 = arith.constant 0 : index
    %214 = vector.load %arg18[%c24, %c0_72] : memref<64x1024xf32, #tpu.memory_space<vmem>>, vector<8x1024xf32>
    %215 = arith.truncf %178 : vector<8x256xf32> to vector<8x256xbf16>
    %c0_73 = arith.constant 0 : index
    %c0_74 = arith.constant 0 : index
    %216 = vector.load %arg3[%c0_73, %c0_74] : memref<256x1024xbf16, #tpu.memory_space<vmem>>, vector<256x1024xbf16>
    %cst_75 = arith.constant dense<0.000000e+00> : vector<8x1024xf32>
    %217 = tpu.matmul %215, %216, %cst_75 {dimension_numbers = #tpu.dot_dimension_numbers<[1], [0], [0], [1], [0, 0, 1, 1], [], []>} : vector<8x256xbf16>, vector<256x1024xbf16>, vector<8x1024xf32> -> vector<8x1024xf32>
    %218 = arith.addf %214, %217 : vector<8x1024xf32>
    %219 = vector.extract_strided_slice %218 {offsets = [0, 0], sizes = [8, 256], strides = [1, 1]} : vector<8x1024xf32> to vector<8x256xf32>
    %220 = arith.negf %219 : vector<8x256xf32>
    %221 = math.exp %220 : vector<8x256xf32>
    %cst_76 = arith.constant 1.000000e+00 : f32
    %222 = vector.broadcast %cst_76 : f32 to vector<8x256xf32>
    %223 = arith.addf %222, %221 : vector<8x256xf32>
    %224 = arith.divf %222, %223 : vector<8x256xf32>
    %225 = vector.extract_strided_slice %218 {offsets = [0, 256], sizes = [8, 256], strides = [1, 1]} : vector<8x1024xf32> to vector<8x256xf32>
    %226 = arith.negf %225 : vector<8x256xf32>
    %227 = math.exp %226 : vector<8x256xf32>
    %cst_77 = arith.constant 1.000000e+00 : f32
    %228 = vector.broadcast %cst_77 : f32 to vector<8x256xf32>
    %229 = arith.addf %228, %227 : vector<8x256xf32>
    %230 = arith.divf %228, %229 : vector<8x256xf32>
    %231 = vector.extract_strided_slice %218 {offsets = [0, 512], sizes = [8, 256], strides = [1, 1]} : vector<8x1024xf32> to vector<8x256xf32>
    %232 = math.tanh %231 : vector<8x256xf32>
    %233 = vector.extract_strided_slice %218 {offsets = [0, 768], sizes = [8, 256], strides = [1, 1]} : vector<8x1024xf32> to vector<8x256xf32>
    %234 = arith.negf %233 : vector<8x256xf32>
    %235 = math.exp %234 : vector<8x256xf32>
    %cst_78 = arith.constant 1.000000e+00 : f32
    %236 = vector.broadcast %cst_78 : f32 to vector<8x256xf32>
    %237 = arith.addf %236, %235 : vector<8x256xf32>
    %238 = arith.divf %236, %237 : vector<8x256xf32>
    %239 = arith.mulf %230, %176 : vector<8x256xf32>
    %240 = arith.mulf %224, %232 : vector<8x256xf32>
    %241 = arith.addf %239, %240 : vector<8x256xf32>
    %242 = math.tanh %241 : vector<8x256xf32>
    %243 = arith.mulf %238, %242 : vector<8x256xf32>
    %244 = arith.truncf %243 : vector<8x256xf32> to vector<8x256xbf16>
    %c0_79 = arith.constant 0 : index
    %c0_80 = arith.constant 0 : index
    %245 = vector.load %arg19[%c0_79, %c0_80] : memref<256x1024xbf16, #tpu.memory_space<vmem>>, vector<256x1024xbf16>
    %cst_81 = arith.constant dense<0.000000e+00> : vector<8x1024xf32>
    %246 = tpu.matmul %244, %245, %cst_81 {dimension_numbers = #tpu.dot_dimension_numbers<[1], [0], [0], [1], [0, 0, 1, 1], [], []>} : vector<8x256xbf16>, vector<256x1024xbf16>, vector<8x1024xf32> -> vector<8x1024xf32>
    %247 = arith.truncf %213 : vector<8x256xf32> to vector<8x256xbf16>
    %c0_82 = arith.constant 0 : index
    %c0_83 = arith.constant 0 : index
    %248 = vector.load %arg20[%c0_82, %c0_83] : memref<256x1024xbf16, #tpu.memory_space<vmem>>, vector<256x1024xbf16>
    %cst_84 = arith.constant dense<0.000000e+00> : vector<8x1024xf32>
    %249 = tpu.matmul %247, %248, %cst_84 {dimension_numbers = #tpu.dot_dimension_numbers<[1], [0], [0], [1], [0, 0, 1, 1], [], []>} : vector<8x256xbf16>, vector<256x1024xbf16>, vector<8x1024xf32> -> vector<8x1024xf32>
    %250 = arith.addf %246, %249 : vector<8x1024xf32>
    %c0_85 = arith.constant 0 : index
    %c0_86 = arith.constant 0 : index
    %251 = vector.load %arg6[%c0_85, %c0_86] : memref<1x1024xf32, #tpu.memory_space<vmem>>, vector<1x1024xf32>
    %252 = vector.broadcast %251 : vector<1x1024xf32> to vector<8x1024xf32>
    %253 = arith.addf %250, %252 : vector<8x1024xf32>
    %254 = vector.extract_strided_slice %253 {offsets = [0, 0], sizes = [8, 256], strides = [1, 1]} : vector<8x1024xf32> to vector<8x256xf32>
    %255 = arith.negf %254 : vector<8x256xf32>
    %256 = math.exp %255 : vector<8x256xf32>
    %cst_87 = arith.constant 1.000000e+00 : f32
    %257 = vector.broadcast %cst_87 : f32 to vector<8x256xf32>
    %258 = arith.addf %257, %256 : vector<8x256xf32>
    %259 = arith.divf %257, %258 : vector<8x256xf32>
    %260 = vector.extract_strided_slice %253 {offsets = [0, 256], sizes = [8, 256], strides = [1, 1]} : vector<8x1024xf32> to vector<8x256xf32>
    %261 = arith.negf %260 : vector<8x256xf32>
    %262 = math.exp %261 : vector<8x256xf32>
    %cst_88 = arith.constant 1.000000e+00 : f32
    %263 = vector.broadcast %cst_88 : f32 to vector<8x256xf32>
    %264 = arith.addf %263, %262 : vector<8x256xf32>
    %265 = arith.divf %263, %264 : vector<8x256xf32>
    %266 = vector.extract_strided_slice %253 {offsets = [0, 512], sizes = [8, 256], strides = [1, 1]} : vector<8x1024xf32> to vector<8x256xf32>
    %267 = math.tanh %266 : vector<8x256xf32>
    %268 = vector.extract_strided_slice %253 {offsets = [0, 768], sizes = [8, 256], strides = [1, 1]} : vector<8x1024xf32> to vector<8x256xf32>
    %269 = arith.negf %268 : vector<8x256xf32>
    %270 = math.exp %269 : vector<8x256xf32>
    %cst_89 = arith.constant 1.000000e+00 : f32
    %271 = vector.broadcast %cst_89 : f32 to vector<8x256xf32>
    %272 = arith.addf %271, %270 : vector<8x256xf32>
    %273 = arith.divf %271, %272 : vector<8x256xf32>
    %274 = arith.mulf %265, %211 : vector<8x256xf32>
    %275 = arith.mulf %259, %267 : vector<8x256xf32>
    %276 = arith.addf %274, %275 : vector<8x256xf32>
    %277 = math.tanh %276 : vector<8x256xf32>
    %278 = arith.mulf %273, %277 : vector<8x256xf32>
    %c32 = arith.constant 32 : index
    %c0_90 = arith.constant 0 : index
    %279 = vector.load %arg18[%c32, %c0_90] : memref<64x1024xf32, #tpu.memory_space<vmem>>, vector<8x1024xf32>
    %280 = arith.truncf %243 : vector<8x256xf32> to vector<8x256xbf16>
    %c0_91 = arith.constant 0 : index
    %c0_92 = arith.constant 0 : index
    %281 = vector.load %arg3[%c0_91, %c0_92] : memref<256x1024xbf16, #tpu.memory_space<vmem>>, vector<256x1024xbf16>
    %cst_93 = arith.constant dense<0.000000e+00> : vector<8x1024xf32>
    %282 = tpu.matmul %280, %281, %cst_93 {dimension_numbers = #tpu.dot_dimension_numbers<[1], [0], [0], [1], [0, 0, 1, 1], [], []>} : vector<8x256xbf16>, vector<256x1024xbf16>, vector<8x1024xf32> -> vector<8x1024xf32>
    %283 = arith.addf %279, %282 : vector<8x1024xf32>
    %284 = vector.extract_strided_slice %283 {offsets = [0, 0], sizes = [8, 256], strides = [1, 1]} : vector<8x1024xf32> to vector<8x256xf32>
    %285 = arith.negf %284 : vector<8x256xf32>
    %286 = math.exp %285 : vector<8x256xf32>
    %cst_94 = arith.constant 1.000000e+00 : f32
    %287 = vector.broadcast %cst_94 : f32 to vector<8x256xf32>
    %288 = arith.addf %287, %286 : vector<8x256xf32>
    %289 = arith.divf %287, %288 : vector<8x256xf32>
    %290 = vector.extract_strided_slice %283 {offsets = [0, 256], sizes = [8, 256], strides = [1, 1]} : vector<8x1024xf32> to vector<8x256xf32>
    %291 = arith.negf %290 : vector<8x256xf32>
    %292 = math.exp %291 : vector<8x256xf32>
    %cst_95 = arith.constant 1.000000e+00 : f32
    %293 = vector.broadcast %cst_95 : f32 to vector<8x256xf32>
    %294 = arith.addf %293, %292 : vector<8x256xf32>
    %295 = arith.divf %293, %294 : vector<8x256xf32>
    %296 = vector.extract_strided_slice %283 {offsets = [0, 512], sizes = [8, 256], strides = [1, 1]} : vector<8x1024xf32> to vector<8x256xf32>
    %297 = math.tanh %296 : vector<8x256xf32>
    %298 = vector.extract_strided_slice %283 {offsets = [0, 768], sizes = [8, 256], strides = [1, 1]} : vector<8x1024xf32> to vector<8x256xf32>
    %299 = arith.negf %298 : vector<8x256xf32>
    %300 = math.exp %299 : vector<8x256xf32>
    %cst_96 = arith.constant 1.000000e+00 : f32
    %301 = vector.broadcast %cst_96 : f32 to vector<8x256xf32>
    %302 = arith.addf %301, %300 : vector<8x256xf32>
    %303 = arith.divf %301, %302 : vector<8x256xf32>
    %304 = arith.mulf %295, %241 : vector<8x256xf32>
    %305 = arith.mulf %289, %297 : vector<8x256xf32>
    %306 = arith.addf %304, %305 : vector<8x256xf32>
    %307 = math.tanh %306 : vector<8x256xf32>
    %308 = arith.mulf %303, %307 : vector<8x256xf32>
    %309 = arith.truncf %308 : vector<8x256xf32> to vector<8x256xbf16>
    %c0_97 = arith.constant 0 : index
    %c0_98 = arith.constant 0 : index
    %310 = vector.load %arg19[%c0_97, %c0_98] : memref<256x1024xbf16, #tpu.memory_space<vmem>>, vector<256x1024xbf16>
    %cst_99 = arith.constant dense<0.000000e+00> : vector<8x1024xf32>
    %311 = tpu.matmul %309, %310, %cst_99 {dimension_numbers = #tpu.dot_dimension_numbers<[1], [0], [0], [1], [0, 0, 1, 1], [], []>} : vector<8x256xbf16>, vector<256x1024xbf16>, vector<8x1024xf32> -> vector<8x1024xf32>
    %312 = arith.truncf %278 : vector<8x256xf32> to vector<8x256xbf16>
    %c0_100 = arith.constant 0 : index
    %c0_101 = arith.constant 0 : index
    %313 = vector.load %arg20[%c0_100, %c0_101] : memref<256x1024xbf16, #tpu.memory_space<vmem>>, vector<256x1024xbf16>
    %cst_102 = arith.constant dense<0.000000e+00> : vector<8x1024xf32>
    %314 = tpu.matmul %312, %313, %cst_102 {dimension_numbers = #tpu.dot_dimension_numbers<[1], [0], [0], [1], [0, 0, 1, 1], [], []>} : vector<8x256xbf16>, vector<256x1024xbf16>, vector<8x1024xf32> -> vector<8x1024xf32>
    %315 = arith.addf %311, %314 : vector<8x1024xf32>
    %c0_103 = arith.constant 0 : index
    %c0_104 = arith.constant 0 : index
    %316 = vector.load %arg6[%c0_103, %c0_104] : memref<1x1024xf32, #tpu.memory_space<vmem>>, vector<1x1024xf32>
    %317 = vector.broadcast %316 : vector<1x1024xf32> to vector<8x1024xf32>
    %318 = arith.addf %315, %317 : vector<8x1024xf32>
    %319 = vector.extract_strided_slice %318 {offsets = [0, 0], sizes = [8, 256], strides = [1, 1]} : vector<8x1024xf32> to vector<8x256xf32>
    %320 = arith.negf %319 : vector<8x256xf32>
    %321 = math.exp %320 : vector<8x256xf32>
    %cst_105 = arith.constant 1.000000e+00 : f32
    %322 = vector.broadcast %cst_105 : f32 to vector<8x256xf32>
    %323 = arith.addf %322, %321 : vector<8x256xf32>
    %324 = arith.divf %322, %323 : vector<8x256xf32>
    %325 = vector.extract_strided_slice %318 {offsets = [0, 256], sizes = [8, 256], strides = [1, 1]} : vector<8x1024xf32> to vector<8x256xf32>
    %326 = arith.negf %325 : vector<8x256xf32>
    %327 = math.exp %326 : vector<8x256xf32>
    %cst_106 = arith.constant 1.000000e+00 : f32
    %328 = vector.broadcast %cst_106 : f32 to vector<8x256xf32>
    %329 = arith.addf %328, %327 : vector<8x256xf32>
    %330 = arith.divf %328, %329 : vector<8x256xf32>
    %331 = vector.extract_strided_slice %318 {offsets = [0, 512], sizes = [8, 256], strides = [1, 1]} : vector<8x1024xf32> to vector<8x256xf32>
    %332 = math.tanh %331 : vector<8x256xf32>
    %333 = vector.extract_strided_slice %318 {offsets = [0, 768], sizes = [8, 256], strides = [1, 1]} : vector<8x1024xf32> to vector<8x256xf32>
    %334 = arith.negf %333 : vector<8x256xf32>
    %335 = math.exp %334 : vector<8x256xf32>
    %cst_107 = arith.constant 1.000000e+00 : f32
    %336 = vector.broadcast %cst_107 : f32 to vector<8x256xf32>
    %337 = arith.addf %336, %335 : vector<8x256xf32>
    %338 = arith.divf %336, %337 : vector<8x256xf32>
    %339 = arith.mulf %330, %276 : vector<8x256xf32>
    %340 = arith.mulf %324, %332 : vector<8x256xf32>
    %341 = arith.addf %339, %340 : vector<8x256xf32>
    %342 = math.tanh %341 : vector<8x256xf32>
    %343 = arith.mulf %338, %342 : vector<8x256xf32>
    %c40 = arith.constant 40 : index
    %c0_108 = arith.constant 0 : index
    %344 = vector.load %arg18[%c40, %c0_108] : memref<64x1024xf32, #tpu.memory_space<vmem>>, vector<8x1024xf32>
    %345 = arith.truncf %308 : vector<8x256xf32> to vector<8x256xbf16>
    %c0_109 = arith.constant 0 : index
    %c0_110 = arith.constant 0 : index
    %346 = vector.load %arg3[%c0_109, %c0_110] : memref<256x1024xbf16, #tpu.memory_space<vmem>>, vector<256x1024xbf16>
    %cst_111 = arith.constant dense<0.000000e+00> : vector<8x1024xf32>
    %347 = tpu.matmul %345, %346, %cst_111 {dimension_numbers = #tpu.dot_dimension_numbers<[1], [0], [0], [1], [0, 0, 1, 1], [], []>} : vector<8x256xbf16>, vector<256x1024xbf16>, vector<8x1024xf32> -> vector<8x1024xf32>
    %348 = arith.addf %344, %347 : vector<8x1024xf32>
    %349 = vector.extract_strided_slice %348 {offsets = [0, 0], sizes = [8, 256], strides = [1, 1]} : vector<8x1024xf32> to vector<8x256xf32>
    %350 = arith.negf %349 : vector<8x256xf32>
    %351 = math.exp %350 : vector<8x256xf32>
    %cst_112 = arith.constant 1.000000e+00 : f32
    %352 = vector.broadcast %cst_112 : f32 to vector<8x256xf32>
    %353 = arith.addf %352, %351 : vector<8x256xf32>
    %354 = arith.divf %352, %353 : vector<8x256xf32>
    %355 = vector.extract_strided_slice %348 {offsets = [0, 256], sizes = [8, 256], strides = [1, 1]} : vector<8x1024xf32> to vector<8x256xf32>
    %356 = arith.negf %355 : vector<8x256xf32>
    %357 = math.exp %356 : vector<8x256xf32>
    %cst_113 = arith.constant 1.000000e+00 : f32
    %358 = vector.broadcast %cst_113 : f32 to vector<8x256xf32>
    %359 = arith.addf %358, %357 : vector<8x256xf32>
    %360 = arith.divf %358, %359 : vector<8x256xf32>
    %361 = vector.extract_strided_slice %348 {offsets = [0, 512], sizes = [8, 256], strides = [1, 1]} : vector<8x1024xf32> to vector<8x256xf32>
    %362 = math.tanh %361 : vector<8x256xf32>
    %363 = vector.extract_strided_slice %348 {offsets = [0, 768], sizes = [8, 256], strides = [1, 1]} : vector<8x1024xf32> to vector<8x256xf32>
    %364 = arith.negf %363 : vector<8x256xf32>
    %365 = math.exp %364 : vector<8x256xf32>
    %cst_114 = arith.constant 1.000000e+00 : f32
    %366 = vector.broadcast %cst_114 : f32 to vector<8x256xf32>
    %367 = arith.addf %366, %365 : vector<8x256xf32>
    %368 = arith.divf %366, %367 : vector<8x256xf32>
    %369 = arith.mulf %360, %306 : vector<8x256xf32>
    %370 = arith.mulf %354, %362 : vector<8x256xf32>
    %371 = arith.addf %369, %370 : vector<8x256xf32>
    %372 = math.tanh %371 : vector<8x256xf32>
    %373 = arith.mulf %368, %372 : vector<8x256xf32>
    %374 = arith.truncf %373 : vector<8x256xf32> to vector<8x256xbf16>
    %c0_115 = arith.constant 0 : index
    %c0_116 = arith.constant 0 : index
    %375 = vector.load %arg19[%c0_115, %c0_116] : memref<256x1024xbf16, #tpu.memory_space<vmem>>, vector<256x1024xbf16>
    %cst_117 = arith.constant dense<0.000000e+00> : vector<8x1024xf32>
    %376 = tpu.matmul %374, %375, %cst_117 {dimension_numbers = #tpu.dot_dimension_numbers<[1], [0], [0], [1], [0, 0, 1, 1], [], []>} : vector<8x256xbf16>, vector<256x1024xbf16>, vector<8x1024xf32> -> vector<8x1024xf32>
    %377 = arith.truncf %343 : vector<8x256xf32> to vector<8x256xbf16>
    %c0_118 = arith.constant 0 : index
    %c0_119 = arith.constant 0 : index
    %378 = vector.load %arg20[%c0_118, %c0_119] : memref<256x1024xbf16, #tpu.memory_space<vmem>>, vector<256x1024xbf16>
    %cst_120 = arith.constant dense<0.000000e+00> : vector<8x1024xf32>
    %379 = tpu.matmul %377, %378, %cst_120 {dimension_numbers = #tpu.dot_dimension_numbers<[1], [0], [0], [1], [0, 0, 1, 1], [], []>} : vector<8x256xbf16>, vector<256x1024xbf16>, vector<8x1024xf32> -> vector<8x1024xf32>
    %380 = arith.addf %376, %379 : vector<8x1024xf32>
    %c0_121 = arith.constant 0 : index
    %c0_122 = arith.constant 0 : index
    %381 = vector.load %arg6[%c0_121, %c0_122] : memref<1x1024xf32, #tpu.memory_space<vmem>>, vector<1x1024xf32>
    %382 = vector.broadcast %381 : vector<1x1024xf32> to vector<8x1024xf32>
    %383 = arith.addf %380, %382 : vector<8x1024xf32>
    %384 = vector.extract_strided_slice %383 {offsets = [0, 0], sizes = [8, 256], strides = [1, 1]} : vector<8x1024xf32> to vector<8x256xf32>
    %385 = arith.negf %384 : vector<8x256xf32>
    %386 = math.exp %385 : vector<8x256xf32>
    %cst_123 = arith.constant 1.000000e+00 : f32
    %387 = vector.broadcast %cst_123 : f32 to vector<8x256xf32>
    %388 = arith.addf %387, %386 : vector<8x256xf32>
    %389 = arith.divf %387, %388 : vector<8x256xf32>
    %390 = vector.extract_strided_slice %383 {offsets = [0, 256], sizes = [8, 256], strides = [1, 1]} : vector<8x1024xf32> to vector<8x256xf32>
    %391 = arith.negf %390 : vector<8x256xf32>
    %392 = math.exp %391 : vector<8x256xf32>
    %cst_124 = arith.constant 1.000000e+00 : f32
    %393 = vector.broadcast %cst_124 : f32 to vector<8x256xf32>
    %394 = arith.addf %393, %392 : vector<8x256xf32>
    %395 = arith.divf %393, %394 : vector<8x256xf32>
    %396 = vector.extract_strided_slice %383 {offsets = [0, 512], sizes = [8, 256], strides = [1, 1]} : vector<8x1024xf32> to vector<8x256xf32>
    %397 = math.tanh %396 : vector<8x256xf32>
    %398 = vector.extract_strided_slice %383 {offsets = [0, 768], sizes = [8, 256], strides = [1, 1]} : vector<8x1024xf32> to vector<8x256xf32>
    %399 = arith.negf %398 : vector<8x256xf32>
    %400 = math.exp %399 : vector<8x256xf32>
    %cst_125 = arith.constant 1.000000e+00 : f32
    %401 = vector.broadcast %cst_125 : f32 to vector<8x256xf32>
    %402 = arith.addf %401, %400 : vector<8x256xf32>
    %403 = arith.divf %401, %402 : vector<8x256xf32>
    %404 = arith.mulf %395, %341 : vector<8x256xf32>
    %405 = arith.mulf %389, %397 : vector<8x256xf32>
    %406 = arith.addf %404, %405 : vector<8x256xf32>
    %407 = math.tanh %406 : vector<8x256xf32>
    %408 = arith.mulf %403, %407 : vector<8x256xf32>
    %c48 = arith.constant 48 : index
    %c0_126 = arith.constant 0 : index
    %409 = vector.load %arg18[%c48, %c0_126] : memref<64x1024xf32, #tpu.memory_space<vmem>>, vector<8x1024xf32>
    %410 = arith.truncf %373 : vector<8x256xf32> to vector<8x256xbf16>
    %c0_127 = arith.constant 0 : index
    %c0_128 = arith.constant 0 : index
    %411 = vector.load %arg3[%c0_127, %c0_128] : memref<256x1024xbf16, #tpu.memory_space<vmem>>, vector<256x1024xbf16>
    %cst_129 = arith.constant dense<0.000000e+00> : vector<8x1024xf32>
    %412 = tpu.matmul %410, %411, %cst_129 {dimension_numbers = #tpu.dot_dimension_numbers<[1], [0], [0], [1], [0, 0, 1, 1], [], []>} : vector<8x256xbf16>, vector<256x1024xbf16>, vector<8x1024xf32> -> vector<8x1024xf32>
    %413 = arith.addf %409, %412 : vector<8x1024xf32>
    %414 = vector.extract_strided_slice %413 {offsets = [0, 0], sizes = [8, 256], strides = [1, 1]} : vector<8x1024xf32> to vector<8x256xf32>
    %415 = arith.negf %414 : vector<8x256xf32>
    %416 = math.exp %415 : vector<8x256xf32>
    %cst_130 = arith.constant 1.000000e+00 : f32
    %417 = vector.broadcast %cst_130 : f32 to vector<8x256xf32>
    %418 = arith.addf %417, %416 : vector<8x256xf32>
    %419 = arith.divf %417, %418 : vector<8x256xf32>
    %420 = vector.extract_strided_slice %413 {offsets = [0, 256], sizes = [8, 256], strides = [1, 1]} : vector<8x1024xf32> to vector<8x256xf32>
    %421 = arith.negf %420 : vector<8x256xf32>
    %422 = math.exp %421 : vector<8x256xf32>
    %cst_131 = arith.constant 1.000000e+00 : f32
    %423 = vector.broadcast %cst_131 : f32 to vector<8x256xf32>
    %424 = arith.addf %423, %422 : vector<8x256xf32>
    %425 = arith.divf %423, %424 : vector<8x256xf32>
    %426 = vector.extract_strided_slice %413 {offsets = [0, 512], sizes = [8, 256], strides = [1, 1]} : vector<8x1024xf32> to vector<8x256xf32>
    %427 = math.tanh %426 : vector<8x256xf32>
    %428 = vector.extract_strided_slice %413 {offsets = [0, 768], sizes = [8, 256], strides = [1, 1]} : vector<8x1024xf32> to vector<8x256xf32>
    %429 = arith.negf %428 : vector<8x256xf32>
    %430 = math.exp %429 : vector<8x256xf32>
    %cst_132 = arith.constant 1.000000e+00 : f32
    %431 = vector.broadcast %cst_132 : f32 to vector<8x256xf32>
    %432 = arith.addf %431, %430 : vector<8x256xf32>
    %433 = arith.divf %431, %432 : vector<8x256xf32>
    %434 = arith.mulf %425, %371 : vector<8x256xf32>
    %435 = arith.mulf %419, %427 : vector<8x256xf32>
    %436 = arith.addf %434, %435 : vector<8x256xf32>
    %437 = math.tanh %436 : vector<8x256xf32>
    %438 = arith.mulf %433, %437 : vector<8x256xf32>
    %439 = arith.truncf %438 : vector<8x256xf32> to vector<8x256xbf16>
    %c0_133 = arith.constant 0 : index
    %c0_134 = arith.constant 0 : index
    %440 = vector.load %arg19[%c0_133, %c0_134] : memref<256x1024xbf16, #tpu.memory_space<vmem>>, vector<256x1024xbf16>
    %cst_135 = arith.constant dense<0.000000e+00> : vector<8x1024xf32>
    %441 = tpu.matmul %439, %440, %cst_135 {dimension_numbers = #tpu.dot_dimension_numbers<[1], [0], [0], [1], [0, 0, 1, 1], [], []>} : vector<8x256xbf16>, vector<256x1024xbf16>, vector<8x1024xf32> -> vector<8x1024xf32>
    %442 = arith.truncf %408 : vector<8x256xf32> to vector<8x256xbf16>
    %c0_136 = arith.constant 0 : index
    %c0_137 = arith.constant 0 : index
    %443 = vector.load %arg20[%c0_136, %c0_137] : memref<256x1024xbf16, #tpu.memory_space<vmem>>, vector<256x1024xbf16>
    %cst_138 = arith.constant dense<0.000000e+00> : vector<8x1024xf32>
    %444 = tpu.matmul %442, %443, %cst_138 {dimension_numbers = #tpu.dot_dimension_numbers<[1], [0], [0], [1], [0, 0, 1, 1], [], []>} : vector<8x256xbf16>, vector<256x1024xbf16>, vector<8x1024xf32> -> vector<8x1024xf32>
    %445 = arith.addf %441, %444 : vector<8x1024xf32>
    %c0_139 = arith.constant 0 : index
    %c0_140 = arith.constant 0 : index
    %446 = vector.load %arg6[%c0_139, %c0_140] : memref<1x1024xf32, #tpu.memory_space<vmem>>, vector<1x1024xf32>
    %447 = vector.broadcast %446 : vector<1x1024xf32> to vector<8x1024xf32>
    %448 = arith.addf %445, %447 : vector<8x1024xf32>
    %449 = vector.extract_strided_slice %448 {offsets = [0, 0], sizes = [8, 256], strides = [1, 1]} : vector<8x1024xf32> to vector<8x256xf32>
    %450 = arith.negf %449 : vector<8x256xf32>
    %451 = math.exp %450 : vector<8x256xf32>
    %cst_141 = arith.constant 1.000000e+00 : f32
    %452 = vector.broadcast %cst_141 : f32 to vector<8x256xf32>
    %453 = arith.addf %452, %451 : vector<8x256xf32>
    %454 = arith.divf %452, %453 : vector<8x256xf32>
    %455 = vector.extract_strided_slice %448 {offsets = [0, 256], sizes = [8, 256], strides = [1, 1]} : vector<8x1024xf32> to vector<8x256xf32>
    %456 = arith.negf %455 : vector<8x256xf32>
    %457 = math.exp %456 : vector<8x256xf32>
    %cst_142 = arith.constant 1.000000e+00 : f32
    %458 = vector.broadcast %cst_142 : f32 to vector<8x256xf32>
    %459 = arith.addf %458, %457 : vector<8x256xf32>
    %460 = arith.divf %458, %459 : vector<8x256xf32>
    %461 = vector.extract_strided_slice %448 {offsets = [0, 512], sizes = [8, 256], strides = [1, 1]} : vector<8x1024xf32> to vector<8x256xf32>
    %462 = math.tanh %461 : vector<8x256xf32>
    %463 = vector.extract_strided_slice %448 {offsets = [0, 768], sizes = [8, 256], strides = [1, 1]} : vector<8x1024xf32> to vector<8x256xf32>
    %464 = arith.negf %463 : vector<8x256xf32>
    %465 = math.exp %464 : vector<8x256xf32>
    %cst_143 = arith.constant 1.000000e+00 : f32
    %466 = vector.broadcast %cst_143 : f32 to vector<8x256xf32>
    %467 = arith.addf %466, %465 : vector<8x256xf32>
    %468 = arith.divf %466, %467 : vector<8x256xf32>
    %469 = arith.mulf %460, %406 : vector<8x256xf32>
    %470 = arith.mulf %454, %462 : vector<8x256xf32>
    %471 = arith.addf %469, %470 : vector<8x256xf32>
    %472 = math.tanh %471 : vector<8x256xf32>
    %473 = arith.mulf %468, %472 : vector<8x256xf32>
    %c56 = arith.constant 56 : index
    %c0_144 = arith.constant 0 : index
    %474 = vector.load %arg18[%c56, %c0_144] : memref<64x1024xf32, #tpu.memory_space<vmem>>, vector<8x1024xf32>
    %475 = arith.truncf %438 : vector<8x256xf32> to vector<8x256xbf16>
    %c0_145 = arith.constant 0 : index
    %c0_146 = arith.constant 0 : index
    %476 = vector.load %arg3[%c0_145, %c0_146] : memref<256x1024xbf16, #tpu.memory_space<vmem>>, vector<256x1024xbf16>
    %cst_147 = arith.constant dense<0.000000e+00> : vector<8x1024xf32>
    %477 = tpu.matmul %475, %476, %cst_147 {dimension_numbers = #tpu.dot_dimension_numbers<[1], [0], [0], [1], [0, 0, 1, 1], [], []>} : vector<8x256xbf16>, vector<256x1024xbf16>, vector<8x1024xf32> -> vector<8x1024xf32>
    %478 = arith.addf %474, %477 : vector<8x1024xf32>
    %479 = vector.extract_strided_slice %478 {offsets = [0, 0], sizes = [8, 256], strides = [1, 1]} : vector<8x1024xf32> to vector<8x256xf32>
    %480 = arith.negf %479 : vector<8x256xf32>
    %481 = math.exp %480 : vector<8x256xf32>
    %cst_148 = arith.constant 1.000000e+00 : f32
    %482 = vector.broadcast %cst_148 : f32 to vector<8x256xf32>
    %483 = arith.addf %482, %481 : vector<8x256xf32>
    %484 = arith.divf %482, %483 : vector<8x256xf32>
    %485 = vector.extract_strided_slice %478 {offsets = [0, 256], sizes = [8, 256], strides = [1, 1]} : vector<8x1024xf32> to vector<8x256xf32>
    %486 = arith.negf %485 : vector<8x256xf32>
    %487 = math.exp %486 : vector<8x256xf32>
    %cst_149 = arith.constant 1.000000e+00 : f32
    %488 = vector.broadcast %cst_149 : f32 to vector<8x256xf32>
    %489 = arith.addf %488, %487 : vector<8x256xf32>
    %490 = arith.divf %488, %489 : vector<8x256xf32>
    %491 = vector.extract_strided_slice %478 {offsets = [0, 512], sizes = [8, 256], strides = [1, 1]} : vector<8x1024xf32> to vector<8x256xf32>
    %492 = math.tanh %491 : vector<8x256xf32>
    %493 = vector.extract_strided_slice %478 {offsets = [0, 768], sizes = [8, 256], strides = [1, 1]} : vector<8x1024xf32> to vector<8x256xf32>
    %494 = arith.negf %493 : vector<8x256xf32>
    %495 = math.exp %494 : vector<8x256xf32>
    %cst_150 = arith.constant 1.000000e+00 : f32
    %496 = vector.broadcast %cst_150 : f32 to vector<8x256xf32>
    %497 = arith.addf %496, %495 : vector<8x256xf32>
    %498 = arith.divf %496, %497 : vector<8x256xf32>
    %499 = arith.mulf %490, %436 : vector<8x256xf32>
    %500 = arith.mulf %484, %492 : vector<8x256xf32>
    %501 = arith.addf %499, %500 : vector<8x256xf32>
    %502 = math.tanh %501 : vector<8x256xf32>
    %503 = arith.mulf %498, %502 : vector<8x256xf32>
    %504 = arith.truncf %503 : vector<8x256xf32> to vector<8x256xbf16>
    %c0_151 = arith.constant 0 : index
    %c0_152 = arith.constant 0 : index
    %505 = vector.load %arg19[%c0_151, %c0_152] : memref<256x1024xbf16, #tpu.memory_space<vmem>>, vector<256x1024xbf16>
    %cst_153 = arith.constant dense<0.000000e+00> : vector<8x1024xf32>
    %506 = tpu.matmul %504, %505, %cst_153 {dimension_numbers = #tpu.dot_dimension_numbers<[1], [0], [0], [1], [0, 0, 1, 1], [], []>} : vector<8x256xbf16>, vector<256x1024xbf16>, vector<8x1024xf32> -> vector<8x1024xf32>
    %507 = arith.truncf %473 : vector<8x256xf32> to vector<8x256xbf16>
    %c0_154 = arith.constant 0 : index
    %c0_155 = arith.constant 0 : index
    %508 = vector.load %arg20[%c0_154, %c0_155] : memref<256x1024xbf16, #tpu.memory_space<vmem>>, vector<256x1024xbf16>
    %cst_156 = arith.constant dense<0.000000e+00> : vector<8x1024xf32>
    %509 = tpu.matmul %507, %508, %cst_156 {dimension_numbers = #tpu.dot_dimension_numbers<[1], [0], [0], [1], [0, 0, 1, 1], [], []>} : vector<8x256xbf16>, vector<256x1024xbf16>, vector<8x1024xf32> -> vector<8x1024xf32>
    %510 = arith.addf %506, %509 : vector<8x1024xf32>
    %c0_157 = arith.constant 0 : index
    %c0_158 = arith.constant 0 : index
    %511 = vector.load %arg6[%c0_157, %c0_158] : memref<1x1024xf32, #tpu.memory_space<vmem>>, vector<1x1024xf32>
    %512 = vector.broadcast %511 : vector<1x1024xf32> to vector<8x1024xf32>
    %513 = arith.addf %510, %512 : vector<8x1024xf32>
    %514 = vector.extract_strided_slice %513 {offsets = [0, 0], sizes = [8, 256], strides = [1, 1]} : vector<8x1024xf32> to vector<8x256xf32>
    %515 = arith.negf %514 : vector<8x256xf32>
    %516 = math.exp %515 : vector<8x256xf32>
    %cst_159 = arith.constant 1.000000e+00 : f32
    %517 = vector.broadcast %cst_159 : f32 to vector<8x256xf32>
    %518 = arith.addf %517, %516 : vector<8x256xf32>
    %519 = arith.divf %517, %518 : vector<8x256xf32>
    %520 = vector.extract_strided_slice %513 {offsets = [0, 256], sizes = [8, 256], strides = [1, 1]} : vector<8x1024xf32> to vector<8x256xf32>
    %521 = arith.negf %520 : vector<8x256xf32>
    %522 = math.exp %521 : vector<8x256xf32>
    %cst_160 = arith.constant 1.000000e+00 : f32
    %523 = vector.broadcast %cst_160 : f32 to vector<8x256xf32>
    %524 = arith.addf %523, %522 : vector<8x256xf32>
    %525 = arith.divf %523, %524 : vector<8x256xf32>
    %526 = vector.extract_strided_slice %513 {offsets = [0, 512], sizes = [8, 256], strides = [1, 1]} : vector<8x1024xf32> to vector<8x256xf32>
    %527 = math.tanh %526 : vector<8x256xf32>
    %528 = vector.extract_strided_slice %513 {offsets = [0, 768], sizes = [8, 256], strides = [1, 1]} : vector<8x1024xf32> to vector<8x256xf32>
    %529 = arith.negf %528 : vector<8x256xf32>
    %530 = math.exp %529 : vector<8x256xf32>
    %cst_161 = arith.constant 1.000000e+00 : f32
    %531 = vector.broadcast %cst_161 : f32 to vector<8x256xf32>
    %532 = arith.addf %531, %530 : vector<8x256xf32>
    %533 = arith.divf %531, %532 : vector<8x256xf32>
    %534 = arith.mulf %525, %471 : vector<8x256xf32>
    %535 = arith.mulf %519, %527 : vector<8x256xf32>
    %536 = arith.addf %534, %535 : vector<8x256xf32>
    %537 = math.tanh %536 : vector<8x256xf32>
    %538 = arith.mulf %533, %537 : vector<8x256xf32>
    %c0_162 = arith.constant 0 : index
    %c0_163 = arith.constant 0 : index
    %539 = vector.load %arg14[%c0_162, %c0_163] : memref<8x256xf32, #tpu.memory_space<vmem>>, vector<8x256xf32>
    tpu.vector_store %arg14[%c0_162, %c0_163], %503 {strides = array<i32>} : memref<8x256xf32, #tpu.memory_space<vmem>>, vector<8x256xf32>,
    %c0_164 = arith.constant 0 : index
    %c0_165 = arith.constant 0 : index
    %540 = vector.load %arg15[%c0_164, %c0_165] : memref<8x256xf32, #tpu.memory_space<vmem>>, vector<8x256xf32>
    tpu.vector_store %arg15[%c0_164, %c0_165], %501 {strides = array<i32>} : memref<8x256xf32, #tpu.memory_space<vmem>>, vector<8x256xf32>,
    %c0_166 = arith.constant 0 : index
    %c0_167 = arith.constant 0 : index
    %541 = vector.load %arg16[%c0_166, %c0_167] : memref<8x256xf32, #tpu.memory_space<vmem>>, vector<8x256xf32>
    tpu.vector_store %arg16[%c0_166, %c0_167], %538 {strides = array<i32>} : memref<8x256xf32, #tpu.memory_space<vmem>>, vector<8x256xf32>,
    %c0_168 = arith.constant 0 : index
    %c0_169 = arith.constant 0 : index
    %542 = vector.load %arg17[%c0_168, %c0_169] : memref<8x256xf32, #tpu.memory_space<vmem>>, vector<8x256xf32>
    tpu.vector_store %arg17[%c0_168, %c0_169], %536 {strides = array<i32>} : memref<8x256xf32, #tpu.memory_space<vmem>>, vector<8x256xf32>,
    %543 = arith.truncf %538 : vector<8x256xf32> to vector<8x256xbf16>
    %c0_170 = arith.constant 0 : index
    %c0_171 = arith.constant 0 : index
    %544 = vector.load %arg7[%c0_170, %c0_171] : memref<256x128xbf16, #tpu.memory_space<vmem>>, vector<256x128xbf16>
    %cst_172 = arith.constant dense<0.000000e+00> : vector<8x128xf32>
    %545 = tpu.matmul %543, %544, %cst_172 {dimension_numbers = #tpu.dot_dimension_numbers<[1], [0], [0], [1], [0, 0, 1, 1], [], []>} : vector<8x256xbf16>, vector<256x128xbf16>, vector<8x128xf32> -> vector<8x128xf32>
    %c0_173 = arith.constant 0 : index
    %c0_174 = arith.constant 0 : index
    %546 = vector.load %arg8[%c0_173, %c0_174] : memref<1x128xf32, #tpu.memory_space<vmem>>, vector<1x128xf32>
    %547 = vector.broadcast %546 : vector<1x128xf32> to vector<8x128xf32>
    %548 = arith.addf %545, %547 : vector<8x128xf32>
    %c0_175 = arith.constant 0 : index
    %c0_176 = arith.constant 0 : index
    %549 = vector.load %arg13[%c0_175, %c0_176] : memref<8x128xf32, #tpu.memory_space<vmem>>, vector<8x128xf32>
    tpu.vector_store %arg13[%c0_175, %c0_176], %548 {strides = array<i32>} : memref<8x128xf32, #tpu.memory_space<vmem>>, vector<8x128xf32>,
    return
  }
}

</mosaic_0001>

<llo_original>
// kernel: tpu_custom_call.1
$region0: #{tpu_custom_call.1}
  #allocation0 [shape = 'u32[]', space=smem, size = 0x4, offset = 0x4, fixed_abs, tag = 'smem constant byte address 0x4 - core index']
  #allocation1 [shape = 'u32[144,128]{1,0:T(1,128)}', space=vmem, size = 0x12000, scoped, tag = 'internal scratch']
  #allocation2 [shape = 'f32[64,1024]{1,0:T(8,128)}', space=vmem, size = 0x40000, scoped, tag = 'scratch operand']
  #allocation3 [shape = 'bf16[256,1024]{1,0:T(8,128)(2,1)}', space=vmem, size = 0x80000, scoped, tag = 'scratch operand']
  #allocation4 [shape = 'bf16[256,1024]{1,0:T(8,128)(2,1)}', space=vmem, size = 0x80000, scoped, tag = 'scratch operand']
  #allocation5 [shape = 's32[2]{0}', space=sflag, size = 0x8, scoped, tag = 'scratch operand']
  #allocation30 [shape = 's32[]', space=sflag, size = 0x4, offset = 0, fixed_abs, tag = 'sflag constant byte address 0x0 - dummy sync flag']
  #allocation31 [shape = 's32[]', space=sflag, size = 0x4, offset = 0, fixed_abs, tag = 'sflag constant byte address 0x0 - dummy sync flag']
  #allocation32 [shape = 'u32[]', space=smem, size = 0x4, offset = 0x44, fixed_abs, tag = 'smem constant byte address 0x44 - assertion arg 0']
  #allocation33 [shape = 'u32[]', space=smem, size = 0x4, offset = 0x48, fixed_abs, tag = 'smem constant byte address 0x48 - assertion arg 1']
  #allocation34 [shape = 's32[]', space=sflag, size = 0x4, offset = 0, fixed_abs, tag = 'sflag constant byte address 0x0 - dummy sync flag']
  #allocation35 [shape = 's32[]', space=sflag, size = 0x4, offset = 0, fixed_abs, tag = 'sflag constant byte address 0x0 - dummy sync flag']
  %s0 = inlined_call_operand.hbm [shape: bf16[64,64], index: 0, kind: input, shape index: {}]
  %s1 = inlined_call_operand.hbm [shape: bf16[64,1024], index: 1, kind: input, shape index: {}]
  %s2 = inlined_call_operand.hbm [shape: f32[1,1024], index: 2, kind: input, shape index: {}]
  %s3 = inlined_call_operand.hbm [shape: bf16[256,1024], index: 3, kind: input, shape index: {}]
  %s4 = inlined_call_operand.hbm [shape: bf16[256,1024], index: 4, kind: input, shape index: {}]
  %s5 = inlined_call_operand.hbm [shape: bf16[256,1024], index: 5, kind: input, shape index: {}]
  %s6 = inlined_call_operand.hbm [shape: f32[1,1024], index: 6, kind: input, shape index: {}]
  %s7 = inlined_call_operand.hbm [shape: bf16[256,128], index: 7, kind: input, shape index: {}]
  %s8 = inlined_call_operand.hbm [shape: f32[1,128], index: 8, kind: input, shape index: {}]
  %s9 = inlined_call_operand.vmem [shape: f32[8,256], index: 9, kind: input, shape index: {}]
  %s10 = inlined_call_operand.hbm [shape: f32[8,256], index: 10, kind: input, shape index: {}]
  %s11 = inlined_call_operand.hbm [shape: f32[8,256], index: 11, kind: input, shape index: {}]
  %s12 = inlined_call_operand.hbm [shape: f32[8,256], index: 12, kind: input, shape index: {}]
  %s13 = inlined_call_operand.hbm [shape: f32[8,128], index: 13, kind: output, shape index: {0}]
  %s14 = inlined_call_operand.hbm [shape: f32[8,256], index: 14, kind: output, shape index: {1}]
  %s15 = inlined_call_operand.hbm [shape: f32[8,256], index: 15, kind: output, shape index: {2}]
  %s16 = inlined_call_operand.hbm [shape: f32[8,256], index: 16, kind: output, shape index: {3}]
  %s17 = inlined_call_operand.hbm [shape: f32[8,256], index: 17, kind: output, shape index: {4}]
  %18 = xla_tuple %s13, %s14, %s15, %s16, %s17
  %s19 = sld [smem:[#allocation0]]
  $region134: #{tpu_custom_call.1} parent=0
    _
  %s21 = ssub.s32 1, %s19
  %s22 = scalar_select 0, %s21, %s19
  $region1: #{tpu_custom_call.1} parent=0
    #allocation6 [shape = 'u8[16384]{0}', space=vmem, size = 0x4000, scoped, tag = 'input window, operand 0, single buffered']
    #allocation7 [shape = 's32[1]{0}', space=sflag, size = 0x4, scoped, tag = 'scoped memory for tpu_custom_call.1']
    #allocation8 [shape = 's32[1]{0}', space=sflag, size = 0x4, scoped, tag = 'scoped memory for tpu_custom_call.1']
    #allocation9 [shape = 'u8[131072]{0}', space=vmem, size = 0x20000, scoped, tag = 'input window, operand 1, single buffered']
    #allocation10 [shape = 's32[1]{0}', space=sflag, size = 0x4, scoped, tag = 'scoped memory for tpu_custom_call.1']
    #allocation11 [shape = 'u8[4096]{0}', space=vmem, size = 0x1000, scoped, tag = 'input window, operand 2, single buffered']
    #allocation12 [shape = 'u8[524288]{0}', space=vmem, size = 0x80000, scoped, tag = 'input window, operand 3, single buffered']
    #allocation13 [shape = 's32[1]{0}', space=sflag, size = 0x4, scoped, tag = 'scoped memory for tpu_custom_call.1']
    #allocation14 [shape = 'u8[4096]{0}', space=vmem, size = 0x1000, scoped, tag = 'input window, operand 6, single buffered']
    #allocation15 [shape = 'u8[65536]{0}', space=vmem, size = 0x10000, scoped, tag = 'input window, operand 7, single buffered']
    #allocation16 [shape = 's32[1]{0}', space=sflag, size = 0x4, scoped, tag = 'scoped memory for tpu_custom_call.1']
    #allocation17 [shape = 'u8[512]{0}', space=vmem, size = 0x400, scoped, tag = 'input window, operand 8, single buffered']
    #allocation18 [shape = 'u8[8192]{0}', space=vmem, size = 0x2000, scoped, tag = 'input window, operand 10, single buffered']
    #allocation19 [shape = 's32[1]{0}', space=sflag, size = 0x4, scoped, tag = 'scoped memory for tpu_custom_call.1']
    #allocation20 [shape = 'u8[8192]{0}', space=vmem, size = 0x2000, scoped, tag = 'input window, operand 11, single buffered']
    #allocation21 [shape = 'u8[8192]{0}', space=vmem, size = 0x2000, scoped, tag = 'input window, operand 12, single buffered']
    #allocation22 [shape = 's32[1]{0}', space=sflag, size = 0x4, scoped, tag = 'scoped memory for tpu_custom_call.1']
    #allocation23 [shape = 'u8[4096]{0}', space=vmem, size = 0x1000, scoped, tag = 'output window, operand 0, single buffered']
    #allocation24 [shape = 'u8[8192]{0}', space=vmem, size = 0x2000, scoped, tag = 'output window, operand 1, single buffered']
    #allocation25 [shape = 's32[1]{0}', space=sflag, size = 0x4, scoped, tag = 'scoped memory for tpu_custom_call.1']
    #allocation26 [shape = 'u8[8192]{0}', space=vmem, size = 0x2000, scoped, tag = 'output window, operand 2, single buffered']
    #allocation27 [shape = 'u8[8192]{0}', space=vmem, size = 0x2000, scoped, tag = 'output window, operand 3, single buffered']
    #allocation28 [shape = 's32[1]{0}', space=sflag, size = 0x4, scoped, tag = 'scoped memory for tpu_custom_call.1']
    #allocation29 [shape = 'u8[8192]{0}', space=vmem, size = 0x2000, scoped, tag = 'output window, operand 4, single buffered']
    %23 = vsyncpa [#allocation7], 0
    %24 = vsyncpa [#allocation10], 0
    %25 = vsyncpa [#allocation13], 0
    %26 = vsyncpa [#allocation16], 0
    %27 = vsyncpa [#allocation19], 0
    %28 = vsyncpa [#allocation22], 0
    %29 = vsyncpa [#allocation8], 0
    %30 = vsyncpa [#allocation25], 0
    %31 = vsyncpa [#allocation28], 0
    // Predicated region
    $region2: #{tpu_custom_call.1} parent=1 // pred_check
      _
    $region3: #{tpu_custom_call.1} parent=1 // pred_check_branch
      %33 = sbr.rel (0) target = $region5
    $region4: #{tpu_custom_call.1} parent=1 // pred_region
      %s35 = ssub.s32 512, 512
      %36 = vsyncadd [#allocation7], %s35
      %s37 = sshll.u32 [#allocation6], 4
      %s38 = int_to_ptr.vmem [resolvable:$true] %s37
      %43 = dma.hbm_to_vmem [thread:$0]  %s0, 512, %s38, [#allocation7], 64, 64, 4
    $region5: #{tpu_custom_call.1} parent=1 // pred_fallthru
      _
    // Predicated region
    $region6: #{tpu_custom_call.1} parent=1 // pred_check
      _
    $region7: #{tpu_custom_call.1} parent=1 // pred_check_branch
      %45 = sbr.rel (0) target = $region9
    $region8: #{tpu_custom_call.1} parent=1 // pred_region
      %s47 = ssub.s32 4096, 4096
      %48 = vsyncadd [#allocation10], %s47
      %s49 = sshll.u32 [#allocation9], 4
      %s50 = int_to_ptr.vmem [resolvable:$true] %s49
      %55 = dma.hbm_to_vmem [thread:$0]  %s1, 4096, %s50, [#allocation10], 512, 512, 32
    $region9: #{tpu_custom_call.1} parent=1 // pred_fallthru
      _
    // Predicated region
    $region10: #{tpu_custom_call.1} parent=1 // pred_check
      _
    $region11: #{tpu_custom_call.1} parent=1 // pred_check_branch
      %57 = sbr.rel (0) target = $region13
    $region12: #{tpu_custom_call.1} parent=1 // pred_region
      %s59 = ssub.s32 128, 128
      %60 = vsyncadd [#allocation10], %s59
      %s62 = sshll.u32 [#allocation11], 4
      %s63 = int_to_ptr.vmem [resolvable:$true] %s62
      %65 = dma.hbm_to_vmem [thread:$0]  %s2, 128, %s63, [#allocation10]
    $region13: #{tpu_custom_call.1} parent=1 // pred_fallthru
      _
    // Predicated region
    $region14: #{tpu_custom_call.1} parent=1 // pred_check
      _
    $region15: #{tpu_custom_call.1} parent=1 // pred_check_branch
      %67 = sbr.rel (0) target = $region17
    $region16: #{tpu_custom_call.1} parent=1 // pred_region
      %s69 = ssub.s32 16384, 16384
      %70 = vsyncadd [#allocation13], %s69
      %s71 = sshll.u32 [#allocation12], 4
      %s72 = int_to_ptr.vmem [resolvable:$true] %s71
      %77 = dma.hbm_to_vmem [thread:$0]  %s3, 16384, %s72, [#allocation13], 512, 512, 32
    $region17: #{tpu_custom_call.1} parent=1 // pred_fallthru
      _
    // Predicated region
    $region18: #{tpu_custom_call.1} parent=1 // pred_check
      _
    $region19: #{tpu_custom_call.1} parent=1 // pred_check_branch
      %79 = sbr.rel (0) target = $region21
    $region20: #{tpu_custom_call.1} parent=1 // pred_region
      %s81 = ssub.s32 128, 128
      %82 = vsyncadd [#allocation13], %s81
      %s84 = sshll.u32 [#allocation14], 4
      %s85 = int_to_ptr.vmem [resolvable:$true] %s84
      %87 = dma.hbm_to_vmem [thread:$0]  %s6, 128, %s85, [#allocation13]
    $region21: #{tpu_custom_call.1} parent=1 // pred_fallthru
      _
    // Predicated region
    $region22: #{tpu_custom_call.1} parent=1 // pred_check
      _
    $region23: #{tpu_custom_call.1} parent=1 // pred_check_branch
      %89 = sbr.rel (0) target = $region25
    $region24: #{tpu_custom_call.1} parent=1 // pred_region
      %s91 = ssub.s32 2048, 2048
      %92 = vsyncadd [#allocation16], %s91
      %s93 = sshll.u32 [#allocation15], 4
      %s94 = int_to_ptr.vmem [resolvable:$true] %s93
      %99 = dma.hbm_to_vmem [thread:$0]  %s7, 2048, %s94, [#allocation16], 64, 64, 4
    $region25: #{tpu_custom_call.1} parent=1 // pred_fallthru
      _
    // Predicated region
    $region26: #{tpu_custom_call.1} parent=1 // pred_check
      _
    $region27: #{tpu_custom_call.1} parent=1 // pred_check_branch
      %101 = sbr.rel (0) target = $region29
    $region28: #{tpu_custom_call.1} parent=1 // pred_region
      %s103 = ssub.s32 16, 16
      %104 = vsyncadd [#allocation16], %s103
      %s106 = sshll.u32 [#allocation17], 4
      %s107 = int_to_ptr.vmem [resolvable:$true] %s106
      %109 = dma.hbm_to_vmem [thread:$0]  %s8, 16, %s107, [#allocation16]
    $region29: #{tpu_custom_call.1} parent=1 // pred_fallthru
      _
    // Predicated region
    $region30: #{tpu_custom_call.1} parent=1 // pred_check
      _
    $region31: #{tpu_custom_call.1} parent=1 // pred_check_branch
      %111 = sbr.rel (0) target = $region33
    $region32: #{tpu_custom_call.1} parent=1 // pred_region
      _
    $region33: #{tpu_custom_call.1} parent=1 // pred_fallthru
      _
    // Predicated region
    $region34: #{tpu_custom_call.1} parent=1 // pred_check
      _
    $region35: #{tpu_custom_call.1} parent=1 // pred_check_branch
      %113 = sbr.rel (0) target = $region37
    $region36: #{tpu_custom_call.1} parent=1 // pred_region
      %s115 = ssub.s32 256, 256
      %116 = vsyncadd [#allocation19], %s115
      %s118 = sshll.u32 [#allocation18], 4
      %s119 = int_to_ptr.vmem [resolvable:$true] %s118
      %121 = dma.hbm_to_vmem [thread:$0]  %s10, 256, %s119, [#allocation19]
    $region37: #{tpu_custom_call.1} parent=1 // pred_fallthru
      _
    // Predicated region
    $region38: #{tpu_custom_call.1} parent=1 // pred_check
      _
    $region39: #{tpu_custom_call.1} parent=1 // pred_check_branch
      %123 = sbr.rel (0) target = $region41
    $region40: #{tpu_custom_call.1} parent=1 // pred_region
      %s125 = ssub.s32 256, 256
      %126 = vsyncadd [#allocation19], %s125
      %s128 = sshll.u32 [#allocation20], 4
      %s129 = int_to_ptr.vmem [resolvable:$true] %s128
      %131 = dma.hbm_to_vmem [thread:$0]  %s11, 256, %s129, [#allocation19]
    $region41: #{tpu_custom_call.1} parent=1 // pred_fallthru
      _
    // Predicated region
    $region42: #{tpu_custom_call.1} parent=1 // pred_check
      _
    $region43: #{tpu_custom_call.1} parent=1 // pred_check_branch
      %133 = sbr.rel (0) target = $region45
    $region44: #{tpu_custom_call.1} parent=1 // pred_region
      %s135 = ssub.s32 256, 256
      %136 = vsyncadd [#allocation22], %s135
      %s138 = sshll.u32 [#allocation21], 4
      %s139 = int_to_ptr.vmem [resolvable:$true] %s138
      %141 = dma.hbm_to_vmem [thread:$0]  %s12, 256, %s139, [#allocation22]
    $region45: #{tpu_custom_call.1} parent=1 // pred_fallthru
      _
    // Predicated region
    $region46: #{tpu_custom_call.1} parent=1 // pred_check
      _
    $region47: #{tpu_custom_call.1} parent=1 // pred_check_branch
      %143 = sbr.rel (0) target = $region49
    $region48: #{tpu_custom_call.1} parent=1 // pred_region
      %144 = dma.done [#allocation7], 512
    $region49: #{tpu_custom_call.1} parent=1 // pred_fallthru
      _
    // Predicated region
    $region50: #{tpu_custom_call.1} parent=1 // pred_check
      _
    $region51: #{tpu_custom_call.1} parent=1 // pred_check_branch
      %146 = sbr.rel (0) target = $region53
    $region52: #{tpu_custom_call.1} parent=1 // pred_region
      %147 = dma.done [#allocation10], 4096
    $region53: #{tpu_custom_call.1} parent=1 // pred_fallthru
      _
    // Predicated region
    $region54: #{tpu_custom_call.1} parent=1 // pred_check
      _
    $region55: #{tpu_custom_call.1} parent=1 // pred_check_branch
      %149 = sbr.rel (0) target = $region57
    $region56: #{tpu_custom_call.1} parent=1 // pred_region
      %150 = dma.done [#allocation10], 128
    $region57: #{tpu_custom_call.1} parent=1 // pred_fallthru
      _
    // Predicated region
    $region58: #{tpu_custom_call.1} parent=1 // pred_check
      _
    $region59: #{tpu_custom_call.1} parent=1 // pred_check_branch
      %152 = sbr.rel (0) target = $region61
    $region60: #{tpu_custom_call.1} parent=1 // pred_region
      %153 = dma.done [#allocation13], 16384
    $region61: #{tpu_custom_call.1} parent=1 // pred_fallthru
      _
    // Predicated region
    $region62: #{tpu_custom_call.1} parent=1 // pred_check
      _
    $region63: #{tpu_custom_call.1} parent=1 // pred_check_branch
      %155 = sbr.rel (0) target = $region65
    $region64: #{tpu_custom_call.1} parent=1 // pred_region
      %156 = dma.done [#allocation13], 128
    $region65: #{tpu_custom_call.1} parent=1 // pred_fallthru
      _
    // Predicated region
    $region66: #{tpu_custom_call.1} parent=1 // pred_check
      _
    $region67: #{tpu_custom_call.1} parent=1 // pred_check_branch
      %158 = sbr.rel (0) target = $region69
    $region68: #{tpu_custom_call.1} parent=1 // pred_region
      %159 = dma.done [#allocation16], 2048
    $region69: #{tpu_custom_call.1} parent=1 // pred_fallthru
      _
    // Predicated region
    $region70: #{tpu_custom_call.1} parent=1 // pred_check
      _
    $region71: #{tpu_custom_call.1} parent=1 // pred_check_branch
      %161 = sbr.rel (0) target = $region73
    $region72: #{tpu_custom_call.1} parent=1 // pred_region
      %162 = dma.done [#allocation16], 16
    $region73: #{tpu_custom_call.1} parent=1 // pred_fallthru
      _
    // Predicated region
    $region74: #{tpu_custom_call.1} parent=1 // pred_check
      _
    $region75: #{tpu_custom_call.1} parent=1 // pred_check_branch
      %164 = sbr.rel (0) target = $region77
    $region76: #{tpu_custom_call.1} parent=1 // pred_region
      %165 = dma.done [#allocation19], 256
    $region77: #{tpu_custom_call.1} parent=1 // pred_fallthru
      _
    // Predicated region
    $region78: #{tpu_custom_call.1} parent=1 // pred_check
      _
    $region79: #{tpu_custom_call.1} parent=1 // pred_check_branch
      %167 = sbr.rel (0) target = $region81
    $region80: #{tpu_custom_call.1} parent=1 // pred_region
      %168 = dma.done [#allocation19], 256
    $region81: #{tpu_custom_call.1} parent=1 // pred_fallthru
      _
    // Predicated region
    $region82: #{tpu_custom_call.1} parent=1 // pred_check
      _
    $region83: #{tpu_custom_call.1} parent=1 // pred_check_branch
      %170 = sbr.rel (0) target = $region85
    $region84: #{tpu_custom_call.1} parent=1 // pred_region
      %171 = dma.done [#allocation22], 256
    $region85: #{tpu_custom_call.1} parent=1 // pred_fallthru
      _
    // Predicated region
    $region86: #{tpu_custom_call.1} parent=1 // pred_check
      _
    $region87: #{tpu_custom_call.1} parent=1 // pred_check_branch
      %174 = sbr.rel target = $region89
    $region88: #{tpu_custom_call.1} parent=1 // pred_region
      %175 = sst [smem:[#allocation32]] [#allocation31]
      %176 = sst [smem:[#allocation33]] [#allocation30]
    $region89: #{tpu_custom_call.1} parent=1 // pred_fallthru
      _
    %178 = shalt.err (0)
    %s180 = sshll.u32 [#allocation3], 4
    %s181 = int_to_ptr.vmem [resolvable:$true] %s180
    %183 = dma.hbm_to_vmem [thread:$0]  %s4, 16384, %s181, [#allocation5]
    %s184 = scalar_lea.sflag [#allocation5], 1
    // Predicated region
    $region90: #{tpu_custom_call.1} parent=1 // pred_check
      _
    $region91: #{tpu_custom_call.1} parent=1 // pred_check_branch
      %186 = sbr.rel target = $region93
    $region92: #{tpu_custom_call.1} parent=1 // pred_region
      %187 = sst [smem:[#allocation32]] [#allocation35]
      %188 = sst [smem:[#allocation33]] [#allocation34]
    $region93: #{tpu_custom_call.1} parent=1 // pred_fallthru
      _
    %190 = shalt.err (0)
    %s192 = sshll.u32 [#allocation4], 4
    %s193 = int_to_ptr.vmem [resolvable:$true] %s192
    %195 = dma.hbm_to_vmem [thread:$0]  %s5, 16384, %s193, %s184
    %v196 = vld [vmem:[#allocation6] sm:$0xf]
    %v197 = vld [vmem:[#allocation6 + $0x4] sm:$0xf]
    %v198 = vld [vmem:[#allocation6 + $0x8] sm:$0xf]
    %v199 = vld [vmem:[#allocation6 + $0xc] sm:$0xf]
    %v200 = vld [vmem:[#allocation6 + $0x10] sm:$0xf]
    %v201 = vld [vmem:[#allocation6 + $0x14] sm:$0xf]
    %v202 = vld [vmem:[#allocation6 + $0x18] sm:$0xf]
    %v203 = vld [vmem:[#allocation6 + $0x1c] sm:$0xf]
    %v204 = vld [vmem:[#allocation9] sm:$0xff]
    %v205 = vld [vmem:[#allocation9 + $0x8] sm:$0xff]
    %v206 = vld [vmem:[#allocation9 + $0x10] sm:$0xff]
    %v207 = vld [vmem:[#allocation9 + $0x18] sm:$0xff]
    %v208 = vld [vmem:[#allocation9 + $0x20] sm:$0xff]
    %v209 = vld [vmem:[#allocation9 + $0x28] sm:$0xff]
    %v210 = vld [vmem:[#allocation9 + $0x30] sm:$0xff]
    %v211 = vld [vmem:[#allocation9 + $0x38] sm:$0xff]
    %v212 = vld [vmem:[#allocation9 + $0x40] sm:$0xff]
    %v213 = vld [vmem:[#allocation9 + $0x48] sm:$0xff]
    %v214 = vld [vmem:[#allocation9 + $0x50] sm:$0xff]
    %v215 = vld [vmem:[#allocation9 + $0x58] sm:$0xff]
    %v216 = vld [vmem:[#allocation9 + $0x60] sm:$0xff]
    %v217 = vld [vmem:[#allocation9 + $0x68] sm:$0xff]
    %v218 = vld [vmem:[#allocation9 + $0x70] sm:$0xff]
    %v219 = vld [vmem:[#allocation9 + $0x78] sm:$0xff]
    %v220 = vld [vmem:[#allocation9 + $0x80] sm:$0xff]
    %v221 = vld [vmem:[#allocation9 + $0x88] sm:$0xff]
    %v222 = vld [vmem:[#allocation9 + $0x90] sm:$0xff]
    %v223 = vld [vmem:[#allocation9 + $0x98] sm:$0xff]
    %v224 = vld [vmem:[#allocation9 + $0xa0] sm:$0xff]
    %v225 = vld [vmem:[#allocation9 + $0xa8] sm:$0xff]
    %v226 = vld [vmem:[#allocation9 + $0xb0] sm:$0xff]
    %v227 = vld [vmem:[#allocation9 + $0xb8] sm:$0xff]
    %v228 = vld [vmem:[#allocation9 + $0xc0] sm:$0xff]
    %v229 = vld [vmem:[#allocation9 + $0xc8] sm:$0xff]
    %v230 = vld [vmem:[#allocation9 + $0xd0] sm:$0xff]
    %v231 = vld [vmem:[#allocation9 + $0xd8] sm:$0xff]
    %v232 = vld [vmem:[#allocation9 + $0xe0] sm:$0xff]
    %v233 = vld [vmem:[#allocation9 + $0xe8] sm:$0xff]
    %v234 = vld [vmem:[#allocation9 + $0xf0] sm:$0xff]
    %v235 = vld [vmem:[#allocation9 + $0xf8] sm:$0xff]
    %v236 = vld [vmem:[#allocation11] sm:$0xff]
    %v238 = vlaneseq
    %v239 = vshrl.u32 %v238, 7
    %v240 = vsub.s32 0, %v239
    %v241 = vrot.slane %v236, %v240
    %v242 = vlaneseq
    %v243 = vshrl.u32 %v242, 7
    %v244 = vsub.s32 1, %v243
    %v245 = vrot.slane %v236, %v244
    %v246 = vlaneseq
    %v247 = vshrl.u32 %v246, 7
    %v248 = vsub.s32 2, %v247
    %v249 = vrot.slane %v236, %v248
    %v250 = vlaneseq
    %v251 = vshrl.u32 %v250, 7
    %v252 = vsub.s32 3, %v251
    %v253 = vrot.slane %v236, %v252
    %v254 = vlaneseq
    %v255 = vshrl.u32 %v254, 7
    %v256 = vsub.s32 4, %v255
    %v257 = vrot.slane %v236, %v256
    %v258 = vlaneseq
    %v259 = vshrl.u32 %v258, 7
    %v260 = vsub.s32 5, %v259
    %v261 = vrot.slane %v236, %v260
    %v262 = vlaneseq
    %v263 = vshrl.u32 %v262, 7
    %v264 = vsub.s32 6, %v263
    %v265 = vrot.slane %v236, %v264
    %v266 = vlaneseq
    %v267 = vshrl.u32 %v266, 7
    %v268 = vsub.s32 7, %v267
    %v269 = vrot.slane %v236, %v268
    %v286 = vunpack.c.l.b16 %v196
    %v287 = vunpack.c.l.b16 %v197
    %v288 = vunpack.c.l.b16 %v198
    %v289 = vunpack.c.l.b16 %v199
    %v290 = vunpack.c.l.b16 %v200
    %v291 = vunpack.c.l.b16 %v201
    %v292 = vunpack.c.l.b16 %v202
    %v293 = vunpack.c.l.b16 %v203
    %v294 = vpack.c.b16 %v287, %v286
    %v295 = vpack.c.b16 %v289, %v288
    %v296 = vpack.c.b16 %v291, %v290
    %v297 = vpack.c.b16 %v293, %v292
    %v330 = vunpack.c.l.b16 %v204
    %v331 = vunpack.c.h.b16 %v204
    %v332 = vunpack.c.l.b16 %v205
    %v333 = vunpack.c.h.b16 %v205
    %v334 = vunpack.c.l.b16 %v206
    %v335 = vunpack.c.h.b16 %v206
    %v336 = vunpack.c.l.b16 %v207
    %v337 = vunpack.c.h.b16 %v207
    %v338 = vunpack.c.l.b16 %v208
    %v339 = vunpack.c.h.b16 %v208
    %v340 = vunpack.c.l.b16 %v209
    %v341 = vunpack.c.h.b16 %v209
    %v342 = vunpack.c.l.b16 %v210
    %v343 = vunpack.c.h.b16 %v210
    %v344 = vunpack.c.l.b16 %v211
    %v345 = vunpack.c.h.b16 %v211
    %v346 = vunpack.c.l.b16 %v212
    %v347 = vunpack.c.h.b16 %v212
    %v348 = vunpack.c.l.b16 %v213
    %v349 = vunpack.c.h.b16 %v213
    %v350 = vunpack.c.l.b16 %v214
    %v351 = vunpack.c.h.b16 %v214
    %v352 = vunpack.c.l.b16 %v215
    %v353 = vunpack.c.h.b16 %v215
    %v354 = vunpack.c.l.b16 %v216
    %v355 = vunpack.c.h.b16 %v216
    %v356 = vunpack.c.l.b16 %v217
    %v357 = vunpack.c.h.b16 %v217
    %v358 = vunpack.c.l.b16 %v218
    %v359 = vunpack.c.h.b16 %v218
    %v360 = vunpack.c.l.b16 %v219
    %v361 = vunpack.c.h.b16 %v219
    %v362 = vunpack.c.l.b16 %v220
    %v363 = vunpack.c.h.b16 %v220
    %v364 = vunpack.c.l.b16 %v221
    %v365 = vunpack.c.h.b16 %v221
    %v366 = vunpack.c.l.b16 %v222
    %v367 = vunpack.c.h.b16 %v222
    %v368 = vunpack.c.l.b16 %v223
    %v369 = vunpack.c.h.b16 %v223
    %v370 = vunpack.c.l.b16 %v224
    %v371 = vunpack.c.h.b16 %v224
    %v372 = vunpack.c.l.b16 %v225
    %v373 = vunpack.c.h.b16 %v225
    %v374 = vunpack.c.l.b16 %v226
    %v375 = vunpack.c.h.b16 %v226
    %v376 = vunpack.c.l.b16 %v227
    %v377 = vunpack.c.h.b16 %v227
    %v378 = vunpack.c.l.b16 %v228
    %v379 = vunpack.c.h.b16 %v228
    %v380 = vunpack.c.l.b16 %v229
    %v381 = vunpack.c.h.b16 %v229
    %v382 = vunpack.c.l.b16 %v230
    %v383 = vunpack.c.h.b16 %v230
    %v384 = vunpack.c.l.b16 %v231
    %v385 = vunpack.c.h.b16 %v231
    %v386 = vunpack.c.l.b16 %v232
    %v387 = vunpack.c.h.b16 %v232
    %v388 = vunpack.c.l.b16 %v233
    %v389 = vunpack.c.h.b16 %v233
    %v390 = vunpack.c.l.b16 %v234
    %v391 = vunpack.c.h.b16 %v234
    %v392 = vunpack.c.l.b16 %v235
    %v393 = vunpack.c.h.b16 %v235
    %v394 = vpack.c.b16 %v338, %v330
    %v395 = vpack.c.b16 %v339, %v331
    %v396 = vpack.c.b16 %v340, %v332
    %v397 = vpack.c.b16 %v341, %v333
    %v398 = vpack.c.b16 %v342, %v334
    %v399 = vpack.c.b16 %v343, %v335
    %v400 = vpack.c.b16 %v344, %v336
    %v401 = vpack.c.b16 %v345, %v337
    %v402 = vpack.c.b16 %v354, %v346
    %v403 = vpack.c.b16 %v355, %v347
    %v404 = vpack.c.b16 %v356, %v348
    %v405 = vpack.c.b16 %v357, %v349
    %v406 = vpack.c.b16 %v358, %v350
    %v407 = vpack.c.b16 %v359, %v351
    %v408 = vpack.c.b16 %v360, %v352
    %v409 = vpack.c.b16 %v361, %v353
    %v410 = vpack.c.b16 %v370, %v362
    %v411 = vpack.c.b16 %v371, %v363
    %v412 = vpack.c.b16 %v372, %v364
    %v413 = vpack.c.b16 %v373, %v365
    %v414 = vpack.c.b16 %v374, %v366
    %v415 = vpack.c.b16 %v375, %v367
    %v416 = vpack.c.b16 %v376, %v368
    %v417 = vpack.c.b16 %v377, %v369
    %v418 = vpack.c.b16 %v386, %v378
    %v419 = vpack.c.b16 %v387, %v379
    %v420 = vpack.c.b16 %v388, %v380
    %v421 = vpack.c.b16 %v389, %v381
    %v422 = vpack.c.b16 %v390, %v382
    %v423 = vpack.c.b16 %v391, %v383
    %v424 = vpack.c.b16 %v392, %v384
    %v425 = vpack.c.b16 %v393, %v385
    %vm458 = vcmask 523264
    %v460 = vsel %vm458, %v294, 0
    %v463 = vsel %vm458, %v295, 0
    %v466 = vsel %vm458, %v296, 0
    %v469 = vsel %vm458, %v297, 0
    %471 = vmatprep.subr.bf16.mxu0 0
    %472 = vmatpush1.bf16.msra.mxu0 0
    %473 = vmatprep.subr.bf16.mxu0 0
    %474 = vmatpush1.bf16.msra.mxu0 0
    %475 = vmatprep.subr.bf16.mxu0 0
    %476 = vmatpush1.bf16.msra.mxu0 0
    %477 = vmatprep.subr.bf16.mxu0 0
    %478 = vmatpush1.bf16.msra.mxu0 0
    %479 = vmatprep.subr.bf16.mxu0 %v419
    %480 = vmatpush1.bf16.msra.mxu0 %v418
    %481 = vmatprep.subr.bf16.mxu0 %v411
    %482 = vmatpush1.bf16.msra.mxu0 %v410
    %483 = vmatprep.subr.bf16.mxu0 %v403
    %484 = vmatpush1.bf16.msra.mxu0 %v402
    %485 = vmatprep.subr.bf16.mxu0 %v395
    %486 = vmatpush1.bf16.msra.mxu0 %v394
    %487 = vmatprep.subr.bf16.mxu0 0
    %488 = vmatpush2.bf16.msra.mxu0 0
    %489 = vmatprep.subr.bf16.mxu0 0
    %490 = vmatpush2.bf16.msra.mxu0 0
    %491 = vmatprep.subr.bf16.mxu0 0
    %492 = vmatpush2.bf16.msra.mxu0 0
    %493 = vmatprep.subr.bf16.mxu0 0
    %494 = vmatpush2.bf16.msra.mxu0 0
    %495 = vmatprep.subr.bf16.mxu0 0
    %496 = vmatpush2.bf16.msra.mxu0 0
    %497 = vmatprep.subr.bf16.mxu0 0
    %498 = vmatpush2.bf16.msra.mxu0 0
    %499 = vmatprep.subr.bf16.mxu0 0
    %500 = vmatpush2.bf16.msra.mxu0 0
    %501 = vmatprep.subr.bf16.mxu0 0
    %502 = vmatpush2.bf16.msra.mxu0 0
    %503 = vmatprep.mubr.bf16.mxu0 0
    %504 = vmatmul.mubr.bf16.gmra.mxu0 %v460
    %v505 = vpop.f32.mrf.mxu0
    %v506 = vadd.f32 %v241, %v505
    %v507 = vpop.f32.mrf.mxu0
    %v508 = vadd.f32 %v245, %v507
    %v509 = vpop.f32.mrf.mxu0
    %v510 = vadd.f32 %v241, %v509
    %v511 = vpop.f32.mrf.mxu0
    %v512 = vadd.f32 %v245, %v511
    %513 = vmatprep.mubr.bf16.mxu0 0
    %514 = vmatmul.mubr.bf16.gmra.mxu0 %v463
    %v515 = vpop.f32.mrf.mxu0
    %v516 = vadd.f32 %v241, %v515
    %v517 = vpop.f32.mrf.mxu0
    %v518 = vadd.f32 %v245, %v517
    %v519 = vpop.f32.mrf.mxu0
    %v520 = vadd.f32 %v241, %v519
    %v521 = vpop.f32.mrf.mxu0
    %v522 = vadd.f32 %v245, %v521
    %523 = vmatprep.mubr.bf16.mxu0 0
    %524 = vmatmul.mubr.bf16.gmra.mxu0 %v466
    %v525 = vpop.f32.mrf.mxu0
    %v526 = vadd.f32 %v241, %v525
    %v527 = vpop.f32.mrf.mxu0
    %v528 = vadd.f32 %v245, %v527
    %v529 = vpop.f32.mrf.mxu0
    %v530 = vadd.f32 %v241, %v529
    %v531 = vpop.f32.mrf.mxu0
    %v532 = vadd.f32 %v245, %v531
    %533 = vmatprep.mubr.bf16.mxu0 0
    %534 = vmatmul.mubr.bf16.gmra.mxu0 %v469
    %v535 = vpop.f32.mrf.mxu0
    %v536 = vadd.f32 %v241, %v535
    %v537 = vpop.f32.mrf.mxu0
    %v538 = vadd.f32 %v245, %v537
    %v539 = vpop.f32.mrf.mxu0
    %v540 = vadd.f32 %v241, %v539
    %v541 = vpop.f32.mrf.mxu0
    %v542 = vadd.f32 %v245, %v541
    %543 = vdwg.mxu0
    %544 = vmatprep.subr.bf16.mxu0 0
    %545 = vmatpush1.bf16.msra.mxu0 0
    %546 = vmatprep.subr.bf16.mxu0 0
    %547 = vmatpush1.bf16.msra.mxu0 0
    %548 = vmatprep.subr.bf16.mxu0 0
    %549 = vmatpush1.bf16.msra.mxu0 0
    %550 = vmatprep.subr.bf16.mxu0 0
    %551 = vmatpush1.bf16.msra.mxu0 0
    %552 = vmatprep.subr.bf16.mxu0 %v421
    %553 = vmatpush1.bf16.msra.mxu0 %v420
    %554 = vmatprep.subr.bf16.mxu0 %v413
    %555 = vmatpush1.bf16.msra.mxu0 %v412
    %556 = vmatprep.subr.bf16.mxu0 %v405
    %557 = vmatpush1.bf16.msra.mxu0 %v404
    %558 = vmatprep.subr.bf16.mxu0 %v397
    %559 = vmatpush1.bf16.msra.mxu0 %v396
    %560 = vmatprep.subr.bf16.mxu0 0
    %561 = vmatpush2.bf16.msra.mxu0 0
    %562 = vmatprep.subr.bf16.mxu0 0
    %563 = vmatpush2.bf16.msra.mxu0 0
    %564 = vmatprep.subr.bf16.mxu0 0
    %565 = vmatpush2.bf16.msra.mxu0 0
    %566 = vmatprep.subr.bf16.mxu0 0
    %567 = vmatpush2.bf16.msra.mxu0 0
    %568 = vmatprep.subr.bf16.mxu0 0
    %569 = vmatpush2.bf16.msra.mxu0 0
    %570 = vmatprep.subr.bf16.mxu0 0
    %571 = vmatpush2.bf16.msra.mxu0 0
    %572 = vmatprep.subr.bf16.mxu0 0
    %573 = vmatpush2.bf16.msra.mxu0 0
    %574 = vmatprep.subr.bf16.mxu0 0
    %575 = vmatpush2.bf16.msra.mxu0 0
    %576 = vmatprep.mubr.bf16.mxu0 0
    %577 = vmatmul.mubr.bf16.gmra.mxu0 %v460
    %v578 = vpop.f32.mrf.mxu0
    %v579 = vadd.f32 %v249, %v578
    %v580 = vpop.f32.mrf.mxu0
    %v581 = vadd.f32 %v253, %v580
    %v582 = vpop.f32.mrf.mxu0
    %v583 = vadd.f32 %v249, %v582
    %v584 = vpop.f32.mrf.mxu0
    %v585 = vadd.f32 %v253, %v584
    %586 = vmatprep.mubr.bf16.mxu0 0
    %587 = vmatmul.mubr.bf16.gmra.mxu0 %v463
    %v588 = vpop.f32.mrf.mxu0
    %v589 = vadd.f32 %v249, %v588
    %v590 = vpop.f32.mrf.mxu0
    %v591 = vadd.f32 %v253, %v590
    %v592 = vpop.f32.mrf.mxu0
    %v593 = vadd.f32 %v249, %v592
    %v594 = vpop.f32.mrf.mxu0
    %v595 = vadd.f32 %v253, %v594
    %596 = vmatprep.mubr.bf16.mxu0 0
    %597 = vmatmul.mubr.bf16.gmra.mxu0 %v466
    %v598 = vpop.f32.mrf.mxu0
    %v599 = vadd.f32 %v249, %v598
    %v600 = vpop.f32.mrf.mxu0
    %v601 = vadd.f32 %v253, %v600
    %v602 = vpop.f32.mrf.mxu0
    %v603 = vadd.f32 %v249, %v602
    %v604 = vpop.f32.mrf.mxu0
    %v605 = vadd.f32 %v253, %v604
    %606 = vmatprep.mubr.bf16.mxu0 0
    %607 = vmatmul.mubr.bf16.gmra.mxu0 %v469
    %v608 = vpop.f32.mrf.mxu0
    %v609 = vadd.f32 %v249, %v608
    %v610 = vpop.f32.mrf.mxu0
    %v611 = vadd.f32 %v253, %v610
    %v612 = vpop.f32.mrf.mxu0
    %v613 = vadd.f32 %v249, %v612
    %v614 = vpop.f32.mrf.mxu0
    %v615 = vadd.f32 %v253, %v614
    %616 = vdwg.mxu0
    %617 = vmatprep.subr.bf16.mxu0 0
    %618 = vmatpush1.bf16.msra.mxu0 0
    %619 = vmatprep.subr.bf16.mxu0 0
    %620 = vmatpush1.bf16.msra.mxu0 0
    %621 = vmatprep.subr.bf16.mxu0 0
    %622 = vmatpush1.bf16.msra.mxu0 0
    %623 = vmatprep.subr.bf16.mxu0 0
    %624 = vmatpush1.bf16.msra.mxu0 0
    %625 = vmatprep.subr.bf16.mxu0 %v423
    %626 = vmatpush1.bf16.msra.mxu0 %v422
    %627 = vmatprep.subr.bf16.mxu0 %v415
    %628 = vmatpush1.bf16.msra.mxu0 %v414
    %629 = vmatprep.subr.bf16.mxu0 %v407
    %630 = vmatpush1.bf16.msra.mxu0 %v406
    %631 = vmatprep.subr.bf16.mxu0 %v399
    %632 = vmatpush1.bf16.msra.mxu0 %v398
    %633 = vmatprep.subr.bf16.mxu0 0
    %634 = vmatpush2.bf16.msra.mxu0 0
    %635 = vmatprep.subr.bf16.mxu0 0
    %636 = vmatpush2.bf16.msra.mxu0 0
    %637 = vmatprep.subr.bf16.mxu0 0
    %638 = vmatpush2.bf16.msra.mxu0 0
    %639 = vmatprep.subr.bf16.mxu0 0
    %640 = vmatpush2.bf16.msra.mxu0 0
    %641 = vmatprep.subr.bf16.mxu0 0
    %642 = vmatpush2.bf16.msra.mxu0 0
    %643 = vmatprep.subr.bf16.mxu0 0
    %644 = vmatpush2.bf16.msra.mxu0 0
    %645 = vmatprep.subr.bf16.mxu0 0
    %646 = vmatpush2.bf16.msra.mxu0 0
    %647 = vmatprep.subr.bf16.mxu0 0
    %648 = vmatpush2.bf16.msra.mxu0 0
    %649 = vmatprep.mubr.bf16.mxu0 0
    %650 = vmatmul.mubr.bf16.gmra.mxu0 %v460
    %v651 = vpop.f32.mrf.mxu0
    %v652 = vadd.f32 %v257, %v651
    %v653 = vpop.f32.mrf.mxu0
    %v654 = vadd.f32 %v261, %v653
    %v655 = vpop.f32.mrf.mxu0
    %v656 = vadd.f32 %v257, %v655
    %v657 = vpop.f32.mrf.mxu0
    %v658 = vadd.f32 %v261, %v657
    %659 = vmatprep.mubr.bf16.mxu0 0
    %660 = vmatmul.mubr.bf16.gmra.mxu0 %v463
    %v661 = vpop.f32.mrf.mxu0
    %v662 = vadd.f32 %v257, %v661
    %v663 = vpop.f32.mrf.mxu0
    %v664 = vadd.f32 %v261, %v663
    %v665 = vpop.f32.mrf.mxu0
    %v666 = vadd.f32 %v257, %v665
    %v667 = vpop.f32.mrf.mxu0
    %v668 = vadd.f32 %v261, %v667
    %669 = vmatprep.mubr.bf16.mxu0 0
    %670 = vmatmul.mubr.bf16.gmra.mxu0 %v466
    %v671 = vpop.f32.mrf.mxu0
    %v672 = vadd.f32 %v257, %v671
    %v673 = vpop.f32.mrf.mxu0
    %v674 = vadd.f32 %v261, %v673
    %v675 = vpop.f32.mrf.mxu0
    %v676 = vadd.f32 %v257, %v675
    %v677 = vpop.f32.mrf.mxu0
    %v678 = vadd.f32 %v261, %v677
    %679 = vmatprep.mubr.bf16.mxu0 0
    %680 = vmatmul.mubr.bf16.gmra.mxu0 %v469
    %v681 = vpop.f32.mrf.mxu0
    %v682 = vadd.f32 %v257, %v681
    %v683 = vpop.f32.mrf.mxu0
    %v684 = vadd.f32 %v261, %v683
    %v685 = vpop.f32.mrf.mxu0
    %v686 = vadd.f32 %v257, %v685
    %v687 = vpop.f32.mrf.mxu0
    %v688 = vadd.f32 %v261, %v687
    %689 = vdwg.mxu0
    %690 = vmatprep.subr.bf16.mxu0 0
    %691 = vmatpush1.bf16.msra.mxu0 0
    %692 = vmatprep.subr.bf16.mxu0 0
    %693 = vmatpush1.bf16.msra.mxu0 0
    %694 = vmatprep.subr.bf16.mxu0 0
    %695 = vmatpush1.bf16.msra.mxu0 0
    %696 = vmatprep.subr.bf16.mxu0 0
    %697 = vmatpush1.bf16.msra.mxu0 0
    %698 = vmatprep.subr.bf16.mxu0 %v425
    %699 = vmatpush1.bf16.msra.mxu0 %v424
    %700 = vmatprep.subr.bf16.mxu0 %v417
    %701 = vmatpush1.bf16.msra.mxu0 %v416
    %702 = vmatprep.subr.bf16.mxu0 %v409
    %703 = vmatpush1.bf16.msra.mxu0 %v408
    %704 = vmatprep.subr.bf16.mxu0 %v401
    %705 = vmatpush1.bf16.msra.mxu0 %v400
    %706 = vmatprep.subr.bf16.mxu0 0
    %707 = vmatpush2.bf16.msra.mxu0 0
    %708 = vmatprep.subr.bf16.mxu0 0
    %709 = vmatpush2.bf16.msra.mxu0 0
    %710 = vmatprep.subr.bf16.mxu0 0
    %711 = vmatpush2.bf16.msra.mxu0 0
    %712 = vmatprep.subr.bf16.mxu0 0
    %713 = vmatpush2.bf16.msra.mxu0 0
    %714 = vmatprep.subr.bf16.mxu0 0
    %715 = vmatpush2.bf16.msra.mxu0 0
    %716 = vmatprep.subr.bf16.mxu0 0
    %717 = vmatpush2.bf16.msra.mxu0 0
    %718 = vmatprep.subr.bf16.mxu0 0
    %719 = vmatpush2.bf16.msra.mxu0 0
    %720 = vmatprep.subr.bf16.mxu0 0
    %721 = vmatpush2.bf16.msra.mxu0 0
    %722 = vmatprep.mubr.bf16.mxu0 0
    %723 = vmatmul.mubr.bf16.gmra.mxu0 %v460
    %v724 = vpop.f32.mrf.mxu0
    %v725 = vadd.f32 %v265, %v724
    %v726 = vpop.f32.mrf.mxu0
    %v727 = vadd.f32 %v269, %v726
    %v728 = vpop.f32.mrf.mxu0
    %v729 = vadd.f32 %v265, %v728
    %v730 = vpop.f32.mrf.mxu0
    %v731 = vadd.f32 %v269, %v730
    %732 = vmatprep.mubr.bf16.mxu0 0
    %733 = vmatmul.mubr.bf16.gmra.mxu0 %v463
    %v734 = vpop.f32.mrf.mxu0
    %v735 = vadd.f32 %v265, %v734
    %v736 = vpop.f32.mrf.mxu0
    %v737 = vadd.f32 %v269, %v736
    %v738 = vpop.f32.mrf.mxu0
    %v739 = vadd.f32 %v265, %v738
    %v740 = vpop.f32.mrf.mxu0
    %v741 = vadd.f32 %v269, %v740
    %742 = vmatprep.mubr.bf16.mxu0 0
    %743 = vmatmul.mubr.bf16.gmra.mxu0 %v466
    %v744 = vpop.f32.mrf.mxu0
    %v745 = vadd.f32 %v265, %v744
    %v746 = vpop.f32.mrf.mxu0
    %v747 = vadd.f32 %v269, %v746
    %v748 = vpop.f32.mrf.mxu0
    %v749 = vadd.f32 %v265, %v748
    %v750 = vpop.f32.mrf.mxu0
    %v751 = vadd.f32 %v269, %v750
    %752 = vmatprep.mubr.bf16.mxu0 0
    %753 = vmatmul.mubr.bf16.gmra.mxu0 %v469
    %v754 = vpop.f32.mrf.mxu0
    %v755 = vadd.f32 %v265, %v754
    %v756 = vpop.f32.mrf.mxu0
    %v757 = vadd.f32 %v269, %v756
    %v758 = vpop.f32.mrf.mxu0
    %v759 = vadd.f32 %v265, %v758
    %v760 = vpop.f32.mrf.mxu0
    %v761 = vadd.f32 %v269, %v760
    %762 = vdwg.mxu0
    %763 = vst [vmem:[#allocation2] sm:$0xff] %v506
    %764 = vst [vmem:[#allocation2 + $0x8] sm:$0xff] %v508
    %765 = vst [vmem:[#allocation2 + $0x10] sm:$0xff] %v579
    %766 = vst [vmem:[#allocation2 + $0x18] sm:$0xff] %v581
    %767 = vst [vmem:[#allocation2 + $0x20] sm:$0xff] %v652
    %768 = vst [vmem:[#allocation2 + $0x28] sm:$0xff] %v654
    %769 = vst [vmem:[#allocation2 + $0x30] sm:$0xff] %v725
    %770 = vst [vmem:[#allocation2 + $0x38] sm:$0xff] %v727
    %771 = vst [vmem:[#allocation2 + $0x40] sm:$0xff] %v510
    %772 = vst [vmem:[#allocation2 + $0x48] sm:$0xff] %v512
    %773 = vst [vmem:[#allocation2 + $0x50] sm:$0xff] %v583
    %774 = vst [vmem:[#allocation2 + $0x58] sm:$0xff] %v585
    %775 = vst [vmem:[#allocation2 + $0x60] sm:$0xff] %v656
    %776 = vst [vmem:[#allocation2 + $0x68] sm:$0xff] %v658
    %777 = vst [vmem:[#allocation2 + $0x70] sm:$0xff] %v729
    %778 = vst [vmem:[#allocation2 + $0x78] sm:$0xff] %v731
    %779 = vst [vmem:[#allocation2 + $0x80] sm:$0xff] %v516
    %780 = vst [vmem:[#allocation2 + $0x88] sm:$0xff] %v518
    %781 = vst [vmem:[#allocation2 + $0x90] sm:$0xff] %v589
    %782 = vst [vmem:[#allocation2 + $0x98] sm:$0xff] %v591
    %783 = vst [vmem:[#allocation2 + $0xa0] sm:$0xff] %v662
    %784 = vst [vmem:[#allocation2 + $0xa8] sm:$0xff] %v664
    %785 = vst [vmem:[#allocation2 + $0xb0] sm:$0xff] %v735
    %786 = vst [vmem:[#allocation2 + $0xb8] sm:$0xff] %v737
    %787 = vst [vmem:[#allocation2 + $0xc0] sm:$0xff] %v520
    %788 = vst [vmem:[#allocation2 + $0xc8] sm:$0xff] %v522
    %789 = vst [vmem:[#allocation2 + $0xd0] sm:$0xff] %v593
    %790 = vst [vmem:[#allocation2 + $0xd8] sm:$0xff] %v595
    %791 = vst [vmem:[#allocation2 + $0xe0] sm:$0xff] %v666
    %792 = vst [vmem:[#allocation2 + $0xe8] sm:$0xff] %v668
    %793 = vst [vmem:[#allocation2 + $0xf0] sm:$0xff] %v739
    %794 = vst [vmem:[#allocation2 + $0xf8] sm:$0xff] %v741
    %795 = vst [vmem:[#allocation2 + $0x100] sm:$0xff] %v526
    %796 = vst [vmem:[#allocation2 + $0x108] sm:$0xff] %v528
    %797 = vst [vmem:[#allocation2 + $0x110] sm:$0xff] %v599
    %798 = vst [vmem:[#allocation2 + $0x118] sm:$0xff] %v601
    %799 = vst [vmem:[#allocation2 + $0x120] sm:$0xff] %v672
    %800 = vst [vmem:[#allocation2 + $0x128] sm:$0xff] %v674
    %801 = vst [vmem:[#allocation2 + $0x130] sm:$0xff] %v745
    %802 = vst [vmem:[#allocation2 + $0x138] sm:$0xff] %v747
    %803 = vst [vmem:[#allocation2 + $0x140] sm:$0xff] %v530
    %804 = vst [vmem:[#allocation2 + $0x148] sm:$0xff] %v532
    %805 = vst [vmem:[#allocation2 + $0x150] sm:$0xff] %v603
    %806 = vst [vmem:[#allocation2 + $0x158] sm:$0xff] %v605
    %807 = vst [vmem:[#allocation2 + $0x160] sm:$0xff] %v676
    %808 = vst [vmem:[#allocation2 + $0x168] sm:$0xff] %v678
    %809 = vst [vmem:[#allocation2 + $0x170] sm:$0xff] %v749
    %810 = vst [vmem:[#allocation2 + $0x178] sm:$0xff] %v751
    %811 = vst [vmem:[#allocation2 + $0x180] sm:$0xff] %v536
    %812 = vst [vmem:[#allocation2 + $0x188] sm:$0xff] %v538
    %813 = vst [vmem:[#allocation2 + $0x190] sm:$0xff] %v609
    %814 = vst [vmem:[#allocation2 + $0x198] sm:$0xff] %v611
    %815 = vst [vmem:[#allocation2 + $0x1a0] sm:$0xff] %v682
    %816 = vst [vmem:[#allocation2 + $0x1a8] sm:$0xff] %v684
    %817 = vst [vmem:[#allocation2 + $0x1b0] sm:$0xff] %v755
    %818 = vst [vmem:[#allocation2 + $0x1b8] sm:$0xff] %v757
    %819 = vst [vmem:[#allocation2 + $0x1c0] sm:$0xff] %v540
    %820 = vst [vmem:[#allocation2 + $0x1c8] sm:$0xff] %v542
    %821 = vst [vmem:[#allocation2 + $0x1d0] sm:$0xff] %v613
    %822 = vst [vmem:[#allocation2 + $0x1d8] sm:$0xff] %v615
    %823 = vst [vmem:[#allocation2 + $0x1e0] sm:$0xff] %v686
    %824 = vst [vmem:[#allocation2 + $0x1e8] sm:$0xff] %v688
    %825 = vst [vmem:[#allocation2 + $0x1f0] sm:$0xff] %v759
    %826 = vst [vmem:[#allocation2 + $0x1f8] sm:$0xff] %v761
    %v827 = vld [vmem:[%s9] sm:$0xff]
    %v828 = vld [vmem:[%s9 + $0x8] sm:$0xff]
    %v829 = vld [vmem:[#allocation18] sm:$0xff]
    %v830 = vld [vmem:[#allocation18 + $0x8] sm:$0xff]
    %v831 = vld [vmem:[#allocation20] sm:$0xff]
    %v832 = vld [vmem:[#allocation20 + $0x8] sm:$0xff]
    %v833 = vld [vmem:[#allocation21] sm:$0xff]
    %v834 = vld [vmem:[#allocation21 + $0x8] sm:$0xff]
    %v835 = vld [vmem:[#allocation2] sm:$0xff]
    %v836 = vld [vmem:[#allocation2 + $0x8] sm:$0xff]
    %v837 = vld [vmem:[#allocation2 + $0x10] sm:$0xff]
    %v838 = vld [vmem:[#allocation2 + $0x18] sm:$0xff]
    %v839 = vld [vmem:[#allocation2 + $0x20] sm:$0xff]
    %v840 = vld [vmem:[#allocation2 + $0x28] sm:$0xff]
    %v841 = vld [vmem:[#allocation2 + $0x30] sm:$0xff]
    %v842 = vld [vmem:[#allocation2 + $0x38] sm:$0xff]
    %v843 = vpack.c.bf16 %v827, %v827
    %v844 = vpack.c.bf16 %v828, %v828
    %v845 = vld [vmem:[#allocation12] sm:$0xff]
    %v846 = vld [vmem:[#allocation12 + $0x8] sm:$0xff]
    %v847 = vld [vmem:[#allocation12 + $0x10] sm:$0xff]
    %v848 = vld [vmem:[#allocation12 + $0x18] sm:$0xff]
    %v849 = vld [vmem:[#allocation12 + $0x20] sm:$0xff]
    %v850 = vld [vmem:[#allocation12 + $0x28] sm:$0xff]
    %v851 = vld [vmem:[#allocation12 + $0x30] sm:$0xff]
    %v852 = vld [vmem:[#allocation12 + $0x38] sm:$0xff]
    %v853 = vld [vmem:[#allocation12 + $0x40] sm:$0xff]
    %v854 = vld [vmem:[#allocation12 + $0x48] sm:$0xff]
    %v855 = vld [vmem:[#allocation12 + $0x50] sm:$0xff]
    %v856 = vld [vmem:[#allocation12 + $0x58] sm:$0xff]
    %v857 = vld [vmem:[#allocation12 + $0x60] sm:$0xff]
    %v858 = vld [vmem:[#allocation12 + $0x68] sm:$0xff]
    %v859 = vld [vmem:[#allocation12 + $0x70] sm:$0xff]
    %v860 = vld [vmem:[#allocation12 + $0x78] sm:$0xff]
    %v861 = vld [vmem:[#allocation12 + $0x80] sm:$0xff]
    %v862 = vld [vmem:[#allocation12 + $0x88] sm:$0xff]
    %v863 = vld [vmem:[#allocation12 + $0x90] sm:$0xff]
    %v864 = vld [vmem:[#allocation12 + $0x98] sm:$0xff]
    %v865 = vld [vmem:[#allocation12 + $0xa0] sm:$0xff]
    %v866 = vld [vmem:[#allocation12 + $0xa8] sm:$0xff]
    %v867 = vld [vmem:[#allocation12 + $0xb0] sm:$0xff]
    %v868 = vld [vmem:[#allocation12 + $0xb8] sm:$0xff]
    %v869 = vld [vmem:[#allocation12 + $0xc0] sm:$0xff]
    %v870 = vld [vmem:[#allocation12 + $0xc8] sm:$0xff]
    %v871 = vld [vmem:[#allocation12 + $0xd0] sm:$0xff]
    %v872 = vld [vmem:[#allocation12 + $0xd8] sm:$0xff]
    %v873 = vld [vmem:[#allocation12 + $0xe0] sm:$0xff]
    %v874 = vld [vmem:[#allocation12 + $0xe8] sm:$0xff]
    %v875 = vld [vmem:[#allocation12 + $0xf0] sm:$0xff]
    %v876 = vld [vmem:[#allocation12 + $0xf8] sm:$0xff]
    %v877 = vld [vmem:[#allocation12 + $0x100] sm:$0xff]
    %v878 = vld [vmem:[#allocation12 + $0x108] sm:$0xff]
    %v879 = vld [vmem:[#allocation12 + $0x110] sm:$0xff]
    %v880 = vld [vmem:[#allocation12 + $0x118] sm:$0xff]
    %v881 = vld [vmem:[#allocation12 + $0x120] sm:$0xff]
    %v882 = vld [vmem:[#allocation12 + $0x128] sm:$0xff]
    %v883 = vld [vmem:[#allocation12 + $0x130] sm:$0xff]
    %v884 = vld [vmem:[#allocation12 + $0x138] sm:$0xff]
    %v885 = vld [vmem:[#allocation12 + $0x140] sm:$0xff]
    %v886 = vld [vmem:[#allocation12 + $0x148] sm:$0xff]
    %v887 = vld [vmem:[#allocation12 + $0x150] sm:$0xff]
    %v888 = vld [vmem:[#allocation12 + $0x158] sm:$0xff]
    %v889 = vld [vmem:[#allocation12 + $0x160] sm:$0xff]
    %v890 = vld [vmem:[#allocation12 + $0x168] sm:$0xff]
    %v891 = vld [vmem:[#allocation12 + $0x170] sm:$0xff]
    %v892 = vld [vmem:[#allocation12 + $0x178] sm:$0xff]
    %v893 = vld [vmem:[#allocation12 + $0x180] sm:$0xff]
    %v894 = vld [vmem:[#allocation12 + $0x188] sm:$0xff]
    %v895 = vld [vmem:[#allocation12 + $0x190] sm:$0xff]
    %v896 = vld [vmem:[#allocation12 + $0x198] sm:$0xff]
    %v897 = vld [vmem:[#allocation12 + $0x1a0] sm:$0xff]
    %v898 = vld [vmem:[#allocation12 + $0x1a8] sm:$0xff]
    %v899 = vld [vmem:[#allocation12 + $0x1b0] sm:$0xff]
    %v900 = vld [vmem:[#allocation12 + $0x1b8] sm:$0xff]
    %v901 = vld [vmem:[#allocation12 + $0x1c0] sm:$0xff]
    %v902 = vld [vmem:[#allocation12 + $0x1c8] sm:$0xff]
    %v903 = vld [vmem:[#allocation12 + $0x1d0] sm:$0xff]
    %v904 = vld [vmem:[#allocation12 + $0x1d8] sm:$0xff]
    %v905 = vld [vmem:[#allocation12 + $0x1e0] sm:$0xff]
    %v906 = vld [vmem:[#allocation12 + $0x1e8] sm:$0xff]
    %v907 = vld [vmem:[#allocation12 + $0x1f0] sm:$0xff]
    %v908 = vld [vmem:[#allocation12 + $0x1f8] sm:$0xff]
    %v909 = vld [vmem:[#allocation12 + $0x200] sm:$0xff]
    %v910 = vld [vmem:[#allocation12 + $0x208] sm:$0xff]
    %v911 = vld [vmem:[#allocation12 + $0x210] sm:$0xff]
    %v912 = vld [vmem:[#allocation12 + $0x218] sm:$0xff]
    %v913 = vld [vmem:[#allocation12 + $0x220] sm:$0xff]
    %v914 = vld [vmem:[#allocation12 + $0x228] sm:$0xff]
    %v915 = vld [vmem:[#allocation12 + $0x230] sm:$0xff]
    %v916 = vld [vmem:[#allocation12 + $0x238] sm:$0xff]
    %v917 = vld [vmem:[#allocation12 + $0x240] sm:$0xff]
    %v918 = vld [vmem:[#allocation12 + $0x248] sm:$0xff]
    %v919 = vld [vmem:[#allocation12 + $0x250] sm:$0xff]
    %v920 = vld [vmem:[#allocation12 + $0x258] sm:$0xff]
    %v921 = vld [vmem:[#allocation12 + $0x260] sm:$0xff]
    %v922 = vld [vmem:[#allocation12 + $0x268] sm:$0xff]
    %v923 = vld [vmem:[#allocation12 + $0x270] sm:$0xff]
    %v924 = vld [vmem:[#allocation12 + $0x278] sm:$0xff]
    %v925 = vld [vmem:[#allocation12 + $0x280] sm:$0xff]
    %v926 = vld [vmem:[#allocation12 + $0x288] sm:$0xff]
    %v927 = vld [vmem:[#allocation12 + $0x290] sm:$0xff]
    %v928 = vld [vmem:[#allocation12 + $0x298] sm:$0xff]
    %v929 = vld [vmem:[#allocation12 + $0x2a0] sm:$0xff]
    %v930 = vld [vmem:[#allocation12 + $0x2a8] sm:$0xff]
    %v931 = vld [vmem:[#allocation12 + $0x2b0] sm:$0xff]
    %v932 = vld [vmem:[#allocation12 + $0x2b8] sm:$0xff]
    %v933 = vld [vmem:[#allocation12 + $0x2c0] sm:$0xff]
    %v934 = vld [vmem:[#allocation12 + $0x2c8] sm:$0xff]
    %v935 = vld [vmem:[#allocation12 + $0x2d0] sm:$0xff]
    %v936 = vld [vmem:[#allocation12 + $0x2d8] sm:$0xff]
    %v937 = vld [vmem:[#allocation12 + $0x2e0] sm:$0xff]
    %v938 = vld [vmem:[#allocation12 + $0x2e8] sm:$0xff]
    %v939 = vld [vmem:[#allocation12 + $0x2f0] sm:$0xff]
    %v940 = vld [vmem:[#allocation12 + $0x2f8] sm:$0xff]
    %v941 = vld [vmem:[#allocation12 + $0x300] sm:$0xff]
    %v942 = vld [vmem:[#allocation12 + $0x308] sm:$0xff]
    %v943 = vld [vmem:[#allocation12 + $0x310] sm:$0xff]
    %v944 = vld [vmem:[#allocation12 + $0x318] sm:$0xff]
    %v945 = vld [vmem:[#allocation12 + $0x320] sm:$0xff]
    %v946 = vld [vmem:[#allocation12 + $0x328] sm:$0xff]
    %v947 = vld [vmem:[#allocation12 + $0x330] sm:$0xff]
    %v948 = vld [vmem:[#allocation12 + $0x338] sm:$0xff]
    %v949 = vld [vmem:[#allocation12 + $0x340] sm:$0xff]
    %v950 = vld [vmem:[#allocation12 + $0x348] sm:$0xff]
    %v951 = vld [vmem:[#allocation12 + $0x350] sm:$0xff]
    %v952 = vld [vmem:[#allocation12 + $0x358] sm:$0xff]
    %v953 = vld [vmem:[#allocation12 + $0x360] sm:$0xff]
    %v954 = vld [vmem:[#allocation12 + $0x368] sm:$0xff]
    %v955 = vld [vmem:[#allocation12 + $0x370] sm:$0xff]
    %v956 = vld [vmem:[#allocation12 + $0x378] sm:$0xff]
    %v957 = vld [vmem:[#allocation12 + $0x380] sm:$0xff]
    %v958 = vld [vmem:[#allocation12 + $0x388] sm:$0xff]
    %v959 = vld [vmem:[#allocation12 + $0x390] sm:$0xff]
    %v960 = vld [vmem:[#allocation12 + $0x398] sm:$0xff]
    %v961 = vld [vmem:[#allocation12 + $0x3a0] sm:$0xff]
    %v962 = vld [vmem:[#allocation12 + $0x3a8] sm:$0xff]
    %v963 = vld [vmem:[#allocation12 + $0x3b0] sm:$0xff]
    %v964 = vld [vmem:[#allocation12 + $0x3b8] sm:$0xff]
    %v965 = vld [vmem:[#allocation12 + $0x3c0] sm:$0xff]
    %v966 = vld [vmem:[#allocation12 + $0x3c8] sm:$0xff]
    %v967 = vld [vmem:[#allocation12 + $0x3d0] sm:$0xff]
    %v968 = vld [vmem:[#allocation12 + $0x3d8] sm:$0xff]
    %v969 = vld [vmem:[#allocation12 + $0x3e0] sm:$0xff]
    %v970 = vld [vmem:[#allocation12 + $0x3e8] sm:$0xff]
    %v971 = vld [vmem:[#allocation12 + $0x3f0] sm:$0xff]
    %v972 = vld [vmem:[#allocation12 + $0x3f8] sm:$0xff]
    %v1101 = vunpack.c.l.b16 %v845
    %v1102 = vunpack.c.h.b16 %v845
    %v1103 = vunpack.c.l.b16 %v846
    %v1104 = vunpack.c.h.b16 %v846
    %v1105 = vunpack.c.l.b16 %v847
    %v1106 = vunpack.c.h.b16 %v847
    %v1107 = vunpack.c.l.b16 %v848
    %v1108 = vunpack.c.h.b16 %v848
    %v1109 = vunpack.c.l.b16 %v849
    %v1110 = vunpack.c.h.b16 %v849
    %v1111 = vunpack.c.l.b16 %v850
    %v1112 = vunpack.c.h.b16 %v850
    %v1113 = vunpack.c.l.b16 %v851
    %v1114 = vunpack.c.h.b16 %v851
    %v1115 = vunpack.c.l.b16 %v852
    %v1116 = vunpack.c.h.b16 %v852
    %v1117 = vunpack.c.l.b16 %v853
    %v1118 = vunpack.c.h.b16 %v853
    %v1119 = vunpack.c.l.b16 %v854
    %v1120 = vunpack.c.h.b16 %v854
    %v1121 = vunpack.c.l.b16 %v855
    %v1122 = vunpack.c.h.b16 %v855
    %v1123 = vunpack.c.l.b16 %v856
    %v1124 = vunpack.c.h.b16 %v856
    %v1125 = vunpack.c.l.b16 %v857
    %v1126 = vunpack.c.h.b16 %v857
    %v1127 = vunpack.c.l.b16 %v858
    %v1128 = vunpack.c.h.b16 %v858
    %v1129 = vunpack.c.l.b16 %v859
    %v1130 = vunpack.c.h.b16 %v859
    %v1131 = vunpack.c.l.b16 %v860
    %v1132 = vunpack.c.h.b16 %v860
    %v1133 = vunpack.c.l.b16 %v861
    %v1134 = vunpack.c.h.b16 %v861
    %v1135 = vunpack.c.l.b16 %v862
    %v1136 = vunpack.c.h.b16 %v862
    %v1137 = vunpack.c.l.b16 %v863
    %v1138 = vunpack.c.h.b16 %v863
    %v1139 = vunpack.c.l.b16 %v864
    %v1140 = vunpack.c.h.b16 %v864
    %v1141 = vunpack.c.l.b16 %v865
    %v1142 = vunpack.c.h.b16 %v865
    %v1143 = vunpack.c.l.b16 %v866
    %v1144 = vunpack.c.h.b16 %v866
    %v1145 = vunpack.c.l.b16 %v867
    %v1146 = vunpack.c.h.b16 %v867
    %v1147 = vunpack.c.l.b16 %v868
    %v1148 = vunpack.c.h.b16 %v868
    %v1149 = vunpack.c.l.b16 %v869
    %v1150 = vunpack.c.h.b16 %v869
    %v1151 = vunpack.c.l.b16 %v870
    %v1152 = vunpack.c.h.b16 %v870
    %v1153 = vunpack.c.l.b16 %v871
    %v1154 = vunpack.c.h.b16 %v871
    %v1155 = vunpack.c.l.b16 %v872
    %v1156 = vunpack.c.h.b16 %v872
    %v1157 = vunpack.c.l.b16 %v873
    %v1158 = vunpack.c.h.b16 %v873
    %v1159 = vunpack.c.l.b16 %v874
    %v1160 = vunpack.c.h.b16 %v874
    %v1161 = vunpack.c.l.b16 %v875
    %v1162 = vunpack.c.h.b16 %v875
    %v1163 = vunpack.c.l.b16 %v876
    %v1164 = vunpack.c.h.b16 %v876
    %v1165 = vunpack.c.l.b16 %v877
    %v1166 = vunpack.c.h.b16 %v877
    %v1167 = vunpack.c.l.b16 %v878
    %v1168 = vunpack.c.h.b16 %v878
    %v1169 = vunpack.c.l.b16 %v879
    %v1170 = vunpack.c.h.b16 %v879
    %v1171 = vunpack.c.l.b16 %v880
    %v1172 = vunpack.c.h.b16 %v880
    %v1173 = vunpack.c.l.b16 %v881
    %v1174 = vunpack.c.h.b16 %v881
    %v1175 = vunpack.c.l.b16 %v882
    %v1176 = vunpack.c.h.b16 %v882
    %v1177 = vunpack.c.l.b16 %v883
    %v1178 = vunpack.c.h.b16 %v883
    %v1179 = vunpack.c.l.b16 %v884
    %v1180 = vunpack.c.h.b16 %v884
    %v1181 = vunpack.c.l.b16 %v885
    %v1182 = vunpack.c.h.b16 %v885
    %v1183 = vunpack.c.l.b16 %v886
    %v1184 = vunpack.c.h.b16 %v886
    %v1185 = vunpack.c.l.b16 %v887
    %v1186 = vunpack.c.h.b16 %v887
    %v1187 = vunpack.c.l.b16 %v888
    %v1188 = vunpack.c.h.b16 %v888
    %v1189 = vunpack.c.l.b16 %v889
    %v1190 = vunpack.c.h.b16 %v889
    %v1191 = vunpack.c.l.b16 %v890
    %v1192 = vunpack.c.h.b16 %v890
    %v1193 = vunpack.c.l.b16 %v891
    %v1194 = vunpack.c.h.b16 %v891
    %v1195 = vunpack.c.l.b16 %v892
    %v1196 = vunpack.c.h.b16 %v892
    %v1197 = vunpack.c.l.b16 %v893
    %v1198 = vunpack.c.h.b16 %v893
    %v1199 = vunpack.c.l.b16 %v894
    %v1200 = vunpack.c.h.b16 %v894
    %v1201 = vunpack.c.l.b16 %v895
    %v1202 = vunpack.c.h.b16 %v895
    %v1203 = vunpack.c.l.b16 %v896
    %v1204 = vunpack.c.h.b16 %v896
    %v1205 = vunpack.c.l.b16 %v897
    %v1206 = vunpack.c.h.b16 %v897
    %v1207 = vunpack.c.l.b16 %v898
    %v1208 = vunpack.c.h.b16 %v898
    %v1209 = vunpack.c.l.b16 %v899
    %v1210 = vunpack.c.h.b16 %v899
    %v1211 = vunpack.c.l.b16 %v900
    %v1212 = vunpack.c.h.b16 %v900
    %v1213 = vunpack.c.l.b16 %v901
    %v1214 = vunpack.c.h.b16 %v901
    %v1215 = vunpack.c.l.b16 %v902
    %v1216 = vunpack.c.h.b16 %v902
    %v1217 = vunpack.c.l.b16 %v903
    %v1218 = vunpack.c.h.b16 %v903
    %v1219 = vunpack.c.l.b16 %v904
    %v1220 = vunpack.c.h.b16 %v904
    %v1221 = vunpack.c.l.b16 %v905
    %v1222 = vunpack.c.h.b16 %v905
    %v1223 = vunpack.c.l.b16 %v906
    %v1224 = vunpack.c.h.b16 %v906
    %v1225 = vunpack.c.l.b16 %v907
    %v1226 = vunpack.c.h.b16 %v907
    %v1227 = vunpack.c.l.b16 %v908
    %v1228 = vunpack.c.h.b16 %v908
    %v1229 = vunpack.c.l.b16 %v909
    %v1230 = vunpack.c.h.b16 %v909
    %v1231 = vunpack.c.l.b16 %v910
    %v1232 = vunpack.c.h.b16 %v910
    %v1233 = vunpack.c.l.b16 %v911
    %v1234 = vunpack.c.h.b16 %v911
    %v1235 = vunpack.c.l.b16 %v912
    %v1236 = vunpack.c.h.b16 %v912
    %v1237 = vunpack.c.l.b16 %v913
    %v1238 = vunpack.c.h.b16 %v913
    %v1239 = vunpack.c.l.b16 %v914
    %v1240 = vunpack.c.h.b16 %v914
    %v1241 = vunpack.c.l.b16 %v915
    %v1242 = vunpack.c.h.b16 %v915
    %v1243 = vunpack.c.l.b16 %v916
    %v1244 = vunpack.c.h.b16 %v916
    %v1245 = vunpack.c.l.b16 %v917
    %v1246 = vunpack.c.h.b16 %v917
    %v1247 = vunpack.c.l.b16 %v918
    %v1248 = vunpack.c.h.b16 %v918
    %v1249 = vunpack.c.l.b16 %v919
    %v1250 = vunpack.c.h.b16 %v919
    %v1251 = vunpack.c.l.b16 %v920
    %v1252 = vunpack.c.h.b16 %v920
    %v1253 = vunpack.c.l.b16 %v921
    %v1254 = vunpack.c.h.b16 %v921
    %v1255 = vunpack.c.l.b16 %v922
    %v1256 = vunpack.c.h.b16 %v922
    %v1257 = vunpack.c.l.b16 %v923
    %v1258 = vunpack.c.h.b16 %v923
    %v1259 = vunpack.c.l.b16 %v924
    %v1260 = vunpack.c.h.b16 %v924
    %v1261 = vunpack.c.l.b16 %v925
    %v1262 = vunpack.c.h.b16 %v925
    %v1263 = vunpack.c.l.b16 %v926
    %v1264 = vunpack.c.h.b16 %v926
    %v1265 = vunpack.c.l.b16 %v927
    %v1266 = vunpack.c.h.b16 %v927
    %v1267 = vunpack.c.l.b16 %v928
    %v1268 = vunpack.c.h.b16 %v928
    %v1269 = vunpack.c.l.b16 %v929
    %v1270 = vunpack.c.h.b16 %v929
    %v1271 = vunpack.c.l.b16 %v930
    %v1272 = vunpack.c.h.b16 %v930
    %v1273 = vunpack.c.l.b16 %v931
    %v1274 = vunpack.c.h.b16 %v931
    %v1275 = vunpack.c.l.b16 %v932
    %v1276 = vunpack.c.h.b16 %v932
    %v1277 = vunpack.c.l.b16 %v933
    %v1278 = vunpack.c.h.b16 %v933
    %v1279 = vunpack.c.l.b16 %v934
    %v1280 = vunpack.c.h.b16 %v934
    %v1281 = vunpack.c.l.b16 %v935
    %v1282 = vunpack.c.h.b16 %v935
    %v1283 = vunpack.c.l.b16 %v936
    %v1284 = vunpack.c.h.b16 %v936
    %v1285 = vunpack.c.l.b16 %v937
    %v1286 = vunpack.c.h.b16 %v937
    %v1287 = vunpack.c.l.b16 %v938
    %v1288 = vunpack.c.h.b16 %v938
    %v1289 = vunpack.c.l.b16 %v939
    %v1290 = vunpack.c.h.b16 %v939
    %v1291 = vunpack.c.l.b16 %v940
    %v1292 = vunpack.c.h.b16 %v940
    %v1293 = vunpack.c.l.b16 %v941
    %v1294 = vunpack.c.h.b16 %v941
    %v1295 = vunpack.c.l.b16 %v942
    %v1296 = vunpack.c.h.b16 %v942
    %v1297 = vunpack.c.l.b16 %v943
    %v1298 = vunpack.c.h.b16 %v943
    %v1299 = vunpack.c.l.b16 %v944
    %v1300 = vunpack.c.h.b16 %v944
    %v1301 = vunpack.c.l.b16 %v945
    %v1302 = vunpack.c.h.b16 %v945
    %v1303 = vunpack.c.l.b16 %v946
    %v1304 = vunpack.c.h.b16 %v946
    %v1305 = vunpack.c.l.b16 %v947
    %v1306 = vunpack.c.h.b16 %v947
    %v1307 = vunpack.c.l.b16 %v948
    %v1308 = vunpack.c.h.b16 %v948
    %v1309 = vunpack.c.l.b16 %v949
    %v1310 = vunpack.c.h.b16 %v949
    %v1311 = vunpack.c.l.b16 %v950
    %v1312 = vunpack.c.h.b16 %v950
    %v1313 = vunpack.c.l.b16 %v951
    %v1314 = vunpack.c.h.b16 %v951
    %v1315 = vunpack.c.l.b16 %v952
    %v1316 = vunpack.c.h.b16 %v952
    %v1317 = vunpack.c.l.b16 %v953
    %v1318 = vunpack.c.h.b16 %v953
    %v1319 = vunpack.c.l.b16 %v954
    %v1320 = vunpack.c.h.b16 %v954
    %v1321 = vunpack.c.l.b16 %v955
    %v1322 = vunpack.c.h.b16 %v955
    %v1323 = vunpack.c.l.b16 %v956
    %v1324 = vunpack.c.h.b16 %v956
    %v1325 = vunpack.c.l.b16 %v957
    %v1326 = vunpack.c.h.b16 %v957
    %v1327 = vunpack.c.l.b16 %v958
    %v1328 = vunpack.c.h.b16 %v958
    %v1329 = vunpack.c.l.b16 %v959
    %v1330 = vunpack.c.h.b16 %v959
    %v1331 = vunpack.c.l.b16 %v960
    %v1332 = vunpack.c.h.b16 %v960
    %v1333 = vunpack.c.l.b16 %v961
    %v1334 = vunpack.c.h.b16 %v961
    %v1335 = vunpack.c.l.b16 %v962
    %v1336 = vunpack.c.h.b16 %v962
    %v1337 = vunpack.c.l.b16 %v963
    %v1338 = vunpack.c.h.b16 %v963
    %v1339 = vunpack.c.l.b16 %v964
    %v1340 = vunpack.c.h.b16 %v964
    %v1341 = vunpack.c.l.b16 %v965
    %v1342 = vunpack.c.h.b16 %v965
    %v1343 = vunpack.c.l.b16 %v966
    %v1344 = vunpack.c.h.b16 %v966
    %v1345 = vunpack.c.l.b16 %v967
    %v1346 = vunpack.c.h.b16 %v967
    %v1347 = vunpack.c.l.b16 %v968
    %v1348 = vunpack.c.h.b16 %v968
    %v1349 = vunpack.c.l.b16 %v969
    %v1350 = vunpack.c.h.b16 %v969
    %v1351 = vunpack.c.l.b16 %v970
    %v1352 = vunpack.c.h.b16 %v970
    %v1353 = vunpack.c.l.b16 %v971
    %v1354 = vunpack.c.h.b16 %v971
    %v1355 = vunpack.c.l.b16 %v972
    %v1356 = vunpack.c.h.b16 %v972
    %v1357 = vpack.c.b16 %v1109, %v1101
    %v1358 = vpack.c.b16 %v1110, %v1102
    %v1359 = vpack.c.b16 %v1111, %v1103
    %v1360 = vpack.c.b16 %v1112, %v1104
    %v1361 = vpack.c.b16 %v1113, %v1105
    %v1362 = vpack.c.b16 %v1114, %v1106
    %v1363 = vpack.c.b16 %v1115, %v1107
    %v1364 = vpack.c.b16 %v1116, %v1108
    %v1365 = vpack.c.b16 %v1125, %v1117
    %v1366 = vpack.c.b16 %v1126, %v1118
    %v1367 = vpack.c.b16 %v1127, %v1119
    %v1368 = vpack.c.b16 %v1128, %v1120
    %v1369 = vpack.c.b16 %v1129, %v1121
    %v1370 = vpack.c.b16 %v1130, %v1122
    %v1371 = vpack.c.b16 %v1131, %v1123
    %v1372 = vpack.c.b16 %v1132, %v1124
    %v1373 = vpack.c.b16 %v1141, %v1133
    %v1374 = vpack.c.b16 %v1142, %v1134
    %v1375 = vpack.c.b16 %v1143, %v1135
    %v1376 = vpack.c.b16 %v1144, %v1136
    %v1377 = vpack.c.b16 %v1145, %v1137
    %v1378 = vpack.c.b16 %v1146, %v1138
    %v1379 = vpack.c.b16 %v1147, %v1139
    %v1380 = vpack.c.b16 %v1148, %v1140
    %v1381 = vpack.c.b16 %v1157, %v1149
    %v1382 = vpack.c.b16 %v1158, %v1150
    %v1383 = vpack.c.b16 %v1159, %v1151
    %v1384 = vpack.c.b16 %v1160, %v1152
    %v1385 = vpack.c.b16 %v1161, %v1153
    %v1386 = vpack.c.b16 %v1162, %v1154
    %v1387 = vpack.c.b16 %v1163, %v1155
    %v1388 = vpack.c.b16 %v1164, %v1156
    %v1389 = vpack.c.b16 %v1173, %v1165
    %v1390 = vpack.c.b16 %v1174, %v1166
    %v1391 = vpack.c.b16 %v1175, %v1167
    %v1392 = vpack.c.b16 %v1176, %v1168
    %v1393 = vpack.c.b16 %v1177, %v1169
    %v1394 = vpack.c.b16 %v1178, %v1170
    %v1395 = vpack.c.b16 %v1179, %v1171
    %v1396 = vpack.c.b16 %v1180, %v1172
    %v1397 = vpack.c.b16 %v1189, %v1181
    %v1398 = vpack.c.b16 %v1190, %v1182
    %v1399 = vpack.c.b16 %v1191, %v1183
    %v1400 = vpack.c.b16 %v1192, %v1184
    %v1401 = vpack.c.b16 %v1193, %v1185
    %v1402 = vpack.c.b16 %v1194, %v1186
    %v1403 = vpack.c.b16 %v1195, %v1187
    %v1404 = vpack.c.b16 %v1196, %v1188
    %v1405 = vpack.c.b16 %v1205, %v1197
    %v1406 = vpack.c.b16 %v1206, %v1198
    %v1407 = vpack.c.b16 %v1207, %v1199
    %v1408 = vpack.c.b16 %v1208, %v1200
    %v1409 = vpack.c.b16 %v1209, %v1201
    %v1410 = vpack.c.b16 %v1210, %v1202
    %v1411 = vpack.c.b16 %v1211, %v1203
    %v1412 = vpack.c.b16 %v1212, %v1204
    %v1413 = vpack.c.b16 %v1221, %v1213
    %v1414 = vpack.c.b16 %v1222, %v1214
    %v1415 = vpack.c.b16 %v1223, %v1215
    %v1416 = vpack.c.b16 %v1224, %v1216
    %v1417 = vpack.c.b16 %v1225, %v1217
    %v1418 = vpack.c.b16 %v1226, %v1218
    %v1419 = vpack.c.b16 %v1227, %v1219
    %v1420 = vpack.c.b16 %v1228, %v1220
    %v1421 = vpack.c.b16 %v1237, %v1229
    %v1422 = vpack.c.b16 %v1238, %v1230
    %v1423 = vpack.c.b16 %v1239, %v1231
    %v1424 = vpack.c.b16 %v1240, %v1232
    %v1425 = vpack.c.b16 %v1241, %v1233
    %v1426 = vpack.c.b16 %v1242, %v1234
    %v1427 = vpack.c.b16 %v1243, %v1235
    %v1428 = vpack.c.b16 %v1244, %v1236
    %v1429 = vpack.c.b16 %v1253, %v1245
    %v1430 = vpack.c.b16 %v1254, %v1246
    %v1431 = vpack.c.b16 %v1255, %v1247
    %v1432 = vpack.c.b16 %v1256, %v1248
    %v1433 = vpack.c.b16 %v1257, %v1249
    %v1434 = vpack.c.b16 %v1258, %v1250
    %v1435 = vpack.c.b16 %v1259, %v1251
    %v1436 = vpack.c.b16 %v1260, %v1252
    %v1437 = vpack.c.b16 %v1269, %v1261
    %v1438 = vpack.c.b16 %v1270, %v1262
    %v1439 = vpack.c.b16 %v1271, %v1263
    %v1440 = vpack.c.b16 %v1272, %v1264
    %v1441 = vpack.c.b16 %v1273, %v1265
    %v1442 = vpack.c.b16 %v1274, %v1266
    %v1443 = vpack.c.b16 %v1275, %v1267
    %v1444 = vpack.c.b16 %v1276, %v1268
    %v1445 = vpack.c.b16 %v1285, %v1277
    %v1446 = vpack.c.b16 %v1286, %v1278
    %v1447 = vpack.c.b16 %v1287, %v1279
    %v1448 = vpack.c.b16 %v1288, %v1280
    %v1449 = vpack.c.b16 %v1289, %v1281
    %v1450 = vpack.c.b16 %v1290, %v1282
    %v1451 = vpack.c.b16 %v1291, %v1283
    %v1452 = vpack.c.b16 %v1292, %v1284
    %v1453 = vpack.c.b16 %v1301, %v1293
    %v1454 = vpack.c.b16 %v1302, %v1294
    %v1455 = vpack.c.b16 %v1303, %v1295
    %v1456 = vpack.c.b16 %v1304, %v1296
    %v1457 = vpack.c.b16 %v1305, %v1297
    %v1458 = vpack.c.b16 %v1306, %v1298
    %v1459 = vpack.c.b16 %v1307, %v1299
    %v1460 = vpack.c.b16 %v1308, %v1300
    %v1461 = vpack.c.b16 %v1317, %v1309
    %v1462 = vpack.c.b16 %v1318, %v1310
    %v1463 = vpack.c.b16 %v1319, %v1311
    %v1464 = vpack.c.b16 %v1320, %v1312
    %v1465 = vpack.c.b16 %v1321, %v1313
    %v1466 = vpack.c.b16 %v1322, %v1314
    %v1467 = vpack.c.b16 %v1323, %v1315
    %v1468 = vpack.c.b16 %v1324, %v1316
    %v1469 = vpack.c.b16 %v1333, %v1325
    %v1470 = vpack.c.b16 %v1334, %v1326
    %v1471 = vpack.c.b16 %v1335, %v1327
    %v1472 = vpack.c.b16 %v1336, %v1328
    %v1473 = vpack.c.b16 %v1337, %v1329
    %v1474 = vpack.c.b16 %v1338, %v1330
    %v1475 = vpack.c.b16 %v1339, %v1331
    %v1476 = vpack.c.b16 %v1340, %v1332
    %v1477 = vpack.c.b16 %v1349, %v1341
    %v1478 = vpack.c.b16 %v1350, %v1342
    %v1479 = vpack.c.b16 %v1351, %v1343
    %v1480 = vpack.c.b16 %v1352, %v1344
    %v1481 = vpack.c.b16 %v1353, %v1345
    %v1482 = vpack.c.b16 %v1354, %v1346
    %v1483 = vpack.c.b16 %v1355, %v1347
    %v1484 = vpack.c.b16 %v1356, %v1348
    %1613 = vmatprep.subr.bf16.mxu0 %v1414
    %1614 = vmatpush1.bf16.msra.mxu0 %v1413
    %1615 = vmatprep.subr.bf16.mxu0 %v1406
    %1616 = vmatpush1.bf16.msra.mxu0 %v1405
    %1617 = vmatprep.subr.bf16.mxu0 %v1398
    %1618 = vmatpush1.bf16.msra.mxu0 %v1397
    %1619 = vmatprep.subr.bf16.mxu0 %v1390
    %1620 = vmatpush1.bf16.msra.mxu0 %v1389
    %1621 = vmatprep.subr.bf16.mxu0 %v1382
    %1622 = vmatpush1.bf16.msra.mxu0 %v1381
    %1623 = vmatprep.subr.bf16.mxu0 %v1374
    %1624 = vmatpush1.bf16.msra.mxu0 %v1373
    %1625 = vmatprep.subr.bf16.mxu0 %v1366
    %1626 = vmatpush1.bf16.msra.mxu0 %v1365
    %1627 = vmatprep.subr.bf16.mxu0 %v1358
    %1628 = vmatpush1.bf16.msra.mxu0 %v1357
    %1629 = vmatprep.subr.bf16.mxu0 %v1478
    %1630 = vmatpush2.bf16.msra.mxu0 %v1477
    %1631 = vmatprep.subr.bf16.mxu0 %v1470
    %1632 = vmatpush2.bf16.msra.mxu0 %v1469
    %1633 = vmatprep.subr.bf16.mxu0 %v1462
    %1634 = vmatpush2.bf16.msra.mxu0 %v1461
    %1635 = vmatprep.subr.bf16.mxu0 %v1454
    %1636 = vmatpush2.bf16.msra.mxu0 %v1453
    %1637 = vmatprep.subr.bf16.mxu0 %v1446
    %1638 = vmatpush2.bf16.msra.mxu0 %v1445
    %1639 = vmatprep.subr.bf16.mxu0 %v1438
    %1640 = vmatpush2.bf16.msra.mxu0 %v1437
    %1641 = vmatprep.subr.bf16.mxu0 %v1430
    %1642 = vmatpush2.bf16.msra.mxu0 %v1429
    %1643 = vmatprep.subr.bf16.mxu0 %v1422
    %1644 = vmatpush2.bf16.msra.mxu0 %v1421
    %1645 = vmatprep.mubr.bf16.mxu0 %v844
    %1646 = vmatmul.mubr.bf16.gmra.mxu0 %v843
    %v1647 = vpop.f32.mrf.mxu0
    %v1648 = vadd.f32 0.0, %v1647
    %v1649 = vpop.f32.mrf.mxu0
    %v1650 = vadd.f32 0.0, %v1649
    %v1651 = vpop.f32.mrf.mxu0
    %v1652 = vpop.f32.mrf.mxu0
    %1653 = vdwg.mxu0
    %1654 = vmatprep.subr.bf16.mxu0 %v1416
    %1655 = vmatpush1.bf16.msra.mxu0 %v1415
    %1656 = vmatprep.subr.bf16.mxu0 %v1408
    %1657 = vmatpush1.bf16.msra.mxu0 %v1407
    %1658 = vmatprep.subr.bf16.mxu0 %v1400
    %1659 = vmatpush1.bf16.msra.mxu0 %v1399
    %1660 = vmatprep.subr.bf16.mxu0 %v1392
    %1661 = vmatpush1.bf16.msra.mxu0 %v1391
    %1662 = vmatprep.subr.bf16.mxu0 %v1384
    %1663 = vmatpush1.bf16.msra.mxu0 %v1383
    %1664 = vmatprep.subr.bf16.mxu0 %v1376
    %1665 = vmatpush1.bf16.msra.mxu0 %v1375
    %1666 = vmatprep.subr.bf16.mxu0 %v1368
    %1667 = vmatpush1.bf16.msra.mxu0 %v1367
    %1668 = vmatprep.subr.bf16.mxu0 %v1360
    %1669 = vmatpush1.bf16.msra.mxu0 %v1359
    %1670 = vmatprep.subr.bf16.mxu0 %v1480
    %1671 = vmatpush2.bf16.msra.mxu0 %v1479
    %1672 = vmatprep.subr.bf16.mxu0 %v1472
    %1673 = vmatpush2.bf16.msra.mxu0 %v1471
    %1674 = vmatprep.subr.bf16.mxu0 %v1464
    %1675 = vmatpush2.bf16.msra.mxu0 %v1463
    %1676 = vmatprep.subr.bf16.mxu0 %v1456
    %1677 = vmatpush2.bf16.msra.mxu0 %v1455
    %1678 = vmatprep.subr.bf16.mxu0 %v1448
    %1679 = vmatpush2.bf16.msra.mxu0 %v1447
    %1680 = vmatprep.subr.bf16.mxu0 %v1440
    %1681 = vmatpush2.bf16.msra.mxu0 %v1439
    %1682 = vmatprep.subr.bf16.mxu0 %v1432
    %1683 = vmatpush2.bf16.msra.mxu0 %v1431
    %1684 = vmatprep.subr.bf16.mxu0 %v1424
    %1685 = vmatpush2.bf16.msra.mxu0 %v1423
    %1686 = vmatprep.mubr.bf16.mxu0 %v844
    %1687 = vmatmul.mubr.bf16.gmra.mxu0 %v843
    %v1688 = vpop.f32.mrf.mxu0
    %v1689 = vadd.f32 0.0, %v1688
    %v1690 = vpop.f32.mrf.mxu0
    %v1691 = vadd.f32 0.0, %v1690
    %v1692 = vpop.f32.mrf.mxu0
    %v1693 = vpop.f32.mrf.mxu0
    %1694 = vdwg.mxu0
    %1695 = vmatprep.subr.bf16.mxu0 %v1418
    %1696 = vmatpush1.bf16.msra.mxu0 %v1417
    %1697 = vmatprep.subr.bf16.mxu0 %v1410
    %1698 = vmatpush1.bf16.msra.mxu0 %v1409
    %1699 = vmatprep.subr.bf16.mxu0 %v1402
    %1700 = vmatpush1.bf16.msra.mxu0 %v1401
    %1701 = vmatprep.subr.bf16.mxu0 %v1394
    %1702 = vmatpush1.bf16.msra.mxu0 %v1393
    %1703 = vmatprep.subr.bf16.mxu0 %v1386
    %1704 = vmatpush1.bf16.msra.mxu0 %v1385
    %1705 = vmatprep.subr.bf16.mxu0 %v1378
    %1706 = vmatpush1.bf16.msra.mxu0 %v1377
    %1707 = vmatprep.subr.bf16.mxu0 %v1370
    %1708 = vmatpush1.bf16.msra.mxu0 %v1369
    %1709 = vmatprep.subr.bf16.mxu0 %v1362
    %1710 = vmatpush1.bf16.msra.mxu0 %v1361
    %1711 = vmatprep.subr.bf16.mxu0 %v1482
    %1712 = vmatpush2.bf16.msra.mxu0 %v1481
    %1713 = vmatprep.subr.bf16.mxu0 %v1474
    %1714 = vmatpush2.bf16.msra.mxu0 %v1473
    %1715 = vmatprep.subr.bf16.mxu0 %v1466
    %1716 = vmatpush2.bf16.msra.mxu0 %v1465
    %1717 = vmatprep.subr.bf16.mxu0 %v1458
    %1718 = vmatpush2.bf16.msra.mxu0 %v1457
    %1719 = vmatprep.subr.bf16.mxu0 %v1450
    %1720 = vmatpush2.bf16.msra.mxu0 %v1449
    %1721 = vmatprep.subr.bf16.mxu0 %v1442
    %1722 = vmatpush2.bf16.msra.mxu0 %v1441
    %1723 = vmatprep.subr.bf16.mxu0 %v1434
    %1724 = vmatpush2.bf16.msra.mxu0 %v1433
    %1725 = vmatprep.subr.bf16.mxu0 %v1426
    %1726 = vmatpush2.bf16.msra.mxu0 %v1425
    %1727 = vmatprep.mubr.bf16.mxu0 %v844
    %1728 = vmatmul.mubr.bf16.gmra.mxu0 %v843
    %v1729 = vpop.f32.mrf.mxu0
    %v1730 = vadd.f32 0.0, %v1729
    %v1731 = vpop.f32.mrf.mxu0
    %v1732 = vadd.f32 0.0, %v1731
    %v1733 = vpop.f32.mrf.mxu0
    %v1734 = vpop.f32.mrf.mxu0
    %1735 = vdwg.mxu0
    %1736 = vmatprep.subr.bf16.mxu0 %v1420
    %1737 = vmatpush1.bf16.msra.mxu0 %v1419
    %1738 = vmatprep.subr.bf16.mxu0 %v1412
    %1739 = vmatpush1.bf16.msra.mxu0 %v1411
    %1740 = vmatprep.subr.bf16.mxu0 %v1404
    %1741 = vmatpush1.bf16.msra.mxu0 %v1403
    %1742 = vmatprep.subr.bf16.mxu0 %v1396
    %1743 = vmatpush1.bf16.msra.mxu0 %v1395
    %1744 = vmatprep.subr.bf16.mxu0 %v1388
    %1745 = vmatpush1.bf16.msra.mxu0 %v1387
    %1746 = vmatprep.subr.bf16.mxu0 %v1380
    %1747 = vmatpush1.bf16.msra.mxu0 %v1379
    %1748 = vmatprep.subr.bf16.mxu0 %v1372
    %1749 = vmatpush1.bf16.msra.mxu0 %v1371
    %1750 = vmatprep.subr.bf16.mxu0 %v1364
    %1751 = vmatpush1.bf16.msra.mxu0 %v1363
    %1752 = vmatprep.subr.bf16.mxu0 %v1484
    %1753 = vmatpush2.bf16.msra.mxu0 %v1483
    %1754 = vmatprep.subr.bf16.mxu0 %v1476
    %1755 = vmatpush2.bf16.msra.mxu0 %v1475
    %1756 = vmatprep.subr.bf16.mxu0 %v1468
    %1757 = vmatpush2.bf16.msra.mxu0 %v1467
    %1758 = vmatprep.subr.bf16.mxu0 %v1460
    %1759 = vmatpush2.bf16.msra.mxu0 %v1459
    %1760 = vmatprep.subr.bf16.mxu0 %v1452
    %1761 = vmatpush2.bf16.msra.mxu0 %v1451
    %1762 = vmatprep.subr.bf16.mxu0 %v1444
    %1763 = vmatpush2.bf16.msra.mxu0 %v1443
    %1764 = vmatprep.subr.bf16.mxu0 %v1436
    %1765 = vmatpush2.bf16.msra.mxu0 %v1435
    %1766 = vmatprep.subr.bf16.mxu0 %v1428
    %1767 = vmatpush2.bf16.msra.mxu0 %v1427
    %1768 = vmatprep.mubr.bf16.mxu0 %v844
    %1769 = vmatmul.mubr.bf16.gmra.mxu0 %v843
    %v1770 = vpop.f32.mrf.mxu0
    %v1771 = vadd.f32 0.0, %v1770
    %v1772 = vpop.f32.mrf.mxu0
    %v1773 = vadd.f32 0.0, %v1772
    %v1774 = vpop.f32.mrf.mxu0
    %v1775 = vpop.f32.mrf.mxu0
    %1776 = vdwg.mxu0
    %v1777 = vadd.f32 %v835, %v1648
    %v1778 = vadd.f32 %v836, %v1650
    %v1779 = vadd.f32 %v837, %v1689
    %v1780 = vadd.f32 %v838, %v1691
    %v1781 = vadd.f32 %v839, %v1730
    %v1782 = vadd.f32 %v840, %v1732
    %v1783 = vadd.f32 %v841, %v1771
    %v1784 = vadd.f32 %v842, %v1773
    %v1785 = vxor.u32 %v1777, 2147483648
    %v1786 = vxor.u32 %v1778, 2147483648
    %v1787 = vmul.f32 %v1785, 1.442695
    %v1788 = vpow.pop %v1787
    %v1789 = vmul.f32 %v1786, 1.442695
    %v1790 = vpow.pop %v1789
    %v1791 = vadd.f32 %v1788, 1.0
    %v1792 = vadd.f32 %v1790, 1.0
    %v1793 = vrcp.pop %v1791
    %v1794 = vmul.f32 1.0, %v1793
    %v1795 = vrcp.pop %v1792
    %v1796 = vmul.f32 1.0, %v1795
    %v1797 = vxor.u32 %v1779, 2147483648
    %v1798 = vxor.u32 %v1780, 2147483648
    %v1799 = vmul.f32 %v1797, 1.442695
    %v1800 = vpow.pop %v1799
    %v1801 = vmul.f32 %v1798, 1.442695
    %v1802 = vpow.pop %v1801
    %v1803 = vadd.f32 %v1800, 1.0
    %v1804 = vadd.f32 %v1802, 1.0
    %v1805 = vrcp.pop %v1803
    %v1806 = vmul.f32 1.0, %v1805
    %v1807 = vrcp.pop %v1804
    %v1808 = vmul.f32 1.0, %v1807
    %v1809 = vtanh.pop %v1781
    %v1810 = vtanh.pop %v1782
    %v1811 = vxor.u32 %v1783, 2147483648
    %v1812 = vxor.u32 %v1784, 2147483648
    %v1813 = vmul.f32 %v1811, 1.442695
    %v1814 = vpow.pop %v1813
    %v1815 = vmul.f32 %v1812, 1.442695
    %v1816 = vpow.pop %v1815
    %v1817 = vadd.f32 %v1814, 1.0
    %v1818 = vadd.f32 %v1816, 1.0
    %v1819 = vrcp.pop %v1817
    %v1820 = vmul.f32 1.0, %v1819
    %v1821 = vrcp.pop %v1818
    %v1822 = vmul.f32 1.0, %v1821
    %v1823 = vmul.f32 %v1806, %v829
    %v1824 = vmul.f32 %v1808, %v830
    %v1825 = vmul.f32 %v1794, %v1809
    %v1826 = vmul.f32 %v1796, %v1810
    %v1827 = vadd.f32 %v1823, %v1825
    %v1828 = vadd.f32 %v1824, %v1826
    %v1829 = vtanh.pop %v1827
    %v1830 = vtanh.pop %v1828
    %v1831 = vmul.f32 %v1820, %v1829
    %v1832 = vmul.f32 %v1822, %v1830
    %s1833 = smul.u32 4, 32
    %s1834 = smul.u32 %s1833, 8
    %s1835 = sshll.u32 %s1834, 4
    %1836 = dma.done [#allocation5], %s1835
    %s1837 = sshll.u32 %s1834, 4
    %1838 = dma.done %s184, %s1837
    %v1839 = vpack.c.bf16 %v1831, %v1831
    %v1840 = vpack.c.bf16 %v1832, %v1832
    %v1841 = vld [vmem:[#allocation3] sm:$0xff]
    %v1842 = vld [vmem:[#allocation3 + $0x8] sm:$0xff]
    %v1843 = vld [vmem:[#allocation3 + $0x10] sm:$0xff]
    %v1844 = vld [vmem:[#allocation3 + $0x18] sm:$0xff]
    %v1845 = vld [vmem:[#allocation3 + $0x20] sm:$0xff]
    %v1846 = vld [vmem:[#allocation3 + $0x28] sm:$0xff]
    %v1847 = vld [vmem:[#allocation3 + $0x30] sm:$0xff]
    %v1848 = vld [vmem:[#allocation3 + $0x38] sm:$0xff]
    %v1849 = vld [vmem:[#allocation3 + $0x40] sm:$0xff]
    %v1850 = vld [vmem:[#allocation3 + $0x48] sm:$0xff]
    %v1851 = vld [vmem:[#allocation3 + $0x50] sm:$0xff]
    %v1852 = vld [vmem:[#allocation3 + $0x58] sm:$0xff]
    %v1853 = vld [vmem:[#allocation3 + $0x60] sm:$0xff]
    %v1854 = vld [vmem:[#allocation3 + $0x68] sm:$0xff]
    %v1855 = vld [vmem:[#allocation3 + $0x70] sm:$0xff]
    %v1856 = vld [vmem:[#allocation3 + $0x78] sm:$0xff]
    %v1857 = vld [vmem:[#allocation3 + $0x80] sm:$0xff]
    %v1858 = vld [vmem:[#allocation3 + $0x88] sm:$0xff]
    %v1859 = vld [vmem:[#allocation3 + $0x90] sm:$0xff]
    %v1860 = vld [vmem:[#allocation3 + $0x98] sm:$0xff]
    %v1861 = vld [vmem:[#allocation3 + $0xa0] sm:$0xff]
    %v1862 = vld [vmem:[#allocation3 + $0xa8] sm:$0xff]
    %v1863 = vld [vmem:[#allocation3 + $0xb0] sm:$0xff]
    %v1864 = vld [vmem:[#allocation3 + $0xb8] sm:$0xff]
    %v1865 = vld [vmem:[#allocation3 + $0xc0] sm:$0xff]
    %v1866 = vld [vmem:[#allocation3 + $0xc8] sm:$0xff]
    %v1867 = vld [vmem:[#allocation3 + $0xd0] sm:$0xff]
    %v1868 = vld [vmem:[#allocation3 + $0xd8] sm:$0xff]
    %v1869 = vld [vmem:[#allocation3 + $0xe0] sm:$0xff]
    %v1870 = vld [vmem:[#allocation3 + $0xe8] sm:$0xff]
    %v1871 = vld [vmem:[#allocation3 + $0xf0] sm:$0xff]
    %v1872 = vld [vmem:[#allocation3 + $0xf8] sm:$0xff]
    %v1873 = vld [vmem:[#allocation3 + $0x100] sm:$0xff]
    %v1874 = vld [vmem:[#allocation3 + $0x108] sm:$0xff]
    %v1875 = vld [vmem:[#allocation3 + $0x110] sm:$0xff]
    %v1876 = vld [vmem:[#allocation3 + $0x118] sm:$0xff]
    %v1877 = vld [vmem:[#allocation3 + $0x120] sm:$0xff]
    %v1878 = vld [vmem:[#allocation3 + $0x128] sm:$0xff]
    %v1879 = vld [vmem:[#allocation3 + $0x130] sm:$0xff]
    %v1880 = vld [vmem:[#allocation3 + $0x138] sm:$0xff]
    %v1881 = vld [vmem:[#allocation3 + $0x140] sm:$0xff]
    %v1882 = vld [vmem:[#allocation3 + $0x148] sm:$0xff]
    %v1883 = vld [vmem:[#allocation3 + $0x150] sm:$0xff]
    %v1884 = vld [vmem:[#allocation3 + $0x158] sm:$0xff]
    %v1885 = vld [vmem:[#allocation3 + $0x160] sm:$0xff]
    %v1886 = vld [vmem:[#allocation3 + $0x168] sm:$0xff]
    %v1887 = vld [vmem:[#allocation3 + $0x170] sm:$0xff]
    %v1888 = vld [vmem:[#allocation3 + $0x178] sm:$0xff]
    %v1889 = vld [vmem:[#allocation3 + $0x180] sm:$0xff]
    %v1890 = vld [vmem:[#allocation3 + $0x188] sm:$0xff]
    %v1891 = vld [vmem:[#allocation3 + $0x190] sm:$0xff]
    %v1892 = vld [vmem:[#allocation3 + $0x198] sm:$0xff]
    %v1893 = vld [vmem:[#allocation3 + $0x1a0] sm:$0xff]
    %v1894 = vld [vmem:[#allocation3 + $0x1a8] sm:$0xff]
    %v1895 = vld [vmem:[#allocation3 + $0x1b0] sm:$0xff]
    %v1896 = vld [vmem:[#allocation3 + $0x1b8] sm:$0xff]
    %v1897 = vld [vmem:[#allocation3 + $0x1c0] sm:$0xff]
    %v1898 = vld [vmem:[#allocation3 + $0x1c8] sm:$0xff]
    %v1899 = vld [vmem:[#allocation3 + $0x1d0] sm:$0xff]
    %v1900 = vld [vmem:[#allocation3 + $0x1d8] sm:$0xff]
    %v1901 = vld [vmem:[#allocation3 + $0x1e0] sm:$0xff]
    %v1902 = vld [vmem:[#allocation3 + $0x1e8] sm:$0xff]
    %v1903 = vld [vmem:[#allocation3 + $0x1f0] sm:$0xff]
    %v1904 = vld [vmem:[#allocation3 + $0x1f8] sm:$0xff]
    %v1905 = vld [vmem:[#allocation3 + $0x200] sm:$0xff]
    %v1906 = vld [vmem:[#allocation3 + $0x208] sm:$0xff]
    %v1907 = vld [vmem:[#allocation3 + $0x210] sm:$0xff]
    %v1908 = vld [vmem:[#allocation3 + $0x218] sm:$0xff]
    %v1909 = vld [vmem:[#allocation3 + $0x220] sm:$0xff]
    %v1910 = vld [vmem:[#allocation3 + $0x228] sm:$0xff]
    %v1911 = vld [vmem:[#allocation3 + $0x230] sm:$0xff]
    %v1912 = vld [vmem:[#allocation3 + $0x238] sm:$0xff]
    %v1913 = vld [vmem:[#allocation3 + $0x240] sm:$0xff]
    %v1914 = vld [vmem:[#allocation3 + $0x248] sm:$0xff]
    %v1915 = vld [vmem:[#allocation3 + $0x250] sm:$0xff]
    %v1916 = vld [vmem:[#allocation3 + $0x258] sm:$0xff]
    %v1917 = vld [vmem:[#allocation3 + $0x260] sm:$0xff]
    %v1918 = vld [vmem:[#allocation3 + $0x268] sm:$0xff]
    %v1919 = vld [vmem:[#allocation3 + $0x270] sm:$0xff]
    %v1920 = vld [vmem:[#allocation3 + $0x278] sm:$0xff]
    %v1921 = vld [vmem:[#allocation3 + $0x280] sm:$0xff]
    %v1922 = vld [vmem:[#allocation3 + $0x288] sm:$0xff]
    %v1923 = vld [vmem:[#allocation3 + $0x290] sm:$0xff]
    %v1924 = vld [vmem:[#allocation3 + $0x298] sm:$0xff]
    %v1925 = vld [vmem:[#allocation3 + $0x2a0] sm:$0xff]
    %v1926 = vld [vmem:[#allocation3 + $0x2a8] sm:$0xff]
    %v1927 = vld [vmem:[#allocation3 + $0x2b0] sm:$0xff]
    %v1928 = vld [vmem:[#allocation3 + $0x2b8] sm:$0xff]
    %v1929 = vld [vmem:[#allocation3 + $0x2c0] sm:$0xff]
    %v1930 = vld [vmem:[#allocation3 + $0x2c8] sm:$0xff]
    %v1931 = vld [vmem:[#allocation3 + $0x2d0] sm:$0xff]
    %v1932 = vld [vmem:[#allocation3 + $0x2d8] sm:$0xff]
    %v1933 = vld [vmem:[#allocation3 + $0x2e0] sm:$0xff]
    %v1934 = vld [vmem:[#allocation3 + $0x2e8] sm:$0xff]
    %v1935 = vld [vmem:[#allocation3 + $0x2f0] sm:$0xff]
    %v1936 = vld [vmem:[#allocation3 + $0x2f8] sm:$0xff]
    %v1937 = vld [vmem:[#allocation3 + $0x300] sm:$0xff]
    %v1938 = vld [vmem:[#allocation3 + $0x308] sm:$0xff]
    %v1939 = vld [vmem:[#allocation3 + $0x310] sm:$0xff]
    %v1940 = vld [vmem:[#allocation3 + $0x318] sm:$0xff]
    %v1941 = vld [vmem:[#allocation3 + $0x320] sm:$0xff]
    %v1942 = vld [vmem:[#allocation3 + $0x328] sm:$0xff]
    %v1943 = vld [vmem:[#allocation3 + $0x330] sm:$0xff]
    %v1944 = vld [vmem:[#allocation3 + $0x338] sm:$0xff]
    %v1945 = vld [vmem:[#allocation3 + $0x340] sm:$0xff]
    %v1946 = vld [vmem:[#allocation3 + $0x348] sm:$0xff]
    %v1947 = vld [vmem:[#allocation3 + $0x350] sm:$0xff]
    %v1948 = vld [vmem:[#allocation3 + $0x358] sm:$0xff]
    %v1949 = vld [vmem:[#allocation3 + $0x360] sm:$0xff]
    %v1950 = vld [vmem:[#allocation3 + $0x368] sm:$0xff]
    %v1951 = vld [vmem:[#allocation3 + $0x370] sm:$0xff]
    %v1952 = vld [vmem:[#allocation3 + $0x378] sm:$0xff]
    %v1953 = vld [vmem:[#allocation3 + $0x380] sm:$0xff]
    %v1954 = vld [vmem:[#allocation3 + $0x388] sm:$0xff]
    %v1955 = vld [vmem:[#allocation3 + $0x390] sm:$0xff]
    %v1956 = vld [vmem:[#allocation3 + $0x398] sm:$0xff]
    %v1957 = vld [vmem:[#allocation3 + $0x3a0] sm:$0xff]
    %v1958 = vld [vmem:[#allocation3 + $0x3a8] sm:$0xff]
    %v1959 = vld [vmem:[#allocation3 + $0x3b0] sm:$0xff]
    %v1960 = vld [vmem:[#allocation3 + $0x3b8] sm:$0xff]
    %v1961 = vld [vmem:[#allocation3 + $0x3c0] sm:$0xff]
    %v1962 = vld [vmem:[#allocation3 + $0x3c8] sm:$0xff]
    %v1963 = vld [vmem:[#allocation3 + $0x3d0] sm:$0xff]
    %v1964 = vld [vmem:[#allocation3 + $0x3d8] sm:$0xff]
    %v1965 = vld [vmem:[#allocation3 + $0x3e0] sm:$0xff]
    %v1966 = vld [vmem:[#allocation3 + $0x3e8] sm:$0xff]
    %v1967 = vld [vmem:[#allocation3 + $0x3f0] sm:$0xff]
    %v1968 = vld [vmem:[#allocation3 + $0x3f8] sm:$0xff]
    %v1969 = vpack.c.bf16 %v831, %v831
    %v1970 = vpack.c.bf16 %v832, %v832
    %v1971 = vld [vmem:[#allocation4] sm:$0xff]
    %v1972 = vld [vmem:[#allocation4 + $0x8] sm:$0xff]
    %v1973 = vld [vmem:[#allocation4 + $0x10] sm:$0xff]
    %v1974 = vld [vmem:[#allocation4 + $0x18] sm:$0xff]
    %v1975 = vld [vmem:[#allocation4 + $0x20] sm:$0xff]
    %v1976 = vld [vmem:[#allocation4 + $0x28] sm:$0xff]
    %v1977 = vld [vmem:[#allocation4 + $0x30] sm:$0xff]
    %v1978 = vld [vmem:[#allocation4 + $0x38] sm:$0xff]
    %v1979 = vld [vmem:[#allocation4 + $0x40] sm:$0xff]
    %v1980 = vld [vmem:[#allocation4 + $0x48] sm:$0xff]
    %v1981 = vld [vmem:[#allocation4 + $0x50] sm:$0xff]
    %v1982 = vld [vmem:[#allocation4 + $0x58] sm:$0xff]
    %v1983 = vld [vmem:[#allocation4 + $0x60] sm:$0xff]
    %v1984 = vld [vmem:[#allocation4 + $0x68] sm:$0xff]
    %v1985 = vld [vmem:[#allocation4 + $0x70] sm:$0xff]
    %v1986 = vld [vmem:[#allocation4 + $0x78] sm:$0xff]
    %v1987 = vld [vmem:[#allocation4 + $0x80] sm:$0xff]
    %v1988 = vld [vmem:[#allocation4 + $0x88] sm:$0xff]
    %v1989 = vld [vmem:[#allocation4 + $0x90] sm:$0xff]
    %v1990 = vld [vmem:[#allocation4 + $0x98] sm:$0xff]
    %v1991 = vld [vmem:[#allocation4 + $0xa0] sm:$0xff]
    %v1992 = vld [vmem:[#allocation4 + $0xa8] sm:$0xff]
    %v1993 = vld [vmem:[#allocation4 + $0xb0] sm:$0xff]
    %v1994 = vld [vmem:[#allocation4 + $0xb8] sm:$0xff]
    %v1995 = vld [vmem:[#allocation4 + $0xc0] sm:$0xff]
    %v1996 = vld [vmem:[#allocation4 + $0xc8] sm:$0xff]
    %v1997 = vld [vmem:[#allocation4 + $0xd0] sm:$0xff]
    %v1998 = vld [vmem:[#allocation4 + $0xd8] sm:$0xff]
    %v1999 = vld [vmem:[#allocation4 + $0xe0] sm:$0xff]
    %v2000 = vld [vmem:[#allocation4 + $0xe8] sm:$0xff]
    %v2001 = vld [vmem:[#allocation4 + $0xf0] sm:$0xff]
    %v2002 = vld [vmem:[#allocation4 + $0xf8] sm:$0xff]
    %v2003 = vld [vmem:[#allocation4 + $0x100] sm:$0xff]
    %v2004 = vld [vmem:[#allocation4 + $0x108] sm:$0xff]
    %v2005 = vld [vmem:[#allocation4 + $0x110] sm:$0xff]
    %v2006 = vld [vmem:[#allocation4 + $0x118] sm:$0xff]
    %v2007 = vld [vmem:[#allocation4 + $0x120] sm:$0xff]
    %v2008 = vld [vmem:[#allocation4 + $0x128] sm:$0xff]
    %v2009 = vld [vmem:[#allocation4 + $0x130] sm:$0xff]
    %v2010 = vld [vmem:[#allocation4 + $0x138] sm:$0xff]
    %v2011 = vld [vmem:[#allocation4 + $0x140] sm:$0xff]
    %v2012 = vld [vmem:[#allocation4 + $0x148] sm:$0xff]
    %v2013 = vld [vmem:[#allocation4 + $0x150] sm:$0xff]
    %v2014 = vld [vmem:[#allocation4 + $0x158] sm:$0xff]
    %v2015 = vld [vmem:[#allocation4 + $0x160] sm:$0xff]
    %v2016 = vld [vmem:[#allocation4 + $0x168] sm:$0xff]
    %v2017 = vld [vmem:[#allocation4 + $0x170] sm:$0xff]
    %v2018 = vld [vmem:[#allocation4 + $0x178] sm:$0xff]
    %v2019 = vld [vmem:[#allocation4 + $0x180] sm:$0xff]
    %v2020 = vld [vmem:[#allocation4 + $0x188] sm:$0xff]
    %v2021 = vld [vmem:[#allocation4 + $0x190] sm:$0xff]
    %v2022 = vld [vmem:[#allocation4 + $0x198] sm:$0xff]
    %v2023 = vld [vmem:[#allocation4 + $0x1a0] sm:$0xff]
    %v2024 = vld [vmem:[#allocation4 + $0x1a8] sm:$0xff]
    %v2025 = vld [vmem:[#allocation4 + $0x1b0] sm:$0xff]
    %v2026 = vld [vmem:[#allocation4 + $0x1b8] sm:$0xff]
    %v2027 = vld [vmem:[#allocation4 + $0x1c0] sm:$0xff]
    %v2028 = vld [vmem:[#allocation4 + $0x1c8] sm:$0xff]
    %v2029 = vld [vmem:[#allocation4 + $0x1d0] sm:$0xff]
    %v2030 = vld [vmem:[#allocation4 + $0x1d8] sm:$0xff]
    %v2031 = vld [vmem:[#allocation4 + $0x1e0] sm:$0xff]
    %v2032 = vld [vmem:[#allocation4 + $0x1e8] sm:$0xff]
    %v2033 = vld [vmem:[#allocation4 + $0x1f0] sm:$0xff]
    %v2034 = vld [vmem:[#allocation4 + $0x1f8] sm:$0xff]
    %v2035 = vld [vmem:[#allocation4 + $0x200] sm:$0xff]
    %v2036 = vld [vmem:[#allocation4 + $0x208] sm:$0xff]
    %v2037 = vld [vmem:[#allocation4 + $0x210] sm:$0xff]
    %v2038 = vld [vmem:[#allocation4 + $0x218] sm:$0xff]
    %v2039 = vld [vmem:[#allocation4 + $0x220] sm:$0xff]
    %v2040 = vld [vmem:[#allocation4 + $0x228] sm:$0xff]
    %v2041 = vld [vmem:[#allocation4 + $0x230] sm:$0xff]
    %v2042 = vld [vmem:[#allocation4 + $0x238] sm:$0xff]
    %v2043 = vld [vmem:[#allocation4 + $0x240] sm:$0xff]
    %v2044 = vld [vmem:[#allocation4 + $0x248] sm:$0xff]
    %v2045 = vld [vmem:[#allocation4 + $0x250] sm:$0xff]
    %v2046 = vld [vmem:[#allocation4 + $0x258] sm:$0xff]
    %v2047 = vld [vmem:[#allocation4 + $0x260] sm:$0xff]
    %v2048 = vld [vmem:[#allocation4 + $0x268] sm:$0xff]
    %v2049 = vld [vmem:[#allocation4 + $0x270] sm:$0xff]
    %v2050 = vld [vmem:[#allocation4 + $0x278] sm:$0xff]
    %v2051 = vld [vmem:[#allocation4 + $0x280] sm:$0xff]
    %v2052 = vld [vmem:[#allocation4 + $0x288] sm:$0xff]
    %v2053 = vld [vmem:[#allocation4 + $0x290] sm:$0xff]
    %v2054 = vld [vmem:[#allocation4 + $0x298] sm:$0xff]
    %v2055 = vld [vmem:[#allocation4 + $0x2a0] sm:$0xff]
    %v2056 = vld [vmem:[#allocation4 + $0x2a8] sm:$0xff]
    %v2057 = vld [vmem:[#allocation4 + $0x2b0] sm:$0xff]
    %v2058 = vld [vmem:[#allocation4 + $0x2b8] sm:$0xff]
    %v2059 = vld [vmem:[#allocation4 + $0x2c0] sm:$0xff]
    %v2060 = vld [vmem:[#allocation4 + $0x2c8] sm:$0xff]
    %v2061 = vld [vmem:[#allocation4 + $0x2d0] sm:$0xff]
    %v2062 = vld [vmem:[#allocation4 + $0x2d8] sm:$0xff]
    %v2063 = vld [vmem:[#allocation4 + $0x2e0] sm:$0xff]
    %v2064 = vld [vmem:[#allocation4 + $0x2e8] sm:$0xff]
    %v2065 = vld [vmem:[#allocation4 + $0x2f0] sm:$0xff]
    %v2066 = vld [vmem:[#allocation4 + $0x2f8] sm:$0xff]
    %v2067 = vld [vmem:[#allocation4 + $0x300] sm:$0xff]
    %v2068 = vld [vmem:[#allocation4 + $0x308] sm:$0xff]
    %v2069 = vld [vmem:[#allocation4 + $0x310] sm:$0xff]
    %v2070 = vld [vmem:[#allocation4 + $0x318] sm:$0xff]
    %v2071 = vld [vmem:[#allocation4 + $0x320] sm:$0xff]
    %v2072 = vld [vmem:[#allocation4 + $0x328] sm:$0xff]
    %v2073 = vld [vmem:[#allocation4 + $0x330] sm:$0xff]
    %v2074 = vld [vmem:[#allocation4 + $0x338] sm:$0xff]
    %v2075 = vld [vmem:[#allocation4 + $0x340] sm:$0xff]
    %v2076 = vld [vmem:[#allocation4 + $0x348] sm:$0xff]
    %v2077 = vld [vmem:[#allocation4 + $0x350] sm:$0xff]
    %v2078 = vld [vmem:[#allocation4 + $0x358] sm:$0xff]
    %v2079 = vld [vmem:[#allocation4 + $0x360] sm:$0xff]
    %v2080 = vld [vmem:[#allocation4 + $0x368] sm:$0xff]
    %v2081 = vld [vmem:[#allocation4 + $0x370] sm:$0xff]
    %v2082 = vld [vmem:[#allocation4 + $0x378] sm:$0xff]
    %v2083 = vld [vmem:[#allocation4 + $0x380] sm:$0xff]
    %v2084 = vld [vmem:[#allocation4 + $0x388] sm:$0xff]
    %v2085 = vld [vmem:[#allocation4 + $0x390] sm:$0xff]
    %v2086 = vld [vmem:[#allocation4 + $0x398] sm:$0xff]
    %v2087 = vld [vmem:[#allocation4 + $0x3a0] sm:$0xff]
    %v2088 = vld [vmem:[#allocation4 + $0x3a8] sm:$0xff]
    %v2089 = vld [vmem:[#allocation4 + $0x3b0] sm:$0xff]
    %v2090 = vld [vmem:[#allocation4 + $0x3b8] sm:$0xff]
    %v2091 = vld [vmem:[#allocation4 + $0x3c0] sm:$0xff]
    %v2092 = vld [vmem:[#allocation4 + $0x3c8] sm:$0xff]
    %v2093 = vld [vmem:[#allocation4 + $0x3d0] sm:$0xff]
    %v2094 = vld [vmem:[#allocation4 + $0x3d8] sm:$0xff]
    %v2095 = vld [vmem:[#allocation4 + $0x3e0] sm:$0xff]
    %v2096 = vld [vmem:[#allocation4 + $0x3e8] sm:$0xff]
    %v2097 = vld [vmem:[#allocation4 + $0x3f0] sm:$0xff]
    %v2098 = vld [vmem:[#allocation4 + $0x3f8] sm:$0xff]
    %v2227 = vunpack.c.l.b16 %v1971
    %v2228 = vunpack.c.h.b16 %v1971
    %v2229 = vunpack.c.l.b16 %v1972
    %v2230 = vunpack.c.h.b16 %v1972
    %v2231 = vunpack.c.l.b16 %v1973
    %v2232 = vunpack.c.h.b16 %v1973
    %v2233 = vunpack.c.l.b16 %v1974
    %v2234 = vunpack.c.h.b16 %v1974
    %v2235 = vunpack.c.l.b16 %v1975
    %v2236 = vunpack.c.h.b16 %v1975
    %v2237 = vunpack.c.l.b16 %v1976
    %v2238 = vunpack.c.h.b16 %v1976
    %v2239 = vunpack.c.l.b16 %v1977
    %v2240 = vunpack.c.h.b16 %v1977
    %v2241 = vunpack.c.l.b16 %v1978
    %v2242 = vunpack.c.h.b16 %v1978
    %v2243 = vunpack.c.l.b16 %v1979
    %v2244 = vunpack.c.h.b16 %v1979
    %v2245 = vunpack.c.l.b16 %v1980
    %v2246 = vunpack.c.h.b16 %v1980
    %v2247 = vunpack.c.l.b16 %v1981
    %v2248 = vunpack.c.h.b16 %v1981
    %v2249 = vunpack.c.l.b16 %v1982
    %v2250 = vunpack.c.h.b16 %v1982
    %v2251 = vunpack.c.l.b16 %v1983
    %v2252 = vunpack.c.h.b16 %v1983
    %v2253 = vunpack.c.l.b16 %v1984
    %v2254 = vunpack.c.h.b16 %v1984
    %v2255 = vunpack.c.l.b16 %v1985
    %v2256 = vunpack.c.h.b16 %v1985
    %v2257 = vunpack.c.l.b16 %v1986
    %v2258 = vunpack.c.h.b16 %v1986
    %v2259 = vunpack.c.l.b16 %v1987
    %v2260 = vunpack.c.h.b16 %v1987
    %v2261 = vunpack.c.l.b16 %v1988
    %v2262 = vunpack.c.h.b16 %v1988
    %v2263 = vunpack.c.l.b16 %v1989
    %v2264 = vunpack.c.h.b16 %v1989
    %v2265 = vunpack.c.l.b16 %v1990
    %v2266 = vunpack.c.h.b16 %v1990
    %v2267 = vunpack.c.l.b16 %v1991
    %v2268 = vunpack.c.h.b16 %v1991
    %v2269 = vunpack.c.l.b16 %v1992
    %v2270 = vunpack.c.h.b16 %v1992
    %v2271 = vunpack.c.l.b16 %v1993
    %v2272 = vunpack.c.h.b16 %v1993
    %v2273 = vunpack.c.l.b16 %v1994
    %v2274 = vunpack.c.h.b16 %v1994
    %v2275 = vunpack.c.l.b16 %v1995
    %v2276 = vunpack.c.h.b16 %v1995
    %v2277 = vunpack.c.l.b16 %v1996
    %v2278 = vunpack.c.h.b16 %v1996
    %v2279 = vunpack.c.l.b16 %v1997
    %v2280 = vunpack.c.h.b16 %v1997
    %v2281 = vunpack.c.l.b16 %v1998
    %v2282 = vunpack.c.h.b16 %v1998
    %v2283 = vunpack.c.l.b16 %v1999
    %v2284 = vunpack.c.h.b16 %v1999
    %v2285 = vunpack.c.l.b16 %v2000
    %v2286 = vunpack.c.h.b16 %v2000
    %v2287 = vunpack.c.l.b16 %v2001
    %v2288 = vunpack.c.h.b16 %v2001
    %v2289 = vunpack.c.l.b16 %v2002
    %v2290 = vunpack.c.h.b16 %v2002
    %v2291 = vunpack.c.l.b16 %v2003
    %v2292 = vunpack.c.h.b16 %v2003
    %v2293 = vunpack.c.l.b16 %v2004
    %v2294 = vunpack.c.h.b16 %v2004
    %v2295 = vunpack.c.l.b16 %v2005
    %v2296 = vunpack.c.h.b16 %v2005
    %v2297 = vunpack.c.l.b16 %v2006
    %v2298 = vunpack.c.h.b16 %v2006
    %v2299 = vunpack.c.l.b16 %v2007
    %v2300 = vunpack.c.h.b16 %v2007
    %v2301 = vunpack.c.l.b16 %v2008
    %v2302 = vunpack.c.h.b16 %v2008
    %v2303 = vunpack.c.l.b16 %v2009
    %v2304 = vunpack.c.h.b16 %v2009
    %v2305 = vunpack.c.l.b16 %v2010
    %v2306 = vunpack.c.h.b16 %v2010
    %v2307 = vunpack.c.l.b16 %v2011
    %v2308 = vunpack.c.h.b16 %v2011
    %v2309 = vunpack.c.l.b16 %v2012
    %v2310 = vunpack.c.h.b16 %v2012
    %v2311 = vunpack.c.l.b16 %v2013
    %v2312 = vunpack.c.h.b16 %v2013
    %v2313 = vunpack.c.l.b16 %v2014
    %v2314 = vunpack.c.h.b16 %v2014
    %v2315 = vunpack.c.l.b16 %v2015
    %v2316 = vunpack.c.h.b16 %v2015
    %v2317 = vunpack.c.l.b16 %v2016
    %v2318 = vunpack.c.h.b16 %v2016
    %v2319 = vunpack.c.l.b16 %v2017
    %v2320 = vunpack.c.h.b16 %v2017
    %v2321 = vunpack.c.l.b16 %v2018
    %v2322 = vunpack.c.h.b16 %v2018
    %v2323 = vunpack.c.l.b16 %v2019
    %v2324 = vunpack.c.h.b16 %v2019
    %v2325 = vunpack.c.l.b16 %v2020
    %v2326 = vunpack.c.h.b16 %v2020
    %v2327 = vunpack.c.l.b16 %v2021
    %v2328 = vunpack.c.h.b16 %v2021
    %v2329 = vunpack.c.l.b16 %v2022
    %v2330 = vunpack.c.h.b16 %v2022
    %v2331 = vunpack.c.l.b16 %v2023
    %v2332 = vunpack.c.h.b16 %v2023
    %v2333 = vunpack.c.l.b16 %v2024
    %v2334 = vunpack.c.h.b16 %v2024
    %v2335 = vunpack.c.l.b16 %v2025
    %v2336 = vunpack.c.h.b16 %v2025
    %v2337 = vunpack.c.l.b16 %v2026
    %v2338 = vunpack.c.h.b16 %v2026
    %v2339 = vunpack.c.l.b16 %v2027
    %v2340 = vunpack.c.h.b16 %v2027
    %v2341 = vunpack.c.l.b16 %v2028
    %v2342 = vunpack.c.h.b16 %v2028
    %v2343 = vunpack.c.l.b16 %v2029
    %v2344 = vunpack.c.h.b16 %v2029
    %v2345 = vunpack.c.l.b16 %v2030
    %v2346 = vunpack.c.h.b16 %v2030
    %v2347 = vunpack.c.l.b16 %v2031
    %v2348 = vunpack.c.h.b16 %v2031
    %v2349 = vunpack.c.l.b16 %v2032
    %v2350 = vunpack.c.h.b16 %v2032
    %v2351 = vunpack.c.l.b16 %v2033
    %v2352 = vunpack.c.h.b16 %v2033
    %v2353 = vunpack.c.l.b16 %v2034
    %v2354 = vunpack.c.h.b16 %v2034
    %v2355 = vunpack.c.l.b16 %v2035
    %v2356 = vunpack.c.h.b16 %v2035
    %v2357 = vunpack.c.l.b16 %v2036
    %v2358 = vunpack.c.h.b16 %v2036
    %v2359 = vunpack.c.l.b16 %v2037
    %v2360 = vunpack.c.h.b16 %v2037
    %v2361 = vunpack.c.l.b16 %v2038
    %v2362 = vunpack.c.h.b16 %v2038
    %v2363 = vunpack.c.l.b16 %v2039
    %v2364 = vunpack.c.h.b16 %v2039
    %v2365 = vunpack.c.l.b16 %v2040
    %v2366 = vunpack.c.h.b16 %v2040
    %v2367 = vunpack.c.l.b16 %v2041
    %v2368 = vunpack.c.h.b16 %v2041
    %v2369 = vunpack.c.l.b16 %v2042
    %v2370 = vunpack.c.h.b16 %v2042
    %v2371 = vunpack.c.l.b16 %v2043
    %v2372 = vunpack.c.h.b16 %v2043
    %v2373 = vunpack.c.l.b16 %v2044
    %v2374 = vunpack.c.h.b16 %v2044
    %v2375 = vunpack.c.l.b16 %v2045
    %v2376 = vunpack.c.h.b16 %v2045
    %v2377 = vunpack.c.l.b16 %v2046
    %v2378 = vunpack.c.h.b16 %v2046
    %v2379 = vunpack.c.l.b16 %v2047
    %v2380 = vunpack.c.h.b16 %v2047
    %v2381 = vunpack.c.l.b16 %v2048
    %v2382 = vunpack.c.h.b16 %v2048
    %v2383 = vunpack.c.l.b16 %v2049
    %v2384 = vunpack.c.h.b16 %v2049
    %v2385 = vunpack.c.l.b16 %v2050
    %v2386 = vunpack.c.h.b16 %v2050
    %v2387 = vunpack.c.l.b16 %v2051
    %v2388 = vunpack.c.h.b16 %v2051
    %v2389 = vunpack.c.l.b16 %v2052
    %v2390 = vunpack.c.h.b16 %v2052
    %v2391 = vunpack.c.l.b16 %v2053
    %v2392 = vunpack.c.h.b16 %v2053
    %v2393 = vunpack.c.l.b16 %v2054
    %v2394 = vunpack.c.h.b16 %v2054
    %v2395 = vunpack.c.l.b16 %v2055
    %v2396 = vunpack.c.h.b16 %v2055
    %v2397 = vunpack.c.l.b16 %v2056
    %v2398 = vunpack.c.h.b16 %v2056
    %v2399 = vunpack.c.l.b16 %v2057
    %v2400 = vunpack.c.h.b16 %v2057
    %v2401 = vunpack.c.l.b16 %v2058
    %v2402 = vunpack.c.h.b16 %v2058
    %v2403 = vunpack.c.l.b16 %v2059
    %v2404 = vunpack.c.h.b16 %v2059
    %v2405 = vunpack.c.l.b16 %v2060
    %v2406 = vunpack.c.h.b16 %v2060
    %v2407 = vunpack.c.l.b16 %v2061
    %v2408 = vunpack.c.h.b16 %v2061
    %v2409 = vunpack.c.l.b16 %v2062
    %v2410 = vunpack.c.h.b16 %v2062
    %v2411 = vunpack.c.l.b16 %v2063
    %v2412 = vunpack.c.h.b16 %v2063
    %v2413 = vunpack.c.l.b16 %v2064
    %v2414 = vunpack.c.h.b16 %v2064
    %v2415 = vunpack.c.l.b16 %v2065
    %v2416 = vunpack.c.h.b16 %v2065
    %v2417 = vunpack.c.l.b16 %v2066
    %v2418 = vunpack.c.h.b16 %v2066
    %v2419 = vunpack.c.l.b16 %v2067
    %v2420 = vunpack.c.h.b16 %v2067
    %v2421 = vunpack.c.l.b16 %v2068
    %v2422 = vunpack.c.h.b16 %v2068
    %v2423 = vunpack.c.l.b16 %v2069
    %v2424 = vunpack.c.h.b16 %v2069
    %v2425 = vunpack.c.l.b16 %v2070
    %v2426 = vunpack.c.h.b16 %v2070
    %v2427 = vunpack.c.l.b16 %v2071
    %v2428 = vunpack.c.h.b16 %v2071
    %v2429 = vunpack.c.l.b16 %v2072
    %v2430 = vunpack.c.h.b16 %v2072
    %v2431 = vunpack.c.l.b16 %v2073
    %v2432 = vunpack.c.h.b16 %v2073
    %v2433 = vunpack.c.l.b16 %v2074
    %v2434 = vunpack.c.h.b16 %v2074
    %v2435 = vunpack.c.l.b16 %v2075
    %v2436 = vunpack.c.h.b16 %v2075
    %v2437 = vunpack.c.l.b16 %v2076
    %v2438 = vunpack.c.h.b16 %v2076
    %v2439 = vunpack.c.l.b16 %v2077
    %v2440 = vunpack.c.h.b16 %v2077
    %v2441 = vunpack.c.l.b16 %v2078
    %v2442 = vunpack.c.h.b16 %v2078
    %v2443 = vunpack.c.l.b16 %v2079
    %v2444 = vunpack.c.h.b16 %v2079
    %v2445 = vunpack.c.l.b16 %v2080
    %v2446 = vunpack.c.h.b16 %v2080
    %v2447 = vunpack.c.l.b16 %v2081
    %v2448 = vunpack.c.h.b16 %v2081
    %v2449 = vunpack.c.l.b16 %v2082
    %v2450 = vunpack.c.h.b16 %v2082
    %v2451 = vunpack.c.l.b16 %v2083
    %v2452 = vunpack.c.h.b16 %v2083
    %v2453 = vunpack.c.l.b16 %v2084
    %v2454 = vunpack.c.h.b16 %v2084
    %v2455 = vunpack.c.l.b16 %v2085
    %v2456 = vunpack.c.h.b16 %v2085
    %v2457 = vunpack.c.l.b16 %v2086
    %v2458 = vunpack.c.h.b16 %v2086
    %v2459 = vunpack.c.l.b16 %v2087
    %v2460 = vunpack.c.h.b16 %v2087
    %v2461 = vunpack.c.l.b16 %v2088
    %v2462 = vunpack.c.h.b16 %v2088
    %v2463 = vunpack.c.l.b16 %v2089
    %v2464 = vunpack.c.h.b16 %v2089
    %v2465 = vunpack.c.l.b16 %v2090
    %v2466 = vunpack.c.h.b16 %v2090
    %v2467 = vunpack.c.l.b16 %v2091
    %v2468 = vunpack.c.h.b16 %v2091
    %v2469 = vunpack.c.l.b16 %v2092
    %v2470 = vunpack.c.h.b16 %v2092
    %v2471 = vunpack.c.l.b16 %v2093
    %v2472 = vunpack.c.h.b16 %v2093
    %v2473 = vunpack.c.l.b16 %v2094
    %v2474 = vunpack.c.h.b16 %v2094
    %v2475 = vunpack.c.l.b16 %v2095
    %v2476 = vunpack.c.h.b16 %v2095
    %v2477 = vunpack.c.l.b16 %v2096
    %v2478 = vunpack.c.h.b16 %v2096
    %v2479 = vunpack.c.l.b16 %v2097
    %v2480 = vunpack.c.h.b16 %v2097
    %v2481 = vunpack.c.l.b16 %v2098
    %v2482 = vunpack.c.h.b16 %v2098
    %v2483 = vpack.c.b16 %v2235, %v2227
    %v2484 = vpack.c.b16 %v2236, %v2228
    %v2485 = vpack.c.b16 %v2237, %v2229
    %v2486 = vpack.c.b16 %v2238, %v2230
    %v2487 = vpack.c.b16 %v2239, %v2231
    %v2488 = vpack.c.b16 %v2240, %v2232
    %v2489 = vpack.c.b16 %v2241, %v2233
    %v2490 = vpack.c.b16 %v2242, %v2234
    %v2491 = vpack.c.b16 %v2251, %v2243
    %v2492 = vpack.c.b16 %v2252, %v2244
    %v2493 = vpack.c.b16 %v2253, %v2245
    %v2494 = vpack.c.b16 %v2254, %v2246
    %v2495 = vpack.c.b16 %v2255, %v2247
    %v2496 = vpack.c.b16 %v2256, %v2248
    %v2497 = vpack.c.b16 %v2257, %v2249
    %v2498 = vpack.c.b16 %v2258, %v2250
    %v2499 = vpack.c.b16 %v2267, %v2259
    %v2500 = vpack.c.b16 %v2268, %v2260
    %v2501 = vpack.c.b16 %v2269, %v2261
    %v2502 = vpack.c.b16 %v2270, %v2262
    %v2503 = vpack.c.b16 %v2271, %v2263
    %v2504 = vpack.c.b16 %v2272, %v2264
    %v2505 = vpack.c.b16 %v2273, %v2265
    %v2506 = vpack.c.b16 %v2274, %v2266
    %v2507 = vpack.c.b16 %v2283, %v2275
    %v2508 = vpack.c.b16 %v2284, %v2276
    %v2509 = vpack.c.b16 %v2285, %v2277
    %v2510 = vpack.c.b16 %v2286, %v2278
    %v2511 = vpack.c.b16 %v2287, %v2279
    %v2512 = vpack.c.b16 %v2288, %v2280
    %v2513 = vpack.c.b16 %v2289, %v2281
    %v2514 = vpack.c.b16 %v2290, %v2282
    %v2515 = vpack.c.b16 %v2299, %v2291
    %v2516 = vpack.c.b16 %v2300, %v2292
    %v2517 = vpack.c.b16 %v2301, %v2293
    %v2518 = vpack.c.b16 %v2302, %v2294
    %v2519 = vpack.c.b16 %v2303, %v2295
    %v2520 = vpack.c.b16 %v2304, %v2296
    %v2521 = vpack.c.b16 %v2305, %v2297
    %v2522 = vpack.c.b16 %v2306, %v2298
    %v2523 = vpack.c.b16 %v2315, %v2307
    %v2524 = vpack.c.b16 %v2316, %v2308
    %v2525 = vpack.c.b16 %v2317, %v2309
    %v2526 = vpack.c.b16 %v2318, %v2310
    %v2527 = vpack.c.b16 %v2319, %v2311
    %v2528 = vpack.c.b16 %v2320, %v2312
    %v2529 = vpack.c.b16 %v2321, %v2313
    %v2530 = vpack.c.b16 %v2322, %v2314
    %v2531 = vpack.c.b16 %v2331, %v2323
    %v2532 = vpack.c.b16 %v2332, %v2324
    %v2533 = vpack.c.b16 %v2333, %v2325
    %v2534 = vpack.c.b16 %v2334, %v2326
    %v2535 = vpack.c.b16 %v2335, %v2327
    %v2536 = vpack.c.b16 %v2336, %v2328
    %v2537 = vpack.c.b16 %v2337, %v2329
    %v2538 = vpack.c.b16 %v2338, %v2330
    %v2539 = vpack.c.b16 %v2347, %v2339
    %v2540 = vpack.c.b16 %v2348, %v2340
    %v2541 = vpack.c.b16 %v2349, %v2341
    %v2542 = vpack.c.b16 %v2350, %v2342
    %v2543 = vpack.c.b16 %v2351, %v2343
    %v2544 = vpack.c.b16 %v2352, %v2344
    %v2545 = vpack.c.b16 %v2353, %v2345
    %v2546 = vpack.c.b16 %v2354, %v2346
    %v2547 = vpack.c.b16 %v2363, %v2355
    %v2548 = vpack.c.b16 %v2364, %v2356
    %v2549 = vpack.c.b16 %v2365, %v2357
    %v2550 = vpack.c.b16 %v2366, %v2358
    %v2551 = vpack.c.b16 %v2367, %v2359
    %v2552 = vpack.c.b16 %v2368, %v2360
    %v2553 = vpack.c.b16 %v2369, %v2361
    %v2554 = vpack.c.b16 %v2370, %v2362
    %v2555 = vpack.c.b16 %v2379, %v2371
    %v2556 = vpack.c.b16 %v2380, %v2372
    %v2557 = vpack.c.b16 %v2381, %v2373
    %v2558 = vpack.c.b16 %v2382, %v2374
    %v2559 = vpack.c.b16 %v2383, %v2375
    %v2560 = vpack.c.b16 %v2384, %v2376
    %v2561 = vpack.c.b16 %v2385, %v2377
    %v2562 = vpack.c.b16 %v2386, %v2378
    %v2563 = vpack.c.b16 %v2395, %v2387
    %v2564 = vpack.c.b16 %v2396, %v2388
    %v2565 = vpack.c.b16 %v2397, %v2389
    %v2566 = vpack.c.b16 %v2398, %v2390
    %v2567 = vpack.c.b16 %v2399, %v2391
    %v2568 = vpack.c.b16 %v2400, %v2392
    %v2569 = vpack.c.b16 %v2401, %v2393
    %v2570 = vpack.c.b16 %v2402, %v2394
    %v2571 = vpack.c.b16 %v2411, %v2403
    %v2572 = vpack.c.b16 %v2412, %v2404
    %v2573 = vpack.c.b16 %v2413, %v2405
    %v2574 = vpack.c.b16 %v2414, %v2406
    %v2575 = vpack.c.b16 %v2415, %v2407
    %v2576 = vpack.c.b16 %v2416, %v2408
    %v2577 = vpack.c.b16 %v2417, %v2409
    %v2578 = vpack.c.b16 %v2418, %v2410
    %v2579 = vpack.c.b16 %v2427, %v2419
    %v2580 = vpack.c.b16 %v2428, %v2420
    %v2581 = vpack.c.b16 %v2429, %v2421
    %v2582 = vpack.c.b16 %v2430, %v2422
    %v2583 = vpack.c.b16 %v2431, %v2423
    %v2584 = vpack.c.b16 %v2432, %v2424
    %v2585 = vpack.c.b16 %v2433, %v2425
    %v2586 = vpack.c.b16 %v2434, %v2426
    %v2587 = vpack.c.b16 %v2443, %v2435
    %v2588 = vpack.c.b16 %v2444, %v2436
    %v2589 = vpack.c.b16 %v2445, %v2437
    %v2590 = vpack.c.b16 %v2446, %v2438
    %v2591 = vpack.c.b16 %v2447, %v2439
    %v2592 = vpack.c.b16 %v2448, %v2440
    %v2593 = vpack.c.b16 %v2449, %v2441
    %v2594 = vpack.c.b16 %v2450, %v2442
    %v2595 = vpack.c.b16 %v2459, %v2451
    %v2596 = vpack.c.b16 %v2460, %v2452
    %v2597 = vpack.c.b16 %v2461, %v2453
    %v2598 = vpack.c.b16 %v2462, %v2454
    %v2599 = vpack.c.b16 %v2463, %v2455
    %v2600 = vpack.c.b16 %v2464, %v2456
    %v2601 = vpack.c.b16 %v2465, %v2457
    %v2602 = vpack.c.b16 %v2466, %v2458
    %v2603 = vpack.c.b16 %v2475, %v2467
    %v2604 = vpack.c.b16 %v2476, %v2468
    %v2605 = vpack.c.b16 %v2477, %v2469
    %v2606 = vpack.c.b16 %v2478, %v2470
    %v2607 = vpack.c.b16 %v2479, %v2471
    %v2608 = vpack.c.b16 %v2480, %v2472
    %v2609 = vpack.c.b16 %v2481, %v2473
    %v2610 = vpack.c.b16 %v2482, %v2474
    %2739 = vmatprep.subr.bf16.mxu0 %v2540
    %2740 = vmatpush1.bf16.msra.mxu0 %v2539
    %2741 = vmatprep.subr.bf16.mxu0 %v2532
    %2742 = vmatpush1.bf16.msra.mxu0 %v2531
    %2743 = vmatprep.subr.bf16.mxu0 %v2524
    %2744 = vmatpush1.bf16.msra.mxu0 %v2523
    %2745 = vmatprep.subr.bf16.mxu0 %v2516
    %2746 = vmatpush1.bf16.msra.mxu0 %v2515
    %2747 = vmatprep.subr.bf16.mxu0 %v2508
    %2748 = vmatpush1.bf16.msra.mxu0 %v2507
    %2749 = vmatprep.subr.bf16.mxu0 %v2500
    %2750 = vmatpush1.bf16.msra.mxu0 %v2499
    %2751 = vmatprep.subr.bf16.mxu0 %v2492
    %2752 = vmatpush1.bf16.msra.mxu0 %v2491
    %2753 = vmatprep.subr.bf16.mxu0 %v2484
    %2754 = vmatpush1.bf16.msra.mxu0 %v2483
    %2755 = vmatprep.subr.bf16.mxu0 %v2604
    %2756 = vmatpush2.bf16.msra.mxu0 %v2603
    %2757 = vmatprep.subr.bf16.mxu0 %v2596
    %2758 = vmatpush2.bf16.msra.mxu0 %v2595
    %2759 = vmatprep.subr.bf16.mxu0 %v2588
    %2760 = vmatpush2.bf16.msra.mxu0 %v2587
    %2761 = vmatprep.subr.bf16.mxu0 %v2580
    %2762 = vmatpush2.bf16.msra.mxu0 %v2579
    %2763 = vmatprep.subr.bf16.mxu0 %v2572
    %2764 = vmatpush2.bf16.msra.mxu0 %v2571
    %2765 = vmatprep.subr.bf16.mxu0 %v2564
    %2766 = vmatpush2.bf16.msra.mxu0 %v2563
    %2767 = vmatprep.subr.bf16.mxu0 %v2556
    %2768 = vmatpush2.bf16.msra.mxu0 %v2555
    %2769 = vmatprep.subr.bf16.mxu0 %v2548
    %2770 = vmatpush2.bf16.msra.mxu0 %v2547
    %2771 = vmatprep.mubr.bf16.mxu0 %v1970
    %2772 = vmatmul.mubr.bf16.gmra.mxu0 %v1969
    %v2773 = vpop.f32.mrf.mxu0
    %v2774 = vadd.f32 0.0, %v2773
    %v2775 = vpop.f32.mrf.mxu0
    %v2776 = vadd.f32 0.0, %v2775
    %v2777 = vpop.f32.mrf.mxu0
    %v2778 = vpop.f32.mrf.mxu0
    %2779 = vdwg.mxu0
    %2780 = vmatprep.subr.bf16.mxu0 %v2542
    %2781 = vmatpush1.bf16.msra.mxu0 %v2541
    %2782 = vmatprep.subr.bf16.mxu0 %v2534
    %2783 = vmatpush1.bf16.msra.mxu0 %v2533
    %2784 = vmatprep.subr.bf16.mxu0 %v2526
    %2785 = vmatpush1.bf16.msra.mxu0 %v2525
    %2786 = vmatprep.subr.bf16.mxu0 %v2518
    %2787 = vmatpush1.bf16.msra.mxu0 %v2517
    %2788 = vmatprep.subr.bf16.mxu0 %v2510
    %2789 = vmatpush1.bf16.msra.mxu0 %v2509
    %2790 = vmatprep.subr.bf16.mxu0 %v2502
    %2791 = vmatpush1.bf16.msra.mxu0 %v2501
    %2792 = vmatprep.subr.bf16.mxu0 %v2494
    %2793 = vmatpush1.bf16.msra.mxu0 %v2493
    %2794 = vmatprep.subr.bf16.mxu0 %v2486
    %2795 = vmatpush1.bf16.msra.mxu0 %v2485
    %2796 = vmatprep.subr.bf16.mxu0 %v2606
    %2797 = vmatpush2.bf16.msra.mxu0 %v2605
    %2798 = vmatprep.subr.bf16.mxu0 %v2598
    %2799 = vmatpush2.bf16.msra.mxu0 %v2597
    %2800 = vmatprep.subr.bf16.mxu0 %v2590
    %2801 = vmatpush2.bf16.msra.mxu0 %v2589
    %2802 = vmatprep.subr.bf16.mxu0 %v2582
    %2803 = vmatpush2.bf16.msra.mxu0 %v2581
    %2804 = vmatprep.subr.bf16.mxu0 %v2574
    %2805 = vmatpush2.bf16.msra.mxu0 %v2573
    %2806 = vmatprep.subr.bf16.mxu0 %v2566
    %2807 = vmatpush2.bf16.msra.mxu0 %v2565
    %2808 = vmatprep.subr.bf16.mxu0 %v2558
    %2809 = vmatpush2.bf16.msra.mxu0 %v2557
    %2810 = vmatprep.subr.bf16.mxu0 %v2550
    %2811 = vmatpush2.bf16.msra.mxu0 %v2549
    %2812 = vmatprep.mubr.bf16.mxu0 %v1970
    %2813 = vmatmul.mubr.bf16.gmra.mxu0 %v1969
    %v2814 = vpop.f32.mrf.mxu0
    %v2815 = vadd.f32 0.0, %v2814
    %v2816 = vpop.f32.mrf.mxu0
    %v2817 = vadd.f32 0.0, %v2816
    %v2818 = vpop.f32.mrf.mxu0
    %v2819 = vpop.f32.mrf.mxu0
    %2820 = vdwg.mxu0
    %2821 = vmatprep.subr.bf16.mxu0 %v2544
    %2822 = vmatpush1.bf16.msra.mxu0 %v2543
    %2823 = vmatprep.subr.bf16.mxu0 %v2536
    %2824 = vmatpush1.bf16.msra.mxu0 %v2535
    %2825 = vmatprep.subr.bf16.mxu0 %v2528
    %2826 = vmatpush1.bf16.msra.mxu0 %v2527
    %2827 = vmatprep.subr.bf16.mxu0 %v2520
    %2828 = vmatpush1.bf16.msra.mxu0 %v2519
    %2829 = vmatprep.subr.bf16.mxu0 %v2512
    %2830 = vmatpush1.bf16.msra.mxu0 %v2511
    %2831 = vmatprep.subr.bf16.mxu0 %v2504
    %2832 = vmatpush1.bf16.msra.mxu0 %v2503
    %2833 = vmatprep.subr.bf16.mxu0 %v2496
    %2834 = vmatpush1.bf16.msra.mxu0 %v2495
    %2835 = vmatprep.subr.bf16.mxu0 %v2488
    %2836 = vmatpush1.bf16.msra.mxu0 %v2487
    %2837 = vmatprep.subr.bf16.mxu0 %v2608
    %2838 = vmatpush2.bf16.msra.mxu0 %v2607
    %2839 = vmatprep.subr.bf16.mxu0 %v2600
    %2840 = vmatpush2.bf16.msra.mxu0 %v2599
    %2841 = vmatprep.subr.bf16.mxu0 %v2592
    %2842 = vmatpush2.bf16.msra.mxu0 %v2591
    %2843 = vmatprep.subr.bf16.mxu0 %v2584
    %2844 = vmatpush2.bf16.msra.mxu0 %v2583
    %2845 = vmatprep.subr.bf16.mxu0 %v2576
    %2846 = vmatpush2.bf16.msra.mxu0 %v2575
    %2847 = vmatprep.subr.bf16.mxu0 %v2568
    %2848 = vmatpush2.bf16.msra.mxu0 %v2567
    %2849 = vmatprep.subr.bf16.mxu0 %v2560
    %2850 = vmatpush2.bf16.msra.mxu0 %v2559
    %2851 = vmatprep.subr.bf16.mxu0 %v2552
    %2852 = vmatpush2.bf16.msra.mxu0 %v2551
    %2853 = vmatprep.mubr.bf16.mxu0 %v1970
    %2854 = vmatmul.mubr.bf16.gmra.mxu0 %v1969
    %v2855 = vpop.f32.mrf.mxu0
    %v2856 = vadd.f32 0.0, %v2855
    %v2857 = vpop.f32.mrf.mxu0
    %v2858 = vadd.f32 0.0, %v2857
    %v2859 = vpop.f32.mrf.mxu0
    %v2860 = vpop.f32.mrf.mxu0
    %2861 = vdwg.mxu0
    %2862 = vmatprep.subr.bf16.mxu0 %v2546
    %2863 = vmatpush1.bf16.msra.mxu0 %v2545
    %2864 = vmatprep.subr.bf16.mxu0 %v2538
    %2865 = vmatpush1.bf16.msra.mxu0 %v2537
    %2866 = vmatprep.subr.bf16.mxu0 %v2530
    %2867 = vmatpush1.bf16.msra.mxu0 %v2529
    %2868 = vmatprep.subr.bf16.mxu0 %v2522
    %2869 = vmatpush1.bf16.msra.mxu0 %v2521
    %2870 = vmatprep.subr.bf16.mxu0 %v2514
    %2871 = vmatpush1.bf16.msra.mxu0 %v2513
    %2872 = vmatprep.subr.bf16.mxu0 %v2506
    %2873 = vmatpush1.bf16.msra.mxu0 %v2505
    %2874 = vmatprep.subr.bf16.mxu0 %v2498
    %2875 = vmatpush1.bf16.msra.mxu0 %v2497
    %2876 = vmatprep.subr.bf16.mxu0 %v2490
    %2877 = vmatpush1.bf16.msra.mxu0 %v2489
    %2878 = vmatprep.subr.bf16.mxu0 %v2610
    %2879 = vmatpush2.bf16.msra.mxu0 %v2609
    %2880 = vmatprep.subr.bf16.mxu0 %v2602
    %2881 = vmatpush2.bf16.msra.mxu0 %v2601
    %2882 = vmatprep.subr.bf16.mxu0 %v2594
    %2883 = vmatpush2.bf16.msra.mxu0 %v2593
    %2884 = vmatprep.subr.bf16.mxu0 %v2586
    %2885 = vmatpush2.bf16.msra.mxu0 %v2585
    %2886 = vmatprep.subr.bf16.mxu0 %v2578
    %2887 = vmatpush2.bf16.msra.mxu0 %v2577
    %2888 = vmatprep.subr.bf16.mxu0 %v2570
    %2889 = vmatpush2.bf16.msra.mxu0 %v2569
    %2890 = vmatprep.subr.bf16.mxu0 %v2562
    %2891 = vmatpush2.bf16.msra.mxu0 %v2561
    %2892 = vmatprep.subr.bf16.mxu0 %v2554
    %2893 = vmatpush2.bf16.msra.mxu0 %v2553
    %2894 = vmatprep.mubr.bf16.mxu0 %v1970
    %2895 = vmatmul.mubr.bf16.gmra.mxu0 %v1969
    %v2896 = vpop.f32.mrf.mxu0
    %v2897 = vadd.f32 0.0, %v2896
    %v2898 = vpop.f32.mrf.mxu0
    %v2899 = vadd.f32 0.0, %v2898
    %v2900 = vpop.f32.mrf.mxu0
    %v2901 = vpop.f32.mrf.mxu0
    %2902 = vdwg.mxu0
    %v3031 = vunpack.c.l.b16 %v1841
    %v3032 = vunpack.c.h.b16 %v1841
    %v3033 = vunpack.c.l.b16 %v1842
    %v3034 = vunpack.c.h.b16 %v1842
    %v3035 = vunpack.c.l.b16 %v1843
    %v3036 = vunpack.c.h.b16 %v1843
    %v3037 = vunpack.c.l.b16 %v1844
    %v3038 = vunpack.c.h.b16 %v1844
    %v3039 = vunpack.c.l.b16 %v1845
    %v3040 = vunpack.c.h.b16 %v1845
    %v3041 = vunpack.c.l.b16 %v1846
    %v3042 = vunpack.c.h.b16 %v1846
    %v3043 = vunpack.c.l.b16 %v1847
    %v3044 = vunpack.c.h.b16 %v1847
    %v3045 = vunpack.c.l.b16 %v1848
    %v3046 = vunpack.c.h.b16 %v1848
    %v3047 = vunpack.c.l.b16 %v1849
    %v3048 = vunpack.c.h.b16 %v1849
    %v3049 = vunpack.c.l.b16 %v1850
    %v3050 = vunpack.c.h.b16 %v1850
    %v3051 = vunpack.c.l.b16 %v1851
    %v3052 = vunpack.c.h.b16 %v1851
    %v3053 = vunpack.c.l.b16 %v1852
    %v3054 = vunpack.c.h.b16 %v1852
    %v3055 = vunpack.c.l.b16 %v1853
    %v3056 = vunpack.c.h.b16 %v1853
    %v3057 = vunpack.c.l.b16 %v1854
    %v3058 = vunpack.c.h.b16 %v1854
    %v3059 = vunpack.c.l.b16 %v1855
    %v3060 = vunpack.c.h.b16 %v1855
    %v3061 = vunpack.c.l.b16 %v1856
    %v3062 = vunpack.c.h.b16 %v1856
    %v3063 = vunpack.c.l.b16 %v1857
    %v3064 = vunpack.c.h.b16 %v1857
    %v3065 = vunpack.c.l.b16 %v1858
    %v3066 = vunpack.c.h.b16 %v1858
    %v3067 = vunpack.c.l.b16 %v1859
    %v3068 = vunpack.c.h.b16 %v1859
    %v3069 = vunpack.c.l.b16 %v1860
    %v3070 = vunpack.c.h.b16 %v1860
    %v3071 = vunpack.c.l.b16 %v1861
    %v3072 = vunpack.c.h.b16 %v1861
    %v3073 = vunpack.c.l.b16 %v1862
    %v3074 = vunpack.c.h.b16 %v1862
    %v3075 = vunpack.c.l.b16 %v1863
    %v3076 = vunpack.c.h.b16 %v1863
    %v3077 = vunpack.c.l.b16 %v1864
    %v3078 = vunpack.c.h.b16 %v1864
    %v3079 = vunpack.c.l.b16 %v1865
    %v3080 = vunpack.c.h.b16 %v1865
    %v3081 = vunpack.c.l.b16 %v1866
    %v3082 = vunpack.c.h.b16 %v1866
    %v3083 = vunpack.c.l.b16 %v1867
    %v3084 = vunpack.c.h.b16 %v1867
    %v3085 = vunpack.c.l.b16 %v1868
    %v3086 = vunpack.c.h.b16 %v1868
    %v3087 = vunpack.c.l.b16 %v1869
    %v3088 = vunpack.c.h.b16 %v1869
    %v3089 = vunpack.c.l.b16 %v1870
    %v3090 = vunpack.c.h.b16 %v1870
    %v3091 = vunpack.c.l.b16 %v1871
    %v3092 = vunpack.c.h.b16 %v1871
    %v3093 = vunpack.c.l.b16 %v1872
    %v3094 = vunpack.c.h.b16 %v1872
    %v3095 = vunpack.c.l.b16 %v1873
    %v3096 = vunpack.c.h.b16 %v1873
    %v3097 = vunpack.c.l.b16 %v1874
    %v3098 = vunpack.c.h.b16 %v1874
    %v3099 = vunpack.c.l.b16 %v1875
    %v3100 = vunpack.c.h.b16 %v1875
    %v3101 = vunpack.c.l.b16 %v1876
    %v3102 = vunpack.c.h.b16 %v1876
    %v3103 = vunpack.c.l.b16 %v1877
    %v3104 = vunpack.c.h.b16 %v1877
    %v3105 = vunpack.c.l.b16 %v1878
    %v3106 = vunpack.c.h.b16 %v1878
    %v3107 = vunpack.c.l.b16 %v1879
    %v3108 = vunpack.c.h.b16 %v1879
    %v3109 = vunpack.c.l.b16 %v1880
    %v3110 = vunpack.c.h.b16 %v1880
    %v3111 = vunpack.c.l.b16 %v1881
    %v3112 = vunpack.c.h.b16 %v1881
    %v3113 = vunpack.c.l.b16 %v1882
    %v3114 = vunpack.c.h.b16 %v1882
    %v3115 = vunpack.c.l.b16 %v1883
    %v3116 = vunpack.c.h.b16 %v1883
    %v3117 = vunpack.c.l.b16 %v1884
    %v3118 = vunpack.c.h.b16 %v1884
    %v3119 = vunpack.c.l.b16 %v1885
    %v3120 = vunpack.c.h.b16 %v1885
    %v3121 = vunpack.c.l.b16 %v1886
    %v3122 = vunpack.c.h.b16 %v1886
    %v3123 = vunpack.c.l.b16 %v1887
    %v3124 = vunpack.c.h.b16 %v1887
    %v3125 = vunpack.c.l.b16 %v1888
    %v3126 = vunpack.c.h.b16 %v1888
    %v3127 = vunpack.c.l.b16 %v1889
    %v3128 = vunpack.c.h.b16 %v1889
    %v3129 = vunpack.c.l.b16 %v1890
    %v3130 = vunpack.c.h.b16 %v1890
    %v3131 = vunpack.c.l.b16 %v1891
    %v3132 = vunpack.c.h.b16 %v1891
    %v3133 = vunpack.c.l.b16 %v1892
    %v3134 = vunpack.c.h.b16 %v1892
    %v3135 = vunpack.c.l.b16 %v1893
    %v3136 = vunpack.c.h.b16 %v1893
    %v3137 = vunpack.c.l.b16 %v1894
    %v3138 = vunpack.c.h.b16 %v1894
    %v3139 = vunpack.c.l.b16 %v1895
    %v3140 = vunpack.c.h.b16 %v1895
    %v3141 = vunpack.c.l.b16 %v1896
    %v3142 = vunpack.c.h.b16 %v1896
    %v3143 = vunpack.c.l.b16 %v1897
    %v3144 = vunpack.c.h.b16 %v1897
    %v3145 = vunpack.c.l.b16 %v1898
    %v3146 = vunpack.c.h.b16 %v1898
    %v3147 = vunpack.c.l.b16 %v1899
    %v3148 = vunpack.c.h.b16 %v1899
    %v3149 = vunpack.c.l.b16 %v1900
    %v3150 = vunpack.c.h.b16 %v1900
    %v3151 = vunpack.c.l.b16 %v1901
    %v3152 = vunpack.c.h.b16 %v1901
    %v3153 = vunpack.c.l.b16 %v1902
    %v3154 = vunpack.c.h.b16 %v1902
    %v3155 = vunpack.c.l.b16 %v1903
    %v3156 = vunpack.c.h.b16 %v1903
    %v3157 = vunpack.c.l.b16 %v1904
    %v3158 = vunpack.c.h.b16 %v1904
    %v3159 = vunpack.c.l.b16 %v1905
    %v3160 = vunpack.c.h.b16 %v1905
    %v3161 = vunpack.c.l.b16 %v1906
    %v3162 = vunpack.c.h.b16 %v1906
    %v3163 = vunpack.c.l.b16 %v1907
    %v3164 = vunpack.c.h.b16 %v1907
    %v3165 = vunpack.c.l.b16 %v1908
    %v3166 = vunpack.c.h.b16 %v1908
    %v3167 = vunpack.c.l.b16 %v1909
    %v3168 = vunpack.c.h.b16 %v1909
    %v3169 = vunpack.c.l.b16 %v1910
    %v3170 = vunpack.c.h.b16 %v1910
    %v3171 = vunpack.c.l.b16 %v1911
    %v3172 = vunpack.c.h.b16 %v1911
    %v3173 = vunpack.c.l.b16 %v1912
    %v3174 = vunpack.c.h.b16 %v1912
    %v3175 = vunpack.c.l.b16 %v1913
    %v3176 = vunpack.c.h.b16 %v1913
    %v3177 = vunpack.c.l.b16 %v1914
    %v3178 = vunpack.c.h.b16 %v1914
    %v3179 = vunpack.c.l.b16 %v1915
    %v3180 = vunpack.c.h.b16 %v1915
    %v3181 = vunpack.c.l.b16 %v1916
    %v3182 = vunpack.c.h.b16 %v1916
    %v3183 = vunpack.c.l.b16 %v1917
    %v3184 = vunpack.c.h.b16 %v1917
    %v3185 = vunpack.c.l.b16 %v1918
    %v3186 = vunpack.c.h.b16 %v1918
    %v3187 = vunpack.c.l.b16 %v1919
    %v3188 = vunpack.c.h.b16 %v1919
    %v3189 = vunpack.c.l.b16 %v1920
    %v3190 = vunpack.c.h.b16 %v1920
    %v3191 = vunpack.c.l.b16 %v1921
    %v3192 = vunpack.c.h.b16 %v1921
    %v3193 = vunpack.c.l.b16 %v1922
    %v3194 = vunpack.c.h.b16 %v1922
    %v3195 = vunpack.c.l.b16 %v1923
    %v3196 = vunpack.c.h.b16 %v1923
    %v3197 = vunpack.c.l.b16 %v1924
    %v3198 = vunpack.c.h.b16 %v1924
    %v3199 = vunpack.c.l.b16 %v1925
    %v3200 = vunpack.c.h.b16 %v1925
    %v3201 = vunpack.c.l.b16 %v1926
    %v3202 = vunpack.c.h.b16 %v1926
    %v3203 = vunpack.c.l.b16 %v1927
    %v3204 = vunpack.c.h.b16 %v1927
    %v3205 = vunpack.c.l.b16 %v1928
    %v3206 = vunpack.c.h.b16 %v1928
    %v3207 = vunpack.c.l.b16 %v1929
    %v3208 = vunpack.c.h.b16 %v1929
    %v3209 = vunpack.c.l.b16 %v1930
    %v3210 = vunpack.c.h.b16 %v1930
    %v3211 = vunpack.c.l.b16 %v1931
    %v3212 = vunpack.c.h.b16 %v1931
    %v3213 = vunpack.c.l.b16 %v1932
    %v3214 = vunpack.c.h.b16 %v1932
    %v3215 = vunpack.c.l.b16 %v1933
    %v3216 = vunpack.c.h.b16 %v1933
    %v3217 = vunpack.c.l.b16 %v1934
    %v3218 = vunpack.c.h.b16 %v1934
    %v3219 = vunpack.c.l.b16 %v1935
    %v3220 = vunpack.c.h.b16 %v1935
    %v3221 = vunpack.c.l.b16 %v1936
    %v3222 = vunpack.c.h.b16 %v1936
    %v3223 = vunpack.c.l.b16 %v1937
    %v3224 = vunpack.c.h.b16 %v1937
    %v3225 = vunpack.c.l.b16 %v1938
    %v3226 = vunpack.c.h.b16 %v1938
    %v3227 = vunpack.c.l.b16 %v1939
    %v3228 = vunpack.c.h.b16 %v1939
    %v3229 = vunpack.c.l.b16 %v1940
    %v3230 = vunpack.c.h.b16 %v1940
    %v3231 = vunpack.c.l.b16 %v1941
    %v3232 = vunpack.c.h.b16 %v1941
    %v3233 = vunpack.c.l.b16 %v1942
    %v3234 = vunpack.c.h.b16 %v1942
    %v3235 = vunpack.c.l.b16 %v1943
    %v3236 = vunpack.c.h.b16 %v1943
    %v3237 = vunpack.c.l.b16 %v1944
    %v3238 = vunpack.c.h.b16 %v1944
    %v3239 = vunpack.c.l.b16 %v1945
    %v3240 = vunpack.c.h.b16 %v1945
    %v3241 = vunpack.c.l.b16 %v1946
    %v3242 = vunpack.c.h.b16 %v1946
    %v3243 = vunpack.c.l.b16 %v1947
    %v3244 = vunpack.c.h.b16 %v1947
    %v3245 = vunpack.c.l.b16 %v1948
    %v3246 = vunpack.c.h.b16 %v1948
    %v3247 = vunpack.c.l.b16 %v1949
    %v3248 = vunpack.c.h.b16 %v1949
    %v3249 = vunpack.c.l.b16 %v1950
    %v3250 = vunpack.c.h.b16 %v1950
    %v3251 = vunpack.c.l.b16 %v1951
    %v3252 = vunpack.c.h.b16 %v1951
    %v3253 = vunpack.c.l.b16 %v1952
    %v3254 = vunpack.c.h.b16 %v1952
    %v3255 = vunpack.c.l.b16 %v1953
    %v3256 = vunpack.c.h.b16 %v1953
    %v3257 = vunpack.c.l.b16 %v1954
    %v3258 = vunpack.c.h.b16 %v1954
    %v3259 = vunpack.c.l.b16 %v1955
    %v3260 = vunpack.c.h.b16 %v1955
    %v3261 = vunpack.c.l.b16 %v1956
    %v3262 = vunpack.c.h.b16 %v1956
    %v3263 = vunpack.c.l.b16 %v1957
    %v3264 = vunpack.c.h.b16 %v1957
    %v3265 = vunpack.c.l.b16 %v1958
    %v3266 = vunpack.c.h.b16 %v1958
    %v3267 = vunpack.c.l.b16 %v1959
    %v3268 = vunpack.c.h.b16 %v1959
    %v3269 = vunpack.c.l.b16 %v1960
    %v3270 = vunpack.c.h.b16 %v1960
    %v3271 = vunpack.c.l.b16 %v1961
    %v3272 = vunpack.c.h.b16 %v1961
    %v3273 = vunpack.c.l.b16 %v1962
    %v3274 = vunpack.c.h.b16 %v1962
    %v3275 = vunpack.c.l.b16 %v1963
    %v3276 = vunpack.c.h.b16 %v1963
    %v3277 = vunpack.c.l.b16 %v1964
    %v3278 = vunpack.c.h.b16 %v1964
    %v3279 = vunpack.c.l.b16 %v1965
    %v3280 = vunpack.c.h.b16 %v1965
    %v3281 = vunpack.c.l.b16 %v1966
    %v3282 = vunpack.c.h.b16 %v1966
    %v3283 = vunpack.c.l.b16 %v1967
    %v3284 = vunpack.c.h.b16 %v1967
    %v3285 = vunpack.c.l.b16 %v1968
    %v3286 = vunpack.c.h.b16 %v1968
    %v3287 = vpack.c.b16 %v3039, %v3031
    %v3288 = vpack.c.b16 %v3040, %v3032
    %v3289 = vpack.c.b16 %v3041, %v3033
    %v3290 = vpack.c.b16 %v3042, %v3034
    %v3291 = vpack.c.b16 %v3043, %v3035
    %v3292 = vpack.c.b16 %v3044, %v3036
    %v3293 = vpack.c.b16 %v3045, %v3037
    %v3294 = vpack.c.b16 %v3046, %v3038
    %v3295 = vpack.c.b16 %v3055, %v3047
    %v3296 = vpack.c.b16 %v3056, %v3048
    %v3297 = vpack.c.b16 %v3057, %v3049
    %v3298 = vpack.c.b16 %v3058, %v3050
    %v3299 = vpack.c.b16 %v3059, %v3051
    %v3300 = vpack.c.b16 %v3060, %v3052
    %v3301 = vpack.c.b16 %v3061, %v3053
    %v3302 = vpack.c.b16 %v3062, %v3054
    %v3303 = vpack.c.b16 %v3071, %v3063
    %v3304 = vpack.c.b16 %v3072, %v3064
    %v3305 = vpack.c.b16 %v3073, %v3065
    %v3306 = vpack.c.b16 %v3074, %v3066
    %v3307 = vpack.c.b16 %v3075, %v3067
    %v3308 = vpack.c.b16 %v3076, %v3068
    %v3309 = vpack.c.b16 %v3077, %v3069
    %v3310 = vpack.c.b16 %v3078, %v3070
    %v3311 = vpack.c.b16 %v3087, %v3079
    %v3312 = vpack.c.b16 %v3088, %v3080
    %v3313 = vpack.c.b16 %v3089, %v3081
    %v3314 = vpack.c.b16 %v3090, %v3082
    %v3315 = vpack.c.b16 %v3091, %v3083
    %v3316 = vpack.c.b16 %v3092, %v3084
    %v3317 = vpack.c.b16 %v3093, %v3085
    %v3318 = vpack.c.b16 %v3094, %v3086
    %v3319 = vpack.c.b16 %v3103, %v3095
    %v3320 = vpack.c.b16 %v3104, %v3096
    %v3321 = vpack.c.b16 %v3105, %v3097
    %v3322 = vpack.c.b16 %v3106, %v3098
    %v3323 = vpack.c.b16 %v3107, %v3099
    %v3324 = vpack.c.b16 %v3108, %v3100
    %v3325 = vpack.c.b16 %v3109, %v3101
    %v3326 = vpack.c.b16 %v3110, %v3102
    %v3327 = vpack.c.b16 %v3119, %v3111
    %v3328 = vpack.c.b16 %v3120, %v3112
    %v3329 = vpack.c.b16 %v3121, %v3113
    %v3330 = vpack.c.b16 %v3122, %v3114
    %v3331 = vpack.c.b16 %v3123, %v3115
    %v3332 = vpack.c.b16 %v3124, %v3116
    %v3333 = vpack.c.b16 %v3125, %v3117
    %v3334 = vpack.c.b16 %v3126, %v3118
    %v3335 = vpack.c.b16 %v3135, %v3127
    %v3336 = vpack.c.b16 %v3136, %v3128
    %v3337 = vpack.c.b16 %v3137, %v3129
    %v3338 = vpack.c.b16 %v3138, %v3130
    %v3339 = vpack.c.b16 %v3139, %v3131
    %v3340 = vpack.c.b16 %v3140, %v3132
    %v3341 = vpack.c.b16 %v3141, %v3133
    %v3342 = vpack.c.b16 %v3142, %v3134
    %v3343 = vpack.c.b16 %v3151, %v3143
    %v3344 = vpack.c.b16 %v3152, %v3144
    %v3345 = vpack.c.b16 %v3153, %v3145
    %v3346 = vpack.c.b16 %v3154, %v3146
    %v3347 = vpack.c.b16 %v3155, %v3147
    %v3348 = vpack.c.b16 %v3156, %v3148
    %v3349 = vpack.c.b16 %v3157, %v3149
    %v3350 = vpack.c.b16 %v3158, %v3150
    %v3351 = vpack.c.b16 %v3167, %v3159
    %v3352 = vpack.c.b16 %v3168, %v3160
    %v3353 = vpack.c.b16 %v3169, %v3161
    %v3354 = vpack.c.b16 %v3170, %v3162
    %v3355 = vpack.c.b16 %v3171, %v3163
    %v3356 = vpack.c.b16 %v3172, %v3164
    %v3357 = vpack.c.b16 %v3173, %v3165
    %v3358 = vpack.c.b16 %v3174, %v3166
    %v3359 = vpack.c.b16 %v3183, %v3175
    %v3360 = vpack.c.b16 %v3184, %v3176
    %v3361 = vpack.c.b16 %v3185, %v3177
    %v3362 = vpack.c.b16 %v3186, %v3178
    %v3363 = vpack.c.b16 %v3187, %v3179
    %v3364 = vpack.c.b16 %v3188, %v3180
    %v3365 = vpack.c.b16 %v3189, %v3181
    %v3366 = vpack.c.b16 %v3190, %v3182
    %v3367 = vpack.c.b16 %v3199, %v3191
    %v3368 = vpack.c.b16 %v3200, %v3192
    %v3369 = vpack.c.b16 %v3201, %v3193
    %v3370 = vpack.c.b16 %v3202, %v3194
    %v3371 = vpack.c.b16 %v3203, %v3195
    %v3372 = vpack.c.b16 %v3204, %v3196
    %v3373 = vpack.c.b16 %v3205, %v3197
    %v3374 = vpack.c.b16 %v3206, %v3198
    %v3375 = vpack.c.b16 %v3215, %v3207
    %v3376 = vpack.c.b16 %v3216, %v3208
    %v3377 = vpack.c.b16 %v3217, %v3209
    %v3378 = vpack.c.b16 %v3218, %v3210
    %v3379 = vpack.c.b16 %v3219, %v3211
    %v3380 = vpack.c.b16 %v3220, %v3212
    %v3381 = vpack.c.b16 %v3221, %v3213
    %v3382 = vpack.c.b16 %v3222, %v3214
    %v3383 = vpack.c.b16 %v3231, %v3223
    %v3384 = vpack.c.b16 %v3232, %v3224
    %v3385 = vpack.c.b16 %v3233, %v3225
    %v3386 = vpack.c.b16 %v3234, %v3226
    %v3387 = vpack.c.b16 %v3235, %v3227
    %v3388 = vpack.c.b16 %v3236, %v3228
    %v3389 = vpack.c.b16 %v3237, %v3229
    %v3390 = vpack.c.b16 %v3238, %v3230
    %v3391 = vpack.c.b16 %v3247, %v3239
    %v3392 = vpack.c.b16 %v3248, %v3240
    %v3393 = vpack.c.b16 %v3249, %v3241
    %v3394 = vpack.c.b16 %v3250, %v3242
    %v3395 = vpack.c.b16 %v3251, %v3243
    %v3396 = vpack.c.b16 %v3252, %v3244
    %v3397 = vpack.c.b16 %v3253, %v3245
    %v3398 = vpack.c.b16 %v3254, %v3246
    %v3399 = vpack.c.b16 %v3263, %v3255
    %v3400 = vpack.c.b16 %v3264, %v3256
    %v3401 = vpack.c.b16 %v3265, %v3257
    %v3402 = vpack.c.b16 %v3266, %v3258
    %v3403 = vpack.c.b16 %v3267, %v3259
    %v3404 = vpack.c.b16 %v3268, %v3260
    %v3405 = vpack.c.b16 %v3269, %v3261
    %v3406 = vpack.c.b16 %v3270, %v3262
    %v3407 = vpack.c.b16 %v3279, %v3271
    %v3408 = vpack.c.b16 %v3280, %v3272
    %v3409 = vpack.c.b16 %v3281, %v3273
    %v3410 = vpack.c.b16 %v3282, %v3274
    %v3411 = vpack.c.b16 %v3283, %v3275
    %v3412 = vpack.c.b16 %v3284, %v3276
    %v3413 = vpack.c.b16 %v3285, %v3277
    %v3414 = vpack.c.b16 %v3286, %v3278
    %3543 = vmatprep.subr.bf16.mxu0 %v3344
    %3544 = vmatpush1.bf16.msra.mxu0 %v3343
    %3545 = vmatprep.subr.bf16.mxu0 %v3336
    %3546 = vmatpush1.bf16.msra.mxu0 %v3335
    %3547 = vmatprep.subr.bf16.mxu0 %v3328
    %3548 = vmatpush1.bf16.msra.mxu0 %v3327
    %3549 = vmatprep.subr.bf16.mxu0 %v3320
    %3550 = vmatpush1.bf16.msra.mxu0 %v3319
    %3551 = vmatprep.subr.bf16.mxu0 %v3312
    %3552 = vmatpush1.bf16.msra.mxu0 %v3311
    %3553 = vmatprep.subr.bf16.mxu0 %v3304
    %3554 = vmatpush1.bf16.msra.mxu0 %v3303
    %3555 = vmatprep.subr.bf16.mxu0 %v3296
    %3556 = vmatpush1.bf16.msra.mxu0 %v3295
    %3557 = vmatprep.subr.bf16.mxu0 %v3288
    %3558 = vmatpush1.bf16.msra.mxu0 %v3287
    %3559 = vmatprep.subr.bf16.mxu0 %v3408
    %3560 = vmatpush2.bf16.msra.mxu0 %v3407
    %3561 = vmatprep.subr.bf16.mxu0 %v3400
    %3562 = vmatpush2.bf16.msra.mxu0 %v3399
    %3563 = vmatprep.subr.bf16.mxu0 %v3392
    %3564 = vmatpush2.bf16.msra.mxu0 %v3391
    %3565 = vmatprep.subr.bf16.mxu0 %v3384
    %3566 = vmatpush2.bf16.msra.mxu0 %v3383
    %3567 = vmatprep.subr.bf16.mxu0 %v3376
    %3568 = vmatpush2.bf16.msra.mxu0 %v3375
    %3569 = vmatprep.subr.bf16.mxu0 %v3368
    %3570 = vmatpush2.bf16.msra.mxu0 %v3367
    %3571 = vmatprep.subr.bf16.mxu0 %v3360
    %3572 = vmatpush2.bf16.msra.mxu0 %v3359
    %3573 = vmatprep.subr.bf16.mxu0 %v3352
    %3574 = vmatpush2.bf16.msra.mxu0 %v3351
    %3575 = vmatprep.mubr.bf16.mxu0 %v1840
    %3576 = vmatmul.mubr.bf16.gmra.mxu0 %v1839
    %v3577 = vpop.f32.mrf.mxu0
    %v3578 = vadd.f32 %v2774, %v3577
    %v3579 = vpop.f32.mrf.mxu0
    %v3580 = vadd.f32 %v2776, %v3579
    %v3581 = vpop.f32.mrf.mxu0
    %v3582 = vpop.f32.mrf.mxu0
    %3583 = vdwg.mxu0
    %3584 = vmatprep.subr.bf16.mxu0 %v3346
    %3585 = vmatpush1.bf16.msra.mxu0 %v3345
    %3586 = vmatprep.subr.bf16.mxu0 %v3338
    %3587 = vmatpush1.bf16.msra.mxu0 %v3337
    %3588 = vmatprep.subr.bf16.mxu0 %v3330
    %3589 = vmatpush1.bf16.msra.mxu0 %v3329
    %3590 = vmatprep.subr.bf16.mxu0 %v3322
    %3591 = vmatpush1.bf16.msra.mxu0 %v3321
    %3592 = vmatprep.subr.bf16.mxu0 %v3314
    %3593 = vmatpush1.bf16.msra.mxu0 %v3313
    %3594 = vmatprep.subr.bf16.mxu0 %v3306
    %3595 = vmatpush1.bf16.msra.mxu0 %v3305
    %3596 = vmatprep.subr.bf16.mxu0 %v3298
    %3597 = vmatpush1.bf16.msra.mxu0 %v3297
    %3598 = vmatprep.subr.bf16.mxu0 %v3290
    %3599 = vmatpush1.bf16.msra.mxu0 %v3289
    %3600 = vmatprep.subr.bf16.mxu0 %v3410
    %3601 = vmatpush2.bf16.msra.mxu0 %v3409
    %3602 = vmatprep.subr.bf16.mxu0 %v3402
    %3603 = vmatpush2.bf16.msra.mxu0 %v3401
    %3604 = vmatprep.subr.bf16.mxu0 %v3394
    %3605 = vmatpush2.bf16.msra.mxu0 %v3393
    %3606 = vmatprep.subr.bf16.mxu0 %v3386
    %3607 = vmatpush2.bf16.msra.mxu0 %v3385
    %3608 = vmatprep.subr.bf16.mxu0 %v3378
    %3609 = vmatpush2.bf16.msra.mxu0 %v3377
    %3610 = vmatprep.subr.bf16.mxu0 %v3370
    %3611 = vmatpush2.bf16.msra.mxu0 %v3369
    %3612 = vmatprep.subr.bf16.mxu0 %v3362
    %3613 = vmatpush2.bf16.msra.mxu0 %v3361
    %3614 = vmatprep.subr.bf16.mxu0 %v3354
    %3615 = vmatpush2.bf16.msra.mxu0 %v3353
    %3616 = vmatprep.mubr.bf16.mxu0 %v1840
    %3617 = vmatmul.mubr.bf16.gmra.mxu0 %v1839
    %v3618 = vpop.f32.mrf.mxu0
    %v3619 = vadd.f32 %v2815, %v3618
    %v3620 = vpop.f32.mrf.mxu0
    %v3621 = vadd.f32 %v2817, %v3620
    %v3622 = vpop.f32.mrf.mxu0
    %v3623 = vpop.f32.mrf.mxu0
    %3624 = vdwg.mxu0
    %3625 = vmatprep.subr.bf16.mxu0 %v3348
    %3626 = vmatpush1.bf16.msra.mxu0 %v3347
    %3627 = vmatprep.subr.bf16.mxu0 %v3340
    %3628 = vmatpush1.bf16.msra.mxu0 %v3339
    %3629 = vmatprep.subr.bf16.mxu0 %v3332
    %3630 = vmatpush1.bf16.msra.mxu0 %v3331
    %3631 = vmatprep.subr.bf16.mxu0 %v3324
    %3632 = vmatpush1.bf16.msra.mxu0 %v3323
    %3633 = vmatprep.subr.bf16.mxu0 %v3316
    %3634 = vmatpush1.bf16.msra.mxu0 %v3315
    %3635 = vmatprep.subr.bf16.mxu0 %v3308
    %3636 = vmatpush1.bf16.msra.mxu0 %v3307
    %3637 = vmatprep.subr.bf16.mxu0 %v3300
    %3638 = vmatpush1.bf16.msra.mxu0 %v3299
    %3639 = vmatprep.subr.bf16.mxu0 %v3292
    %3640 = vmatpush1.bf16.msra.mxu0 %v3291
    %3641 = vmatprep.subr.bf16.mxu0 %v3412
    %3642 = vmatpush2.bf16.msra.mxu0 %v3411
    %3643 = vmatprep.subr.bf16.mxu0 %v3404
    %3644 = vmatpush2.bf16.msra.mxu0 %v3403
    %3645 = vmatprep.subr.bf16.mxu0 %v3396
    %3646 = vmatpush2.bf16.msra.mxu0 %v3395
    %3647 = vmatprep.subr.bf16.mxu0 %v3388
    %3648 = vmatpush2.bf16.msra.mxu0 %v3387
    %3649 = vmatprep.subr.bf16.mxu0 %v3380
    %3650 = vmatpush2.bf16.msra.mxu0 %v3379
    %3651 = vmatprep.subr.bf16.mxu0 %v3372
    %3652 = vmatpush2.bf16.msra.mxu0 %v3371
    %3653 = vmatprep.subr.bf16.mxu0 %v3364
    %3654 = vmatpush2.bf16.msra.mxu0 %v3363
    %3655 = vmatprep.subr.bf16.mxu0 %v3356
    %3656 = vmatpush2.bf16.msra.mxu0 %v3355
    %3657 = vmatprep.mubr.bf16.mxu0 %v1840
    %3658 = vmatmul.mubr.bf16.gmra.mxu0 %v1839
    %v3659 = vpop.f32.mrf.mxu0
    %v3660 = vadd.f32 %v2856, %v3659
    %v3661 = vpop.f32.mrf.mxu0
    %v3662 = vadd.f32 %v2858, %v3661
    %v3663 = vpop.f32.mrf.mxu0
    %v3664 = vpop.f32.mrf.mxu0
    %3665 = vdwg.mxu0
    %3666 = vmatprep.subr.bf16.mxu0 %v3350
    %3667 = vmatpush1.bf16.msra.mxu0 %v3349
    %3668 = vmatprep.subr.bf16.mxu0 %v3342
    %3669 = vmatpush1.bf16.msra.mxu0 %v3341
    %3670 = vmatprep.subr.bf16.mxu0 %v3334
    %3671 = vmatpush1.bf16.msra.mxu0 %v3333
    %3672 = vmatprep.subr.bf16.mxu0 %v3326
    %3673 = vmatpush1.bf16.msra.mxu0 %v3325
    %3674 = vmatprep.subr.bf16.mxu0 %v3318
    %3675 = vmatpush1.bf16.msra.mxu0 %v3317
    %3676 = vmatprep.subr.bf16.mxu0 %v3310
    %3677 = vmatpush1.bf16.msra.mxu0 %v3309
    %3678 = vmatprep.subr.bf16.mxu0 %v3302
    %3679 = vmatpush1.bf16.msra.mxu0 %v3301
    %3680 = vmatprep.subr.bf16.mxu0 %v3294
    %3681 = vmatpush1.bf16.msra.mxu0 %v3293
    %3682 = vmatprep.subr.bf16.mxu0 %v3414
    %3683 = vmatpush2.bf16.msra.mxu0 %v3413
    %3684 = vmatprep.subr.bf16.mxu0 %v3406
    %3685 = vmatpush2.bf16.msra.mxu0 %v3405
    %3686 = vmatprep.subr.bf16.mxu0 %v3398
    %3687 = vmatpush2.bf16.msra.mxu0 %v3397
    %3688 = vmatprep.subr.bf16.mxu0 %v3390
    %3689 = vmatpush2.bf16.msra.mxu0 %v3389
    %3690 = vmatprep.subr.bf16.mxu0 %v3382
    %3691 = vmatpush2.bf16.msra.mxu0 %v3381
    %3692 = vmatprep.subr.bf16.mxu0 %v3374
    %3693 = vmatpush2.bf16.msra.mxu0 %v3373
    %3694 = vmatprep.subr.bf16.mxu0 %v3366
    %3695 = vmatpush2.bf16.msra.mxu0 %v3365
    %3696 = vmatprep.subr.bf16.mxu0 %v3358
    %3697 = vmatpush2.bf16.msra.mxu0 %v3357
    %3698 = vmatprep.mubr.bf16.mxu0 %v1840
    %3699 = vmatmul.mubr.bf16.gmra.mxu0 %v1839
    %v3700 = vpop.f32.mrf.mxu0
    %v3701 = vadd.f32 %v2897, %v3700
    %v3702 = vpop.f32.mrf.mxu0
    %v3703 = vadd.f32 %v2899, %v3702
    %v3704 = vpop.f32.mrf.mxu0
    %v3705 = vpop.f32.mrf.mxu0
    %3706 = vdwg.mxu0
    %v3707 = vld [vmem:[#allocation14] sm:$0xff]
    %v3709 = vlaneseq
    %v3710 = vshrl.u32 %v3709, 7
    %v3711 = vsub.s32 0, %v3710
    %v3712 = vrot.slane %v3707, %v3711
    %v3713 = vlaneseq
    %v3714 = vshrl.u32 %v3713, 7
    %v3715 = vsub.s32 1, %v3714
    %v3716 = vrot.slane %v3707, %v3715
    %v3717 = vlaneseq
    %v3718 = vshrl.u32 %v3717, 7
    %v3719 = vsub.s32 2, %v3718
    %v3720 = vrot.slane %v3707, %v3719
    %v3721 = vlaneseq
    %v3722 = vshrl.u32 %v3721, 7
    %v3723 = vsub.s32 3, %v3722
    %v3724 = vrot.slane %v3707, %v3723
    %v3725 = vlaneseq
    %v3726 = vshrl.u32 %v3725, 7
    %v3727 = vsub.s32 4, %v3726
    %v3728 = vrot.slane %v3707, %v3727
    %v3729 = vlaneseq
    %v3730 = vshrl.u32 %v3729, 7
    %v3731 = vsub.s32 5, %v3730
    %v3732 = vrot.slane %v3707, %v3731
    %v3733 = vlaneseq
    %v3734 = vshrl.u32 %v3733, 7
    %v3735 = vsub.s32 6, %v3734
    %v3736 = vrot.slane %v3707, %v3735
    %v3737 = vlaneseq
    %v3738 = vshrl.u32 %v3737, 7
    %v3739 = vsub.s32 7, %v3738
    %v3740 = vrot.slane %v3707, %v3739
    %v3749 = vadd.f32 %v3578, %v3712
    %v3750 = vadd.f32 %v3580, %v3716
    %v3751 = vadd.f32 %v3619, %v3720
    %v3752 = vadd.f32 %v3621, %v3724
    %v3753 = vadd.f32 %v3660, %v3728
    %v3754 = vadd.f32 %v3662, %v3732
    %v3755 = vadd.f32 %v3701, %v3736
    %v3756 = vadd.f32 %v3703, %v3740
    %v3757 = vxor.u32 %v3749, 2147483648
    %v3758 = vxor.u32 %v3750, 2147483648
    %v3759 = vmul.f32 %v3757, 1.442695
    %v3760 = vpow.pop %v3759
    %v3761 = vmul.f32 %v3758, 1.442695
    %v3762 = vpow.pop %v3761
    %v3763 = vadd.f32 %v3760, 1.0
    %v3764 = vadd.f32 %v3762, 1.0
    %v3765 = vrcp.pop %v3763
    %v3766 = vmul.f32 1.0, %v3765
    %v3767 = vrcp.pop %v3764
    %v3768 = vmul.f32 1.0, %v3767
    %v3769 = vxor.u32 %v3751, 2147483648
    %v3770 = vxor.u32 %v3752, 2147483648
    %v3771 = vmul.f32 %v3769, 1.442695
    %v3772 = vpow.pop %v3771
    %v3773 = vmul.f32 %v3770, 1.442695
    %v3774 = vpow.pop %v3773
    %v3775 = vadd.f32 %v3772, 1.0
    %v3776 = vadd.f32 %v3774, 1.0
    %v3777 = vrcp.pop %v3775
    %v3778 = vmul.f32 1.0, %v3777
    %v3779 = vrcp.pop %v3776
    %v3780 = vmul.f32 1.0, %v3779
    %v3781 = vtanh.pop %v3753
    %v3782 = vtanh.pop %v3754
    %v3783 = vxor.u32 %v3755, 2147483648
    %v3784 = vxor.u32 %v3756, 2147483648
    %v3785 = vmul.f32 %v3783, 1.442695
    %v3786 = vpow.pop %v3785
    %v3787 = vmul.f32 %v3784, 1.442695
    %v3788 = vpow.pop %v3787
    %v3789 = vadd.f32 %v3786, 1.0
    %v3790 = vadd.f32 %v3788, 1.0
    %v3791 = vrcp.pop %v3789
    %v3792 = vmul.f32 1.0, %v3791
    %v3793 = vrcp.pop %v3790
    %v3794 = vmul.f32 1.0, %v3793
    %v3795 = vmul.f32 %v3778, %v833
    %v3796 = vmul.f32 %v3780, %v834
    %v3797 = vmul.f32 %v3766, %v3781
    %v3798 = vmul.f32 %v3768, %v3782
    %v3799 = vadd.f32 %v3795, %v3797
    %v3800 = vadd.f32 %v3796, %v3798
    %v3801 = vtanh.pop %v3799
    %v3802 = vtanh.pop %v3800
    %v3803 = vmul.f32 %v3792, %v3801
    %v3804 = vmul.f32 %v3794, %v3802
    %v3805 = vld [vmem:[#allocation2 + $0x40] sm:$0xff]
    %v3806 = vld [vmem:[#allocation2 + $0x48] sm:$0xff]
    %v3807 = vld [vmem:[#allocation2 + $0x50] sm:$0xff]
    %v3808 = vld [vmem:[#allocation2 + $0x58] sm:$0xff]
    %v3809 = vld [vmem:[#allocation2 + $0x60] sm:$0xff]
    %v3810 = vld [vmem:[#allocation2 + $0x68] sm:$0xff]
    %v3811 = vld [vmem:[#allocation2 + $0x70] sm:$0xff]
    %v3812 = vld [vmem:[#allocation2 + $0x78] sm:$0xff]
    %v3813 = vld [vmem:[#allocation12] sm:$0xff]
    %v3814 = vld [vmem:[#allocation12 + $0x8] sm:$0xff]
    %v3815 = vld [vmem:[#allocation12 + $0x10] sm:$0xff]
    %v3816 = vld [vmem:[#allocation12 + $0x18] sm:$0xff]
    %v3817 = vld [vmem:[#allocation12 + $0x20] sm:$0xff]
    %v3818 = vld [vmem:[#allocation12 + $0x28] sm:$0xff]
    %v3819 = vld [vmem:[#allocation12 + $0x30] sm:$0xff]
    %v3820 = vld [vmem:[#allocation12 + $0x38] sm:$0xff]
    %v3821 = vld [vmem:[#allocation12 + $0x40] sm:$0xff]
    %v3822 = vld [vmem:[#allocation12 + $0x48] sm:$0xff]
    %v3823 = vld [vmem:[#allocation12 + $0x50] sm:$0xff]
    %v3824 = vld [vmem:[#allocation12 + $0x58] sm:$0xff]
    %v3825 = vld [vmem:[#allocation12 + $0x60] sm:$0xff]
    %v3826 = vld [vmem:[#allocation12 + $0x68] sm:$0xff]
    %v3827 = vld [vmem:[#allocation12 + $0x70] sm:$0xff]
    %v3828 = vld [vmem:[#allocation12 + $0x78] sm:$0xff]
    %v3829 = vld [vmem:[#allocation12 + $0x80] sm:$0xff]
    %v3830 = vld [vmem:[#allocation12 + $0x88] sm:$0xff]
    %v3831 = vld [vmem:[#allocation12 + $0x90] sm:$0xff]
    %v3832 = vld [vmem:[#allocation12 + $0x98] sm:$0xff]
    %v3833 = vld [vmem:[#allocation12 + $0xa0] sm:$0xff]
    %v3834 = vld [vmem:[#allocation12 + $0xa8] sm:$0xff]
    %v3835 = vld [vmem:[#allocation12 + $0xb0] sm:$0xff]
    %v3836 = vld [vmem:[#allocation12 + $0xb8] sm:$0xff]
    %v3837 = vld [vmem:[#allocation12 + $0xc0] sm:$0xff]
    %v3838 = vld [vmem:[#allocation12 + $0xc8] sm:$0xff]
    %v3839 = vld [vmem:[#allocation12 + $0xd0] sm:$0xff]
    %v3840 = vld [vmem:[#allocation12 + $0xd8] sm:$0xff]
    %v3841 = vld [vmem:[#allocation12 + $0xe0] sm:$0xff]
    %v3842 = vld [vmem:[#allocation12 + $0xe8] sm:$0xff]
    %v3843 = vld [vmem:[#allocation12 + $0xf0] sm:$0xff]
    %v3844 = vld [vmem:[#allocation12 + $0xf8] sm:$0xff]
    %v3845 = vld [vmem:[#allocation12 + $0x100] sm:$0xff]
    %v3846 = vld [vmem:[#allocation12 + $0x108] sm:$0xff]
    %v3847 = vld [vmem:[#allocation12 + $0x110] sm:$0xff]
    %v3848 = vld [vmem:[#allocation12 + $0x118] sm:$0xff]
    %v3849 = vld [vmem:[#allocation12 + $0x120] sm:$0xff]
    %v3850 = vld [vmem:[#allocation12 + $0x128] sm:$0xff]
    %v3851 = vld [vmem:[#allocation12 + $0x130] sm:$0xff]
    %v3852 = vld [vmem:[#allocation12 + $0x138] sm:$0xff]
    %v3853 = vld [vmem:[#allocation12 + $0x140] sm:$0xff]
    %v3854 = vld [vmem:[#allocation12 + $0x148] sm:$0xff]
    %v3855 = vld [vmem:[#allocation12 + $0x150] sm:$0xff]
    %v3856 = vld [vmem:[#allocation12 + $0x158] sm:$0xff]
    %v3857 = vld [vmem:[#allocation12 + $0x160] sm:$0xff]
    %v3858 = vld [vmem:[#allocation12 + $0x168] sm:$0xff]
    %v3859 = vld [vmem:[#allocation12 + $0x170] sm:$0xff]
    %v3860 = vld [vmem:[#allocation12 + $0x178] sm:$0xff]
    %v3861 = vld [vmem:[#allocation12 + $0x180] sm:$0xff]
    %v3862 = vld [vmem:[#allocation12 + $0x188] sm:$0xff]
    %v3863 = vld [vmem:[#allocation12 + $0x190] sm:$0xff]
    %v3864 = vld [vmem:[#allocation12 + $0x198] sm:$0xff]
    %v3865 = vld [vmem:[#allocation12 + $0x1a0] sm:$0xff]
    %v3866 = vld [vmem:[#allocation12 + $0x1a8] sm:$0xff]
    %v3867 = vld [vmem:[#allocation12 + $0x1b0] sm:$0xff]
    %v3868 = vld [vmem:[#allocation12 + $0x1b8] sm:$0xff]
    %v3869 = vld [vmem:[#allocation12 + $0x1c0] sm:$0xff]
    %v3870 = vld [vmem:[#allocation12 + $0x1c8] sm:$0xff]
    %v3871 = vld [vmem:[#allocation12 + $0x1d0] sm:$0xff]
    %v3872 = vld [vmem:[#allocation12 + $0x1d8] sm:$0xff]
    %v3873 = vld [vmem:[#allocation12 + $0x1e0] sm:$0xff]
    %v3874 = vld [vmem:[#allocation12 + $0x1e8] sm:$0xff]
    %v3875 = vld [vmem:[#allocation12 + $0x1f0] sm:$0xff]
    %v3876 = vld [vmem:[#allocation12 + $0x1f8] sm:$0xff]
    %v3877 = vld [vmem:[#allocation12 + $0x200] sm:$0xff]
    %v3878 = vld [vmem:[#allocation12 + $0x208] sm:$0xff]
    %v3879 = vld [vmem:[#allocation12 + $0x210] sm:$0xff]
    %v3880 = vld [vmem:[#allocation12 + $0x218] sm:$0xff]
    %v3881 = vld [vmem:[#allocation12 + $0x220] sm:$0xff]
    %v3882 = vld [vmem:[#allocation12 + $0x228] sm:$0xff]
    %v3883 = vld [vmem:[#allocation12 + $0x230] sm:$0xff]
    %v3884 = vld [vmem:[#allocation12 + $0x238] sm:$0xff]
    %v3885 = vld [vmem:[#allocation12 + $0x240] sm:$0xff]
    %v3886 = vld [vmem:[#allocation12 + $0x248] sm:$0xff]
    %v3887 = vld [vmem:[#allocation12 + $0x250] sm:$0xff]
    %v3888 = vld [vmem:[#allocation12 + $0x258] sm:$0xff]
    %v3889 = vld [vmem:[#allocation12 + $0x260] sm:$0xff]
    %v3890 = vld [vmem:[#allocation12 + $0x268] sm:$0xff]
    %v3891 = vld [vmem:[#allocation12 + $0x270] sm:$0xff]
    %v3892 = vld [vmem:[#allocation12 + $0x278] sm:$0xff]
    %v3893 = vld [vmem:[#allocation12 + $0x280] sm:$0xff]
    %v3894 = vld [vmem:[#allocation12 + $0x288] sm:$0xff]
    %v3895 = vld [vmem:[#allocation12 + $0x290] sm:$0xff]
    %v3896 = vld [vmem:[#allocation12 + $0x298] sm:$0xff]
    %v3897 = vld [vmem:[#allocation12 + $0x2a0] sm:$0xff]
    %v3898 = vld [vmem:[#allocation12 + $0x2a8] sm:$0xff]
    %v3899 = vld [vmem:[#allocation12 + $0x2b0] sm:$0xff]
    %v3900 = vld [vmem:[#allocation12 + $0x2b8] sm:$0xff]
    %v3901 = vld [vmem:[#allocation12 + $0x2c0] sm:$0xff]
    %v3902 = vld [vmem:[#allocation12 + $0x2c8] sm:$0xff]
    %v3903 = vld [vmem:[#allocation12 + $0x2d0] sm:$0xff]
    %v3904 = vld [vmem:[#allocation12 + $0x2d8] sm:$0xff]
    %v3905 = vld [vmem:[#allocation12 + $0x2e0] sm:$0xff]
    %v3906 = vld [vmem:[#allocation12 + $0x2e8] sm:$0xff]
    %v3907 = vld [vmem:[#allocation12 + $0x2f0] sm:$0xff]
    %v3908 = vld [vmem:[#allocation12 + $0x2f8] sm:$0xff]
    %v3909 = vld [vmem:[#allocation12 + $0x300] sm:$0xff]
    %v3910 = vld [vmem:[#allocation12 + $0x308] sm:$0xff]
    %v3911 = vld [vmem:[#allocation12 + $0x310] sm:$0xff]
    %v3912 = vld [vmem:[#allocation12 + $0x318] sm:$0xff]
    %v3913 = vld [vmem:[#allocation12 + $0x320] sm:$0xff]
    %v3914 = vld [vmem:[#allocation12 + $0x328] sm:$0xff]
    %v3915 = vld [vmem:[#allocation12 + $0x330] sm:$0xff]
    %v3916 = vld [vmem:[#allocation12 + $0x338] sm:$0xff]
    %v3917 = vld [vmem:[#allocation12 + $0x340] sm:$0xff]
    %v3918 = vld [vmem:[#allocation12 + $0x348] sm:$0xff]
    %v3919 = vld [vmem:[#allocation12 + $0x350] sm:$0xff]
    %v3920 = vld [vmem:[#allocation12 + $0x358] sm:$0xff]
    %v3921 = vld [vmem:[#allocation12 + $0x360] sm:$0xff]
    %v3922 = vld [vmem:[#allocation12 + $0x368] sm:$0xff]
    %v3923 = vld [vmem:[#allocation12 + $0x370] sm:$0xff]
    %v3924 = vld [vmem:[#allocation12 + $0x378] sm:$0xff]
    %v3925 = vld [vmem:[#allocation12 + $0x380] sm:$0xff]
    %v3926 = vld [vmem:[#allocation12 + $0x388] sm:$0xff]
    %v3927 = vld [vmem:[#allocation12 + $0x390] sm:$0xff]
    %v3928 = vld [vmem:[#allocation12 + $0x398] sm:$0xff]
    %v3929 = vld [vmem:[#allocation12 + $0x3a0] sm:$0xff]
    %v3930 = vld [vmem:[#allocation12 + $0x3a8] sm:$0xff]
    %v3931 = vld [vmem:[#allocation12 + $0x3b0] sm:$0xff]
    %v3932 = vld [vmem:[#allocation12 + $0x3b8] sm:$0xff]
    %v3933 = vld [vmem:[#allocation12 + $0x3c0] sm:$0xff]
    %v3934 = vld [vmem:[#allocation12 + $0x3c8] sm:$0xff]
    %v3935 = vld [vmem:[#allocation12 + $0x3d0] sm:$0xff]
    %v3936 = vld [vmem:[#allocation12 + $0x3d8] sm:$0xff]
    %v3937 = vld [vmem:[#allocation12 + $0x3e0] sm:$0xff]
    %v3938 = vld [vmem:[#allocation12 + $0x3e8] sm:$0xff]
    %v3939 = vld [vmem:[#allocation12 + $0x3f0] sm:$0xff]
    %v3940 = vld [vmem:[#allocation12 + $0x3f8] sm:$0xff]
    %v4069 = vunpack.c.l.b16 %v3813
    %v4070 = vunpack.c.h.b16 %v3813
    %v4071 = vunpack.c.l.b16 %v3814
    %v4072 = vunpack.c.h.b16 %v3814
    %v4073 = vunpack.c.l.b16 %v3815
    %v4074 = vunpack.c.h.b16 %v3815
    %v4075 = vunpack.c.l.b16 %v3816
    %v4076 = vunpack.c.h.b16 %v3816
    %v4077 = vunpack.c.l.b16 %v3817
    %v4078 = vunpack.c.h.b16 %v3817
    %v4079 = vunpack.c.l.b16 %v3818
    %v4080 = vunpack.c.h.b16 %v3818
    %v4081 = vunpack.c.l.b16 %v3819
    %v4082 = vunpack.c.h.b16 %v3819
    %v4083 = vunpack.c.l.b16 %v3820
    %v4084 = vunpack.c.h.b16 %v3820
    %v4085 = vunpack.c.l.b16 %v3821
    %v4086 = vunpack.c.h.b16 %v3821
    %v4087 = vunpack.c.l.b16 %v3822
    %v4088 = vunpack.c.h.b16 %v3822
    %v4089 = vunpack.c.l.b16 %v3823
    %v4090 = vunpack.c.h.b16 %v3823
    %v4091 = vunpack.c.l.b16 %v3824
    %v4092 = vunpack.c.h.b16 %v3824
    %v4093 = vunpack.c.l.b16 %v3825
    %v4094 = vunpack.c.h.b16 %v3825
    %v4095 = vunpack.c.l.b16 %v3826
    %v4096 = vunpack.c.h.b16 %v3826
    %v4097 = vunpack.c.l.b16 %v3827
    %v4098 = vunpack.c.h.b16 %v3827
    %v4099 = vunpack.c.l.b16 %v3828
    %v4100 = vunpack.c.h.b16 %v3828
    %v4101 = vunpack.c.l.b16 %v3829
    %v4102 = vunpack.c.h.b16 %v3829
    %v4103 = vunpack.c.l.b16 %v3830
    %v4104 = vunpack.c.h.b16 %v3830
    %v4105 = vunpack.c.l.b16 %v3831
    %v4106 = vunpack.c.h.b16 %v3831
    %v4107 = vunpack.c.l.b16 %v3832
    %v4108 = vunpack.c.h.b16 %v3832
    %v4109 = vunpack.c.l.b16 %v3833
    %v4110 = vunpack.c.h.b16 %v3833
    %v4111 = vunpack.c.l.b16 %v3834
    %v4112 = vunpack.c.h.b16 %v3834
    %v4113 = vunpack.c.l.b16 %v3835
    %v4114 = vunpack.c.h.b16 %v3835
    %v4115 = vunpack.c.l.b16 %v3836
    %v4116 = vunpack.c.h.b16 %v3836
    %v4117 = vunpack.c.l.b16 %v3837
    %v4118 = vunpack.c.h.b16 %v3837
    %v4119 = vunpack.c.l.b16 %v3838
    %v4120 = vunpack.c.h.b16 %v3838
    %v4121 = vunpack.c.l.b16 %v3839
    %v4122 = vunpack.c.h.b16 %v3839
    %v4123 = vunpack.c.l.b16 %v3840
    %v4124 = vunpack.c.h.b16 %v3840
    %v4125 = vunpack.c.l.b16 %v3841
    %v4126 = vunpack.c.h.b16 %v3841
    %v4127 = vunpack.c.l.b16 %v3842
    %v4128 = vunpack.c.h.b16 %v3842
    %v4129 = vunpack.c.l.b16 %v3843
    %v4130 = vunpack.c.h.b16 %v3843
    %v4131 = vunpack.c.l.b16 %v3844
    %v4132 = vunpack.c.h.b16 %v3844
    %v4133 = vunpack.c.l.b16 %v3845
    %v4134 = vunpack.c.h.b16 %v3845
    %v4135 = vunpack.c.l.b16 %v3846
    %v4136 = vunpack.c.h.b16 %v3846
    %v4137 = vunpack.c.l.b16 %v3847
    %v4138 = vunpack.c.h.b16 %v3847
    %v4139 = vunpack.c.l.b16 %v3848
    %v4140 = vunpack.c.h.b16 %v3848
    %v4141 = vunpack.c.l.b16 %v3849
    %v4142 = vunpack.c.h.b16 %v3849
    %v4143 = vunpack.c.l.b16 %v3850
    %v4144 = vunpack.c.h.b16 %v3850
    %v4145 = vunpack.c.l.b16 %v3851
    %v4146 = vunpack.c.h.b16 %v3851
    %v4147 = vunpack.c.l.b16 %v3852
    %v4148 = vunpack.c.h.b16 %v3852
    %v4149 = vunpack.c.l.b16 %v3853
    %v4150 = vunpack.c.h.b16 %v3853
    %v4151 = vunpack.c.l.b16 %v3854
    %v4152 = vunpack.c.h.b16 %v3854
    %v4153 = vunpack.c.l.b16 %v3855
    %v4154 = vunpack.c.h.b16 %v3855
    %v4155 = vunpack.c.l.b16 %v3856
    %v4156 = vunpack.c.h.b16 %v3856
    %v4157 = vunpack.c.l.b16 %v3857
    %v4158 = vunpack.c.h.b16 %v3857
    %v4159 = vunpack.c.l.b16 %v3858
    %v4160 = vunpack.c.h.b16 %v3858
    %v4161 = vunpack.c.l.b16 %v3859
    %v4162 = vunpack.c.h.b16 %v3859
    %v4163 = vunpack.c.l.b16 %v3860
    %v4164 = vunpack.c.h.b16 %v3860
    %v4165 = vunpack.c.l.b16 %v3861
    %v4166 = vunpack.c.h.b16 %v3861
    %v4167 = vunpack.c.l.b16 %v3862
    %v4168 = vunpack.c.h.b16 %v3862
    %v4169 = vunpack.c.l.b16 %v3863
    %v4170 = vunpack.c.h.b16 %v3863
    %v4171 = vunpack.c.l.b16 %v3864
    %v4172 = vunpack.c.h.b16 %v3864
    %v4173 = vunpack.c.l.b16 %v3865
    %v4174 = vunpack.c.h.b16 %v3865
    %v4175 = vunpack.c.l.b16 %v3866
    %v4176 = vunpack.c.h.b16 %v3866
    %v4177 = vunpack.c.l.b16 %v3867
    %v4178 = vunpack.c.h.b16 %v3867
    %v4179 = vunpack.c.l.b16 %v3868
    %v4180 = vunpack.c.h.b16 %v3868
    %v4181 = vunpack.c.l.b16 %v3869
    %v4182 = vunpack.c.h.b16 %v3869
    %v4183 = vunpack.c.l.b16 %v3870
    %v4184 = vunpack.c.h.b16 %v3870
    %v4185 = vunpack.c.l.b16 %v3871
    %v4186 = vunpack.c.h.b16 %v3871
    %v4187 = vunpack.c.l.b16 %v3872
    %v4188 = vunpack.c.h.b16 %v3872
    %v4189 = vunpack.c.l.b16 %v3873
    %v4190 = vunpack.c.h.b16 %v3873
    %v4191 = vunpack.c.l.b16 %v3874
    %v4192 = vunpack.c.h.b16 %v3874
    %v4193 = vunpack.c.l.b16 %v3875
    %v4194 = vunpack.c.h.b16 %v3875
    %v4195 = vunpack.c.l.b16 %v3876
    %v4196 = vunpack.c.h.b16 %v3876
    %v4197 = vunpack.c.l.b16 %v3877
    %v4198 = vunpack.c.h.b16 %v3877
    %v4199 = vunpack.c.l.b16 %v3878
    %v4200 = vunpack.c.h.b16 %v3878
    %v4201 = vunpack.c.l.b16 %v3879
    %v4202 = vunpack.c.h.b16 %v3879
    %v4203 = vunpack.c.l.b16 %v3880
    %v4204 = vunpack.c.h.b16 %v3880
    %v4205 = vunpack.c.l.b16 %v3881
    %v4206 = vunpack.c.h.b16 %v3881
    %v4207 = vunpack.c.l.b16 %v3882
    %v4208 = vunpack.c.h.b16 %v3882
    %v4209 = vunpack.c.l.b16 %v3883
    %v4210 = vunpack.c.h.b16 %v3883
    %v4211 = vunpack.c.l.b16 %v3884
    %v4212 = vunpack.c.h.b16 %v3884
    %v4213 = vunpack.c.l.b16 %v3885
    %v4214 = vunpack.c.h.b16 %v3885
    %v4215 = vunpack.c.l.b16 %v3886
    %v4216 = vunpack.c.h.b16 %v3886
    %v4217 = vunpack.c.l.b16 %v3887
    %v4218 = vunpack.c.h.b16 %v3887
    %v4219 = vunpack.c.l.b16 %v3888
    %v4220 = vunpack.c.h.b16 %v3888
    %v4221 = vunpack.c.l.b16 %v3889
    %v4222 = vunpack.c.h.b16 %v3889
    %v4223 = vunpack.c.l.b16 %v3890
    %v4224 = vunpack.c.h.b16 %v3890
    %v4225 = vunpack.c.l.b16 %v3891
    %v4226 = vunpack.c.h.b16 %v3891
    %v4227 = vunpack.c.l.b16 %v3892
    %v4228 = vunpack.c.h.b16 %v3892
    %v4229 = vunpack.c.l.b16 %v3893
    %v4230 = vunpack.c.h.b16 %v3893
    %v4231 = vunpack.c.l.b16 %v3894
    %v4232 = vunpack.c.h.b16 %v3894
    %v4233 = vunpack.c.l.b16 %v3895
    %v4234 = vunpack.c.h.b16 %v3895
    %v4235 = vunpack.c.l.b16 %v3896
    %v4236 = vunpack.c.h.b16 %v3896
    %v4237 = vunpack.c.l.b16 %v3897
    %v4238 = vunpack.c.h.b16 %v3897
    %v4239 = vunpack.c.l.b16 %v3898
    %v4240 = vunpack.c.h.b16 %v3898
    %v4241 = vunpack.c.l.b16 %v3899
    %v4242 = vunpack.c.h.b16 %v3899
    %v4243 = vunpack.c.l.b16 %v3900
    %v4244 = vunpack.c.h.b16 %v3900
    %v4245 = vunpack.c.l.b16 %v3901
    %v4246 = vunpack.c.h.b16 %v3901
    %v4247 = vunpack.c.l.b16 %v3902
    %v4248 = vunpack.c.h.b16 %v3902
    %v4249 = vunpack.c.l.b16 %v3903
    %v4250 = vunpack.c.h.b16 %v3903
    %v4251 = vunpack.c.l.b16 %v3904
    %v4252 = vunpack.c.h.b16 %v3904
    %v4253 = vunpack.c.l.b16 %v3905
    %v4254 = vunpack.c.h.b16 %v3905
    %v4255 = vunpack.c.l.b16 %v3906
    %v4256 = vunpack.c.h.b16 %v3906
    %v4257 = vunpack.c.l.b16 %v3907
    %v4258 = vunpack.c.h.b16 %v3907
    %v4259 = vunpack.c.l.b16 %v3908
    %v4260 = vunpack.c.h.b16 %v3908
    %v4261 = vunpack.c.l.b16 %v3909
    %v4262 = vunpack.c.h.b16 %v3909
    %v4263 = vunpack.c.l.b16 %v3910
    %v4264 = vunpack.c.h.b16 %v3910
    %v4265 = vunpack.c.l.b16 %v3911
    %v4266 = vunpack.c.h.b16 %v3911
    %v4267 = vunpack.c.l.b16 %v3912
    %v4268 = vunpack.c.h.b16 %v3912
    %v4269 = vunpack.c.l.b16 %v3913
    %v4270 = vunpack.c.h.b16 %v3913
    %v4271 = vunpack.c.l.b16 %v3914
    %v4272 = vunpack.c.h.b16 %v3914
    %v4273 = vunpack.c.l.b16 %v3915
    %v4274 = vunpack.c.h.b16 %v3915
    %v4275 = vunpack.c.l.b16 %v3916
    %v4276 = vunpack.c.h.b16 %v3916
    %v4277 = vunpack.c.l.b16 %v3917
    %v4278 = vunpack.c.h.b16 %v3917
    %v4279 = vunpack.c.l.b16 %v3918
    %v4280 = vunpack.c.h.b16 %v3918
    %v4281 = vunpack.c.l.b16 %v3919
    %v4282 = vunpack.c.h.b16 %v3919
    %v4283 = vunpack.c.l.b16 %v3920
    %v4284 = vunpack.c.h.b16 %v3920
    %v4285 = vunpack.c.l.b16 %v3921
    %v4286 = vunpack.c.h.b16 %v3921
    %v4287 = vunpack.c.l.b16 %v3922
    %v4288 = vunpack.c.h.b16 %v3922
    %v4289 = vunpack.c.l.b16 %v3923
    %v4290 = vunpack.c.h.b16 %v3923
    %v4291 = vunpack.c.l.b16 %v3924
    %v4292 = vunpack.c.h.b16 %v3924
    %v4293 = vunpack.c.l.b16 %v3925
    %v4294 = vunpack.c.h.b16 %v3925
    %v4295 = vunpack.c.l.b16 %v3926
    %v4296 = vunpack.c.h.b16 %v3926
    %v4297 = vunpack.c.l.b16 %v3927
    %v4298 = vunpack.c.h.b16 %v3927
    %v4299 = vunpack.c.l.b16 %v3928
    %v4300 = vunpack.c.h.b16 %v3928
    %v4301 = vunpack.c.l.b16 %v3929
    %v4302 = vunpack.c.h.b16 %v3929
    %v4303 = vunpack.c.l.b16 %v3930
    %v4304 = vunpack.c.h.b16 %v3930
    %v4305 = vunpack.c.l.b16 %v3931
    %v4306 = vunpack.c.h.b16 %v3931
    %v4307 = vunpack.c.l.b16 %v3932
    %v4308 = vunpack.c.h.b16 %v3932
    %v4309 = vunpack.c.l.b16 %v3933
    %v4310 = vunpack.c.h.b16 %v3933
    %v4311 = vunpack.c.l.b16 %v3934
    %v4312 = vunpack.c.h.b16 %v3934
    %v4313 = vunpack.c.l.b16 %v3935
    %v4314 = vunpack.c.h.b16 %v3935
    %v4315 = vunpack.c.l.b16 %v3936
    %v4316 = vunpack.c.h.b16 %v3936
    %v4317 = vunpack.c.l.b16 %v3937
    %v4318 = vunpack.c.h.b16 %v3937
    %v4319 = vunpack.c.l.b16 %v3938
    %v4320 = vunpack.c.h.b16 %v3938
    %v4321 = vunpack.c.l.b16 %v3939
    %v4322 = vunpack.c.h.b16 %v3939
    %v4323 = vunpack.c.l.b16 %v3940
    %v4324 = vunpack.c.h.b16 %v3940
    %v4325 = vpack.c.b16 %v4077, %v4069
    %v4326 = vpack.c.b16 %v4078, %v4070
    %v4327 = vpack.c.b16 %v4079, %v4071
    %v4328 = vpack.c.b16 %v4080, %v4072
    %v4329 = vpack.c.b16 %v4081, %v4073
    %v4330 = vpack.c.b16 %v4082, %v4074
    %v4331 = vpack.c.b16 %v4083, %v4075
    %v4332 = vpack.c.b16 %v4084, %v4076
    %v4333 = vpack.c.b16 %v4093, %v4085
    %v4334 = vpack.c.b16 %v4094, %v4086
    %v4335 = vpack.c.b16 %v4095, %v4087
    %v4336 = vpack.c.b16 %v4096, %v4088
    %v4337 = vpack.c.b16 %v4097, %v4089
    %v4338 = vpack.c.b16 %v4098, %v4090
    %v4339 = vpack.c.b16 %v4099, %v4091
    %v4340 = vpack.c.b16 %v4100, %v4092
    %v4341 = vpack.c.b16 %v4109, %v4101
    %v4342 = vpack.c.b16 %v4110, %v4102
    %v4343 = vpack.c.b16 %v4111, %v4103
    %v4344 = vpack.c.b16 %v4112, %v4104
    %v4345 = vpack.c.b16 %v4113, %v4105
    %v4346 = vpack.c.b16 %v4114, %v4106
    %v4347 = vpack.c.b16 %v4115, %v4107
    %v4348 = vpack.c.b16 %v4116, %v4108
    %v4349 = vpack.c.b16 %v4125, %v4117
    %v4350 = vpack.c.b16 %v4126, %v4118
    %v4351 = vpack.c.b16 %v4127, %v4119
    %v4352 = vpack.c.b16 %v4128, %v4120
    %v4353 = vpack.c.b16 %v4129, %v4121
    %v4354 = vpack.c.b16 %v4130, %v4122
    %v4355 = vpack.c.b16 %v4131, %v4123
    %v4356 = vpack.c.b16 %v4132, %v4124
    %v4357 = vpack.c.b16 %v4141, %v4133
    %v4358 = vpack.c.b16 %v4142, %v4134
    %v4359 = vpack.c.b16 %v4143, %v4135
    %v4360 = vpack.c.b16 %v4144, %v4136
    %v4361 = vpack.c.b16 %v4145, %v4137
    %v4362 = vpack.c.b16 %v4146, %v4138
    %v4363 = vpack.c.b16 %v4147, %v4139
    %v4364 = vpack.c.b16 %v4148, %v4140
    %v4365 = vpack.c.b16 %v4157, %v4149
    %v4366 = vpack.c.b16 %v4158, %v4150
    %v4367 = vpack.c.b16 %v4159, %v4151
    %v4368 = vpack.c.b16 %v4160, %v4152
    %v4369 = vpack.c.b16 %v4161, %v4153
    %v4370 = vpack.c.b16 %v4162, %v4154
    %v4371 = vpack.c.b16 %v4163, %v4155
    %v4372 = vpack.c.b16 %v4164, %v4156
    %v4373 = vpack.c.b16 %v4173, %v4165
    %v4374 = vpack.c.b16 %v4174, %v4166
    %v4375 = vpack.c.b16 %v4175, %v4167
    %v4376 = vpack.c.b16 %v4176, %v4168
    %v4377 = vpack.c.b16 %v4177, %v4169
    %v4378 = vpack.c.b16 %v4178, %v4170
    %v4379 = vpack.c.b16 %v4179, %v4171
    %v4380 = vpack.c.b16 %v4180, %v4172
    %v4381 = vpack.c.b16 %v4189, %v4181
    %v4382 = vpack.c.b16 %v4190, %v4182
    %v4383 = vpack.c.b16 %v4191, %v4183
    %v4384 = vpack.c.b16 %v4192, %v4184
    %v4385 = vpack.c.b16 %v4193, %v4185
    %v4386 = vpack.c.b16 %v4194, %v4186
    %v4387 = vpack.c.b16 %v4195, %v4187
    %v4388 = vpack.c.b16 %v4196, %v4188
    %v4389 = vpack.c.b16 %v4205, %v4197
    %v4390 = vpack.c.b16 %v4206, %v4198
    %v4391 = vpack.c.b16 %v4207, %v4199
    %v4392 = vpack.c.b16 %v4208, %v4200
    %v4393 = vpack.c.b16 %v4209, %v4201
    %v4394 = vpack.c.b16 %v4210, %v4202
    %v4395 = vpack.c.b16 %v4211, %v4203
    %v4396 = vpack.c.b16 %v4212, %v4204
    %v4397 = vpack.c.b16 %v4221, %v4213
    %v4398 = vpack.c.b16 %v4222, %v4214
    %v4399 = vpack.c.b16 %v4223, %v4215
    %v4400 = vpack.c.b16 %v4224, %v4216
    %v4401 = vpack.c.b16 %v4225, %v4217
    %v4402 = vpack.c.b16 %v4226, %v4218
    %v4403 = vpack.c.b16 %v4227, %v4219
    %v4404 = vpack.c.b16 %v4228, %v4220
    %v4405 = vpack.c.b16 %v4237, %v4229
    %v4406 = vpack.c.b16 %v4238, %v4230
    %v4407 = vpack.c.b16 %v4239, %v4231
    %v4408 = vpack.c.b16 %v4240, %v4232
    %v4409 = vpack.c.b16 %v4241, %v4233
    %v4410 = vpack.c.b16 %v4242, %v4234
    %v4411 = vpack.c.b16 %v4243, %v4235
    %v4412 = vpack.c.b16 %v4244, %v4236
    %v4413 = vpack.c.b16 %v4253, %v4245
    %v4414 = vpack.c.b16 %v4254, %v4246
    %v4415 = vpack.c.b16 %v4255, %v4247
    %v4416 = vpack.c.b16 %v4256, %v4248
    %v4417 = vpack.c.b16 %v4257, %v4249
    %v4418 = vpack.c.b16 %v4258, %v4250
    %v4419 = vpack.c.b16 %v4259, %v4251
    %v4420 = vpack.c.b16 %v4260, %v4252
    %v4421 = vpack.c.b16 %v4269, %v4261
    %v4422 = vpack.c.b16 %v4270, %v4262
    %v4423 = vpack.c.b16 %v4271, %v4263
    %v4424 = vpack.c.b16 %v4272, %v4264
    %v4425 = vpack.c.b16 %v4273, %v4265
    %v4426 = vpack.c.b16 %v4274, %v4266
    %v4427 = vpack.c.b16 %v4275, %v4267
    %v4428 = vpack.c.b16 %v4276, %v4268
    %v4429 = vpack.c.b16 %v4285, %v4277
    %v4430 = vpack.c.b16 %v4286, %v4278
    %v4431 = vpack.c.b16 %v4287, %v4279
    %v4432 = vpack.c.b16 %v4288, %v4280
    %v4433 = vpack.c.b16 %v4289, %v4281
    %v4434 = vpack.c.b16 %v4290, %v4282
    %v4435 = vpack.c.b16 %v4291, %v4283
    %v4436 = vpack.c.b16 %v4292, %v4284
    %v4437 = vpack.c.b16 %v4301, %v4293
    %v4438 = vpack.c.b16 %v4302, %v4294
    %v4439 = vpack.c.b16 %v4303, %v4295
    %v4440 = vpack.c.b16 %v4304, %v4296
    %v4441 = vpack.c.b16 %v4305, %v4297
    %v4442 = vpack.c.b16 %v4306, %v4298
    %v4443 = vpack.c.b16 %v4307, %v4299
    %v4444 = vpack.c.b16 %v4308, %v4300
    %v4445 = vpack.c.b16 %v4317, %v4309
    %v4446 = vpack.c.b16 %v4318, %v4310
    %v4447 = vpack.c.b16 %v4319, %v4311
    %v4448 = vpack.c.b16 %v4320, %v4312
    %v4449 = vpack.c.b16 %v4321, %v4313
    %v4450 = vpack.c.b16 %v4322, %v4314
    %v4451 = vpack.c.b16 %v4323, %v4315
    %v4452 = vpack.c.b16 %v4324, %v4316
    %4581 = vmatprep.subr.bf16.mxu0 %v4382
    %4582 = vmatpush1.bf16.msra.mxu0 %v4381
    %4583 = vmatprep.subr.bf16.mxu0 %v4374
    %4584 = vmatpush1.bf16.msra.mxu0 %v4373
    %4585 = vmatprep.subr.bf16.mxu0 %v4366
    %4586 = vmatpush1.bf16.msra.mxu0 %v4365
    %4587 = vmatprep.subr.bf16.mxu0 %v4358
    %4588 = vmatpush1.bf16.msra.mxu0 %v4357
    %4589 = vmatprep.subr.bf16.mxu0 %v4350
    %4590 = vmatpush1.bf16.msra.mxu0 %v4349
    %4591 = vmatprep.subr.bf16.mxu0 %v4342
    %4592 = vmatpush1.bf16.msra.mxu0 %v4341
    %4593 = vmatprep.subr.bf16.mxu0 %v4334
    %4594 = vmatpush1.bf16.msra.mxu0 %v4333
    %4595 = vmatprep.subr.bf16.mxu0 %v4326
    %4596 = vmatpush1.bf16.msra.mxu0 %v4325
    %4597 = vmatprep.subr.bf16.mxu0 %v4446
    %4598 = vmatpush2.bf16.msra.mxu0 %v4445
    %4599 = vmatprep.subr.bf16.mxu0 %v4438
    %4600 = vmatpush2.bf16.msra.mxu0 %v4437
    %4601 = vmatprep.subr.bf16.mxu0 %v4430
    %4602 = vmatpush2.bf16.msra.mxu0 %v4429
    %4603 = vmatprep.subr.bf16.mxu0 %v4422
    %4604 = vmatpush2.bf16.msra.mxu0 %v4421
    %4605 = vmatprep.subr.bf16.mxu0 %v4414
    %4606 = vmatpush2.bf16.msra.mxu0 %v4413
    %4607 = vmatprep.subr.bf16.mxu0 %v4406
    %4608 = vmatpush2.bf16.msra.mxu0 %v4405
    %4609 = vmatprep.subr.bf16.mxu0 %v4398
    %4610 = vmatpush2.bf16.msra.mxu0 %v4397
    %4611 = vmatprep.subr.bf16.mxu0 %v4390
    %4612 = vmatpush2.bf16.msra.mxu0 %v4389
    %4613 = vmatprep.mubr.bf16.mxu0 %v1840
    %4614 = vmatmul.mubr.bf16.gmra.mxu0 %v1839
    %v4615 = vpop.f32.mrf.mxu0
    %v4616 = vadd.f32 0.0, %v4615
    %v4617 = vpop.f32.mrf.mxu0
    %v4618 = vadd.f32 0.0, %v4617
    %v4619 = vpop.f32.mrf.mxu0
    %v4620 = vpop.f32.mrf.mxu0
    %4621 = vdwg.mxu0
    %4622 = vmatprep.subr.bf16.mxu0 %v4384
    %4623 = vmatpush1.bf16.msra.mxu0 %v4383
    %4624 = vmatprep.subr.bf16.mxu0 %v4376
    %4625 = vmatpush1.bf16.msra.mxu0 %v4375
    %4626 = vmatprep.subr.bf16.mxu0 %v4368
    %4627 = vmatpush1.bf16.msra.mxu0 %v4367
    %4628 = vmatprep.subr.bf16.mxu0 %v4360
    %4629 = vmatpush1.bf16.msra.mxu0 %v4359
    %4630 = vmatprep.subr.bf16.mxu0 %v4352
    %4631 = vmatpush1.bf16.msra.mxu0 %v4351
    %4632 = vmatprep.subr.bf16.mxu0 %v4344
    %4633 = vmatpush1.bf16.msra.mxu0 %v4343
    %4634 = vmatprep.subr.bf16.mxu0 %v4336
    %4635 = vmatpush1.bf16.msra.mxu0 %v4335
    %4636 = vmatprep.subr.bf16.mxu0 %v4328
    %4637 = vmatpush1.bf16.msra.mxu0 %v4327
    %4638 = vmatprep.subr.bf16.mxu0 %v4448
    %4639 = vmatpush2.bf16.msra.mxu0 %v4447
    %4640 = vmatprep.subr.bf16.mxu0 %v4440
    %4641 = vmatpush2.bf16.msra.mxu0 %v4439
    %4642 = vmatprep.subr.bf16.mxu0 %v4432
    %4643 = vmatpush2.bf16.msra.mxu0 %v4431
    %4644 = vmatprep.subr.bf16.mxu0 %v4424
    %4645 = vmatpush2.bf16.msra.mxu0 %v4423
    %4646 = vmatprep.subr.bf16.mxu0 %v4416
    %4647 = vmatpush2.bf16.msra.mxu0 %v4415
    %4648 = vmatprep.subr.bf16.mxu0 %v4408
    %4649 = vmatpush2.bf16.msra.mxu0 %v4407
    %4650 = vmatprep.subr.bf16.mxu0 %v4400
    %4651 = vmatpush2.bf16.msra.mxu0 %v4399
    %4652 = vmatprep.subr.bf16.mxu0 %v4392
    %4653 = vmatpush2.bf16.msra.mxu0 %v4391
    %4654 = vmatprep.mubr.bf16.mxu0 %v1840
    %4655 = vmatmul.mubr.bf16.gmra.mxu0 %v1839
    %v4656 = vpop.f32.mrf.mxu0
    %v4657 = vadd.f32 0.0, %v4656
    %v4658 = vpop.f32.mrf.mxu0
    %v4659 = vadd.f32 0.0, %v4658
    %v4660 = vpop.f32.mrf.mxu0
    %v4661 = vpop.f32.mrf.mxu0
    %4662 = vdwg.mxu0
    %4663 = vmatprep.subr.bf16.mxu0 %v4386
    %4664 = vmatpush1.bf16.msra.mxu0 %v4385
    %4665 = vmatprep.subr.bf16.mxu0 %v4378
    %4666 = vmatpush1.bf16.msra.mxu0 %v4377
    %4667 = vmatprep.subr.bf16.mxu0 %v4370
    %4668 = vmatpush1.bf16.msra.mxu0 %v4369
    %4669 = vmatprep.subr.bf16.mxu0 %v4362
    %4670 = vmatpush1.bf16.msra.mxu0 %v4361
    %4671 = vmatprep.subr.bf16.mxu0 %v4354
    %4672 = vmatpush1.bf16.msra.mxu0 %v4353
    %4673 = vmatprep.subr.bf16.mxu0 %v4346
    %4674 = vmatpush1.bf16.msra.mxu0 %v4345
    %4675 = vmatprep.subr.bf16.mxu0 %v4338
    %4676 = vmatpush1.bf16.msra.mxu0 %v4337
    %4677 = vmatprep.subr.bf16.mxu0 %v4330
    %4678 = vmatpush1.bf16.msra.mxu0 %v4329
    %4679 = vmatprep.subr.bf16.mxu0 %v4450
    %4680 = vmatpush2.bf16.msra.mxu0 %v4449
    %4681 = vmatprep.subr.bf16.mxu0 %v4442
    %4682 = vmatpush2.bf16.msra.mxu0 %v4441
    %4683 = vmatprep.subr.bf16.mxu0 %v4434
    %4684 = vmatpush2.bf16.msra.mxu0 %v4433
    %4685 = vmatprep.subr.bf16.mxu0 %v4426
    %4686 = vmatpush2.bf16.msra.mxu0 %v4425
    %4687 = vmatprep.subr.bf16.mxu0 %v4418
    %4688 = vmatpush2.bf16.msra.mxu0 %v4417
    %4689 = vmatprep.subr.bf16.mxu0 %v4410
    %4690 = vmatpush2.bf16.msra.mxu0 %v4409
    %4691 = vmatprep.subr.bf16.mxu0 %v4402
    %4692 = vmatpush2.bf16.msra.mxu0 %v4401
    %4693 = vmatprep.subr.bf16.mxu0 %v4394
    %4694 = vmatpush2.bf16.msra.mxu0 %v4393
    %4695 = vmatprep.mubr.bf16.mxu0 %v1840
    %4696 = vmatmul.mubr.bf16.gmra.mxu0 %v1839
    %v4697 = vpop.f32.mrf.mxu0
    %v4698 = vadd.f32 0.0, %v4697
    %v4699 = vpop.f32.mrf.mxu0
    %v4700 = vadd.f32 0.0, %v4699
    %v4701 = vpop.f32.mrf.mxu0
    %v4702 = vpop.f32.mrf.mxu0
    %4703 = vdwg.mxu0
    %4704 = vmatprep.subr.bf16.mxu0 %v4388
    %4705 = vmatpush1.bf16.msra.mxu0 %v4387
    %4706 = vmatprep.subr.bf16.mxu0 %v4380
    %4707 = vmatpush1.bf16.msra.mxu0 %v4379
    %4708 = vmatprep.subr.bf16.mxu0 %v4372
    %4709 = vmatpush1.bf16.msra.mxu0 %v4371
    %4710 = vmatprep.subr.bf16.mxu0 %v4364
    %4711 = vmatpush1.bf16.msra.mxu0 %v4363
    %4712 = vmatprep.subr.bf16.mxu0 %v4356
    %4713 = vmatpush1.bf16.msra.mxu0 %v4355
    %4714 = vmatprep.subr.bf16.mxu0 %v4348
    %4715 = vmatpush1.bf16.msra.mxu0 %v4347
    %4716 = vmatprep.subr.bf16.mxu0 %v4340
    %4717 = vmatpush1.bf16.msra.mxu0 %v4339
    %4718 = vmatprep.subr.bf16.mxu0 %v4332
    %4719 = vmatpush1.bf16.msra.mxu0 %v4331
    %4720 = vmatprep.subr.bf16.mxu0 %v4452
    %4721 = vmatpush2.bf16.msra.mxu0 %v4451
    %4722 = vmatprep.subr.bf16.mxu0 %v4444
    %4723 = vmatpush2.bf16.msra.mxu0 %v4443
    %4724 = vmatprep.subr.bf16.mxu0 %v4436
    %4725 = vmatpush2.bf16.msra.mxu0 %v4435
    %4726 = vmatprep.subr.bf16.mxu0 %v4428
    %4727 = vmatpush2.bf16.msra.mxu0 %v4427
    %4728 = vmatprep.subr.bf16.mxu0 %v4420
    %4729 = vmatpush2.bf16.msra.mxu0 %v4419
    %4730 = vmatprep.subr.bf16.mxu0 %v4412
    %4731 = vmatpush2.bf16.msra.mxu0 %v4411
    %4732 = vmatprep.subr.bf16.mxu0 %v4404
    %4733 = vmatpush2.bf16.msra.mxu0 %v4403
    %4734 = vmatprep.subr.bf16.mxu0 %v4396
    %4735 = vmatpush2.bf16.msra.mxu0 %v4395
    %4736 = vmatprep.mubr.bf16.mxu0 %v1840
    %4737 = vmatmul.mubr.bf16.gmra.mxu0 %v1839
    %v4738 = vpop.f32.mrf.mxu0
    %v4739 = vadd.f32 0.0, %v4738
    %v4740 = vpop.f32.mrf.mxu0
    %v4741 = vadd.f32 0.0, %v4740
    %v4742 = vpop.f32.mrf.mxu0
    %v4743 = vpop.f32.mrf.mxu0
    %4744 = vdwg.mxu0
    %v4745 = vadd.f32 %v3805, %v4616
    %v4746 = vadd.f32 %v3806, %v4618
    %v4747 = vadd.f32 %v3807, %v4657
    %v4748 = vadd.f32 %v3808, %v4659
    %v4749 = vadd.f32 %v3809, %v4698
    %v4750 = vadd.f32 %v3810, %v4700
    %v4751 = vadd.f32 %v3811, %v4739
    %v4752 = vadd.f32 %v3812, %v4741
    %v4753 = vxor.u32 %v4745, 2147483648
    %v4754 = vxor.u32 %v4746, 2147483648
    %v4755 = vmul.f32 %v4753, 1.442695
    %v4756 = vpow.pop %v4755
    %v4757 = vmul.f32 %v4754, 1.442695
    %v4758 = vpow.pop %v4757
    %v4759 = vadd.f32 %v4756, 1.0
    %v4760 = vadd.f32 %v4758, 1.0
    %v4761 = vrcp.pop %v4759
    %v4762 = vmul.f32 1.0, %v4761
    %v4763 = vrcp.pop %v4760
    %v4764 = vmul.f32 1.0, %v4763
    %v4765 = vxor.u32 %v4747, 2147483648
    %v4766 = vxor.u32 %v4748, 2147483648
    %v4767 = vmul.f32 %v4765, 1.442695
    %v4768 = vpow.pop %v4767
    %v4769 = vmul.f32 %v4766, 1.442695
    %v4770 = vpow.pop %v4769
    %v4771 = vadd.f32 %v4768, 1.0
    %v4772 = vadd.f32 %v4770, 1.0
    %v4773 = vrcp.pop %v4771
    %v4774 = vmul.f32 1.0, %v4773
    %v4775 = vrcp.pop %v4772
    %v4776 = vmul.f32 1.0, %v4775
    %v4777 = vtanh.pop %v4749
    %v4778 = vtanh.pop %v4750
    %v4779 = vxor.u32 %v4751, 2147483648
    %v4780 = vxor.u32 %v4752, 2147483648
    %v4781 = vmul.f32 %v4779, 1.442695
    %v4782 = vpow.pop %v4781
    %v4783 = vmul.f32 %v4780, 1.442695
    %v4784 = vpow.pop %v4783
    %v4785 = vadd.f32 %v4782, 1.0
    %v4786 = vadd.f32 %v4784, 1.0
    %v4787 = vrcp.pop %v4785
    %v4788 = vmul.f32 1.0, %v4787
    %v4789 = vrcp.pop %v4786
    %v4790 = vmul.f32 1.0, %v4789
    %v4791 = vmul.f32 %v4774, %v1827
    %v4792 = vmul.f32 %v4776, %v1828
    %v4793 = vmul.f32 %v4762, %v4777
    %v4794 = vmul.f32 %v4764, %v4778
    %v4795 = vadd.f32 %v4791, %v4793
    %v4796 = vadd.f32 %v4792, %v4794
    %v4797 = vtanh.pop %v4795
    %v4798 = vtanh.pop %v4796
    %v4799 = vmul.f32 %v4788, %v4797
    %v4800 = vmul.f32 %v4790, %v4798
    %v4801 = vpack.c.bf16 %v4799, %v4799
    %v4802 = vpack.c.bf16 %v4800, %v4800
    %v4803 = vpack.c.bf16 %v3803, %v3803
    %v4804 = vpack.c.bf16 %v3804, %v3804
    %4805 = vmatprep.subr.bf16.mxu0 %v2540
    %4806 = vmatpush1.bf16.msra.mxu0 %v2539
    %4807 = vmatprep.subr.bf16.mxu0 %v2532
    %4808 = vmatpush1.bf16.msra.mxu0 %v2531
    %4809 = vmatprep.subr.bf16.mxu0 %v2524
    %4810 = vmatpush1.bf16.msra.mxu0 %v2523
    %4811 = vmatprep.subr.bf16.mxu0 %v2516
    %4812 = vmatpush1.bf16.msra.mxu0 %v2515
    %4813 = vmatprep.subr.bf16.mxu0 %v2508
    %4814 = vmatpush1.bf16.msra.mxu0 %v2507
    %4815 = vmatprep.subr.bf16.mxu0 %v2500
    %4816 = vmatpush1.bf16.msra.mxu0 %v2499
    %4817 = vmatprep.subr.bf16.mxu0 %v2492
    %4818 = vmatpush1.bf16.msra.mxu0 %v2491
    %4819 = vmatprep.subr.bf16.mxu0 %v2484
    %4820 = vmatpush1.bf16.msra.mxu0 %v2483
    %4821 = vmatprep.subr.bf16.mxu0 %v2604
    %4822 = vmatpush2.bf16.msra.mxu0 %v2603
    %4823 = vmatprep.subr.bf16.mxu0 %v2596
    %4824 = vmatpush2.bf16.msra.mxu0 %v2595
    %4825 = vmatprep.subr.bf16.mxu0 %v2588
    %4826 = vmatpush2.bf16.msra.mxu0 %v2587
    %4827 = vmatprep.subr.bf16.mxu0 %v2580
    %4828 = vmatpush2.bf16.msra.mxu0 %v2579
    %4829 = vmatprep.subr.bf16.mxu0 %v2572
    %4830 = vmatpush2.bf16.msra.mxu0 %v2571
    %4831 = vmatprep.subr.bf16.mxu0 %v2564
    %4832 = vmatpush2.bf16.msra.mxu0 %v2563
    %4833 = vmatprep.subr.bf16.mxu0 %v2556
    %4834 = vmatpush2.bf16.msra.mxu0 %v2555
    %4835 = vmatprep.subr.bf16.mxu0 %v2548
    %4836 = vmatpush2.bf16.msra.mxu0 %v2547
    %4837 = vmatprep.mubr.bf16.mxu0 %v4804
    %4838 = vmatmul.mubr.bf16.gmra.mxu0 %v4803
    %v4839 = vpop.f32.mrf.mxu0
    %v4840 = vadd.f32 0.0, %v4839
    %v4841 = vpop.f32.mrf.mxu0
    %v4842 = vadd.f32 0.0, %v4841
    %v4843 = vpop.f32.mrf.mxu0
    %v4844 = vpop.f32.mrf.mxu0
    %4845 = vdwg.mxu0
    %4846 = vmatprep.subr.bf16.mxu0 %v2542
    %4847 = vmatpush1.bf16.msra.mxu0 %v2541
    %4848 = vmatprep.subr.bf16.mxu0 %v2534
    %4849 = vmatpush1.bf16.msra.mxu0 %v2533
    %4850 = vmatprep.subr.bf16.mxu0 %v2526
    %4851 = vmatpush1.bf16.msra.mxu0 %v2525
    %4852 = vmatprep.subr.bf16.mxu0 %v2518
    %4853 = vmatpush1.bf16.msra.mxu0 %v2517
    %4854 = vmatprep.subr.bf16.mxu0 %v2510
    %4855 = vmatpush1.bf16.msra.mxu0 %v2509
    %4856 = vmatprep.subr.bf16.mxu0 %v2502
    %4857 = vmatpush1.bf16.msra.mxu0 %v2501
    %4858 = vmatprep.subr.bf16.mxu0 %v2494
    %4859 = vmatpush1.bf16.msra.mxu0 %v2493
    %4860 = vmatprep.subr.bf16.mxu0 %v2486
    %4861 = vmatpush1.bf16.msra.mxu0 %v2485
    %4862 = vmatprep.subr.bf16.mxu0 %v2606
    %4863 = vmatpush2.bf16.msra.mxu0 %v2605
    %4864 = vmatprep.subr.bf16.mxu0 %v2598
    %4865 = vmatpush2.bf16.msra.mxu0 %v2597
    %4866 = vmatprep.subr.bf16.mxu0 %v2590
    %4867 = vmatpush2.bf16.msra.mxu0 %v2589
    %4868 = vmatprep.subr.bf16.mxu0 %v2582
    %4869 = vmatpush2.bf16.msra.mxu0 %v2581
    %4870 = vmatprep.subr.bf16.mxu0 %v2574
    %4871 = vmatpush2.bf16.msra.mxu0 %v2573
    %4872 = vmatprep.subr.bf16.mxu0 %v2566
    %4873 = vmatpush2.bf16.msra.mxu0 %v2565
    %4874 = vmatprep.subr.bf16.mxu0 %v2558
    %4875 = vmatpush2.bf16.msra.mxu0 %v2557
    %4876 = vmatprep.subr.bf16.mxu0 %v2550
    %4877 = vmatpush2.bf16.msra.mxu0 %v2549
    %4878 = vmatprep.mubr.bf16.mxu0 %v4804
    %4879 = vmatmul.mubr.bf16.gmra.mxu0 %v4803
    %v4880 = vpop.f32.mrf.mxu0
    %v4881 = vadd.f32 0.0, %v4880
    %v4882 = vpop.f32.mrf.mxu0
    %v4883 = vadd.f32 0.0, %v4882
    %v4884 = vpop.f32.mrf.mxu0
    %v4885 = vpop.f32.mrf.mxu0
    %4886 = vdwg.mxu0
    %4887 = vmatprep.subr.bf16.mxu0 %v2544
    %4888 = vmatpush1.bf16.msra.mxu0 %v2543
    %4889 = vmatprep.subr.bf16.mxu0 %v2536
    %4890 = vmatpush1.bf16.msra.mxu0 %v2535
    %4891 = vmatprep.subr.bf16.mxu0 %v2528
    %4892 = vmatpush1.bf16.msra.mxu0 %v2527
    %4893 = vmatprep.subr.bf16.mxu0 %v2520
    %4894 = vmatpush1.bf16.msra.mxu0 %v2519
    %4895 = vmatprep.subr.bf16.mxu0 %v2512
    %4896 = vmatpush1.bf16.msra.mxu0 %v2511
    %4897 = vmatprep.subr.bf16.mxu0 %v2504
    %4898 = vmatpush1.bf16.msra.mxu0 %v2503
    %4899 = vmatprep.subr.bf16.mxu0 %v2496
    %4900 = vmatpush1.bf16.msra.mxu0 %v2495
    %4901 = vmatprep.subr.bf16.mxu0 %v2488
    %4902 = vmatpush1.bf16.msra.mxu0 %v2487
    %4903 = vmatprep.subr.bf16.mxu0 %v2608
    %4904 = vmatpush2.bf16.msra.mxu0 %v2607
    %4905 = vmatprep.subr.bf16.mxu0 %v2600
    %4906 = vmatpush2.bf16.msra.mxu0 %v2599
    %4907 = vmatprep.subr.bf16.mxu0 %v2592
    %4908 = vmatpush2.bf16.msra.mxu0 %v2591
    %4909 = vmatprep.subr.bf16.mxu0 %v2584
    %4910 = vmatpush2.bf16.msra.mxu0 %v2583
    %4911 = vmatprep.subr.bf16.mxu0 %v2576
    %4912 = vmatpush2.bf16.msra.mxu0 %v2575
    %4913 = vmatprep.subr.bf16.mxu0 %v2568
    %4914 = vmatpush2.bf16.msra.mxu0 %v2567
    %4915 = vmatprep.subr.bf16.mxu0 %v2560
    %4916 = vmatpush2.bf16.msra.mxu0 %v2559
    %4917 = vmatprep.subr.bf16.mxu0 %v2552
    %4918 = vmatpush2.bf16.msra.mxu0 %v2551
    %4919 = vmatprep.mubr.bf16.mxu0 %v4804
    %4920 = vmatmul.mubr.bf16.gmra.mxu0 %v4803
    %v4921 = vpop.f32.mrf.mxu0
    %v4922 = vadd.f32 0.0, %v4921
    %v4923 = vpop.f32.mrf.mxu0
    %v4924 = vadd.f32 0.0, %v4923
    %v4925 = vpop.f32.mrf.mxu0
    %v4926 = vpop.f32.mrf.mxu0
    %4927 = vdwg.mxu0
    %4928 = vmatprep.subr.bf16.mxu0 %v2546
    %4929 = vmatpush1.bf16.msra.mxu0 %v2545
    %4930 = vmatprep.subr.bf16.mxu0 %v2538
    %4931 = vmatpush1.bf16.msra.mxu0 %v2537
    %4932 = vmatprep.subr.bf16.mxu0 %v2530
    %4933 = vmatpush1.bf16.msra.mxu0 %v2529
    %4934 = vmatprep.subr.bf16.mxu0 %v2522
    %4935 = vmatpush1.bf16.msra.mxu0 %v2521
    %4936 = vmatprep.subr.bf16.mxu0 %v2514
    %4937 = vmatpush1.bf16.msra.mxu0 %v2513
    %4938 = vmatprep.subr.bf16.mxu0 %v2506
    %4939 = vmatpush1.bf16.msra.mxu0 %v2505
    %4940 = vmatprep.subr.bf16.mxu0 %v2498
    %4941 = vmatpush1.bf16.msra.mxu0 %v2497
    %4942 = vmatprep.subr.bf16.mxu0 %v2490
    %4943 = vmatpush1.bf16.msra.mxu0 %v2489
    %4944 = vmatprep.subr.bf16.mxu0 %v2610
    %4945 = vmatpush2.bf16.msra.mxu0 %v2609
    %4946 = vmatprep.subr.bf16.mxu0 %v2602
    %4947 = vmatpush2.bf16.msra.mxu0 %v2601
    %4948 = vmatprep.subr.bf16.mxu0 %v2594
    %4949 = vmatpush2.bf16.msra.mxu0 %v2593
    %4950 = vmatprep.subr.bf16.mxu0 %v2586
    %4951 = vmatpush2.bf16.msra.mxu0 %v2585
    %4952 = vmatprep.subr.bf16.mxu0 %v2578
    %4953 = vmatpush2.bf16.msra.mxu0 %v2577
    %4954 = vmatprep.subr.bf16.mxu0 %v2570
    %4955 = vmatpush2.bf16.msra.mxu0 %v2569
    %4956 = vmatprep.subr.bf16.mxu0 %v2562
    %4957 = vmatpush2.bf16.msra.mxu0 %v2561
    %4958 = vmatprep.subr.bf16.mxu0 %v2554
    %4959 = vmatpush2.bf16.msra.mxu0 %v2553
    %4960 = vmatprep.mubr.bf16.mxu0 %v4804
    %4961 = vmatmul.mubr.bf16.gmra.mxu0 %v4803
    %v4962 = vpop.f32.mrf.mxu0
    %v4963 = vadd.f32 0.0, %v4962
    %v4964 = vpop.f32.mrf.mxu0
    %v4965 = vadd.f32 0.0, %v4964
    %v4966 = vpop.f32.mrf.mxu0
    %v4967 = vpop.f32.mrf.mxu0
    %4968 = vdwg.mxu0
    %4969 = vmatprep.subr.bf16.mxu0 %v3344
    %4970 = vmatpush1.bf16.msra.mxu0 %v3343
    %4971 = vmatprep.subr.bf16.mxu0 %v3336
    %4972 = vmatpush1.bf16.msra.mxu0 %v3335
    %4973 = vmatprep.subr.bf16.mxu0 %v3328
    %4974 = vmatpush1.bf16.msra.mxu0 %v3327
    %4975 = vmatprep.subr.bf16.mxu0 %v3320
    %4976 = vmatpush1.bf16.msra.mxu0 %v3319
    %4977 = vmatprep.subr.bf16.mxu0 %v3312
    %4978 = vmatpush1.bf16.msra.mxu0 %v3311
    %4979 = vmatprep.subr.bf16.mxu0 %v3304
    %4980 = vmatpush1.bf16.msra.mxu0 %v3303
    %4981 = vmatprep.subr.bf16.mxu0 %v3296
    %4982 = vmatpush1.bf16.msra.mxu0 %v3295
    %4983 = vmatprep.subr.bf16.mxu0 %v3288
    %4984 = vmatpush1.bf16.msra.mxu0 %v3287
    %4985 = vmatprep.subr.bf16.mxu0 %v3408
    %4986 = vmatpush2.bf16.msra.mxu0 %v3407
    %4987 = vmatprep.subr.bf16.mxu0 %v3400
    %4988 = vmatpush2.bf16.msra.mxu0 %v3399
    %4989 = vmatprep.subr.bf16.mxu0 %v3392
    %4990 = vmatpush2.bf16.msra.mxu0 %v3391
    %4991 = vmatprep.subr.bf16.mxu0 %v3384
    %4992 = vmatpush2.bf16.msra.mxu0 %v3383
    %4993 = vmatprep.subr.bf16.mxu0 %v3376
    %4994 = vmatpush2.bf16.msra.mxu0 %v3375
    %4995 = vmatprep.subr.bf16.mxu0 %v3368
    %4996 = vmatpush2.bf16.msra.mxu0 %v3367
    %4997 = vmatprep.subr.bf16.mxu0 %v3360
    %4998 = vmatpush2.bf16.msra.mxu0 %v3359
    %4999 = vmatprep.subr.bf16.mxu0 %v3352
    %5000 = vmatpush2.bf16.msra.mxu0 %v3351
    %5001 = vmatprep.mubr.bf16.mxu0 %v4802
    %5002 = vmatmul.mubr.bf16.gmra.mxu0 %v4801
    %v5003 = vpop.f32.mrf.mxu0
    %v5004 = vadd.f32 %v4840, %v5003
    %v5005 = vpop.f32.mrf.mxu0
    %v5006 = vadd.f32 %v4842, %v5005
    %v5007 = vpop.f32.mrf.mxu0
    %v5008 = vpop.f32.mrf.mxu0
    %5009 = vdwg.mxu0
    %5010 = vmatprep.subr.bf16.mxu0 %v3346
    %5011 = vmatpush1.bf16.msra.mxu0 %v3345
    %5012 = vmatprep.subr.bf16.mxu0 %v3338
    %5013 = vmatpush1.bf16.msra.mxu0 %v3337
    %5014 = vmatprep.subr.bf16.mxu0 %v3330
    %5015 = vmatpush1.bf16.msra.mxu0 %v3329
    %5016 = vmatprep.subr.bf16.mxu0 %v3322
    %5017 = vmatpush1.bf16.msra.mxu0 %v3321
    %5018 = vmatprep.subr.bf16.mxu0 %v3314
    %5019 = vmatpush1.bf16.msra.mxu0 %v3313
    %5020 = vmatprep.subr.bf16.mxu0 %v3306
    %5021 = vmatpush1.bf16.msra.mxu0 %v3305
    %5022 = vmatprep.subr.bf16.mxu0 %v3298
    %5023 = vmatpush1.bf16.msra.mxu0 %v3297
    %5024 = vmatprep.subr.bf16.mxu0 %v3290
    %5025 = vmatpush1.bf16.msra.mxu0 %v3289
    %5026 = vmatprep.subr.bf16.mxu0 %v3410
    %5027 = vmatpush2.bf16.msra.mxu0 %v3409
    %5028 = vmatprep.subr.bf16.mxu0 %v3402
    %5029 = vmatpush2.bf16.msra.mxu0 %v3401
    %5030 = vmatprep.subr.bf16.mxu0 %v3394
    %5031 = vmatpush2.bf16.msra.mxu0 %v3393
    %5032 = vmatprep.subr.bf16.mxu0 %v3386
    %5033 = vmatpush2.bf16.msra.mxu0 %v3385
    %5034 = vmatprep.subr.bf16.mxu0 %v3378
    %5035 = vmatpush2.bf16.msra.mxu0 %v3377
    %5036 = vmatprep.subr.bf16.mxu0 %v3370
    %5037 = vmatpush2.bf16.msra.mxu0 %v3369
    %5038 = vmatprep.subr.bf16.mxu0 %v3362
    %5039 = vmatpush2.bf16.msra.mxu0 %v3361
    %5040 = vmatprep.subr.bf16.mxu0 %v3354
    %5041 = vmatpush2.bf16.msra.mxu0 %v3353
    %5042 = vmatprep.mubr.bf16.mxu0 %v4802
    %5043 = vmatmul.mubr.bf16.gmra.mxu0 %v4801
    %v5044 = vpop.f32.mrf.mxu0
    %v5045 = vadd.f32 %v4881, %v5044
    %v5046 = vpop.f32.mrf.mxu0
    %v5047 = vadd.f32 %v4883, %v5046
    %v5048 = vpop.f32.mrf.mxu0
    %v5049 = vpop.f32.mrf.mxu0
    %5050 = vdwg.mxu0
    %5051 = vmatprep.subr.bf16.mxu0 %v3348
    %5052 = vmatpush1.bf16.msra.mxu0 %v3347
    %5053 = vmatprep.subr.bf16.mxu0 %v3340
    %5054 = vmatpush1.bf16.msra.mxu0 %v3339
    %5055 = vmatprep.subr.bf16.mxu0 %v3332
    %5056 = vmatpush1.bf16.msra.mxu0 %v3331
    %5057 = vmatprep.subr.bf16.mxu0 %v3324
    %5058 = vmatpush1.bf16.msra.mxu0 %v3323
    %5059 = vmatprep.subr.bf16.mxu0 %v3316
    %5060 = vmatpush1.bf16.msra.mxu0 %v3315
    %5061 = vmatprep.subr.bf16.mxu0 %v3308
    %5062 = vmatpush1.bf16.msra.mxu0 %v3307
    %5063 = vmatprep.subr.bf16.mxu0 %v3300
    %5064 = vmatpush1.bf16.msra.mxu0 %v3299
    %5065 = vmatprep.subr.bf16.mxu0 %v3292
    %5066 = vmatpush1.bf16.msra.mxu0 %v3291
    %5067 = vmatprep.subr.bf16.mxu0 %v3412
    %5068 = vmatpush2.bf16.msra.mxu0 %v3411
    %5069 = vmatprep.subr.bf16.mxu0 %v3404
    %5070 = vmatpush2.bf16.msra.mxu0 %v3403
    %5071 = vmatprep.subr.bf16.mxu0 %v3396
    %5072 = vmatpush2.bf16.msra.mxu0 %v3395
    %5073 = vmatprep.subr.bf16.mxu0 %v3388
    %5074 = vmatpush2.bf16.msra.mxu0 %v3387
    %5075 = vmatprep.subr.bf16.mxu0 %v3380
    %5076 = vmatpush2.bf16.msra.mxu0 %v3379
    %5077 = vmatprep.subr.bf16.mxu0 %v3372
    %5078 = vmatpush2.bf16.msra.mxu0 %v3371
    %5079 = vmatprep.subr.bf16.mxu0 %v3364
    %5080 = vmatpush2.bf16.msra.mxu0 %v3363
    %5081 = vmatprep.subr.bf16.mxu0 %v3356
    %5082 = vmatpush2.bf16.msra.mxu0 %v3355
    %5083 = vmatprep.mubr.bf16.mxu0 %v4802
    %5084 = vmatmul.mubr.bf16.gmra.mxu0 %v4801
    %v5085 = vpop.f32.mrf.mxu0
    %v5086 = vadd.f32 %v4922, %v5085
    %v5087 = vpop.f32.mrf.mxu0
    %v5088 = vadd.f32 %v4924, %v5087
    %v5089 = vpop.f32.mrf.mxu0
    %v5090 = vpop.f32.mrf.mxu0
    %5091 = vdwg.mxu0
    %5092 = vmatprep.subr.bf16.mxu0 %v3350
    %5093 = vmatpush1.bf16.msra.mxu0 %v3349
    %5094 = vmatprep.subr.bf16.mxu0 %v3342
    %5095 = vmatpush1.bf16.msra.mxu0 %v3341
    %5096 = vmatprep.subr.bf16.mxu0 %v3334
    %5097 = vmatpush1.bf16.msra.mxu0 %v3333
    %5098 = vmatprep.subr.bf16.mxu0 %v3326
    %5099 = vmatpush1.bf16.msra.mxu0 %v3325
    %5100 = vmatprep.subr.bf16.mxu0 %v3318
    %5101 = vmatpush1.bf16.msra.mxu0 %v3317
    %5102 = vmatprep.subr.bf16.mxu0 %v3310
    %5103 = vmatpush1.bf16.msra.mxu0 %v3309
    %5104 = vmatprep.subr.bf16.mxu0 %v3302
    %5105 = vmatpush1.bf16.msra.mxu0 %v3301
    %5106 = vmatprep.subr.bf16.mxu0 %v3294
    %5107 = vmatpush1.bf16.msra.mxu0 %v3293
    %5108 = vmatprep.subr.bf16.mxu0 %v3414
    %5109 = vmatpush2.bf16.msra.mxu0 %v3413
    %5110 = vmatprep.subr.bf16.mxu0 %v3406
    %5111 = vmatpush2.bf16.msra.mxu0 %v3405
    %5112 = vmatprep.subr.bf16.mxu0 %v3398
    %5113 = vmatpush2.bf16.msra.mxu0 %v3397
    %5114 = vmatprep.subr.bf16.mxu0 %v3390
    %5115 = vmatpush2.bf16.msra.mxu0 %v3389
    %5116 = vmatprep.subr.bf16.mxu0 %v3382
    %5117 = vmatpush2.bf16.msra.mxu0 %v3381
    %5118 = vmatprep.subr.bf16.mxu0 %v3374
    %5119 = vmatpush2.bf16.msra.mxu0 %v3373
    %5120 = vmatprep.subr.bf16.mxu0 %v3366
    %5121 = vmatpush2.bf16.msra.mxu0 %v3365
    %5122 = vmatprep.subr.bf16.mxu0 %v3358
    %5123 = vmatpush2.bf16.msra.mxu0 %v3357
    %5124 = vmatprep.mubr.bf16.mxu0 %v4802
    %5125 = vmatmul.mubr.bf16.gmra.mxu0 %v4801
    %v5126 = vpop.f32.mrf.mxu0
    %v5127 = vadd.f32 %v4963, %v5126
    %v5128 = vpop.f32.mrf.mxu0
    %v5129 = vadd.f32 %v4965, %v5128
    %v5130 = vpop.f32.mrf.mxu0
    %v5131 = vpop.f32.mrf.mxu0
    %5132 = vdwg.mxu0
    %v5133 = vadd.f32 %v5004, %v3712
    %v5134 = vadd.f32 %v5006, %v3716
    %v5135 = vadd.f32 %v5045, %v3720
    %v5136 = vadd.f32 %v5047, %v3724
    %v5137 = vadd.f32 %v5086, %v3728
    %v5138 = vadd.f32 %v5088, %v3732
    %v5139 = vadd.f32 %v5127, %v3736
    %v5140 = vadd.f32 %v5129, %v3740
    %v5141 = vxor.u32 %v5133, 2147483648
    %v5142 = vxor.u32 %v5134, 2147483648
    %v5143 = vmul.f32 %v5141, 1.442695
    %v5144 = vpow.pop %v5143
    %v5145 = vmul.f32 %v5142, 1.442695
    %v5146 = vpow.pop %v5145
    %v5147 = vadd.f32 %v5144, 1.0
    %v5148 = vadd.f32 %v5146, 1.0
    %v5149 = vrcp.pop %v5147
    %v5150 = vmul.f32 1.0, %v5149
    %v5151 = vrcp.pop %v5148
    %v5152 = vmul.f32 1.0, %v5151
    %v5153 = vxor.u32 %v5135, 2147483648
    %v5154 = vxor.u32 %v5136, 2147483648
    %v5155 = vmul.f32 %v5153, 1.442695
    %v5156 = vpow.pop %v5155
    %v5157 = vmul.f32 %v5154, 1.442695
    %v5158 = vpow.pop %v5157
    %v5159 = vadd.f32 %v5156, 1.0
    %v5160 = vadd.f32 %v5158, 1.0
    %v5161 = vrcp.pop %v5159
    %v5162 = vmul.f32 1.0, %v5161
    %v5163 = vrcp.pop %v5160
    %v5164 = vmul.f32 1.0, %v5163
    %v5165 = vtanh.pop %v5137
    %v5166 = vtanh.pop %v5138
    %v5167 = vxor.u32 %v5139, 2147483648
    %v5168 = vxor.u32 %v5140, 2147483648
    %v5169 = vmul.f32 %v5167, 1.442695
    %v5170 = vpow.pop %v5169
    %v5171 = vmul.f32 %v5168, 1.442695
    %v5172 = vpow.pop %v5171
    %v5173 = vadd.f32 %v5170, 1.0
    %v5174 = vadd.f32 %v5172, 1.0
    %v5175 = vrcp.pop %v5173
    %v5176 = vmul.f32 1.0, %v5175
    %v5177 = vrcp.pop %v5174
    %v5178 = vmul.f32 1.0, %v5177
    %v5179 = vmul.f32 %v5162, %v3799
    %v5180 = vmul.f32 %v5164, %v3800
    %v5181 = vmul.f32 %v5150, %v5165
    %v5182 = vmul.f32 %v5152, %v5166
    %v5183 = vadd.f32 %v5179, %v5181
    %v5184 = vadd.f32 %v5180, %v5182
    %v5185 = vtanh.pop %v5183
    %v5186 = vtanh.pop %v5184
    %v5187 = vmul.f32 %v5176, %v5185
    %v5188 = vmul.f32 %v5178, %v5186
    %v5189 = vld [vmem:[#allocation2 + $0x80] sm:$0xff]
    %v5190 = vld [vmem:[#allocation2 + $0x88] sm:$0xff]
    %v5191 = vld [vmem:[#allocation2 + $0x90] sm:$0xff]
    %v5192 = vld [vmem:[#allocation2 + $0x98] sm:$0xff]
    %v5193 = vld [vmem:[#allocation2 + $0xa0] sm:$0xff]
    %v5194 = vld [vmem:[#allocation2 + $0xa8] sm:$0xff]
    %v5195 = vld [vmem:[#allocation2 + $0xb0] sm:$0xff]
    %v5196 = vld [vmem:[#allocation2 + $0xb8] sm:$0xff]
    %5197 = vmatprep.subr.bf16.mxu0 %v4382
    %5198 = vmatpush1.bf16.msra.mxu0 %v4381
    %5199 = vmatprep.subr.bf16.mxu0 %v4374
    %5200 = vmatpush1.bf16.msra.mxu0 %v4373
    %5201 = vmatprep.subr.bf16.mxu0 %v4366
    %5202 = vmatpush1.bf16.msra.mxu0 %v4365
    %5203 = vmatprep.subr.bf16.mxu0 %v4358
    %5204 = vmatpush1.bf16.msra.mxu0 %v4357
    %5205 = vmatprep.subr.bf16.mxu0 %v4350
    %5206 = vmatpush1.bf16.msra.mxu0 %v4349
    %5207 = vmatprep.subr.bf16.mxu0 %v4342
    %5208 = vmatpush1.bf16.msra.mxu0 %v4341
    %5209 = vmatprep.subr.bf16.mxu0 %v4334
    %5210 = vmatpush1.bf16.msra.mxu0 %v4333
    %5211 = vmatprep.subr.bf16.mxu0 %v4326
    %5212 = vmatpush1.bf16.msra.mxu0 %v4325
    %5213 = vmatprep.subr.bf16.mxu0 %v4446
    %5214 = vmatpush2.bf16.msra.mxu0 %v4445
    %5215 = vmatprep.subr.bf16.mxu0 %v4438
    %5216 = vmatpush2.bf16.msra.mxu0 %v4437
    %5217 = vmatprep.subr.bf16.mxu0 %v4430
    %5218 = vmatpush2.bf16.msra.mxu0 %v4429
    %5219 = vmatprep.subr.bf16.mxu0 %v4422
    %5220 = vmatpush2.bf16.msra.mxu0 %v4421
    %5221 = vmatprep.subr.bf16.mxu0 %v4414
    %5222 = vmatpush2.bf16.msra.mxu0 %v4413
    %5223 = vmatprep.subr.bf16.mxu0 %v4406
    %5224 = vmatpush2.bf16.msra.mxu0 %v4405
    %5225 = vmatprep.subr.bf16.mxu0 %v4398
    %5226 = vmatpush2.bf16.msra.mxu0 %v4397
    %5227 = vmatprep.subr.bf16.mxu0 %v4390
    %5228 = vmatpush2.bf16.msra.mxu0 %v4389
    %5229 = vmatprep.mubr.bf16.mxu0 %v4802
    %5230 = vmatmul.mubr.bf16.gmra.mxu0 %v4801
    %v5231 = vpop.f32.mrf.mxu0
    %v5232 = vadd.f32 0.0, %v5231
    %v5233 = vpop.f32.mrf.mxu0
    %v5234 = vadd.f32 0.0, %v5233
    %v5235 = vpop.f32.mrf.mxu0
    %v5236 = vpop.f32.mrf.mxu0
    %5237 = vdwg.mxu0
    %5238 = vmatprep.subr.bf16.mxu0 %v4384
    %5239 = vmatpush1.bf16.msra.mxu0 %v4383
    %5240 = vmatprep.subr.bf16.mxu0 %v4376
    %5241 = vmatpush1.bf16.msra.mxu0 %v4375
    %5242 = vmatprep.subr.bf16.mxu0 %v4368
    %5243 = vmatpush1.bf16.msra.mxu0 %v4367
    %5244 = vmatprep.subr.bf16.mxu0 %v4360
    %5245 = vmatpush1.bf16.msra.mxu0 %v4359
    %5246 = vmatprep.subr.bf16.mxu0 %v4352
    %5247 = vmatpush1.bf16.msra.mxu0 %v4351
    %5248 = vmatprep.subr.bf16.mxu0 %v4344
    %5249 = vmatpush1.bf16.msra.mxu0 %v4343
    %5250 = vmatprep.subr.bf16.mxu0 %v4336
    %5251 = vmatpush1.bf16.msra.mxu0 %v4335
    %5252 = vmatprep.subr.bf16.mxu0 %v4328
    %5253 = vmatpush1.bf16.msra.mxu0 %v4327
    %5254 = vmatprep.subr.bf16.mxu0 %v4448
    %5255 = vmatpush2.bf16.msra.mxu0 %v4447
    %5256 = vmatprep.subr.bf16.mxu0 %v4440
    %5257 = vmatpush2.bf16.msra.mxu0 %v4439
    %5258 = vmatprep.subr.bf16.mxu0 %v4432
    %5259 = vmatpush2.bf16.msra.mxu0 %v4431
    %5260 = vmatprep.subr.bf16.mxu0 %v4424
    %5261 = vmatpush2.bf16.msra.mxu0 %v4423
    %5262 = vmatprep.subr.bf16.mxu0 %v4416
    %5263 = vmatpush2.bf16.msra.mxu0 %v4415
    %5264 = vmatprep.subr.bf16.mxu0 %v4408
    %5265 = vmatpush2.bf16.msra.mxu0 %v4407
    %5266 = vmatprep.subr.bf16.mxu0 %v4400
    %5267 = vmatpush2.bf16.msra.mxu0 %v4399
    %5268 = vmatprep.subr.bf16.mxu0 %v4392
    %5269 = vmatpush2.bf16.msra.mxu0 %v4391
    %5270 = vmatprep.mubr.bf16.mxu0 %v4802
    %5271 = vmatmul.mubr.bf16.gmra.mxu0 %v4801
    %v5272 = vpop.f32.mrf.mxu0
    %v5273 = vadd.f32 0.0, %v5272
    %v5274 = vpop.f32.mrf.mxu0
    %v5275 = vadd.f32 0.0, %v5274
    %v5276 = vpop.f32.mrf.mxu0
    %v5277 = vpop.f32.mrf.mxu0
    %5278 = vdwg.mxu0
    %5279 = vmatprep.subr.bf16.mxu0 %v4386
    %5280 = vmatpush1.bf16.msra.mxu0 %v4385
    %5281 = vmatprep.subr.bf16.mxu0 %v4378
    %5282 = vmatpush1.bf16.msra.mxu0 %v4377
    %5283 = vmatprep.subr.bf16.mxu0 %v4370
    %5284 = vmatpush1.bf16.msra.mxu0 %v4369
    %5285 = vmatprep.subr.bf16.mxu0 %v4362
    %5286 = vmatpush1.bf16.msra.mxu0 %v4361
    %5287 = vmatprep.subr.bf16.mxu0 %v4354
    %5288 = vmatpush1.bf16.msra.mxu0 %v4353
    %5289 = vmatprep.subr.bf16.mxu0 %v4346
    %5290 = vmatpush1.bf16.msra.mxu0 %v4345
    %5291 = vmatprep.subr.bf16.mxu0 %v4338
    %5292 = vmatpush1.bf16.msra.mxu0 %v4337
    %5293 = vmatprep.subr.bf16.mxu0 %v4330
    %5294 = vmatpush1.bf16.msra.mxu0 %v4329
    %5295 = vmatprep.subr.bf16.mxu0 %v4450
    %5296 = vmatpush2.bf16.msra.mxu0 %v4449
    %5297 = vmatprep.subr.bf16.mxu0 %v4442
    %5298 = vmatpush2.bf16.msra.mxu0 %v4441
    %5299 = vmatprep.subr.bf16.mxu0 %v4434
    %5300 = vmatpush2.bf16.msra.mxu0 %v4433
    %5301 = vmatprep.subr.bf16.mxu0 %v4426
    %5302 = vmatpush2.bf16.msra.mxu0 %v4425
    %5303 = vmatprep.subr.bf16.mxu0 %v4418
    %5304 = vmatpush2.bf16.msra.mxu0 %v4417
    %5305 = vmatprep.subr.bf16.mxu0 %v4410
    %5306 = vmatpush2.bf16.msra.mxu0 %v4409
    %5307 = vmatprep.subr.bf16.mxu0 %v4402
    %5308 = vmatpush2.bf16.msra.mxu0 %v4401
    %5309 = vmatprep.subr.bf16.mxu0 %v4394
    %5310 = vmatpush2.bf16.msra.mxu0 %v4393
    %5311 = vmatprep.mubr.bf16.mxu0 %v4802
    %5312 = vmatmul.mubr.bf16.gmra.mxu0 %v4801
    %v5313 = vpop.f32.mrf.mxu0
    %v5314 = vadd.f32 0.0, %v5313
    %v5315 = vpop.f32.mrf.mxu0
    %v5316 = vadd.f32 0.0, %v5315
    %v5317 = vpop.f32.mrf.mxu0
    %v5318 = vpop.f32.mrf.mxu0
    %5319 = vdwg.mxu0
    %5320 = vmatprep.subr.bf16.mxu0 %v4388
    %5321 = vmatpush1.bf16.msra.mxu0 %v4387
    %5322 = vmatprep.subr.bf16.mxu0 %v4380
    %5323 = vmatpush1.bf16.msra.mxu0 %v4379
    %5324 = vmatprep.subr.bf16.mxu0 %v4372
    %5325 = vmatpush1.bf16.msra.mxu0 %v4371
    %5326 = vmatprep.subr.bf16.mxu0 %v4364
    %5327 = vmatpush1.bf16.msra.mxu0 %v4363
    %5328 = vmatprep.subr.bf16.mxu0 %v4356
    %5329 = vmatpush1.bf16.msra.mxu0 %v4355
    %5330 = vmatprep.subr.bf16.mxu0 %v4348
    %5331 = vmatpush1.bf16.msra.mxu0 %v4347
    %5332 = vmatprep.subr.bf16.mxu0 %v4340
    %5333 = vmatpush1.bf16.msra.mxu0 %v4339
    %5334 = vmatprep.subr.bf16.mxu0 %v4332
    %5335 = vmatpush1.bf16.msra.mxu0 %v4331
    %5336 = vmatprep.subr.bf16.mxu0 %v4452
    %5337 = vmatpush2.bf16.msra.mxu0 %v4451
    %5338 = vmatprep.subr.bf16.mxu0 %v4444
    %5339 = vmatpush2.bf16.msra.mxu0 %v4443
    %5340 = vmatprep.subr.bf16.mxu0 %v4436
    %5341 = vmatpush2.bf16.msra.mxu0 %v4435
    %5342 = vmatprep.subr.bf16.mxu0 %v4428
    %5343 = vmatpush2.bf16.msra.mxu0 %v4427
    %5344 = vmatprep.subr.bf16.mxu0 %v4420
    %5345 = vmatpush2.bf16.msra.mxu0 %v4419
    %5346 = vmatprep.subr.bf16.mxu0 %v4412
    %5347 = vmatpush2.bf16.msra.mxu0 %v4411
    %5348 = vmatprep.subr.bf16.mxu0 %v4404
    %5349 = vmatpush2.bf16.msra.mxu0 %v4403
    %5350 = vmatprep.subr.bf16.mxu0 %v4396
    %5351 = vmatpush2.bf16.msra.mxu0 %v4395
    %5352 = vmatprep.mubr.bf16.mxu0 %v4802
    %5353 = vmatmul.mubr.bf16.gmra.mxu0 %v4801
    %v5354 = vpop.f32.mrf.mxu0
    %v5355 = vadd.f32 0.0, %v5354
    %v5356 = vpop.f32.mrf.mxu0
    %v5357 = vadd.f32 0.0, %v5356
    %v5358 = vpop.f32.mrf.mxu0
    %v5359 = vpop.f32.mrf.mxu0
    %5360 = vdwg.mxu0
    %v5361 = vadd.f32 %v5189, %v5232
    %v5362 = vadd.f32 %v5190, %v5234
    %v5363 = vadd.f32 %v5191, %v5273
    %v5364 = vadd.f32 %v5192, %v5275
    %v5365 = vadd.f32 %v5193, %v5314
    %v5366 = vadd.f32 %v5194, %v5316
    %v5367 = vadd.f32 %v5195, %v5355
    %v5368 = vadd.f32 %v5196, %v5357
    %v5369 = vxor.u32 %v5361, 2147483648
    %v5370 = vxor.u32 %v5362, 2147483648
    %v5371 = vmul.f32 %v5369, 1.442695
    %v5372 = vpow.pop %v5371
    %v5373 = vmul.f32 %v5370, 1.442695
    %v5374 = vpow.pop %v5373
    %v5375 = vadd.f32 %v5372, 1.0
    %v5376 = vadd.f32 %v5374, 1.0
    %v5377 = vrcp.pop %v5375
    %v5378 = vmul.f32 1.0, %v5377
    %v5379 = vrcp.pop %v5376
    %v5380 = vmul.f32 1.0, %v5379
    %v5381 = vxor.u32 %v5363, 2147483648
    %v5382 = vxor.u32 %v5364, 2147483648
    %v5383 = vmul.f32 %v5381, 1.442695
    %v5384 = vpow.pop %v5383
    %v5385 = vmul.f32 %v5382, 1.442695
    %v5386 = vpow.pop %v5385
    %v5387 = vadd.f32 %v5384, 1.0
    %v5388 = vadd.f32 %v5386, 1.0
    %v5389 = vrcp.pop %v5387
    %v5390 = vmul.f32 1.0, %v5389
    %v5391 = vrcp.pop %v5388
    %v5392 = vmul.f32 1.0, %v5391
    %v5393 = vtanh.pop %v5365
    %v5394 = vtanh.pop %v5366
    %v5395 = vxor.u32 %v5367, 2147483648
    %v5396 = vxor.u32 %v5368, 2147483648
    %v5397 = vmul.f32 %v5395, 1.442695
    %v5398 = vpow.pop %v5397
    %v5399 = vmul.f32 %v5396, 1.442695
    %v5400 = vpow.pop %v5399
    %v5401 = vadd.f32 %v5398, 1.0
    %v5402 = vadd.f32 %v5400, 1.0
    %v5403 = vrcp.pop %v5401
    %v5404 = vmul.f32 1.0, %v5403
    %v5405 = vrcp.pop %v5402
    %v5406 = vmul.f32 1.0, %v5405
    %v5407 = vmul.f32 %v5390, %v4795
    %v5408 = vmul.f32 %v5392, %v4796
    %v5409 = vmul.f32 %v5378, %v5393
    %v5410 = vmul.f32 %v5380, %v5394
    %v5411 = vadd.f32 %v5407, %v5409
    %v5412 = vadd.f32 %v5408, %v5410
    %v5413 = vtanh.pop %v5411
    %v5414 = vtanh.pop %v5412
    %v5415 = vmul.f32 %v5404, %v5413
    %v5416 = vmul.f32 %v5406, %v5414
    %v5417 = vpack.c.bf16 %v5415, %v5415
    %v5418 = vpack.c.bf16 %v5416, %v5416
    %v5419 = vpack.c.bf16 %v5187, %v5187
    %v5420 = vpack.c.bf16 %v5188, %v5188
    %5421 = vmatprep.subr.bf16.mxu0 %v2540
    %5422 = vmatpush1.bf16.msra.mxu0 %v2539
    %5423 = vmatprep.subr.bf16.mxu0 %v2532
    %5424 = vmatpush1.bf16.msra.mxu0 %v2531
    %5425 = vmatprep.subr.bf16.mxu0 %v2524
    %5426 = vmatpush1.bf16.msra.mxu0 %v2523
    %5427 = vmatprep.subr.bf16.mxu0 %v2516
    %5428 = vmatpush1.bf16.msra.mxu0 %v2515
    %5429 = vmatprep.subr.bf16.mxu0 %v2508
    %5430 = vmatpush1.bf16.msra.mxu0 %v2507
    %5431 = vmatprep.subr.bf16.mxu0 %v2500
    %5432 = vmatpush1.bf16.msra.mxu0 %v2499
    %5433 = vmatprep.subr.bf16.mxu0 %v2492
    %5434 = vmatpush1.bf16.msra.mxu0 %v2491
    %5435 = vmatprep.subr.bf16.mxu0 %v2484
    %5436 = vmatpush1.bf16.msra.mxu0 %v2483
    %5437 = vmatprep.subr.bf16.mxu0 %v2604
    %5438 = vmatpush2.bf16.msra.mxu0 %v2603
    %5439 = vmatprep.subr.bf16.mxu0 %v2596
    %5440 = vmatpush2.bf16.msra.mxu0 %v2595
    %5441 = vmatprep.subr.bf16.mxu0 %v2588
    %5442 = vmatpush2.bf16.msra.mxu0 %v2587
    %5443 = vmatprep.subr.bf16.mxu0 %v2580
    %5444 = vmatpush2.bf16.msra.mxu0 %v2579
    %5445 = vmatprep.subr.bf16.mxu0 %v2572
    %5446 = vmatpush2.bf16.msra.mxu0 %v2571
    %5447 = vmatprep.subr.bf16.mxu0 %v2564
    %5448 = vmatpush2.bf16.msra.mxu0 %v2563
    %5449 = vmatprep.subr.bf16.mxu0 %v2556
    %5450 = vmatpush2.bf16.msra.mxu0 %v2555
    %5451 = vmatprep.subr.bf16.mxu0 %v2548
    %5452 = vmatpush2.bf16.msra.mxu0 %v2547
    %5453 = vmatprep.mubr.bf16.mxu0 %v5420
    %5454 = vmatmul.mubr.bf16.gmra.mxu0 %v5419
    %v5455 = vpop.f32.mrf.mxu0
    %v5456 = vadd.f32 0.0, %v5455
    %v5457 = vpop.f32.mrf.mxu0
    %v5458 = vadd.f32 0.0, %v5457
    %v5459 = vpop.f32.mrf.mxu0
    %v5460 = vpop.f32.mrf.mxu0
    %5461 = vdwg.mxu0
    %5462 = vmatprep.subr.bf16.mxu0 %v2542
    %5463 = vmatpush1.bf16.msra.mxu0 %v2541
    %5464 = vmatprep.subr.bf16.mxu0 %v2534
    %5465 = vmatpush1.bf16.msra.mxu0 %v2533
    %5466 = vmatprep.subr.bf16.mxu0 %v2526
    %5467 = vmatpush1.bf16.msra.mxu0 %v2525
    %5468 = vmatprep.subr.bf16.mxu0 %v2518
    %5469 = vmatpush1.bf16.msra.mxu0 %v2517
    %5470 = vmatprep.subr.bf16.mxu0 %v2510
    %5471 = vmatpush1.bf16.msra.mxu0 %v2509
    %5472 = vmatprep.subr.bf16.mxu0 %v2502
    %5473 = vmatpush1.bf16.msra.mxu0 %v2501
    %5474 = vmatprep.subr.bf16.mxu0 %v2494
    %5475 = vmatpush1.bf16.msra.mxu0 %v2493
    %5476 = vmatprep.subr.bf16.mxu0 %v2486
    %5477 = vmatpush1.bf16.msra.mxu0 %v2485
    %5478 = vmatprep.subr.bf16.mxu0 %v2606
    %5479 = vmatpush2.bf16.msra.mxu0 %v2605
    %5480 = vmatprep.subr.bf16.mxu0 %v2598
    %5481 = vmatpush2.bf16.msra.mxu0 %v2597
    %5482 = vmatprep.subr.bf16.mxu0 %v2590
    %5483 = vmatpush2.bf16.msra.mxu0 %v2589
    %5484 = vmatprep.subr.bf16.mxu0 %v2582
    %5485 = vmatpush2.bf16.msra.mxu0 %v2581
    %5486 = vmatprep.subr.bf16.mxu0 %v2574
    %5487 = vmatpush2.bf16.msra.mxu0 %v2573
    %5488 = vmatprep.subr.bf16.mxu0 %v2566
    %5489 = vmatpush2.bf16.msra.mxu0 %v2565
    %5490 = vmatprep.subr.bf16.mxu0 %v2558
    %5491 = vmatpush2.bf16.msra.mxu0 %v2557
    %5492 = vmatprep.subr.bf16.mxu0 %v2550
    %5493 = vmatpush2.bf16.msra.mxu0 %v2549
    %5494 = vmatprep.mubr.bf16.mxu0 %v5420
    %5495 = vmatmul.mubr.bf16.gmra.mxu0 %v5419
    %v5496 = vpop.f32.mrf.mxu0
    %v5497 = vadd.f32 0.0, %v5496
    %v5498 = vpop.f32.mrf.mxu0
    %v5499 = vadd.f32 0.0, %v5498
    %v5500 = vpop.f32.mrf.mxu0
    %v5501 = vpop.f32.mrf.mxu0
    %5502 = vdwg.mxu0
    %5503 = vmatprep.subr.bf16.mxu0 %v2544
    %5504 = vmatpush1.bf16.msra.mxu0 %v2543
    %5505 = vmatprep.subr.bf16.mxu0 %v2536
    %5506 = vmatpush1.bf16.msra.mxu0 %v2535
    %5507 = vmatprep.subr.bf16.mxu0 %v2528
    %5508 = vmatpush1.bf16.msra.mxu0 %v2527
    %5509 = vmatprep.subr.bf16.mxu0 %v2520
    %5510 = vmatpush1.bf16.msra.mxu0 %v2519
    %5511 = vmatprep.subr.bf16.mxu0 %v2512
    %5512 = vmatpush1.bf16.msra.mxu0 %v2511
    %5513 = vmatprep.subr.bf16.mxu0 %v2504
    %5514 = vmatpush1.bf16.msra.mxu0 %v2503
    %5515 = vmatprep.subr.bf16.mxu0 %v2496
    %5516 = vmatpush1.bf16.msra.mxu0 %v2495
    %5517 = vmatprep.subr.bf16.mxu0 %v2488
    %5518 = vmatpush1.bf16.msra.mxu0 %v2487
    %5519 = vmatprep.subr.bf16.mxu0 %v2608
    %5520 = vmatpush2.bf16.msra.mxu0 %v2607
    %5521 = vmatprep.subr.bf16.mxu0 %v2600
    %5522 = vmatpush2.bf16.msra.mxu0 %v2599
    %5523 = vmatprep.subr.bf16.mxu0 %v2592
    %5524 = vmatpush2.bf16.msra.mxu0 %v2591
    %5525 = vmatprep.subr.bf16.mxu0 %v2584
    %5526 = vmatpush2.bf16.msra.mxu0 %v2583
    %5527 = vmatprep.subr.bf16.mxu0 %v2576
    %5528 = vmatpush2.bf16.msra.mxu0 %v2575
    %5529 = vmatprep.subr.bf16.mxu0 %v2568
    %5530 = vmatpush2.bf16.msra.mxu0 %v2567
    %5531 = vmatprep.subr.bf16.mxu0 %v2560
    %5532 = vmatpush2.bf16.msra.mxu0 %v2559
    %5533 = vmatprep.subr.bf16.mxu0 %v2552
    %5534 = vmatpush2.bf16.msra.mxu0 %v2551
    %5535 = vmatprep.mubr.bf16.mxu0 %v5420
    %5536 = vmatmul.mubr.bf16.gmra.mxu0 %v5419
    %v5537 = vpop.f32.mrf.mxu0
    %v5538 = vadd.f32 0.0, %v5537
    %v5539 = vpop.f32.mrf.mxu0
    %v5540 = vadd.f32 0.0, %v5539
    %v5541 = vpop.f32.mrf.mxu0
    %v5542 = vpop.f32.mrf.mxu0
    %5543 = vdwg.mxu0
    %5544 = vmatprep.subr.bf16.mxu0 %v2546
    %5545 = vmatpush1.bf16.msra.mxu0 %v2545
    %5546 = vmatprep.subr.bf16.mxu0 %v2538
    %5547 = vmatpush1.bf16.msra.mxu0 %v2537
    %5548 = vmatprep.subr.bf16.mxu0 %v2530
    %5549 = vmatpush1.bf16.msra.mxu0 %v2529
    %5550 = vmatprep.subr.bf16.mxu0 %v2522
    %5551 = vmatpush1.bf16.msra.mxu0 %v2521
    %5552 = vmatprep.subr.bf16.mxu0 %v2514
    %5553 = vmatpush1.bf16.msra.mxu0 %v2513
    %5554 = vmatprep.subr.bf16.mxu0 %v2506
    %5555 = vmatpush1.bf16.msra.mxu0 %v2505
    %5556 = vmatprep.subr.bf16.mxu0 %v2498
    %5557 = vmatpush1.bf16.msra.mxu0 %v2497
    %5558 = vmatprep.subr.bf16.mxu0 %v2490
    %5559 = vmatpush1.bf16.msra.mxu0 %v2489
    %5560 = vmatprep.subr.bf16.mxu0 %v2610
    %5561 = vmatpush2.bf16.msra.mxu0 %v2609
    %5562 = vmatprep.subr.bf16.mxu0 %v2602
    %5563 = vmatpush2.bf16.msra.mxu0 %v2601
    %5564 = vmatprep.subr.bf16.mxu0 %v2594
    %5565 = vmatpush2.bf16.msra.mxu0 %v2593
    %5566 = vmatprep.subr.bf16.mxu0 %v2586
    %5567 = vmatpush2.bf16.msra.mxu0 %v2585
    %5568 = vmatprep.subr.bf16.mxu0 %v2578
    %5569 = vmatpush2.bf16.msra.mxu0 %v2577
    %5570 = vmatprep.subr.bf16.mxu0 %v2570
    %5571 = vmatpush2.bf16.msra.mxu0 %v2569
    %5572 = vmatprep.subr.bf16.mxu0 %v2562
    %5573 = vmatpush2.bf16.msra.mxu0 %v2561
    %5574 = vmatprep.subr.bf16.mxu0 %v2554
    %5575 = vmatpush2.bf16.msra.mxu0 %v2553
    %5576 = vmatprep.mubr.bf16.mxu0 %v5420
    %5577 = vmatmul.mubr.bf16.gmra.mxu0 %v5419
    %v5578 = vpop.f32.mrf.mxu0
    %v5579 = vadd.f32 0.0, %v5578
    %v5580 = vpop.f32.mrf.mxu0
    %v5581 = vadd.f32 0.0, %v5580
    %v5582 = vpop.f32.mrf.mxu0
    %v5583 = vpop.f32.mrf.mxu0
    %5584 = vdwg.mxu0
    %5585 = vmatprep.subr.bf16.mxu0 %v3344
    %5586 = vmatpush1.bf16.msra.mxu0 %v3343
    %5587 = vmatprep.subr.bf16.mxu0 %v3336
    %5588 = vmatpush1.bf16.msra.mxu0 %v3335
    %5589 = vmatprep.subr.bf16.mxu0 %v3328
    %5590 = vmatpush1.bf16.msra.mxu0 %v3327
    %5591 = vmatprep.subr.bf16.mxu0 %v3320
    %5592 = vmatpush1.bf16.msra.mxu0 %v3319
    %5593 = vmatprep.subr.bf16.mxu0 %v3312
    %5594 = vmatpush1.bf16.msra.mxu0 %v3311
    %5595 = vmatprep.subr.bf16.mxu0 %v3304
    %5596 = vmatpush1.bf16.msra.mxu0 %v3303
    %5597 = vmatprep.subr.bf16.mxu0 %v3296
    %5598 = vmatpush1.bf16.msra.mxu0 %v3295
    %5599 = vmatprep.subr.bf16.mxu0 %v3288
    %5600 = vmatpush1.bf16.msra.mxu0 %v3287
    %5601 = vmatprep.subr.bf16.mxu0 %v3408
    %5602 = vmatpush2.bf16.msra.mxu0 %v3407
    %5603 = vmatprep.subr.bf16.mxu0 %v3400
    %5604 = vmatpush2.bf16.msra.mxu0 %v3399
    %5605 = vmatprep.subr.bf16.mxu0 %v3392
    %5606 = vmatpush2.bf16.msra.mxu0 %v3391
    %5607 = vmatprep.subr.bf16.mxu0 %v3384
    %5608 = vmatpush2.bf16.msra.mxu0 %v3383
    %5609 = vmatprep.subr.bf16.mxu0 %v3376
    %5610 = vmatpush2.bf16.msra.mxu0 %v3375
    %5611 = vmatprep.subr.bf16.mxu0 %v3368
    %5612 = vmatpush2.bf16.msra.mxu0 %v3367
    %5613 = vmatprep.subr.bf16.mxu0 %v3360
    %5614 = vmatpush2.bf16.msra.mxu0 %v3359
    %5615 = vmatprep.subr.bf16.mxu0 %v3352
    %5616 = vmatpush2.bf16.msra.mxu0 %v3351
    %5617 = vmatprep.mubr.bf16.mxu0 %v5418
    %5618 = vmatmul.mubr.bf16.gmra.mxu0 %v5417
    %v5619 = vpop.f32.mrf.mxu0
    %v5620 = vadd.f32 %v5456, %v5619
    %v5621 = vpop.f32.mrf.mxu0
    %v5622 = vadd.f32 %v5458, %v5621
    %v5623 = vpop.f32.mrf.mxu0
    %v5624 = vpop.f32.mrf.mxu0
    %5625 = vdwg.mxu0
    %5626 = vmatprep.subr.bf16.mxu0 %v3346
    %5627 = vmatpush1.bf16.msra.mxu0 %v3345
    %5628 = vmatprep.subr.bf16.mxu0 %v3338
    %5629 = vmatpush1.bf16.msra.mxu0 %v3337
    %5630 = vmatprep.subr.bf16.mxu0 %v3330
    %5631 = vmatpush1.bf16.msra.mxu0 %v3329
    %5632 = vmatprep.subr.bf16.mxu0 %v3322
    %5633 = vmatpush1.bf16.msra.mxu0 %v3321
    %5634 = vmatprep.subr.bf16.mxu0 %v3314
    %5635 = vmatpush1.bf16.msra.mxu0 %v3313
    %5636 = vmatprep.subr.bf16.mxu0 %v3306
    %5637 = vmatpush1.bf16.msra.mxu0 %v3305
    %5638 = vmatprep.subr.bf16.mxu0 %v3298
    %5639 = vmatpush1.bf16.msra.mxu0 %v3297
    %5640 = vmatprep.subr.bf16.mxu0 %v3290
    %5641 = vmatpush1.bf16.msra.mxu0 %v3289
    %5642 = vmatprep.subr.bf16.mxu0 %v3410
    %5643 = vmatpush2.bf16.msra.mxu0 %v3409
    %5644 = vmatprep.subr.bf16.mxu0 %v3402
    %5645 = vmatpush2.bf16.msra.mxu0 %v3401
    %5646 = vmatprep.subr.bf16.mxu0 %v3394
    %5647 = vmatpush2.bf16.msra.mxu0 %v3393
    %5648 = vmatprep.subr.bf16.mxu0 %v3386
    %5649 = vmatpush2.bf16.msra.mxu0 %v3385
    %5650 = vmatprep.subr.bf16.mxu0 %v3378
    %5651 = vmatpush2.bf16.msra.mxu0 %v3377
    %5652 = vmatprep.subr.bf16.mxu0 %v3370
    %5653 = vmatpush2.bf16.msra.mxu0 %v3369
    %5654 = vmatprep.subr.bf16.mxu0 %v3362
    %5655 = vmatpush2.bf16.msra.mxu0 %v3361
    %5656 = vmatprep.subr.bf16.mxu0 %v3354
    %5657 = vmatpush2.bf16.msra.mxu0 %v3353
    %5658 = vmatprep.mubr.bf16.mxu0 %v5418
    %5659 = vmatmul.mubr.bf16.gmra.mxu0 %v5417
    %v5660 = vpop.f32.mrf.mxu0
    %v5661 = vadd.f32 %v5497, %v5660
    %v5662 = vpop.f32.mrf.mxu0
    %v5663 = vadd.f32 %v5499, %v5662
    %v5664 = vpop.f32.mrf.mxu0
    %v5665 = vpop.f32.mrf.mxu0
    %5666 = vdwg.mxu0
    %5667 = vmatprep.subr.bf16.mxu0 %v3348
    %5668 = vmatpush1.bf16.msra.mxu0 %v3347
    %5669 = vmatprep.subr.bf16.mxu0 %v3340
    %5670 = vmatpush1.bf16.msra.mxu0 %v3339
    %5671 = vmatprep.subr.bf16.mxu0 %v3332
    %5672 = vmatpush1.bf16.msra.mxu0 %v3331
    %5673 = vmatprep.subr.bf16.mxu0 %v3324
    %5674 = vmatpush1.bf16.msra.mxu0 %v3323
    %5675 = vmatprep.subr.bf16.mxu0 %v3316
    %5676 = vmatpush1.bf16.msra.mxu0 %v3315
    %5677 = vmatprep.subr.bf16.mxu0 %v3308
    %5678 = vmatpush1.bf16.msra.mxu0 %v3307
    %5679 = vmatprep.subr.bf16.mxu0 %v3300
    %5680 = vmatpush1.bf16.msra.mxu0 %v3299
    %5681 = vmatprep.subr.bf16.mxu0 %v3292
    %5682 = vmatpush1.bf16.msra.mxu0 %v3291
    %5683 = vmatprep.subr.bf16.mxu0 %v3412
    %5684 = vmatpush2.bf16.msra.mxu0 %v3411
    %5685 = vmatprep.subr.bf16.mxu0 %v3404
    %5686 = vmatpush2.bf16.msra.mxu0 %v3403
    %5687 = vmatprep.subr.bf16.mxu0 %v3396
    %5688 = vmatpush2.bf16.msra.mxu0 %v3395
    %5689 = vmatprep.subr.bf16.mxu0 %v3388
    %5690 = vmatpush2.bf16.msra.mxu0 %v3387
    %5691 = vmatprep.subr.bf16.mxu0 %v3380
    %5692 = vmatpush2.bf16.msra.mxu0 %v3379
    %5693 = vmatprep.subr.bf16.mxu0 %v3372
    %5694 = vmatpush2.bf16.msra.mxu0 %v3371
    %5695 = vmatprep.subr.bf16.mxu0 %v3364
    %5696 = vmatpush2.bf16.msra.mxu0 %v3363
    %5697 = vmatprep.subr.bf16.mxu0 %v3356
    %5698 = vmatpush2.bf16.msra.mxu0 %v3355
    %5699 = vmatprep.mubr.bf16.mxu0 %v5418
    %5700 = vmatmul.mubr.bf16.gmra.mxu0 %v5417
    %v5701 = vpop.f32.mrf.mxu0
    %v5702 = vadd.f32 %v5538, %v5701
    %v5703 = vpop.f32.mrf.mxu0
    %v5704 = vadd.f32 %v5540, %v5703
    %v5705 = vpop.f32.mrf.mxu0
    %v5706 = vpop.f32.mrf.mxu0
    %5707 = vdwg.mxu0
    %5708 = vmatprep.subr.bf16.mxu0 %v3350
    %5709 = vmatpush1.bf16.msra.mxu0 %v3349
    %5710 = vmatprep.subr.bf16.mxu0 %v3342
    %5711 = vmatpush1.bf16.msra.mxu0 %v3341
    %5712 = vmatprep.subr.bf16.mxu0 %v3334
    %5713 = vmatpush1.bf16.msra.mxu0 %v3333
    %5714 = vmatprep.subr.bf16.mxu0 %v3326
    %5715 = vmatpush1.bf16.msra.mxu0 %v3325
    %5716 = vmatprep.subr.bf16.mxu0 %v3318
    %5717 = vmatpush1.bf16.msra.mxu0 %v3317
    %5718 = vmatprep.subr.bf16.mxu0 %v3310
    %5719 = vmatpush1.bf16.msra.mxu0 %v3309
    %5720 = vmatprep.subr.bf16.mxu0 %v3302
    %5721 = vmatpush1.bf16.msra.mxu0 %v3301
    %5722 = vmatprep.subr.bf16.mxu0 %v3294
    %5723 = vmatpush1.bf16.msra.mxu0 %v3293
    %5724 = vmatprep.subr.bf16.mxu0 %v3414
    %5725 = vmatpush2.bf16.msra.mxu0 %v3413
    %5726 = vmatprep.subr.bf16.mxu0 %v3406
    %5727 = vmatpush2.bf16.msra.mxu0 %v3405
    %5728 = vmatprep.subr.bf16.mxu0 %v3398
    %5729 = vmatpush2.bf16.msra.mxu0 %v3397
    %5730 = vmatprep.subr.bf16.mxu0 %v3390
    %5731 = vmatpush2.bf16.msra.mxu0 %v3389
    %5732 = vmatprep.subr.bf16.mxu0 %v3382
    %5733 = vmatpush2.bf16.msra.mxu0 %v3381
    %5734 = vmatprep.subr.bf16.mxu0 %v3374
    %5735 = vmatpush2.bf16.msra.mxu0 %v3373
    %5736 = vmatprep.subr.bf16.mxu0 %v3366
    %5737 = vmatpush2.bf16.msra.mxu0 %v3365
    %5738 = vmatprep.subr.bf16.mxu0 %v3358
    %5739 = vmatpush2.bf16.msra.mxu0 %v3357
    %5740 = vmatprep.mubr.bf16.mxu0 %v5418
    %5741 = vmatmul.mubr.bf16.gmra.mxu0 %v5417
    %v5742 = vpop.f32.mrf.mxu0
    %v5743 = vadd.f32 %v5579, %v5742
    %v5744 = vpop.f32.mrf.mxu0
    %v5745 = vadd.f32 %v5581, %v5744
    %v5746 = vpop.f32.mrf.mxu0
    %v5747 = vpop.f32.mrf.mxu0
    %5748 = vdwg.mxu0
    %v5749 = vadd.f32 %v5620, %v3712
    %v5750 = vadd.f32 %v5622, %v3716
    %v5751 = vadd.f32 %v5661, %v3720
    %v5752 = vadd.f32 %v5663, %v3724
    %v5753 = vadd.f32 %v5702, %v3728
    %v5754 = vadd.f32 %v5704, %v3732
    %v5755 = vadd.f32 %v5743, %v3736
    %v5756 = vadd.f32 %v5745, %v3740
    %v5757 = vxor.u32 %v5749, 2147483648
    %v5758 = vxor.u32 %v5750, 2147483648
    %v5759 = vmul.f32 %v5757, 1.442695
    %v5760 = vpow.pop %v5759
    %v5761 = vmul.f32 %v5758, 1.442695
    %v5762 = vpow.pop %v5761
    %v5763 = vadd.f32 %v5760, 1.0
    %v5764 = vadd.f32 %v5762, 1.0
    %v5765 = vrcp.pop %v5763
    %v5766 = vmul.f32 1.0, %v5765
    %v5767 = vrcp.pop %v5764
    %v5768 = vmul.f32 1.0, %v5767
    %v5769 = vxor.u32 %v5751, 2147483648
    %v5770 = vxor.u32 %v5752, 2147483648
    %v5771 = vmul.f32 %v5769, 1.442695
    %v5772 = vpow.pop %v5771
    %v5773 = vmul.f32 %v5770, 1.442695
    %v5774 = vpow.pop %v5773
    %v5775 = vadd.f32 %v5772, 1.0
    %v5776 = vadd.f32 %v5774, 1.0
    %v5777 = vrcp.pop %v5775
    %v5778 = vmul.f32 1.0, %v5777
    %v5779 = vrcp.pop %v5776
    %v5780 = vmul.f32 1.0, %v5779
    %v5781 = vtanh.pop %v5753
    %v5782 = vtanh.pop %v5754
    %v5783 = vxor.u32 %v5755, 2147483648
    %v5784 = vxor.u32 %v5756, 2147483648
    %v5785 = vmul.f32 %v5783, 1.442695
    %v5786 = vpow.pop %v5785
    %v5787 = vmul.f32 %v5784, 1.442695
    %v5788 = vpow.pop %v5787
    %v5789 = vadd.f32 %v5786, 1.0
    %v5790 = vadd.f32 %v5788, 1.0
    %v5791 = vrcp.pop %v5789
    %v5792 = vmul.f32 1.0, %v5791
    %v5793 = vrcp.pop %v5790
    %v5794 = vmul.f32 1.0, %v5793
    %v5795 = vmul.f32 %v5778, %v5183
    %v5796 = vmul.f32 %v5780, %v5184
    %v5797 = vmul.f32 %v5766, %v5781
    %v5798 = vmul.f32 %v5768, %v5782
    %v5799 = vadd.f32 %v5795, %v5797
    %v5800 = vadd.f32 %v5796, %v5798
    %v5801 = vtanh.pop %v5799
    %v5802 = vtanh.pop %v5800
    %v5803 = vmul.f32 %v5792, %v5801
    %v5804 = vmul.f32 %v5794, %v5802
    %v5805 = vld [vmem:[#allocation2 + $0xc0] sm:$0xff]
    %v5806 = vld [vmem:[#allocation2 + $0xc8] sm:$0xff]
    %v5807 = vld [vmem:[#allocation2 + $0xd0] sm:$0xff]
    %v5808 = vld [vmem:[#allocation2 + $0xd8] sm:$0xff]
    %v5809 = vld [vmem:[#allocation2 + $0xe0] sm:$0xff]
    %v5810 = vld [vmem:[#allocation2 + $0xe8] sm:$0xff]
    %v5811 = vld [vmem:[#allocation2 + $0xf0] sm:$0xff]
    %v5812 = vld [vmem:[#allocation2 + $0xf8] sm:$0xff]
    %5813 = vmatprep.subr.bf16.mxu0 %v4382
    %5814 = vmatpush1.bf16.msra.mxu0 %v4381
    %5815 = vmatprep.subr.bf16.mxu0 %v4374
    %5816 = vmatpush1.bf16.msra.mxu0 %v4373
    %5817 = vmatprep.subr.bf16.mxu0 %v4366
    %5818 = vmatpush1.bf16.msra.mxu0 %v4365
    %5819 = vmatprep.subr.bf16.mxu0 %v4358
    %5820 = vmatpush1.bf16.msra.mxu0 %v4357
    %5821 = vmatprep.subr.bf16.mxu0 %v4350
    %5822 = vmatpush1.bf16.msra.mxu0 %v4349
    %5823 = vmatprep.subr.bf16.mxu0 %v4342
    %5824 = vmatpush1.bf16.msra.mxu0 %v4341
    %5825 = vmatprep.subr.bf16.mxu0 %v4334
    %5826 = vmatpush1.bf16.msra.mxu0 %v4333
    %5827 = vmatprep.subr.bf16.mxu0 %v4326
    %5828 = vmatpush1.bf16.msra.mxu0 %v4325
    %5829 = vmatprep.subr.bf16.mxu0 %v4446
    %5830 = vmatpush2.bf16.msra.mxu0 %v4445
    %5831 = vmatprep.subr.bf16.mxu0 %v4438
    %5832 = vmatpush2.bf16.msra.mxu0 %v4437
    %5833 = vmatprep.subr.bf16.mxu0 %v4430
    %5834 = vmatpush2.bf16.msra.mxu0 %v4429
    %5835 = vmatprep.subr.bf16.mxu0 %v4422
    %5836 = vmatpush2.bf16.msra.mxu0 %v4421
    %5837 = vmatprep.subr.bf16.mxu0 %v4414
    %5838 = vmatpush2.bf16.msra.mxu0 %v4413
    %5839 = vmatprep.subr.bf16.mxu0 %v4406
    %5840 = vmatpush2.bf16.msra.mxu0 %v4405
    %5841 = vmatprep.subr.bf16.mxu0 %v4398
    %5842 = vmatpush2.bf16.msra.mxu0 %v4397
    %5843 = vmatprep.subr.bf16.mxu0 %v4390
    %5844 = vmatpush2.bf16.msra.mxu0 %v4389
    %5845 = vmatprep.mubr.bf16.mxu0 %v5418
    %5846 = vmatmul.mubr.bf16.gmra.mxu0 %v5417
    %v5847 = vpop.f32.mrf.mxu0
    %v5848 = vadd.f32 0.0, %v5847
    %v5849 = vpop.f32.mrf.mxu0
    %v5850 = vadd.f32 0.0, %v5849
    %v5851 = vpop.f32.mrf.mxu0
    %v5852 = vpop.f32.mrf.mxu0
    %5853 = vdwg.mxu0
    %5854 = vmatprep.subr.bf16.mxu0 %v4384
    %5855 = vmatpush1.bf16.msra.mxu0 %v4383
    %5856 = vmatprep.subr.bf16.mxu0 %v4376
    %5857 = vmatpush1.bf16.msra.mxu0 %v4375
    %5858 = vmatprep.subr.bf16.mxu0 %v4368
    %5859 = vmatpush1.bf16.msra.mxu0 %v4367
    %5860 = vmatprep.subr.bf16.mxu0 %v4360
    %5861 = vmatpush1.bf16.msra.mxu0 %v4359
    %5862 = vmatprep.subr.bf16.mxu0 %v4352
    %5863 = vmatpush1.bf16.msra.mxu0 %v4351
    %5864 = vmatprep.subr.bf16.mxu0 %v4344
    %5865 = vmatpush1.bf16.msra.mxu0 %v4343
    %5866 = vmatprep.subr.bf16.mxu0 %v4336
    %5867 = vmatpush1.bf16.msra.mxu0 %v4335
    %5868 = vmatprep.subr.bf16.mxu0 %v4328
    %5869 = vmatpush1.bf16.msra.mxu0 %v4327
    %5870 = vmatprep.subr.bf16.mxu0 %v4448
    %5871 = vmatpush2.bf16.msra.mxu0 %v4447
    %5872 = vmatprep.subr.bf16.mxu0 %v4440
    %5873 = vmatpush2.bf16.msra.mxu0 %v4439
    %5874 = vmatprep.subr.bf16.mxu0 %v4432
    %5875 = vmatpush2.bf16.msra.mxu0 %v4431
    %5876 = vmatprep.subr.bf16.mxu0 %v4424
    %5877 = vmatpush2.bf16.msra.mxu0 %v4423
    %5878 = vmatprep.subr.bf16.mxu0 %v4416
    %5879 = vmatpush2.bf16.msra.mxu0 %v4415
    %5880 = vmatprep.subr.bf16.mxu0 %v4408
    %5881 = vmatpush2.bf16.msra.mxu0 %v4407
    %5882 = vmatprep.subr.bf16.mxu0 %v4400
    %5883 = vmatpush2.bf16.msra.mxu0 %v4399
    %5884 = vmatprep.subr.bf16.mxu0 %v4392
    %5885 = vmatpush2.bf16.msra.mxu0 %v4391
    %5886 = vmatprep.mubr.bf16.mxu0 %v5418
    %5887 = vmatmul.mubr.bf16.gmra.mxu0 %v5417
    %v5888 = vpop.f32.mrf.mxu0
    %v5889 = vadd.f32 0.0, %v5888
    %v5890 = vpop.f32.mrf.mxu0
    %v5891 = vadd.f32 0.0, %v5890
    %v5892 = vpop.f32.mrf.mxu0
    %v5893 = vpop.f32.mrf.mxu0
    %5894 = vdwg.mxu0
    %5895 = vmatprep.subr.bf16.mxu0 %v4386
    %5896 = vmatpush1.bf16.msra.mxu0 %v4385
    %5897 = vmatprep.subr.bf16.mxu0 %v4378
    %5898 = vmatpush1.bf16.msra.mxu0 %v4377
    %5899 = vmatprep.subr.bf16.mxu0 %v4370
    %5900 = vmatpush1.bf16.msra.mxu0 %v4369
    %5901 = vmatprep.subr.bf16.mxu0 %v4362
    %5902 = vmatpush1.bf16.msra.mxu0 %v4361
    %5903 = vmatprep.subr.bf16.mxu0 %v4354
    %5904 = vmatpush1.bf16.msra.mxu0 %v4353
    %5905 = vmatprep.subr.bf16.mxu0 %v4346
    %5906 = vmatpush1.bf16.msra.mxu0 %v4345
    %5907 = vmatprep.subr.bf16.mxu0 %v4338
    %5908 = vmatpush1.bf16.msra.mxu0 %v4337
    %5909 = vmatprep.subr.bf16.mxu0 %v4330
    %5910 = vmatpush1.bf16.msra.mxu0 %v4329
    %5911 = vmatprep.subr.bf16.mxu0 %v4450
    %5912 = vmatpush2.bf16.msra.mxu0 %v4449
    %5913 = vmatprep.subr.bf16.mxu0 %v4442
    %5914 = vmatpush2.bf16.msra.mxu0 %v4441
    %5915 = vmatprep.subr.bf16.mxu0 %v4434
    %5916 = vmatpush2.bf16.msra.mxu0 %v4433
    %5917 = vmatprep.subr.bf16.mxu0 %v4426
    %5918 = vmatpush2.bf16.msra.mxu0 %v4425
    %5919 = vmatprep.subr.bf16.mxu0 %v4418
    %5920 = vmatpush2.bf16.msra.mxu0 %v4417
    %5921 = vmatprep.subr.bf16.mxu0 %v4410
    %5922 = vmatpush2.bf16.msra.mxu0 %v4409
    %5923 = vmatprep.subr.bf16.mxu0 %v4402
    %5924 = vmatpush2.bf16.msra.mxu0 %v4401
    %5925 = vmatprep.subr.bf16.mxu0 %v4394
    %5926 = vmatpush2.bf16.msra.mxu0 %v4393
    %5927 = vmatprep.mubr.bf16.mxu0 %v5418
    %5928 = vmatmul.mubr.bf16.gmra.mxu0 %v5417
    %v5929 = vpop.f32.mrf.mxu0
    %v5930 = vadd.f32 0.0, %v5929
    %v5931 = vpop.f32.mrf.mxu0
    %v5932 = vadd.f32 0.0, %v5931
    %v5933 = vpop.f32.mrf.mxu0
    %v5934 = vpop.f32.mrf.mxu0
    %5935 = vdwg.mxu0
    %5936 = vmatprep.subr.bf16.mxu0 %v4388
    %5937 = vmatpush1.bf16.msra.mxu0 %v4387
    %5938 = vmatprep.subr.bf16.mxu0 %v4380
    %5939 = vmatpush1.bf16.msra.mxu0 %v4379
    %5940 = vmatprep.subr.bf16.mxu0 %v4372
    %5941 = vmatpush1.bf16.msra.mxu0 %v4371
    %5942 = vmatprep.subr.bf16.mxu0 %v4364
    %5943 = vmatpush1.bf16.msra.mxu0 %v4363
    %5944 = vmatprep.subr.bf16.mxu0 %v4356
    %5945 = vmatpush1.bf16.msra.mxu0 %v4355
    %5946 = vmatprep.subr.bf16.mxu0 %v4348
    %5947 = vmatpush1.bf16.msra.mxu0 %v4347
    %5948 = vmatprep.subr.bf16.mxu0 %v4340
    %5949 = vmatpush1.bf16.msra.mxu0 %v4339
    %5950 = vmatprep.subr.bf16.mxu0 %v4332
    %5951 = vmatpush1.bf16.msra.mxu0 %v4331
    %5952 = vmatprep.subr.bf16.mxu0 %v4452
    %5953 = vmatpush2.bf16.msra.mxu0 %v4451
    %5954 = vmatprep.subr.bf16.mxu0 %v4444
    %5955 = vmatpush2.bf16.msra.mxu0 %v4443
    %5956 = vmatprep.subr.bf16.mxu0 %v4436
    %5957 = vmatpush2.bf16.msra.mxu0 %v4435
    %5958 = vmatprep.subr.bf16.mxu0 %v4428
    %5959 = vmatpush2.bf16.msra.mxu0 %v4427
    %5960 = vmatprep.subr.bf16.mxu0 %v4420
    %5961 = vmatpush2.bf16.msra.mxu0 %v4419
    %5962 = vmatprep.subr.bf16.mxu0 %v4412
    %5963 = vmatpush2.bf16.msra.mxu0 %v4411
    %5964 = vmatprep.subr.bf16.mxu0 %v4404
    %5965 = vmatpush2.bf16.msra.mxu0 %v4403
    %5966 = vmatprep.subr.bf16.mxu0 %v4396
    %5967 = vmatpush2.bf16.msra.mxu0 %v4395
    %5968 = vmatprep.mubr.bf16.mxu0 %v5418
    %5969 = vmatmul.mubr.bf16.gmra.mxu0 %v5417
    %v5970 = vpop.f32.mrf.mxu0
    %v5971 = vadd.f32 0.0, %v5970
    %v5972 = vpop.f32.mrf.mxu0
    %v5973 = vadd.f32 0.0, %v5972
    %v5974 = vpop.f32.mrf.mxu0
    %v5975 = vpop.f32.mrf.mxu0
    %5976 = vdwg.mxu0
    %v5977 = vadd.f32 %v5805, %v5848
    %v5978 = vadd.f32 %v5806, %v5850
    %v5979 = vadd.f32 %v5807, %v5889
    %v5980 = vadd.f32 %v5808, %v5891
    %v5981 = vadd.f32 %v5809, %v5930
    %v5982 = vadd.f32 %v5810, %v5932
    %v5983 = vadd.f32 %v5811, %v5971
    %v5984 = vadd.f32 %v5812, %v5973
    %v5985 = vxor.u32 %v5977, 2147483648
    %v5986 = vxor.u32 %v5978, 2147483648
    %v5987 = vmul.f32 %v5985, 1.442695
    %v5988 = vpow.pop %v5987
    %v5989 = vmul.f32 %v5986, 1.442695
    %v5990 = vpow.pop %v5989
    %v5991 = vadd.f32 %v5988, 1.0
    %v5992 = vadd.f32 %v5990, 1.0
    %v5993 = vrcp.pop %v5991
    %v5994 = vmul.f32 1.0, %v5993
    %v5995 = vrcp.pop %v5992
    %v5996 = vmul.f32 1.0, %v5995
    %v5997 = vxor.u32 %v5979, 2147483648
    %v5998 = vxor.u32 %v5980, 2147483648
    %v5999 = vmul.f32 %v5997, 1.442695
    %v6000 = vpow.pop %v5999
    %v6001 = vmul.f32 %v5998, 1.442695
    %v6002 = vpow.pop %v6001
    %v6003 = vadd.f32 %v6000, 1.0
    %v6004 = vadd.f32 %v6002, 1.0
    %v6005 = vrcp.pop %v6003
    %v6006 = vmul.f32 1.0, %v6005
    %v6007 = vrcp.pop %v6004
    %v6008 = vmul.f32 1.0, %v6007
    %v6009 = vtanh.pop %v5981
    %v6010 = vtanh.pop %v5982
    %v6011 = vxor.u32 %v5983, 2147483648
    %v6012 = vxor.u32 %v5984, 2147483648
    %v6013 = vmul.f32 %v6011, 1.442695
    %v6014 = vpow.pop %v6013
    %v6015 = vmul.f32 %v6012, 1.442695
    %v6016 = vpow.pop %v6015
    %v6017 = vadd.f32 %v6014, 1.0
    %v6018 = vadd.f32 %v6016, 1.0
    %v6019 = vrcp.pop %v6017
    %v6020 = vmul.f32 1.0, %v6019
    %v6021 = vrcp.pop %v6018
    %v6022 = vmul.f32 1.0, %v6021
    %v6023 = vmul.f32 %v6006, %v5411
    %v6024 = vmul.f32 %v6008, %v5412
    %v6025 = vmul.f32 %v5994, %v6009
    %v6026 = vmul.f32 %v5996, %v6010
    %v6027 = vadd.f32 %v6023, %v6025
    %v6028 = vadd.f32 %v6024, %v6026
    %v6029 = vtanh.pop %v6027
    %v6030 = vtanh.pop %v6028
    %v6031 = vmul.f32 %v6020, %v6029
    %v6032 = vmul.f32 %v6022, %v6030
    %v6033 = vpack.c.bf16 %v6031, %v6031
    %v6034 = vpack.c.bf16 %v6032, %v6032
    %v6035 = vpack.c.bf16 %v5803, %v5803
    %v6036 = vpack.c.bf16 %v5804, %v5804
    %6037 = vmatprep.subr.bf16.mxu0 %v2540
    %6038 = vmatpush1.bf16.msra.mxu0 %v2539
    %6039 = vmatprep.subr.bf16.mxu0 %v2532
    %6040 = vmatpush1.bf16.msra.mxu0 %v2531
    %6041 = vmatprep.subr.bf16.mxu0 %v2524
    %6042 = vmatpush1.bf16.msra.mxu0 %v2523
    %6043 = vmatprep.subr.bf16.mxu0 %v2516
    %6044 = vmatpush1.bf16.msra.mxu0 %v2515
    %6045 = vmatprep.subr.bf16.mxu0 %v2508
    %6046 = vmatpush1.bf16.msra.mxu0 %v2507
    %6047 = vmatprep.subr.bf16.mxu0 %v2500
    %6048 = vmatpush1.bf16.msra.mxu0 %v2499
    %6049 = vmatprep.subr.bf16.mxu0 %v2492
    %6050 = vmatpush1.bf16.msra.mxu0 %v2491
    %6051 = vmatprep.subr.bf16.mxu0 %v2484
    %6052 = vmatpush1.bf16.msra.mxu0 %v2483
    %6053 = vmatprep.subr.bf16.mxu0 %v2604
    %6054 = vmatpush2.bf16.msra.mxu0 %v2603
    %6055 = vmatprep.subr.bf16.mxu0 %v2596
    %6056 = vmatpush2.bf16.msra.mxu0 %v2595
    %6057 = vmatprep.subr.bf16.mxu0 %v2588
    %6058 = vmatpush2.bf16.msra.mxu0 %v2587
    %6059 = vmatprep.subr.bf16.mxu0 %v2580
    %6060 = vmatpush2.bf16.msra.mxu0 %v2579
    %6061 = vmatprep.subr.bf16.mxu0 %v2572
    %6062 = vmatpush2.bf16.msra.mxu0 %v2571
    %6063 = vmatprep.subr.bf16.mxu0 %v2564
    %6064 = vmatpush2.bf16.msra.mxu0 %v2563
    %6065 = vmatprep.subr.bf16.mxu0 %v2556
    %6066 = vmatpush2.bf16.msra.mxu0 %v2555
    %6067 = vmatprep.subr.bf16.mxu0 %v2548
    %6068 = vmatpush2.bf16.msra.mxu0 %v2547
    %6069 = vmatprep.mubr.bf16.mxu0 %v6036
    %6070 = vmatmul.mubr.bf16.gmra.mxu0 %v6035
    %v6071 = vpop.f32.mrf.mxu0
    %v6072 = vadd.f32 0.0, %v6071
    %v6073 = vpop.f32.mrf.mxu0
    %v6074 = vadd.f32 0.0, %v6073
    %v6075 = vpop.f32.mrf.mxu0
    %v6076 = vpop.f32.mrf.mxu0
    %6077 = vdwg.mxu0
    %6078 = vmatprep.subr.bf16.mxu0 %v2542
    %6079 = vmatpush1.bf16.msra.mxu0 %v2541
    %6080 = vmatprep.subr.bf16.mxu0 %v2534
    %6081 = vmatpush1.bf16.msra.mxu0 %v2533
    %6082 = vmatprep.subr.bf16.mxu0 %v2526
    %6083 = vmatpush1.bf16.msra.mxu0 %v2525
    %6084 = vmatprep.subr.bf16.mxu0 %v2518
    %6085 = vmatpush1.bf16.msra.mxu0 %v2517
    %6086 = vmatprep.subr.bf16.mxu0 %v2510
    %6087 = vmatpush1.bf16.msra.mxu0 %v2509
    %6088 = vmatprep.subr.bf16.mxu0 %v2502
    %6089 = vmatpush1.bf16.msra.mxu0 %v2501
    %6090 = vmatprep.subr.bf16.mxu0 %v2494
    %6091 = vmatpush1.bf16.msra.mxu0 %v2493
    %6092 = vmatprep.subr.bf16.mxu0 %v2486
    %6093 = vmatpush1.bf16.msra.mxu0 %v2485
    %6094 = vmatprep.subr.bf16.mxu0 %v2606
    %6095 = vmatpush2.bf16.msra.mxu0 %v2605
    %6096 = vmatprep.subr.bf16.mxu0 %v2598
    %6097 = vmatpush2.bf16.msra.mxu0 %v2597
    %6098 = vmatprep.subr.bf16.mxu0 %v2590
    %6099 = vmatpush2.bf16.msra.mxu0 %v2589
    %6100 = vmatprep.subr.bf16.mxu0 %v2582
    %6101 = vmatpush2.bf16.msra.mxu0 %v2581
    %6102 = vmatprep.subr.bf16.mxu0 %v2574
    %6103 = vmatpush2.bf16.msra.mxu0 %v2573
    %6104 = vmatprep.subr.bf16.mxu0 %v2566
    %6105 = vmatpush2.bf16.msra.mxu0 %v2565
    %6106 = vmatprep.subr.bf16.mxu0 %v2558
    %6107 = vmatpush2.bf16.msra.mxu0 %v2557
    %6108 = vmatprep.subr.bf16.mxu0 %v2550
    %6109 = vmatpush2.bf16.msra.mxu0 %v2549
    %6110 = vmatprep.mubr.bf16.mxu0 %v6036
    %6111 = vmatmul.mubr.bf16.gmra.mxu0 %v6035
    %v6112 = vpop.f32.mrf.mxu0
    %v6113 = vadd.f32 0.0, %v6112
    %v6114 = vpop.f32.mrf.mxu0
    %v6115 = vadd.f32 0.0, %v6114
    %v6116 = vpop.f32.mrf.mxu0
    %v6117 = vpop.f32.mrf.mxu0
    %6118 = vdwg.mxu0
    %6119 = vmatprep.subr.bf16.mxu0 %v2544
    %6120 = vmatpush1.bf16.msra.mxu0 %v2543
    %6121 = vmatprep.subr.bf16.mxu0 %v2536
    %6122 = vmatpush1.bf16.msra.mxu0 %v2535
    %6123 = vmatprep.subr.bf16.mxu0 %v2528
    %6124 = vmatpush1.bf16.msra.mxu0 %v2527
    %6125 = vmatprep.subr.bf16.mxu0 %v2520
    %6126 = vmatpush1.bf16.msra.mxu0 %v2519
    %6127 = vmatprep.subr.bf16.mxu0 %v2512
    %6128 = vmatpush1.bf16.msra.mxu0 %v2511
    %6129 = vmatprep.subr.bf16.mxu0 %v2504
    %6130 = vmatpush1.bf16.msra.mxu0 %v2503
    %6131 = vmatprep.subr.bf16.mxu0 %v2496
    %6132 = vmatpush1.bf16.msra.mxu0 %v2495
    %6133 = vmatprep.subr.bf16.mxu0 %v2488
    %6134 = vmatpush1.bf16.msra.mxu0 %v2487
    %6135 = vmatprep.subr.bf16.mxu0 %v2608
    %6136 = vmatpush2.bf16.msra.mxu0 %v2607
    %6137 = vmatprep.subr.bf16.mxu0 %v2600
    %6138 = vmatpush2.bf16.msra.mxu0 %v2599
    %6139 = vmatprep.subr.bf16.mxu0 %v2592
    %6140 = vmatpush2.bf16.msra.mxu0 %v2591
    %6141 = vmatprep.subr.bf16.mxu0 %v2584
    %6142 = vmatpush2.bf16.msra.mxu0 %v2583
    %6143 = vmatprep.subr.bf16.mxu0 %v2576
    %6144 = vmatpush2.bf16.msra.mxu0 %v2575
    %6145 = vmatprep.subr.bf16.mxu0 %v2568
    %6146 = vmatpush2.bf16.msra.mxu0 %v2567
    %6147 = vmatprep.subr.bf16.mxu0 %v2560
    %6148 = vmatpush2.bf16.msra.mxu0 %v2559
    %6149 = vmatprep.subr.bf16.mxu0 %v2552
    %6150 = vmatpush2.bf16.msra.mxu0 %v2551
    %6151 = vmatprep.mubr.bf16.mxu0 %v6036
    %6152 = vmatmul.mubr.bf16.gmra.mxu0 %v6035
    %v6153 = vpop.f32.mrf.mxu0
    %v6154 = vadd.f32 0.0, %v6153
    %v6155 = vpop.f32.mrf.mxu0
    %v6156 = vadd.f32 0.0, %v6155
    %v6157 = vpop.f32.mrf.mxu0
    %v6158 = vpop.f32.mrf.mxu0
    %6159 = vdwg.mxu0
    %6160 = vmatprep.subr.bf16.mxu0 %v2546
    %6161 = vmatpush1.bf16.msra.mxu0 %v2545
    %6162 = vmatprep.subr.bf16.mxu0 %v2538
    %6163 = vmatpush1.bf16.msra.mxu0 %v2537
    %6164 = vmatprep.subr.bf16.mxu0 %v2530
    %6165 = vmatpush1.bf16.msra.mxu0 %v2529
    %6166 = vmatprep.subr.bf16.mxu0 %v2522
    %6167 = vmatpush1.bf16.msra.mxu0 %v2521
    %6168 = vmatprep.subr.bf16.mxu0 %v2514
    %6169 = vmatpush1.bf16.msra.mxu0 %v2513
    %6170 = vmatprep.subr.bf16.mxu0 %v2506
    %6171 = vmatpush1.bf16.msra.mxu0 %v2505
    %6172 = vmatprep.subr.bf16.mxu0 %v2498
    %6173 = vmatpush1.bf16.msra.mxu0 %v2497
    %6174 = vmatprep.subr.bf16.mxu0 %v2490
    %6175 = vmatpush1.bf16.msra.mxu0 %v2489
    %6176 = vmatprep.subr.bf16.mxu0 %v2610
    %6177 = vmatpush2.bf16.msra.mxu0 %v2609
    %6178 = vmatprep.subr.bf16.mxu0 %v2602
    %6179 = vmatpush2.bf16.msra.mxu0 %v2601
    %6180 = vmatprep.subr.bf16.mxu0 %v2594
    %6181 = vmatpush2.bf16.msra.mxu0 %v2593
    %6182 = vmatprep.subr.bf16.mxu0 %v2586
    %6183 = vmatpush2.bf16.msra.mxu0 %v2585
    %6184 = vmatprep.subr.bf16.mxu0 %v2578
    %6185 = vmatpush2.bf16.msra.mxu0 %v2577
    %6186 = vmatprep.subr.bf16.mxu0 %v2570
    %6187 = vmatpush2.bf16.msra.mxu0 %v2569
    %6188 = vmatprep.subr.bf16.mxu0 %v2562
    %6189 = vmatpush2.bf16.msra.mxu0 %v2561
    %6190 = vmatprep.subr.bf16.mxu0 %v2554
    %6191 = vmatpush2.bf16.msra.mxu0 %v2553
    %6192 = vmatprep.mubr.bf16.mxu0 %v6036
    %6193 = vmatmul.mubr.bf16.gmra.mxu0 %v6035
    %v6194 = vpop.f32.mrf.mxu0
    %v6195 = vadd.f32 0.0, %v6194
    %v6196 = vpop.f32.mrf.mxu0
    %v6197 = vadd.f32 0.0, %v6196
    %v6198 = vpop.f32.mrf.mxu0
    %v6199 = vpop.f32.mrf.mxu0
    %6200 = vdwg.mxu0
    %6201 = vmatprep.subr.bf16.mxu0 %v3344
    %6202 = vmatpush1.bf16.msra.mxu0 %v3343
    %6203 = vmatprep.subr.bf16.mxu0 %v3336
    %6204 = vmatpush1.bf16.msra.mxu0 %v3335
    %6205 = vmatprep.subr.bf16.mxu0 %v3328
    %6206 = vmatpush1.bf16.msra.mxu0 %v3327
    %6207 = vmatprep.subr.bf16.mxu0 %v3320
    %6208 = vmatpush1.bf16.msra.mxu0 %v3319
    %6209 = vmatprep.subr.bf16.mxu0 %v3312
    %6210 = vmatpush1.bf16.msra.mxu0 %v3311
    %6211 = vmatprep.subr.bf16.mxu0 %v3304
    %6212 = vmatpush1.bf16.msra.mxu0 %v3303
    %6213 = vmatprep.subr.bf16.mxu0 %v3296
    %6214 = vmatpush1.bf16.msra.mxu0 %v3295
    %6215 = vmatprep.subr.bf16.mxu0 %v3288
    %6216 = vmatpush1.bf16.msra.mxu0 %v3287
    %6217 = vmatprep.subr.bf16.mxu0 %v3408
    %6218 = vmatpush2.bf16.msra.mxu0 %v3407
    %6219 = vmatprep.subr.bf16.mxu0 %v3400
    %6220 = vmatpush2.bf16.msra.mxu0 %v3399
    %6221 = vmatprep.subr.bf16.mxu0 %v3392
    %6222 = vmatpush2.bf16.msra.mxu0 %v3391
    %6223 = vmatprep.subr.bf16.mxu0 %v3384
    %6224 = vmatpush2.bf16.msra.mxu0 %v3383
    %6225 = vmatprep.subr.bf16.mxu0 %v3376
    %6226 = vmatpush2.bf16.msra.mxu0 %v3375
    %6227 = vmatprep.subr.bf16.mxu0 %v3368
    %6228 = vmatpush2.bf16.msra.mxu0 %v3367
    %6229 = vmatprep.subr.bf16.mxu0 %v3360
    %6230 = vmatpush2.bf16.msra.mxu0 %v3359
    %6231 = vmatprep.subr.bf16.mxu0 %v3352
    %6232 = vmatpush2.bf16.msra.mxu0 %v3351
    %6233 = vmatprep.mubr.bf16.mxu0 %v6034
    %6234 = vmatmul.mubr.bf16.gmra.mxu0 %v6033
    %v6235 = vpop.f32.mrf.mxu0
    %v6236 = vadd.f32 %v6072, %v6235
    %v6237 = vpop.f32.mrf.mxu0
    %v6238 = vadd.f32 %v6074, %v6237
    %v6239 = vpop.f32.mrf.mxu0
    %v6240 = vpop.f32.mrf.mxu0
    %6241 = vdwg.mxu0
    %6242 = vmatprep.subr.bf16.mxu0 %v3346
    %6243 = vmatpush1.bf16.msra.mxu0 %v3345
    %6244 = vmatprep.subr.bf16.mxu0 %v3338
    %6245 = vmatpush1.bf16.msra.mxu0 %v3337
    %6246 = vmatprep.subr.bf16.mxu0 %v3330
    %6247 = vmatpush1.bf16.msra.mxu0 %v3329
    %6248 = vmatprep.subr.bf16.mxu0 %v3322
    %6249 = vmatpush1.bf16.msra.mxu0 %v3321
    %6250 = vmatprep.subr.bf16.mxu0 %v3314
    %6251 = vmatpush1.bf16.msra.mxu0 %v3313
    %6252 = vmatprep.subr.bf16.mxu0 %v3306
    %6253 = vmatpush1.bf16.msra.mxu0 %v3305
    %6254 = vmatprep.subr.bf16.mxu0 %v3298
    %6255 = vmatpush1.bf16.msra.mxu0 %v3297
    %6256 = vmatprep.subr.bf16.mxu0 %v3290
    %6257 = vmatpush1.bf16.msra.mxu0 %v3289
    %6258 = vmatprep.subr.bf16.mxu0 %v3410
    %6259 = vmatpush2.bf16.msra.mxu0 %v3409
    %6260 = vmatprep.subr.bf16.mxu0 %v3402
    %6261 = vmatpush2.bf16.msra.mxu0 %v3401
    %6262 = vmatprep.subr.bf16.mxu0 %v3394
    %6263 = vmatpush2.bf16.msra.mxu0 %v3393
    %6264 = vmatprep.subr.bf16.mxu0 %v3386
    %6265 = vmatpush2.bf16.msra.mxu0 %v3385
    %6266 = vmatprep.subr.bf16.mxu0 %v3378
    %6267 = vmatpush2.bf16.msra.mxu0 %v3377
    %6268 = vmatprep.subr.bf16.mxu0 %v3370
    %6269 = vmatpush2.bf16.msra.mxu0 %v3369
    %6270 = vmatprep.subr.bf16.mxu0 %v3362
    %6271 = vmatpush2.bf16.msra.mxu0 %v3361
    %6272 = vmatprep.subr.bf16.mxu0 %v3354
    %6273 = vmatpush2.bf16.msra.mxu0 %v3353
    %6274 = vmatprep.mubr.bf16.mxu0 %v6034
    %6275 = vmatmul.mubr.bf16.gmra.mxu0 %v6033
    %v6276 = vpop.f32.mrf.mxu0
    %v6277 = vadd.f32 %v6113, %v6276
    %v6278 = vpop.f32.mrf.mxu0
    %v6279 = vadd.f32 %v6115, %v6278
    %v6280 = vpop.f32.mrf.mxu0
    %v6281 = vpop.f32.mrf.mxu0
    %6282 = vdwg.mxu0
    %6283 = vmatprep.subr.bf16.mxu0 %v3348
    %6284 = vmatpush1.bf16.msra.mxu0 %v3347
    %6285 = vmatprep.subr.bf16.mxu0 %v3340
    %6286 = vmatpush1.bf16.msra.mxu0 %v3339
    %6287 = vmatprep.subr.bf16.mxu0 %v3332
    %6288 = vmatpush1.bf16.msra.mxu0 %v3331
    %6289 = vmatprep.subr.bf16.mxu0 %v3324
    %6290 = vmatpush1.bf16.msra.mxu0 %v3323
    %6291 = vmatprep.subr.bf16.mxu0 %v3316
    %6292 = vmatpush1.bf16.msra.mxu0 %v3315
    %6293 = vmatprep.subr.bf16.mxu0 %v3308
    %6294 = vmatpush1.bf16.msra.mxu0 %v3307
    %6295 = vmatprep.subr.bf16.mxu0 %v3300
    %6296 = vmatpush1.bf16.msra.mxu0 %v3299
    %6297 = vmatprep.subr.bf16.mxu0 %v3292
    %6298 = vmatpush1.bf16.msra.mxu0 %v3291
    %6299 = vmatprep.subr.bf16.mxu0 %v3412
    %6300 = vmatpush2.bf16.msra.mxu0 %v3411
    %6301 = vmatprep.subr.bf16.mxu0 %v3404
    %6302 = vmatpush2.bf16.msra.mxu0 %v3403
    %6303 = vmatprep.subr.bf16.mxu0 %v3396
    %6304 = vmatpush2.bf16.msra.mxu0 %v3395
    %6305 = vmatprep.subr.bf16.mxu0 %v3388
    %6306 = vmatpush2.bf16.msra.mxu0 %v3387
    %6307 = vmatprep.subr.bf16.mxu0 %v3380
    %6308 = vmatpush2.bf16.msra.mxu0 %v3379
    %6309 = vmatprep.subr.bf16.mxu0 %v3372
    %6310 = vmatpush2.bf16.msra.mxu0 %v3371
    %6311 = vmatprep.subr.bf16.mxu0 %v3364
    %6312 = vmatpush2.bf16.msra.mxu0 %v3363
    %6313 = vmatprep.subr.bf16.mxu0 %v3356
    %6314 = vmatpush2.bf16.msra.mxu0 %v3355
    %6315 = vmatprep.mubr.bf16.mxu0 %v6034
    %6316 = vmatmul.mubr.bf16.gmra.mxu0 %v6033
    %v6317 = vpop.f32.mrf.mxu0
    %v6318 = vadd.f32 %v6154, %v6317
    %v6319 = vpop.f32.mrf.mxu0
    %v6320 = vadd.f32 %v6156, %v6319
    %v6321 = vpop.f32.mrf.mxu0
    %v6322 = vpop.f32.mrf.mxu0
    %6323 = vdwg.mxu0
    %6324 = vmatprep.subr.bf16.mxu0 %v3350
    %6325 = vmatpush1.bf16.msra.mxu0 %v3349
    %6326 = vmatprep.subr.bf16.mxu0 %v3342
    %6327 = vmatpush1.bf16.msra.mxu0 %v3341
    %6328 = vmatprep.subr.bf16.mxu0 %v3334
    %6329 = vmatpush1.bf16.msra.mxu0 %v3333
    %6330 = vmatprep.subr.bf16.mxu0 %v3326
    %6331 = vmatpush1.bf16.msra.mxu0 %v3325
    %6332 = vmatprep.subr.bf16.mxu0 %v3318
    %6333 = vmatpush1.bf16.msra.mxu0 %v3317
    %6334 = vmatprep.subr.bf16.mxu0 %v3310
    %6335 = vmatpush1.bf16.msra.mxu0 %v3309
    %6336 = vmatprep.subr.bf16.mxu0 %v3302
    %6337 = vmatpush1.bf16.msra.mxu0 %v3301
    %6338 = vmatprep.subr.bf16.mxu0 %v3294
    %6339 = vmatpush1.bf16.msra.mxu0 %v3293
    %6340 = vmatprep.subr.bf16.mxu0 %v3414
    %6341 = vmatpush2.bf16.msra.mxu0 %v3413
    %6342 = vmatprep.subr.bf16.mxu0 %v3406
    %6343 = vmatpush2.bf16.msra.mxu0 %v3405
    %6344 = vmatprep.subr.bf16.mxu0 %v3398
    %6345 = vmatpush2.bf16.msra.mxu0 %v3397
    %6346 = vmatprep.subr.bf16.mxu0 %v3390
    %6347 = vmatpush2.bf16.msra.mxu0 %v3389
    %6348 = vmatprep.subr.bf16.mxu0 %v3382
    %6349 = vmatpush2.bf16.msra.mxu0 %v3381
    %6350 = vmatprep.subr.bf16.mxu0 %v3374
    %6351 = vmatpush2.bf16.msra.mxu0 %v3373
    %6352 = vmatprep.subr.bf16.mxu0 %v3366
    %6353 = vmatpush2.bf16.msra.mxu0 %v3365
    %6354 = vmatprep.subr.bf16.mxu0 %v3358
    %6355 = vmatpush2.bf16.msra.mxu0 %v3357
    %6356 = vmatprep.mubr.bf16.mxu0 %v6034
    %6357 = vmatmul.mubr.bf16.gmra.mxu0 %v6033
    %v6358 = vpop.f32.mrf.mxu0
    %v6359 = vadd.f32 %v6195, %v6358
    %v6360 = vpop.f32.mrf.mxu0
    %v6361 = vadd.f32 %v6197, %v6360
    %v6362 = vpop.f32.mrf.mxu0
    %v6363 = vpop.f32.mrf.mxu0
    %6364 = vdwg.mxu0
    %v6365 = vadd.f32 %v6236, %v3712
    %v6366 = vadd.f32 %v6238, %v3716
    %v6367 = vadd.f32 %v6277, %v3720
    %v6368 = vadd.f32 %v6279, %v3724
    %v6369 = vadd.f32 %v6318, %v3728
    %v6370 = vadd.f32 %v6320, %v3732
    %v6371 = vadd.f32 %v6359, %v3736
    %v6372 = vadd.f32 %v6361, %v3740
    %v6373 = vxor.u32 %v6365, 2147483648
    %v6374 = vxor.u32 %v6366, 2147483648
    %v6375 = vmul.f32 %v6373, 1.442695
    %v6376 = vpow.pop %v6375
    %v6377 = vmul.f32 %v6374, 1.442695
    %v6378 = vpow.pop %v6377
    %v6379 = vadd.f32 %v6376, 1.0
    %v6380 = vadd.f32 %v6378, 1.0
    %v6381 = vrcp.pop %v6379
    %v6382 = vmul.f32 1.0, %v6381
    %v6383 = vrcp.pop %v6380
    %v6384 = vmul.f32 1.0, %v6383
    %v6385 = vxor.u32 %v6367, 2147483648
    %v6386 = vxor.u32 %v6368, 2147483648
    %v6387 = vmul.f32 %v6385, 1.442695
    %v6388 = vpow.pop %v6387
    %v6389 = vmul.f32 %v6386, 1.442695
    %v6390 = vpow.pop %v6389
    %v6391 = vadd.f32 %v6388, 1.0
    %v6392 = vadd.f32 %v6390, 1.0
    %v6393 = vrcp.pop %v6391
    %v6394 = vmul.f32 1.0, %v6393
    %v6395 = vrcp.pop %v6392
    %v6396 = vmul.f32 1.0, %v6395
    %v6397 = vtanh.pop %v6369
    %v6398 = vtanh.pop %v6370
    %v6399 = vxor.u32 %v6371, 2147483648
    %v6400 = vxor.u32 %v6372, 2147483648
    %v6401 = vmul.f32 %v6399, 1.442695
    %v6402 = vpow.pop %v6401
    %v6403 = vmul.f32 %v6400, 1.442695
    %v6404 = vpow.pop %v6403
    %v6405 = vadd.f32 %v6402, 1.0
    %v6406 = vadd.f32 %v6404, 1.0
    %v6407 = vrcp.pop %v6405
    %v6408 = vmul.f32 1.0, %v6407
    %v6409 = vrcp.pop %v6406
    %v6410 = vmul.f32 1.0, %v6409
    %v6411 = vmul.f32 %v6394, %v5799
    %v6412 = vmul.f32 %v6396, %v5800
    %v6413 = vmul.f32 %v6382, %v6397
    %v6414 = vmul.f32 %v6384, %v6398
    %v6415 = vadd.f32 %v6411, %v6413
    %v6416 = vadd.f32 %v6412, %v6414
    %v6417 = vtanh.pop %v6415
    %v6418 = vtanh.pop %v6416
    %v6419 = vmul.f32 %v6408, %v6417
    %v6420 = vmul.f32 %v6410, %v6418
    %v6421 = vld [vmem:[#allocation2 + $0x100] sm:$0xff]
    %v6422 = vld [vmem:[#allocation2 + $0x108] sm:$0xff]
    %v6423 = vld [vmem:[#allocation2 + $0x110] sm:$0xff]
    %v6424 = vld [vmem:[#allocation2 + $0x118] sm:$0xff]
    %v6425 = vld [vmem:[#allocation2 + $0x120] sm:$0xff]
    %v6426 = vld [vmem:[#allocation2 + $0x128] sm:$0xff]
    %v6427 = vld [vmem:[#allocation2 + $0x130] sm:$0xff]
    %v6428 = vld [vmem:[#allocation2 + $0x138] sm:$0xff]
    %6429 = vmatprep.subr.bf16.mxu0 %v4382
    %6430 = vmatpush1.bf16.msra.mxu0 %v4381
    %6431 = vmatprep.subr.bf16.mxu0 %v4374
    %6432 = vmatpush1.bf16.msra.mxu0 %v4373
    %6433 = vmatprep.subr.bf16.mxu0 %v4366
    %6434 = vmatpush1.bf16.msra.mxu0 %v4365
    %6435 = vmatprep.subr.bf16.mxu0 %v4358
    %6436 = vmatpush1.bf16.msra.mxu0 %v4357
    %6437 = vmatprep.subr.bf16.mxu0 %v4350
    %6438 = vmatpush1.bf16.msra.mxu0 %v4349
    %6439 = vmatprep.subr.bf16.mxu0 %v4342
    %6440 = vmatpush1.bf16.msra.mxu0 %v4341
    %6441 = vmatprep.subr.bf16.mxu0 %v4334
    %6442 = vmatpush1.bf16.msra.mxu0 %v4333
    %6443 = vmatprep.subr.bf16.mxu0 %v4326
    %6444 = vmatpush1.bf16.msra.mxu0 %v4325
    %6445 = vmatprep.subr.bf16.mxu0 %v4446
    %6446 = vmatpush2.bf16.msra.mxu0 %v4445
    %6447 = vmatprep.subr.bf16.mxu0 %v4438
    %6448 = vmatpush2.bf16.msra.mxu0 %v4437
    %6449 = vmatprep.subr.bf16.mxu0 %v4430
    %6450 = vmatpush2.bf16.msra.mxu0 %v4429
    %6451 = vmatprep.subr.bf16.mxu0 %v4422
    %6452 = vmatpush2.bf16.msra.mxu0 %v4421
    %6453 = vmatprep.subr.bf16.mxu0 %v4414
    %6454 = vmatpush2.bf16.msra.mxu0 %v4413
    %6455 = vmatprep.subr.bf16.mxu0 %v4406
    %6456 = vmatpush2.bf16.msra.mxu0 %v4405
    %6457 = vmatprep.subr.bf16.mxu0 %v4398
    %6458 = vmatpush2.bf16.msra.mxu0 %v4397
    %6459 = vmatprep.subr.bf16.mxu0 %v4390
    %6460 = vmatpush2.bf16.msra.mxu0 %v4389
    %6461 = vmatprep.mubr.bf16.mxu0 %v6034
    %6462 = vmatmul.mubr.bf16.gmra.mxu0 %v6033
    %v6463 = vpop.f32.mrf.mxu0
    %v6464 = vadd.f32 0.0, %v6463
    %v6465 = vpop.f32.mrf.mxu0
    %v6466 = vadd.f32 0.0, %v6465
    %v6467 = vpop.f32.mrf.mxu0
    %v6468 = vpop.f32.mrf.mxu0
    %6469 = vdwg.mxu0
    %6470 = vmatprep.subr.bf16.mxu0 %v4384
    %6471 = vmatpush1.bf16.msra.mxu0 %v4383
    %6472 = vmatprep.subr.bf16.mxu0 %v4376
    %6473 = vmatpush1.bf16.msra.mxu0 %v4375
    %6474 = vmatprep.subr.bf16.mxu0 %v4368
    %6475 = vmatpush1.bf16.msra.mxu0 %v4367
    %6476 = vmatprep.subr.bf16.mxu0 %v4360
    %6477 = vmatpush1.bf16.msra.mxu0 %v4359
    %6478 = vmatprep.subr.bf16.mxu0 %v4352
    %6479 = vmatpush1.bf16.msra.mxu0 %v4351
    %6480 = vmatprep.subr.bf16.mxu0 %v4344
    %6481 = vmatpush1.bf16.msra.mxu0 %v4343
    %6482 = vmatprep.subr.bf16.mxu0 %v4336
    %6483 = vmatpush1.bf16.msra.mxu0 %v4335
    %6484 = vmatprep.subr.bf16.mxu0 %v4328
    %6485 = vmatpush1.bf16.msra.mxu0 %v4327
    %6486 = vmatprep.subr.bf16.mxu0 %v4448
    %6487 = vmatpush2.bf16.msra.mxu0 %v4447
    %6488 = vmatprep.subr.bf16.mxu0 %v4440
    %6489 = vmatpush2.bf16.msra.mxu0 %v4439
    %6490 = vmatprep.subr.bf16.mxu0 %v4432
    %6491 = vmatpush2.bf16.msra.mxu0 %v4431
    %6492 = vmatprep.subr.bf16.mxu0 %v4424
    %6493 = vmatpush2.bf16.msra.mxu0 %v4423
    %6494 = vmatprep.subr.bf16.mxu0 %v4416
    %6495 = vmatpush2.bf16.msra.mxu0 %v4415
    %6496 = vmatprep.subr.bf16.mxu0 %v4408
    %6497 = vmatpush2.bf16.msra.mxu0 %v4407
    %6498 = vmatprep.subr.bf16.mxu0 %v4400
    %6499 = vmatpush2.bf16.msra.mxu0 %v4399
    %6500 = vmatprep.subr.bf16.mxu0 %v4392
    %6501 = vmatpush2.bf16.msra.mxu0 %v4391
    %6502 = vmatprep.mubr.bf16.mxu0 %v6034
    %6503 = vmatmul.mubr.bf16.gmra.mxu0 %v6033
    %v6504 = vpop.f32.mrf.mxu0
    %v6505 = vadd.f32 0.0, %v6504
    %v6506 = vpop.f32.mrf.mxu0
    %v6507 = vadd.f32 0.0, %v6506
    %v6508 = vpop.f32.mrf.mxu0
    %v6509 = vpop.f32.mrf.mxu0
    %6510 = vdwg.mxu0
    %6511 = vmatprep.subr.bf16.mxu0 %v4386
    %6512 = vmatpush1.bf16.msra.mxu0 %v4385
    %6513 = vmatprep.subr.bf16.mxu0 %v4378
    %6514 = vmatpush1.bf16.msra.mxu0 %v4377
    %6515 = vmatprep.subr.bf16.mxu0 %v4370
    %6516 = vmatpush1.bf16.msra.mxu0 %v4369
    %6517 = vmatprep.subr.bf16.mxu0 %v4362
    %6518 = vmatpush1.bf16.msra.mxu0 %v4361
    %6519 = vmatprep.subr.bf16.mxu0 %v4354
    %6520 = vmatpush1.bf16.msra.mxu0 %v4353
    %6521 = vmatprep.subr.bf16.mxu0 %v4346
    %6522 = vmatpush1.bf16.msra.mxu0 %v4345
    %6523 = vmatprep.subr.bf16.mxu0 %v4338
    %6524 = vmatpush1.bf16.msra.mxu0 %v4337
    %6525 = vmatprep.subr.bf16.mxu0 %v4330
    %6526 = vmatpush1.bf16.msra.mxu0 %v4329
    %6527 = vmatprep.subr.bf16.mxu0 %v4450
    %6528 = vmatpush2.bf16.msra.mxu0 %v4449
    %6529 = vmatprep.subr.bf16.mxu0 %v4442
    %6530 = vmatpush2.bf16.msra.mxu0 %v4441
    %6531 = vmatprep.subr.bf16.mxu0 %v4434
    %6532 = vmatpush2.bf16.msra.mxu0 %v4433
    %6533 = vmatprep.subr.bf16.mxu0 %v4426
    %6534 = vmatpush2.bf16.msra.mxu0 %v4425
    %6535 = vmatprep.subr.bf16.mxu0 %v4418
    %6536 = vmatpush2.bf16.msra.mxu0 %v4417
    %6537 = vmatprep.subr.bf16.mxu0 %v4410
    %6538 = vmatpush2.bf16.msra.mxu0 %v4409
    %6539 = vmatprep.subr.bf16.mxu0 %v4402
    %6540 = vmatpush2.bf16.msra.mxu0 %v4401
    %6541 = vmatprep.subr.bf16.mxu0 %v4394
    %6542 = vmatpush2.bf16.msra.mxu0 %v4393
    %6543 = vmatprep.mubr.bf16.mxu0 %v6034
    %6544 = vmatmul.mubr.bf16.gmra.mxu0 %v6033
    %v6545 = vpop.f32.mrf.mxu0
    %v6546 = vadd.f32 0.0, %v6545
    %v6547 = vpop.f32.mrf.mxu0
    %v6548 = vadd.f32 0.0, %v6547
    %v6549 = vpop.f32.mrf.mxu0
    %v6550 = vpop.f32.mrf.mxu0
    %6551 = vdwg.mxu0
    %6552 = vmatprep.subr.bf16.mxu0 %v4388
    %6553 = vmatpush1.bf16.msra.mxu0 %v4387
    %6554 = vmatprep.subr.bf16.mxu0 %v4380
    %6555 = vmatpush1.bf16.msra.mxu0 %v4379
    %6556 = vmatprep.subr.bf16.mxu0 %v4372
    %6557 = vmatpush1.bf16.msra.mxu0 %v4371
    %6558 = vmatprep.subr.bf16.mxu0 %v4364
    %6559 = vmatpush1.bf16.msra.mxu0 %v4363
    %6560 = vmatprep.subr.bf16.mxu0 %v4356
    %6561 = vmatpush1.bf16.msra.mxu0 %v4355
    %6562 = vmatprep.subr.bf16.mxu0 %v4348
    %6563 = vmatpush1.bf16.msra.mxu0 %v4347
    %6564 = vmatprep.subr.bf16.mxu0 %v4340
    %6565 = vmatpush1.bf16.msra.mxu0 %v4339
    %6566 = vmatprep.subr.bf16.mxu0 %v4332
    %6567 = vmatpush1.bf16.msra.mxu0 %v4331
    %6568 = vmatprep.subr.bf16.mxu0 %v4452
    %6569 = vmatpush2.bf16.msra.mxu0 %v4451
    %6570 = vmatprep.subr.bf16.mxu0 %v4444
    %6571 = vmatpush2.bf16.msra.mxu0 %v4443
    %6572 = vmatprep.subr.bf16.mxu0 %v4436
    %6573 = vmatpush2.bf16.msra.mxu0 %v4435
    %6574 = vmatprep.subr.bf16.mxu0 %v4428
    %6575 = vmatpush2.bf16.msra.mxu0 %v4427
    %6576 = vmatprep.subr.bf16.mxu0 %v4420
    %6577 = vmatpush2.bf16.msra.mxu0 %v4419
    %6578 = vmatprep.subr.bf16.mxu0 %v4412
    %6579 = vmatpush2.bf16.msra.mxu0 %v4411
    %6580 = vmatprep.subr.bf16.mxu0 %v4404
    %6581 = vmatpush2.bf16.msra.mxu0 %v4403
    %6582 = vmatprep.subr.bf16.mxu0 %v4396
    %6583 = vmatpush2.bf16.msra.mxu0 %v4395
    %6584 = vmatprep.mubr.bf16.mxu0 %v6034
    %6585 = vmatmul.mubr.bf16.gmra.mxu0 %v6033
    %v6586 = vpop.f32.mrf.mxu0
    %v6587 = vadd.f32 0.0, %v6586
    %v6588 = vpop.f32.mrf.mxu0
    %v6589 = vadd.f32 0.0, %v6588
    %v6590 = vpop.f32.mrf.mxu0
    %v6591 = vpop.f32.mrf.mxu0
    %6592 = vdwg.mxu0
    %v6593 = vadd.f32 %v6421, %v6464
    %v6594 = vadd.f32 %v6422, %v6466
    %v6595 = vadd.f32 %v6423, %v6505
    %v6596 = vadd.f32 %v6424, %v6507
    %v6597 = vadd.f32 %v6425, %v6546
    %v6598 = vadd.f32 %v6426, %v6548
    %v6599 = vadd.f32 %v6427, %v6587
    %v6600 = vadd.f32 %v6428, %v6589
    %v6601 = vxor.u32 %v6593, 2147483648
    %v6602 = vxor.u32 %v6594, 2147483648
    %v6603 = vmul.f32 %v6601, 1.442695
    %v6604 = vpow.pop %v6603
    %v6605 = vmul.f32 %v6602, 1.442695
    %v6606 = vpow.pop %v6605
    %v6607 = vadd.f32 %v6604, 1.0
    %v6608 = vadd.f32 %v6606, 1.0
    %v6609 = vrcp.pop %v6607
    %v6610 = vmul.f32 1.0, %v6609
    %v6611 = vrcp.pop %v6608
    %v6612 = vmul.f32 1.0, %v6611
    %v6613 = vxor.u32 %v6595, 2147483648
    %v6614 = vxor.u32 %v6596, 2147483648
    %v6615 = vmul.f32 %v6613, 1.442695
    %v6616 = vpow.pop %v6615
    %v6617 = vmul.f32 %v6614, 1.442695
    %v6618 = vpow.pop %v6617
    %v6619 = vadd.f32 %v6616, 1.0
    %v6620 = vadd.f32 %v6618, 1.0
    %v6621 = vrcp.pop %v6619
    %v6622 = vmul.f32 1.0, %v6621
    %v6623 = vrcp.pop %v6620
    %v6624 = vmul.f32 1.0, %v6623
    %v6625 = vtanh.pop %v6597
    %v6626 = vtanh.pop %v6598
    %v6627 = vxor.u32 %v6599, 2147483648
    %v6628 = vxor.u32 %v6600, 2147483648
    %v6629 = vmul.f32 %v6627, 1.442695
    %v6630 = vpow.pop %v6629
    %v6631 = vmul.f32 %v6628, 1.442695
    %v6632 = vpow.pop %v6631
    %v6633 = vadd.f32 %v6630, 1.0
    %v6634 = vadd.f32 %v6632, 1.0
    %v6635 = vrcp.pop %v6633
    %v6636 = vmul.f32 1.0, %v6635
    %v6637 = vrcp.pop %v6634
    %v6638 = vmul.f32 1.0, %v6637
    %v6639 = vmul.f32 %v6622, %v6027
    %v6640 = vmul.f32 %v6624, %v6028
    %v6641 = vmul.f32 %v6610, %v6625
    %v6642 = vmul.f32 %v6612, %v6626
    %v6643 = vadd.f32 %v6639, %v6641
    %v6644 = vadd.f32 %v6640, %v6642
    %v6645 = vtanh.pop %v6643
    %v6646 = vtanh.pop %v6644
    %v6647 = vmul.f32 %v6636, %v6645
    %v6648 = vmul.f32 %v6638, %v6646
    %v6649 = vpack.c.bf16 %v6647, %v6647
    %v6650 = vpack.c.bf16 %v6648, %v6648
    %v6651 = vpack.c.bf16 %v6419, %v6419
    %v6652 = vpack.c.bf16 %v6420, %v6420
    %6653 = vmatprep.subr.bf16.mxu0 %v2540
    %6654 = vmatpush1.bf16.msra.mxu0 %v2539
    %6655 = vmatprep.subr.bf16.mxu0 %v2532
    %6656 = vmatpush1.bf16.msra.mxu0 %v2531
    %6657 = vmatprep.subr.bf16.mxu0 %v2524
    %6658 = vmatpush1.bf16.msra.mxu0 %v2523
    %6659 = vmatprep.subr.bf16.mxu0 %v2516
    %6660 = vmatpush1.bf16.msra.mxu0 %v2515
    %6661 = vmatprep.subr.bf16.mxu0 %v2508
    %6662 = vmatpush1.bf16.msra.mxu0 %v2507
    %6663 = vmatprep.subr.bf16.mxu0 %v2500
    %6664 = vmatpush1.bf16.msra.mxu0 %v2499
    %6665 = vmatprep.subr.bf16.mxu0 %v2492
    %6666 = vmatpush1.bf16.msra.mxu0 %v2491
    %6667 = vmatprep.subr.bf16.mxu0 %v2484
    %6668 = vmatpush1.bf16.msra.mxu0 %v2483
    %6669 = vmatprep.subr.bf16.mxu0 %v2604
    %6670 = vmatpush2.bf16.msra.mxu0 %v2603
    %6671 = vmatprep.subr.bf16.mxu0 %v2596
    %6672 = vmatpush2.bf16.msra.mxu0 %v2595
    %6673 = vmatprep.subr.bf16.mxu0 %v2588
    %6674 = vmatpush2.bf16.msra.mxu0 %v2587
    %6675 = vmatprep.subr.bf16.mxu0 %v2580
    %6676 = vmatpush2.bf16.msra.mxu0 %v2579
    %6677 = vmatprep.subr.bf16.mxu0 %v2572
    %6678 = vmatpush2.bf16.msra.mxu0 %v2571
    %6679 = vmatprep.subr.bf16.mxu0 %v2564
    %6680 = vmatpush2.bf16.msra.mxu0 %v2563
    %6681 = vmatprep.subr.bf16.mxu0 %v2556
    %6682 = vmatpush2.bf16.msra.mxu0 %v2555
    %6683 = vmatprep.subr.bf16.mxu0 %v2548
    %6684 = vmatpush2.bf16.msra.mxu0 %v2547
    %6685 = vmatprep.mubr.bf16.mxu0 %v6652
    %6686 = vmatmul.mubr.bf16.gmra.mxu0 %v6651
    %v6687 = vpop.f32.mrf.mxu0
    %v6688 = vadd.f32 0.0, %v6687
    %v6689 = vpop.f32.mrf.mxu0
    %v6690 = vadd.f32 0.0, %v6689
    %v6691 = vpop.f32.mrf.mxu0
    %v6692 = vpop.f32.mrf.mxu0
    %6693 = vdwg.mxu0
    %6694 = vmatprep.subr.bf16.mxu0 %v2542
    %6695 = vmatpush1.bf16.msra.mxu0 %v2541
    %6696 = vmatprep.subr.bf16.mxu0 %v2534
    %6697 = vmatpush1.bf16.msra.mxu0 %v2533
    %6698 = vmatprep.subr.bf16.mxu0 %v2526
    %6699 = vmatpush1.bf16.msra.mxu0 %v2525
    %6700 = vmatprep.subr.bf16.mxu0 %v2518
    %6701 = vmatpush1.bf16.msra.mxu0 %v2517
    %6702 = vmatprep.subr.bf16.mxu0 %v2510
    %6703 = vmatpush1.bf16.msra.mxu0 %v2509
    %6704 = vmatprep.subr.bf16.mxu0 %v2502
    %6705 = vmatpush1.bf16.msra.mxu0 %v2501
    %6706 = vmatprep.subr.bf16.mxu0 %v2494
    %6707 = vmatpush1.bf16.msra.mxu0 %v2493
    %6708 = vmatprep.subr.bf16.mxu0 %v2486
    %6709 = vmatpush1.bf16.msra.mxu0 %v2485
    %6710 = vmatprep.subr.bf16.mxu0 %v2606
    %6711 = vmatpush2.bf16.msra.mxu0 %v2605
    %6712 = vmatprep.subr.bf16.mxu0 %v2598
    %6713 = vmatpush2.bf16.msra.mxu0 %v2597
    %6714 = vmatprep.subr.bf16.mxu0 %v2590
    %6715 = vmatpush2.bf16.msra.mxu0 %v2589
    %6716 = vmatprep.subr.bf16.mxu0 %v2582
    %6717 = vmatpush2.bf16.msra.mxu0 %v2581
    %6718 = vmatprep.subr.bf16.mxu0 %v2574
    %6719 = vmatpush2.bf16.msra.mxu0 %v2573
    %6720 = vmatprep.subr.bf16.mxu0 %v2566
    %6721 = vmatpush2.bf16.msra.mxu0 %v2565
    %6722 = vmatprep.subr.bf16.mxu0 %v2558
    %6723 = vmatpush2.bf16.msra.mxu0 %v2557
    %6724 = vmatprep.subr.bf16.mxu0 %v2550
    %6725 = vmatpush2.bf16.msra.mxu0 %v2549
    %6726 = vmatprep.mubr.bf16.mxu0 %v6652
    %6727 = vmatmul.mubr.bf16.gmra.mxu0 %v6651
    %v6728 = vpop.f32.mrf.mxu0
    %v6729 = vadd.f32 0.0, %v6728
    %v6730 = vpop.f32.mrf.mxu0
    %v6731 = vadd.f32 0.0, %v6730
    %v6732 = vpop.f32.mrf.mxu0
    %v6733 = vpop.f32.mrf.mxu0
    %6734 = vdwg.mxu0
    %6735 = vmatprep.subr.bf16.mxu0 %v2544
    %6736 = vmatpush1.bf16.msra.mxu0 %v2543
    %6737 = vmatprep.subr.bf16.mxu0 %v2536
    %6738 = vmatpush1.bf16.msra.mxu0 %v2535
    %6739 = vmatprep.subr.bf16.mxu0 %v2528
    %6740 = vmatpush1.bf16.msra.mxu0 %v2527
    %6741 = vmatprep.subr.bf16.mxu0 %v2520
    %6742 = vmatpush1.bf16.msra.mxu0 %v2519
    %6743 = vmatprep.subr.bf16.mxu0 %v2512
    %6744 = vmatpush1.bf16.msra.mxu0 %v2511
    %6745 = vmatprep.subr.bf16.mxu0 %v2504
    %6746 = vmatpush1.bf16.msra.mxu0 %v2503
    %6747 = vmatprep.subr.bf16.mxu0 %v2496
    %6748 = vmatpush1.bf16.msra.mxu0 %v2495
    %6749 = vmatprep.subr.bf16.mxu0 %v2488
    %6750 = vmatpush1.bf16.msra.mxu0 %v2487
    %6751 = vmatprep.subr.bf16.mxu0 %v2608
    %6752 = vmatpush2.bf16.msra.mxu0 %v2607
    %6753 = vmatprep.subr.bf16.mxu0 %v2600
    %6754 = vmatpush2.bf16.msra.mxu0 %v2599
    %6755 = vmatprep.subr.bf16.mxu0 %v2592
    %6756 = vmatpush2.bf16.msra.mxu0 %v2591
    %6757 = vmatprep.subr.bf16.mxu0 %v2584
    %6758 = vmatpush2.bf16.msra.mxu0 %v2583
    %6759 = vmatprep.subr.bf16.mxu0 %v2576
    %6760 = vmatpush2.bf16.msra.mxu0 %v2575
    %6761 = vmatprep.subr.bf16.mxu0 %v2568
    %6762 = vmatpush2.bf16.msra.mxu0 %v2567
    %6763 = vmatprep.subr.bf16.mxu0 %v2560
    %6764 = vmatpush2.bf16.msra.mxu0 %v2559
    %6765 = vmatprep.subr.bf16.mxu0 %v2552
    %6766 = vmatpush2.bf16.msra.mxu0 %v2551
    %6767 = vmatprep.mubr.bf16.mxu0 %v6652
    %6768 = vmatmul.mubr.bf16.gmra.mxu0 %v6651
    %v6769 = vpop.f32.mrf.mxu0
    %v6770 = vadd.f32 0.0, %v6769
    %v6771 = vpop.f32.mrf.mxu0
    %v6772 = vadd.f32 0.0, %v6771
    %v6773 = vpop.f32.mrf.mxu0
    %v6774 = vpop.f32.mrf.mxu0
    %6775 = vdwg.mxu0
    %6776 = vmatprep.subr.bf16.mxu0 %v2546
    %6777 = vmatpush1.bf16.msra.mxu0 %v2545
    %6778 = vmatprep.subr.bf16.mxu0 %v2538
    %6779 = vmatpush1.bf16.msra.mxu0 %v2537
    %6780 = vmatprep.subr.bf16.mxu0 %v2530
    %6781 = vmatpush1.bf16.msra.mxu0 %v2529
    %6782 = vmatprep.subr.bf16.mxu0 %v2522
    %6783 = vmatpush1.bf16.msra.mxu0 %v2521
    %6784 = vmatprep.subr.bf16.mxu0 %v2514
    %6785 = vmatpush1.bf16.msra.mxu0 %v2513
    %6786 = vmatprep.subr.bf16.mxu0 %v2506
    %6787 = vmatpush1.bf16.msra.mxu0 %v2505
    %6788 = vmatprep.subr.bf16.mxu0 %v2498
    %6789 = vmatpush1.bf16.msra.mxu0 %v2497
    %6790 = vmatprep.subr.bf16.mxu0 %v2490
    %6791 = vmatpush1.bf16.msra.mxu0 %v2489
    %6792 = vmatprep.subr.bf16.mxu0 %v2610
    %6793 = vmatpush2.bf16.msra.mxu0 %v2609
    %6794 = vmatprep.subr.bf16.mxu0 %v2602
    %6795 = vmatpush2.bf16.msra.mxu0 %v2601
    %6796 = vmatprep.subr.bf16.mxu0 %v2594
    %6797 = vmatpush2.bf16.msra.mxu0 %v2593
    %6798 = vmatprep.subr.bf16.mxu0 %v2586
    %6799 = vmatpush2.bf16.msra.mxu0 %v2585
    %6800 = vmatprep.subr.bf16.mxu0 %v2578
    %6801 = vmatpush2.bf16.msra.mxu0 %v2577
    %6802 = vmatprep.subr.bf16.mxu0 %v2570
    %6803 = vmatpush2.bf16.msra.mxu0 %v2569
    %6804 = vmatprep.subr.bf16.mxu0 %v2562
    %6805 = vmatpush2.bf16.msra.mxu0 %v2561
    %6806 = vmatprep.subr.bf16.mxu0 %v2554
    %6807 = vmatpush2.bf16.msra.mxu0 %v2553
    %6808 = vmatprep.mubr.bf16.mxu0 %v6652
    %6809 = vmatmul.mubr.bf16.gmra.mxu0 %v6651
    %v6810 = vpop.f32.mrf.mxu0
    %v6811 = vadd.f32 0.0, %v6810
    %v6812 = vpop.f32.mrf.mxu0
    %v6813 = vadd.f32 0.0, %v6812
    %v6814 = vpop.f32.mrf.mxu0
    %v6815 = vpop.f32.mrf.mxu0
    %6816 = vdwg.mxu0
    %6817 = vmatprep.subr.bf16.mxu0 %v3344
    %6818 = vmatpush1.bf16.msra.mxu0 %v3343
    %6819 = vmatprep.subr.bf16.mxu0 %v3336
    %6820 = vmatpush1.bf16.msra.mxu0 %v3335
    %6821 = vmatprep.subr.bf16.mxu0 %v3328
    %6822 = vmatpush1.bf16.msra.mxu0 %v3327
    %6823 = vmatprep.subr.bf16.mxu0 %v3320
    %6824 = vmatpush1.bf16.msra.mxu0 %v3319
    %6825 = vmatprep.subr.bf16.mxu0 %v3312
    %6826 = vmatpush1.bf16.msra.mxu0 %v3311
    %6827 = vmatprep.subr.bf16.mxu0 %v3304
    %6828 = vmatpush1.bf16.msra.mxu0 %v3303
    %6829 = vmatprep.subr.bf16.mxu0 %v3296
    %6830 = vmatpush1.bf16.msra.mxu0 %v3295
    %6831 = vmatprep.subr.bf16.mxu0 %v3288
    %6832 = vmatpush1.bf16.msra.mxu0 %v3287
    %6833 = vmatprep.subr.bf16.mxu0 %v3408
    %6834 = vmatpush2.bf16.msra.mxu0 %v3407
    %6835 = vmatprep.subr.bf16.mxu0 %v3400
    %6836 = vmatpush2.bf16.msra.mxu0 %v3399
    %6837 = vmatprep.subr.bf16.mxu0 %v3392
    %6838 = vmatpush2.bf16.msra.mxu0 %v3391
    %6839 = vmatprep.subr.bf16.mxu0 %v3384
    %6840 = vmatpush2.bf16.msra.mxu0 %v3383
    %6841 = vmatprep.subr.bf16.mxu0 %v3376
    %6842 = vmatpush2.bf16.msra.mxu0 %v3375
    %6843 = vmatprep.subr.bf16.mxu0 %v3368
    %6844 = vmatpush2.bf16.msra.mxu0 %v3367
    %6845 = vmatprep.subr.bf16.mxu0 %v3360
    %6846 = vmatpush2.bf16.msra.mxu0 %v3359
    %6847 = vmatprep.subr.bf16.mxu0 %v3352
    %6848 = vmatpush2.bf16.msra.mxu0 %v3351
    %6849 = vmatprep.mubr.bf16.mxu0 %v6650
    %6850 = vmatmul.mubr.bf16.gmra.mxu0 %v6649
    %v6851 = vpop.f32.mrf.mxu0
    %v6852 = vadd.f32 %v6688, %v6851
    %v6853 = vpop.f32.mrf.mxu0
    %v6854 = vadd.f32 %v6690, %v6853
    %v6855 = vpop.f32.mrf.mxu0
    %v6856 = vpop.f32.mrf.mxu0
    %6857 = vdwg.mxu0
    %6858 = vmatprep.subr.bf16.mxu0 %v3346
    %6859 = vmatpush1.bf16.msra.mxu0 %v3345
    %6860 = vmatprep.subr.bf16.mxu0 %v3338
    %6861 = vmatpush1.bf16.msra.mxu0 %v3337
    %6862 = vmatprep.subr.bf16.mxu0 %v3330
    %6863 = vmatpush1.bf16.msra.mxu0 %v3329
    %6864 = vmatprep.subr.bf16.mxu0 %v3322
    %6865 = vmatpush1.bf16.msra.mxu0 %v3321
    %6866 = vmatprep.subr.bf16.mxu0 %v3314
    %6867 = vmatpush1.bf16.msra.mxu0 %v3313
    %6868 = vmatprep.subr.bf16.mxu0 %v3306
    %6869 = vmatpush1.bf16.msra.mxu0 %v3305
    %6870 = vmatprep.subr.bf16.mxu0 %v3298
    %6871 = vmatpush1.bf16.msra.mxu0 %v3297
    %6872 = vmatprep.subr.bf16.mxu0 %v3290
    %6873 = vmatpush1.bf16.msra.mxu0 %v3289
    %6874 = vmatprep.subr.bf16.mxu0 %v3410
    %6875 = vmatpush2.bf16.msra.mxu0 %v3409
    %6876 = vmatprep.subr.bf16.mxu0 %v3402
    %6877 = vmatpush2.bf16.msra.mxu0 %v3401
    %6878 = vmatprep.subr.bf16.mxu0 %v3394
    %6879 = vmatpush2.bf16.msra.mxu0 %v3393
    %6880 = vmatprep.subr.bf16.mxu0 %v3386
    %6881 = vmatpush2.bf16.msra.mxu0 %v3385
    %6882 = vmatprep.subr.bf16.mxu0 %v3378
    %6883 = vmatpush2.bf16.msra.mxu0 %v3377
    %6884 = vmatprep.subr.bf16.mxu0 %v3370
    %6885 = vmatpush2.bf16.msra.mxu0 %v3369
    %6886 = vmatprep.subr.bf16.mxu0 %v3362
    %6887 = vmatpush2.bf16.msra.mxu0 %v3361
    %6888 = vmatprep.subr.bf16.mxu0 %v3354
    %6889 = vmatpush2.bf16.msra.mxu0 %v3353
    %6890 = vmatprep.mubr.bf16.mxu0 %v6650
    %6891 = vmatmul.mubr.bf16.gmra.mxu0 %v6649
    %v6892 = vpop.f32.mrf.mxu0
    %v6893 = vadd.f32 %v6729, %v6892
    %v6894 = vpop.f32.mrf.mxu0
    %v6895 = vadd.f32 %v6731, %v6894
    %v6896 = vpop.f32.mrf.mxu0
    %v6897 = vpop.f32.mrf.mxu0
    %6898 = vdwg.mxu0
    %6899 = vmatprep.subr.bf16.mxu0 %v3348
    %6900 = vmatpush1.bf16.msra.mxu0 %v3347
    %6901 = vmatprep.subr.bf16.mxu0 %v3340
    %6902 = vmatpush1.bf16.msra.mxu0 %v3339
    %6903 = vmatprep.subr.bf16.mxu0 %v3332
    %6904 = vmatpush1.bf16.msra.mxu0 %v3331
    %6905 = vmatprep.subr.bf16.mxu0 %v3324
    %6906 = vmatpush1.bf16.msra.mxu0 %v3323
    %6907 = vmatprep.subr.bf16.mxu0 %v3316
    %6908 = vmatpush1.bf16.msra.mxu0 %v3315
    %6909 = vmatprep.subr.bf16.mxu0 %v3308
    %6910 = vmatpush1.bf16.msra.mxu0 %v3307
    %6911 = vmatprep.subr.bf16.mxu0 %v3300
    %6912 = vmatpush1.bf16.msra.mxu0 %v3299
    %6913 = vmatprep.subr.bf16.mxu0 %v3292
    %6914 = vmatpush1.bf16.msra.mxu0 %v3291
    %6915 = vmatprep.subr.bf16.mxu0 %v3412
    %6916 = vmatpush2.bf16.msra.mxu0 %v3411
    %6917 = vmatprep.subr.bf16.mxu0 %v3404
    %6918 = vmatpush2.bf16.msra.mxu0 %v3403
    %6919 = vmatprep.subr.bf16.mxu0 %v3396
    %6920 = vmatpush2.bf16.msra.mxu0 %v3395
    %6921 = vmatprep.subr.bf16.mxu0 %v3388
    %6922 = vmatpush2.bf16.msra.mxu0 %v3387
    %6923 = vmatprep.subr.bf16.mxu0 %v3380
    %6924 = vmatpush2.bf16.msra.mxu0 %v3379
    %6925 = vmatprep.subr.bf16.mxu0 %v3372
    %6926 = vmatpush2.bf16.msra.mxu0 %v3371
    %6927 = vmatprep.subr.bf16.mxu0 %v3364
    %6928 = vmatpush2.bf16.msra.mxu0 %v3363
    %6929 = vmatprep.subr.bf16.mxu0 %v3356
    %6930 = vmatpush2.bf16.msra.mxu0 %v3355
    %6931 = vmatprep.mubr.bf16.mxu0 %v6650
    %6932 = vmatmul.mubr.bf16.gmra.mxu0 %v6649
    %v6933 = vpop.f32.mrf.mxu0
    %v6934 = vadd.f32 %v6770, %v6933
    %v6935 = vpop.f32.mrf.mxu0
    %v6936 = vadd.f32 %v6772, %v6935
    %v6937 = vpop.f32.mrf.mxu0
    %v6938 = vpop.f32.mrf.mxu0
    %6939 = vdwg.mxu0
    %6940 = vmatprep.subr.bf16.mxu0 %v3350
    %6941 = vmatpush1.bf16.msra.mxu0 %v3349
    %6942 = vmatprep.subr.bf16.mxu0 %v3342
    %6943 = vmatpush1.bf16.msra.mxu0 %v3341
    %6944 = vmatprep.subr.bf16.mxu0 %v3334
    %6945 = vmatpush1.bf16.msra.mxu0 %v3333
    %6946 = vmatprep.subr.bf16.mxu0 %v3326
    %6947 = vmatpush1.bf16.msra.mxu0 %v3325
    %6948 = vmatprep.subr.bf16.mxu0 %v3318
    %6949 = vmatpush1.bf16.msra.mxu0 %v3317
    %6950 = vmatprep.subr.bf16.mxu0 %v3310
    %6951 = vmatpush1.bf16.msra.mxu0 %v3309
    %6952 = vmatprep.subr.bf16.mxu0 %v3302
    %6953 = vmatpush1.bf16.msra.mxu0 %v3301
    %6954 = vmatprep.subr.bf16.mxu0 %v3294
    %6955 = vmatpush1.bf16.msra.mxu0 %v3293
    %6956 = vmatprep.subr.bf16.mxu0 %v3414
    %6957 = vmatpush2.bf16.msra.mxu0 %v3413
    %6958 = vmatprep.subr.bf16.mxu0 %v3406
    %6959 = vmatpush2.bf16.msra.mxu0 %v3405
    %6960 = vmatprep.subr.bf16.mxu0 %v3398
    %6961 = vmatpush2.bf16.msra.mxu0 %v3397
    %6962 = vmatprep.subr.bf16.mxu0 %v3390
    %6963 = vmatpush2.bf16.msra.mxu0 %v3389
    %6964 = vmatprep.subr.bf16.mxu0 %v3382
    %6965 = vmatpush2.bf16.msra.mxu0 %v3381
    %6966 = vmatprep.subr.bf16.mxu0 %v3374
    %6967 = vmatpush2.bf16.msra.mxu0 %v3373
    %6968 = vmatprep.subr.bf16.mxu0 %v3366
    %6969 = vmatpush2.bf16.msra.mxu0 %v3365
    %6970 = vmatprep.subr.bf16.mxu0 %v3358
    %6971 = vmatpush2.bf16.msra.mxu0 %v3357
    %6972 = vmatprep.mubr.bf16.mxu0 %v6650
    %6973 = vmatmul.mubr.bf16.gmra.mxu0 %v6649
    %v6974 = vpop.f32.mrf.mxu0
    %v6975 = vadd.f32 %v6811, %v6974
    %v6976 = vpop.f32.mrf.mxu0
    %v6977 = vadd.f32 %v6813, %v6976
    %v6978 = vpop.f32.mrf.mxu0
    %v6979 = vpop.f32.mrf.mxu0
    %6980 = vdwg.mxu0
    %v6981 = vadd.f32 %v6852, %v3712
    %v6982 = vadd.f32 %v6854, %v3716
    %v6983 = vadd.f32 %v6893, %v3720
    %v6984 = vadd.f32 %v6895, %v3724
    %v6985 = vadd.f32 %v6934, %v3728
    %v6986 = vadd.f32 %v6936, %v3732
    %v6987 = vadd.f32 %v6975, %v3736
    %v6988 = vadd.f32 %v6977, %v3740
    %v6989 = vxor.u32 %v6981, 2147483648
    %v6990 = vxor.u32 %v6982, 2147483648
    %v6991 = vmul.f32 %v6989, 1.442695
    %v6992 = vpow.pop %v6991
    %v6993 = vmul.f32 %v6990, 1.442695
    %v6994 = vpow.pop %v6993
    %v6995 = vadd.f32 %v6992, 1.0
    %v6996 = vadd.f32 %v6994, 1.0
    %v6997 = vrcp.pop %v6995
    %v6998 = vmul.f32 1.0, %v6997
    %v6999 = vrcp.pop %v6996
    %v7000 = vmul.f32 1.0, %v6999
    %v7001 = vxor.u32 %v6983, 2147483648
    %v7002 = vxor.u32 %v6984, 2147483648
    %v7003 = vmul.f32 %v7001, 1.442695
    %v7004 = vpow.pop %v7003
    %v7005 = vmul.f32 %v7002, 1.442695
    %v7006 = vpow.pop %v7005
    %v7007 = vadd.f32 %v7004, 1.0
    %v7008 = vadd.f32 %v7006, 1.0
    %v7009 = vrcp.pop %v7007
    %v7010 = vmul.f32 1.0, %v7009
    %v7011 = vrcp.pop %v7008
    %v7012 = vmul.f32 1.0, %v7011
    %v7013 = vtanh.pop %v6985
    %v7014 = vtanh.pop %v6986
    %v7015 = vxor.u32 %v6987, 2147483648
    %v7016 = vxor.u32 %v6988, 2147483648
    %v7017 = vmul.f32 %v7015, 1.442695
    %v7018 = vpow.pop %v7017
    %v7019 = vmul.f32 %v7016, 1.442695
    %v7020 = vpow.pop %v7019
    %v7021 = vadd.f32 %v7018, 1.0
    %v7022 = vadd.f32 %v7020, 1.0
    %v7023 = vrcp.pop %v7021
    %v7024 = vmul.f32 1.0, %v7023
    %v7025 = vrcp.pop %v7022
    %v7026 = vmul.f32 1.0, %v7025
    %v7027 = vmul.f32 %v7010, %v6415
    %v7028 = vmul.f32 %v7012, %v6416
    %v7029 = vmul.f32 %v6998, %v7013
    %v7030 = vmul.f32 %v7000, %v7014
    %v7031 = vadd.f32 %v7027, %v7029
    %v7032 = vadd.f32 %v7028, %v7030
    %v7033 = vtanh.pop %v7031
    %v7034 = vtanh.pop %v7032
    %v7035 = vmul.f32 %v7024, %v7033
    %v7036 = vmul.f32 %v7026, %v7034
    %v7037 = vld [vmem:[#allocation2 + $0x140] sm:$0xff]
    %v7038 = vld [vmem:[#allocation2 + $0x148] sm:$0xff]
    %v7039 = vld [vmem:[#allocation2 + $0x150] sm:$0xff]
    %v7040 = vld [vmem:[#allocation2 + $0x158] sm:$0xff]
    %v7041 = vld [vmem:[#allocation2 + $0x160] sm:$0xff]
    %v7042 = vld [vmem:[#allocation2 + $0x168] sm:$0xff]
    %v7043 = vld [vmem:[#allocation2 + $0x170] sm:$0xff]
    %v7044 = vld [vmem:[#allocation2 + $0x178] sm:$0xff]
    %7045 = vmatprep.subr.bf16.mxu0 %v4382
    %7046 = vmatpush1.bf16.msra.mxu0 %v4381
    %7047 = vmatprep.subr.bf16.mxu0 %v4374
    %7048 = vmatpush1.bf16.msra.mxu0 %v4373
    %7049 = vmatprep.subr.bf16.mxu0 %v4366
    %7050 = vmatpush1.bf16.msra.mxu0 %v4365
    %7051 = vmatprep.subr.bf16.mxu0 %v4358
    %7052 = vmatpush1.bf16.msra.mxu0 %v4357
    %7053 = vmatprep.subr.bf16.mxu0 %v4350
    %7054 = vmatpush1.bf16.msra.mxu0 %v4349
    %7055 = vmatprep.subr.bf16.mxu0 %v4342
    %7056 = vmatpush1.bf16.msra.mxu0 %v4341
    %7057 = vmatprep.subr.bf16.mxu0 %v4334
    %7058 = vmatpush1.bf16.msra.mxu0 %v4333
    %7059 = vmatprep.subr.bf16.mxu0 %v4326
    %7060 = vmatpush1.bf16.msra.mxu0 %v4325
    %7061 = vmatprep.subr.bf16.mxu0 %v4446
    %7062 = vmatpush2.bf16.msra.mxu0 %v4445
    %7063 = vmatprep.subr.bf16.mxu0 %v4438
    %7064 = vmatpush2.bf16.msra.mxu0 %v4437
    %7065 = vmatprep.subr.bf16.mxu0 %v4430
    %7066 = vmatpush2.bf16.msra.mxu0 %v4429
    %7067 = vmatprep.subr.bf16.mxu0 %v4422
    %7068 = vmatpush2.bf16.msra.mxu0 %v4421
    %7069 = vmatprep.subr.bf16.mxu0 %v4414
    %7070 = vmatpush2.bf16.msra.mxu0 %v4413
    %7071 = vmatprep.subr.bf16.mxu0 %v4406
    %7072 = vmatpush2.bf16.msra.mxu0 %v4405
    %7073 = vmatprep.subr.bf16.mxu0 %v4398
    %7074 = vmatpush2.bf16.msra.mxu0 %v4397
    %7075 = vmatprep.subr.bf16.mxu0 %v4390
    %7076 = vmatpush2.bf16.msra.mxu0 %v4389
    %7077 = vmatprep.mubr.bf16.mxu0 %v6650
    %7078 = vmatmul.mubr.bf16.gmra.mxu0 %v6649
    %v7079 = vpop.f32.mrf.mxu0
    %v7080 = vadd.f32 0.0, %v7079
    %v7081 = vpop.f32.mrf.mxu0
    %v7082 = vadd.f32 0.0, %v7081
    %v7083 = vpop.f32.mrf.mxu0
    %v7084 = vpop.f32.mrf.mxu0
    %7085 = vdwg.mxu0
    %7086 = vmatprep.subr.bf16.mxu0 %v4384
    %7087 = vmatpush1.bf16.msra.mxu0 %v4383
    %7088 = vmatprep.subr.bf16.mxu0 %v4376
    %7089 = vmatpush1.bf16.msra.mxu0 %v4375
    %7090 = vmatprep.subr.bf16.mxu0 %v4368
    %7091 = vmatpush1.bf16.msra.mxu0 %v4367
    %7092 = vmatprep.subr.bf16.mxu0 %v4360
    %7093 = vmatpush1.bf16.msra.mxu0 %v4359
    %7094 = vmatprep.subr.bf16.mxu0 %v4352
    %7095 = vmatpush1.bf16.msra.mxu0 %v4351
    %7096 = vmatprep.subr.bf16.mxu0 %v4344
    %7097 = vmatpush1.bf16.msra.mxu0 %v4343
    %7098 = vmatprep.subr.bf16.mxu0 %v4336
    %7099 = vmatpush1.bf16.msra.mxu0 %v4335
    %7100 = vmatprep.subr.bf16.mxu0 %v4328
    %7101 = vmatpush1.bf16.msra.mxu0 %v4327
    %7102 = vmatprep.subr.bf16.mxu0 %v4448
    %7103 = vmatpush2.bf16.msra.mxu0 %v4447
    %7104 = vmatprep.subr.bf16.mxu0 %v4440
    %7105 = vmatpush2.bf16.msra.mxu0 %v4439
    %7106 = vmatprep.subr.bf16.mxu0 %v4432
    %7107 = vmatpush2.bf16.msra.mxu0 %v4431
    %7108 = vmatprep.subr.bf16.mxu0 %v4424
    %7109 = vmatpush2.bf16.msra.mxu0 %v4423
    %7110 = vmatprep.subr.bf16.mxu0 %v4416
    %7111 = vmatpush2.bf16.msra.mxu0 %v4415
    %7112 = vmatprep.subr.bf16.mxu0 %v4408
    %7113 = vmatpush2.bf16.msra.mxu0 %v4407
    %7114 = vmatprep.subr.bf16.mxu0 %v4400
    %7115 = vmatpush2.bf16.msra.mxu0 %v4399
    %7116 = vmatprep.subr.bf16.mxu0 %v4392
    %7117 = vmatpush2.bf16.msra.mxu0 %v4391
    %7118 = vmatprep.mubr.bf16.mxu0 %v6650
    %7119 = vmatmul.mubr.bf16.gmra.mxu0 %v6649
    %v7120 = vpop.f32.mrf.mxu0
    %v7121 = vadd.f32 0.0, %v7120
    %v7122 = vpop.f32.mrf.mxu0
    %v7123 = vadd.f32 0.0, %v7122
    %v7124 = vpop.f32.mrf.mxu0
    %v7125 = vpop.f32.mrf.mxu0
    %7126 = vdwg.mxu0
    %7127 = vmatprep.subr.bf16.mxu0 %v4386
    %7128 = vmatpush1.bf16.msra.mxu0 %v4385
    %7129 = vmatprep.subr.bf16.mxu0 %v4378
    %7130 = vmatpush1.bf16.msra.mxu0 %v4377
    %7131 = vmatprep.subr.bf16.mxu0 %v4370
    %7132 = vmatpush1.bf16.msra.mxu0 %v4369
    %7133 = vmatprep.subr.bf16.mxu0 %v4362
    %7134 = vmatpush1.bf16.msra.mxu0 %v4361
    %7135 = vmatprep.subr.bf16.mxu0 %v4354
    %7136 = vmatpush1.bf16.msra.mxu0 %v4353
    %7137 = vmatprep.subr.bf16.mxu0 %v4346
    %7138 = vmatpush1.bf16.msra.mxu0 %v4345
    %7139 = vmatprep.subr.bf16.mxu0 %v4338
    %7140 = vmatpush1.bf16.msra.mxu0 %v4337
    %7141 = vmatprep.subr.bf16.mxu0 %v4330
    %7142 = vmatpush1.bf16.msra.mxu0 %v4329
    %7143 = vmatprep.subr.bf16.mxu0 %v4450
    %7144 = vmatpush2.bf16.msra.mxu0 %v4449
    %7145 = vmatprep.subr.bf16.mxu0 %v4442
    %7146 = vmatpush2.bf16.msra.mxu0 %v4441
    %7147 = vmatprep.subr.bf16.mxu0 %v4434
    %7148 = vmatpush2.bf16.msra.mxu0 %v4433
    %7149 = vmatprep.subr.bf16.mxu0 %v4426
    %7150 = vmatpush2.bf16.msra.mxu0 %v4425
    %7151 = vmatprep.subr.bf16.mxu0 %v4418
    %7152 = vmatpush2.bf16.msra.mxu0 %v4417
    %7153 = vmatprep.subr.bf16.mxu0 %v4410
    %7154 = vmatpush2.bf16.msra.mxu0 %v4409
    %7155 = vmatprep.subr.bf16.mxu0 %v4402
    %7156 = vmatpush2.bf16.msra.mxu0 %v4401
    %7157 = vmatprep.subr.bf16.mxu0 %v4394
    %7158 = vmatpush2.bf16.msra.mxu0 %v4393
    %7159 = vmatprep.mubr.bf16.mxu0 %v6650
    %7160 = vmatmul.mubr.bf16.gmra.mxu0 %v6649
    %v7161 = vpop.f32.mrf.mxu0
    %v7162 = vadd.f32 0.0, %v7161
    %v7163 = vpop.f32.mrf.mxu0
    %v7164 = vadd.f32 0.0, %v7163
    %v7165 = vpop.f32.mrf.mxu0
    %v7166 = vpop.f32.mrf.mxu0
    %7167 = vdwg.mxu0
    %7168 = vmatprep.subr.bf16.mxu0 %v4388
    %7169 = vmatpush1.bf16.msra.mxu0 %v4387
    %7170 = vmatprep.subr.bf16.mxu0 %v4380
    %7171 = vmatpush1.bf16.msra.mxu0 %v4379
    %7172 = vmatprep.subr.bf16.mxu0 %v4372
    %7173 = vmatpush1.bf16.msra.mxu0 %v4371
    %7174 = vmatprep.subr.bf16.mxu0 %v4364
    %7175 = vmatpush1.bf16.msra.mxu0 %v4363
    %7176 = vmatprep.subr.bf16.mxu0 %v4356
    %7177 = vmatpush1.bf16.msra.mxu0 %v4355
    %7178 = vmatprep.subr.bf16.mxu0 %v4348
    %7179 = vmatpush1.bf16.msra.mxu0 %v4347
    %7180 = vmatprep.subr.bf16.mxu0 %v4340
    %7181 = vmatpush1.bf16.msra.mxu0 %v4339
    %7182 = vmatprep.subr.bf16.mxu0 %v4332
    %7183 = vmatpush1.bf16.msra.mxu0 %v4331
    %7184 = vmatprep.subr.bf16.mxu0 %v4452
    %7185 = vmatpush2.bf16.msra.mxu0 %v4451
    %7186 = vmatprep.subr.bf16.mxu0 %v4444
    %7187 = vmatpush2.bf16.msra.mxu0 %v4443
    %7188 = vmatprep.subr.bf16.mxu0 %v4436
    %7189 = vmatpush2.bf16.msra.mxu0 %v4435
    %7190 = vmatprep.subr.bf16.mxu0 %v4428
    %7191 = vmatpush2.bf16.msra.mxu0 %v4427
    %7192 = vmatprep.subr.bf16.mxu0 %v4420
    %7193 = vmatpush2.bf16.msra.mxu0 %v4419
    %7194 = vmatprep.subr.bf16.mxu0 %v4412
    %7195 = vmatpush2.bf16.msra.mxu0 %v4411
    %7196 = vmatprep.subr.bf16.mxu0 %v4404
    %7197 = vmatpush2.bf16.msra.mxu0 %v4403
    %7198 = vmatprep.subr.bf16.mxu0 %v4396
    %7199 = vmatpush2.bf16.msra.mxu0 %v4395
    %7200 = vmatprep.mubr.bf16.mxu0 %v6650
    %7201 = vmatmul.mubr.bf16.gmra.mxu0 %v6649
    %v7202 = vpop.f32.mrf.mxu0
    %v7203 = vadd.f32 0.0, %v7202
    %v7204 = vpop.f32.mrf.mxu0
    %v7205 = vadd.f32 0.0, %v7204
    %v7206 = vpop.f32.mrf.mxu0
    %v7207 = vpop.f32.mrf.mxu0
    %7208 = vdwg.mxu0
    %v7209 = vadd.f32 %v7037, %v7080
    %v7210 = vadd.f32 %v7038, %v7082
    %v7211 = vadd.f32 %v7039, %v7121
    %v7212 = vadd.f32 %v7040, %v7123
    %v7213 = vadd.f32 %v7041, %v7162
    %v7214 = vadd.f32 %v7042, %v7164
    %v7215 = vadd.f32 %v7043, %v7203
    %v7216 = vadd.f32 %v7044, %v7205
    %v7217 = vxor.u32 %v7209, 2147483648
    %v7218 = vxor.u32 %v7210, 2147483648
    %v7219 = vmul.f32 %v7217, 1.442695
    %v7220 = vpow.pop %v7219
    %v7221 = vmul.f32 %v7218, 1.442695
    %v7222 = vpow.pop %v7221
    %v7223 = vadd.f32 %v7220, 1.0
    %v7224 = vadd.f32 %v7222, 1.0
    %v7225 = vrcp.pop %v7223
    %v7226 = vmul.f32 1.0, %v7225
    %v7227 = vrcp.pop %v7224
    %v7228 = vmul.f32 1.0, %v7227
    %v7229 = vxor.u32 %v7211, 2147483648
    %v7230 = vxor.u32 %v7212, 2147483648
    %v7231 = vmul.f32 %v7229, 1.442695
    %v7232 = vpow.pop %v7231
    %v7233 = vmul.f32 %v7230, 1.442695
    %v7234 = vpow.pop %v7233
    %v7235 = vadd.f32 %v7232, 1.0
    %v7236 = vadd.f32 %v7234, 1.0
    %v7237 = vrcp.pop %v7235
    %v7238 = vmul.f32 1.0, %v7237
    %v7239 = vrcp.pop %v7236
    %v7240 = vmul.f32 1.0, %v7239
    %v7241 = vtanh.pop %v7213
    %v7242 = vtanh.pop %v7214
    %v7243 = vxor.u32 %v7215, 2147483648
    %v7244 = vxor.u32 %v7216, 2147483648
    %v7245 = vmul.f32 %v7243, 1.442695
    %v7246 = vpow.pop %v7245
    %v7247 = vmul.f32 %v7244, 1.442695
    %v7248 = vpow.pop %v7247
    %v7249 = vadd.f32 %v7246, 1.0
    %v7250 = vadd.f32 %v7248, 1.0
    %v7251 = vrcp.pop %v7249
    %v7252 = vmul.f32 1.0, %v7251
    %v7253 = vrcp.pop %v7250
    %v7254 = vmul.f32 1.0, %v7253
    %v7255 = vmul.f32 %v7238, %v6643
    %v7256 = vmul.f32 %v7240, %v6644
    %v7257 = vmul.f32 %v7226, %v7241
    %v7258 = vmul.f32 %v7228, %v7242
    %v7259 = vadd.f32 %v7255, %v7257
    %v7260 = vadd.f32 %v7256, %v7258
    %v7261 = vtanh.pop %v7259
    %v7262 = vtanh.pop %v7260
    %v7263 = vmul.f32 %v7252, %v7261
    %v7264 = vmul.f32 %v7254, %v7262
    %v7265 = vpack.c.bf16 %v7263, %v7263
    %v7266 = vpack.c.bf16 %v7264, %v7264
    %v7267 = vpack.c.bf16 %v7035, %v7035
    %v7268 = vpack.c.bf16 %v7036, %v7036
    %7269 = vmatprep.subr.bf16.mxu0 %v2540
    %7270 = vmatpush1.bf16.msra.mxu0 %v2539
    %7271 = vmatprep.subr.bf16.mxu0 %v2532
    %7272 = vmatpush1.bf16.msra.mxu0 %v2531
    %7273 = vmatprep.subr.bf16.mxu0 %v2524
    %7274 = vmatpush1.bf16.msra.mxu0 %v2523
    %7275 = vmatprep.subr.bf16.mxu0 %v2516
    %7276 = vmatpush1.bf16.msra.mxu0 %v2515
    %7277 = vmatprep.subr.bf16.mxu0 %v2508
    %7278 = vmatpush1.bf16.msra.mxu0 %v2507
    %7279 = vmatprep.subr.bf16.mxu0 %v2500
    %7280 = vmatpush1.bf16.msra.mxu0 %v2499
    %7281 = vmatprep.subr.bf16.mxu0 %v2492
    %7282 = vmatpush1.bf16.msra.mxu0 %v2491
    %7283 = vmatprep.subr.bf16.mxu0 %v2484
    %7284 = vmatpush1.bf16.msra.mxu0 %v2483
    %7285 = vmatprep.subr.bf16.mxu0 %v2604
    %7286 = vmatpush2.bf16.msra.mxu0 %v2603
    %7287 = vmatprep.subr.bf16.mxu0 %v2596
    %7288 = vmatpush2.bf16.msra.mxu0 %v2595
    %7289 = vmatprep.subr.bf16.mxu0 %v2588
    %7290 = vmatpush2.bf16.msra.mxu0 %v2587
    %7291 = vmatprep.subr.bf16.mxu0 %v2580
    %7292 = vmatpush2.bf16.msra.mxu0 %v2579
    %7293 = vmatprep.subr.bf16.mxu0 %v2572
    %7294 = vmatpush2.bf16.msra.mxu0 %v2571
    %7295 = vmatprep.subr.bf16.mxu0 %v2564
    %7296 = vmatpush2.bf16.msra.mxu0 %v2563
    %7297 = vmatprep.subr.bf16.mxu0 %v2556
    %7298 = vmatpush2.bf16.msra.mxu0 %v2555
    %7299 = vmatprep.subr.bf16.mxu0 %v2548
    %7300 = vmatpush2.bf16.msra.mxu0 %v2547
    %7301 = vmatprep.mubr.bf16.mxu0 %v7268
    %7302 = vmatmul.mubr.bf16.gmra.mxu0 %v7267
    %v7303 = vpop.f32.mrf.mxu0
    %v7304 = vadd.f32 0.0, %v7303
    %v7305 = vpop.f32.mrf.mxu0
    %v7306 = vadd.f32 0.0, %v7305
    %v7307 = vpop.f32.mrf.mxu0
    %v7308 = vpop.f32.mrf.mxu0
    %7309 = vdwg.mxu0
    %7310 = vmatprep.subr.bf16.mxu0 %v2542
    %7311 = vmatpush1.bf16.msra.mxu0 %v2541
    %7312 = vmatprep.subr.bf16.mxu0 %v2534
    %7313 = vmatpush1.bf16.msra.mxu0 %v2533
    %7314 = vmatprep.subr.bf16.mxu0 %v2526
    %7315 = vmatpush1.bf16.msra.mxu0 %v2525
    %7316 = vmatprep.subr.bf16.mxu0 %v2518
    %7317 = vmatpush1.bf16.msra.mxu0 %v2517
    %7318 = vmatprep.subr.bf16.mxu0 %v2510
    %7319 = vmatpush1.bf16.msra.mxu0 %v2509
    %7320 = vmatprep.subr.bf16.mxu0 %v2502
    %7321 = vmatpush1.bf16.msra.mxu0 %v2501
    %7322 = vmatprep.subr.bf16.mxu0 %v2494
    %7323 = vmatpush1.bf16.msra.mxu0 %v2493
    %7324 = vmatprep.subr.bf16.mxu0 %v2486
    %7325 = vmatpush1.bf16.msra.mxu0 %v2485
    %7326 = vmatprep.subr.bf16.mxu0 %v2606
    %7327 = vmatpush2.bf16.msra.mxu0 %v2605
    %7328 = vmatprep.subr.bf16.mxu0 %v2598
    %7329 = vmatpush2.bf16.msra.mxu0 %v2597
    %7330 = vmatprep.subr.bf16.mxu0 %v2590
    %7331 = vmatpush2.bf16.msra.mxu0 %v2589
    %7332 = vmatprep.subr.bf16.mxu0 %v2582
    %7333 = vmatpush2.bf16.msra.mxu0 %v2581
    %7334 = vmatprep.subr.bf16.mxu0 %v2574
    %7335 = vmatpush2.bf16.msra.mxu0 %v2573
    %7336 = vmatprep.subr.bf16.mxu0 %v2566
    %7337 = vmatpush2.bf16.msra.mxu0 %v2565
    %7338 = vmatprep.subr.bf16.mxu0 %v2558
    %7339 = vmatpush2.bf16.msra.mxu0 %v2557
    %7340 = vmatprep.subr.bf16.mxu0 %v2550
    %7341 = vmatpush2.bf16.msra.mxu0 %v2549
    %7342 = vmatprep.mubr.bf16.mxu0 %v7268
    %7343 = vmatmul.mubr.bf16.gmra.mxu0 %v7267
    %v7344 = vpop.f32.mrf.mxu0
    %v7345 = vadd.f32 0.0, %v7344
    %v7346 = vpop.f32.mrf.mxu0
    %v7347 = vadd.f32 0.0, %v7346
    %v7348 = vpop.f32.mrf.mxu0
    %v7349 = vpop.f32.mrf.mxu0
    %7350 = vdwg.mxu0
    %7351 = vmatprep.subr.bf16.mxu0 %v2544
    %7352 = vmatpush1.bf16.msra.mxu0 %v2543
    %7353 = vmatprep.subr.bf16.mxu0 %v2536
    %7354 = vmatpush1.bf16.msra.mxu0 %v2535
    %7355 = vmatprep.subr.bf16.mxu0 %v2528
    %7356 = vmatpush1.bf16.msra.mxu0 %v2527
    %7357 = vmatprep.subr.bf16.mxu0 %v2520
    %7358 = vmatpush1.bf16.msra.mxu0 %v2519
    %7359 = vmatprep.subr.bf16.mxu0 %v2512
    %7360 = vmatpush1.bf16.msra.mxu0 %v2511
    %7361 = vmatprep.subr.bf16.mxu0 %v2504
    %7362 = vmatpush1.bf16.msra.mxu0 %v2503
    %7363 = vmatprep.subr.bf16.mxu0 %v2496
    %7364 = vmatpush1.bf16.msra.mxu0 %v2495
    %7365 = vmatprep.subr.bf16.mxu0 %v2488
    %7366 = vmatpush1.bf16.msra.mxu0 %v2487
    %7367 = vmatprep.subr.bf16.mxu0 %v2608
    %7368 = vmatpush2.bf16.msra.mxu0 %v2607
    %7369 = vmatprep.subr.bf16.mxu0 %v2600
    %7370 = vmatpush2.bf16.msra.mxu0 %v2599
    %7371 = vmatprep.subr.bf16.mxu0 %v2592
    %7372 = vmatpush2.bf16.msra.mxu0 %v2591
    %7373 = vmatprep.subr.bf16.mxu0 %v2584
    %7374 = vmatpush2.bf16.msra.mxu0 %v2583
    %7375 = vmatprep.subr.bf16.mxu0 %v2576
    %7376 = vmatpush2.bf16.msra.mxu0 %v2575
    %7377 = vmatprep.subr.bf16.mxu0 %v2568
    %7378 = vmatpush2.bf16.msra.mxu0 %v2567
    %7379 = vmatprep.subr.bf16.mxu0 %v2560
    %7380 = vmatpush2.bf16.msra.mxu0 %v2559
    %7381 = vmatprep.subr.bf16.mxu0 %v2552
    %7382 = vmatpush2.bf16.msra.mxu0 %v2551
    %7383 = vmatprep.mubr.bf16.mxu0 %v7268
    %7384 = vmatmul.mubr.bf16.gmra.mxu0 %v7267
    %v7385 = vpop.f32.mrf.mxu0
    %v7386 = vadd.f32 0.0, %v7385
    %v7387 = vpop.f32.mrf.mxu0
    %v7388 = vadd.f32 0.0, %v7387
    %v7389 = vpop.f32.mrf.mxu0
    %v7390 = vpop.f32.mrf.mxu0
    %7391 = vdwg.mxu0
    %7392 = vmatprep.subr.bf16.mxu0 %v2546
    %7393 = vmatpush1.bf16.msra.mxu0 %v2545
    %7394 = vmatprep.subr.bf16.mxu0 %v2538
    %7395 = vmatpush1.bf16.msra.mxu0 %v2537
    %7396 = vmatprep.subr.bf16.mxu0 %v2530
    %7397 = vmatpush1.bf16.msra.mxu0 %v2529
    %7398 = vmatprep.subr.bf16.mxu0 %v2522
    %7399 = vmatpush1.bf16.msra.mxu0 %v2521
    %7400 = vmatprep.subr.bf16.mxu0 %v2514
    %7401 = vmatpush1.bf16.msra.mxu0 %v2513
    %7402 = vmatprep.subr.bf16.mxu0 %v2506
    %7403 = vmatpush1.bf16.msra.mxu0 %v2505
    %7404 = vmatprep.subr.bf16.mxu0 %v2498
    %7405 = vmatpush1.bf16.msra.mxu0 %v2497
    %7406 = vmatprep.subr.bf16.mxu0 %v2490
    %7407 = vmatpush1.bf16.msra.mxu0 %v2489
    %7408 = vmatprep.subr.bf16.mxu0 %v2610
    %7409 = vmatpush2.bf16.msra.mxu0 %v2609
    %7410 = vmatprep.subr.bf16.mxu0 %v2602
    %7411 = vmatpush2.bf16.msra.mxu0 %v2601
    %7412 = vmatprep.subr.bf16.mxu0 %v2594
    %7413 = vmatpush2.bf16.msra.mxu0 %v2593
    %7414 = vmatprep.subr.bf16.mxu0 %v2586
    %7415 = vmatpush2.bf16.msra.mxu0 %v2585
    %7416 = vmatprep.subr.bf16.mxu0 %v2578
    %7417 = vmatpush2.bf16.msra.mxu0 %v2577
    %7418 = vmatprep.subr.bf16.mxu0 %v2570
    %7419 = vmatpush2.bf16.msra.mxu0 %v2569
    %7420 = vmatprep.subr.bf16.mxu0 %v2562
    %7421 = vmatpush2.bf16.msra.mxu0 %v2561
    %7422 = vmatprep.subr.bf16.mxu0 %v2554
    %7423 = vmatpush2.bf16.msra.mxu0 %v2553
    %7424 = vmatprep.mubr.bf16.mxu0 %v7268
    %7425 = vmatmul.mubr.bf16.gmra.mxu0 %v7267
    %v7426 = vpop.f32.mrf.mxu0
    %v7427 = vadd.f32 0.0, %v7426
    %v7428 = vpop.f32.mrf.mxu0
    %v7429 = vadd.f32 0.0, %v7428
    %v7430 = vpop.f32.mrf.mxu0
    %v7431 = vpop.f32.mrf.mxu0
    %7432 = vdwg.mxu0
    %7433 = vmatprep.subr.bf16.mxu0 %v3344
    %7434 = vmatpush1.bf16.msra.mxu0 %v3343
    %7435 = vmatprep.subr.bf16.mxu0 %v3336
    %7436 = vmatpush1.bf16.msra.mxu0 %v3335
    %7437 = vmatprep.subr.bf16.mxu0 %v3328
    %7438 = vmatpush1.bf16.msra.mxu0 %v3327
    %7439 = vmatprep.subr.bf16.mxu0 %v3320
    %7440 = vmatpush1.bf16.msra.mxu0 %v3319
    %7441 = vmatprep.subr.bf16.mxu0 %v3312
    %7442 = vmatpush1.bf16.msra.mxu0 %v3311
    %7443 = vmatprep.subr.bf16.mxu0 %v3304
    %7444 = vmatpush1.bf16.msra.mxu0 %v3303
    %7445 = vmatprep.subr.bf16.mxu0 %v3296
    %7446 = vmatpush1.bf16.msra.mxu0 %v3295
    %7447 = vmatprep.subr.bf16.mxu0 %v3288
    %7448 = vmatpush1.bf16.msra.mxu0 %v3287
    %7449 = vmatprep.subr.bf16.mxu0 %v3408
    %7450 = vmatpush2.bf16.msra.mxu0 %v3407
    %7451 = vmatprep.subr.bf16.mxu0 %v3400
    %7452 = vmatpush2.bf16.msra.mxu0 %v3399
    %7453 = vmatprep.subr.bf16.mxu0 %v3392
    %7454 = vmatpush2.bf16.msra.mxu0 %v3391
    %7455 = vmatprep.subr.bf16.mxu0 %v3384
    %7456 = vmatpush2.bf16.msra.mxu0 %v3383
    %7457 = vmatprep.subr.bf16.mxu0 %v3376
    %7458 = vmatpush2.bf16.msra.mxu0 %v3375
    %7459 = vmatprep.subr.bf16.mxu0 %v3368
    %7460 = vmatpush2.bf16.msra.mxu0 %v3367
    %7461 = vmatprep.subr.bf16.mxu0 %v3360
    %7462 = vmatpush2.bf16.msra.mxu0 %v3359
    %7463 = vmatprep.subr.bf16.mxu0 %v3352
    %7464 = vmatpush2.bf16.msra.mxu0 %v3351
    %7465 = vmatprep.mubr.bf16.mxu0 %v7266
    %7466 = vmatmul.mubr.bf16.gmra.mxu0 %v7265
    %v7467 = vpop.f32.mrf.mxu0
    %v7468 = vadd.f32 %v7304, %v7467
    %v7469 = vpop.f32.mrf.mxu0
    %v7470 = vadd.f32 %v7306, %v7469
    %v7471 = vpop.f32.mrf.mxu0
    %v7472 = vpop.f32.mrf.mxu0
    %7473 = vdwg.mxu0
    %7474 = vmatprep.subr.bf16.mxu0 %v3346
    %7475 = vmatpush1.bf16.msra.mxu0 %v3345
    %7476 = vmatprep.subr.bf16.mxu0 %v3338
    %7477 = vmatpush1.bf16.msra.mxu0 %v3337
    %7478 = vmatprep.subr.bf16.mxu0 %v3330
    %7479 = vmatpush1.bf16.msra.mxu0 %v3329
    %7480 = vmatprep.subr.bf16.mxu0 %v3322
    %7481 = vmatpush1.bf16.msra.mxu0 %v3321
    %7482 = vmatprep.subr.bf16.mxu0 %v3314
    %7483 = vmatpush1.bf16.msra.mxu0 %v3313
    %7484 = vmatprep.subr.bf16.mxu0 %v3306
    %7485 = vmatpush1.bf16.msra.mxu0 %v3305
    %7486 = vmatprep.subr.bf16.mxu0 %v3298
    %7487 = vmatpush1.bf16.msra.mxu0 %v3297
    %7488 = vmatprep.subr.bf16.mxu0 %v3290
    %7489 = vmatpush1.bf16.msra.mxu0 %v3289
    %7490 = vmatprep.subr.bf16.mxu0 %v3410
    %7491 = vmatpush2.bf16.msra.mxu0 %v3409
    %7492 = vmatprep.subr.bf16.mxu0 %v3402
    %7493 = vmatpush2.bf16.msra.mxu0 %v3401
    %7494 = vmatprep.subr.bf16.mxu0 %v3394
    %7495 = vmatpush2.bf16.msra.mxu0 %v3393
    %7496 = vmatprep.subr.bf16.mxu0 %v3386
    %7497 = vmatpush2.bf16.msra.mxu0 %v3385
    %7498 = vmatprep.subr.bf16.mxu0 %v3378
    %7499 = vmatpush2.bf16.msra.mxu0 %v3377
    %7500 = vmatprep.subr.bf16.mxu0 %v3370
    %7501 = vmatpush2.bf16.msra.mxu0 %v3369
    %7502 = vmatprep.subr.bf16.mxu0 %v3362
    %7503 = vmatpush2.bf16.msra.mxu0 %v3361
    %7504 = vmatprep.subr.bf16.mxu0 %v3354
    %7505 = vmatpush2.bf16.msra.mxu0 %v3353
    %7506 = vmatprep.mubr.bf16.mxu0 %v7266
    %7507 = vmatmul.mubr.bf16.gmra.mxu0 %v7265
    %v7508 = vpop.f32.mrf.mxu0
    %v7509 = vadd.f32 %v7345, %v7508
    %v7510 = vpop.f32.mrf.mxu0
    %v7511 = vadd.f32 %v7347, %v7510
    %v7512 = vpop.f32.mrf.mxu0
    %v7513 = vpop.f32.mrf.mxu0
    %7514 = vdwg.mxu0
    %7515 = vmatprep.subr.bf16.mxu0 %v3348
    %7516 = vmatpush1.bf16.msra.mxu0 %v3347
    %7517 = vmatprep.subr.bf16.mxu0 %v3340
    %7518 = vmatpush1.bf16.msra.mxu0 %v3339
    %7519 = vmatprep.subr.bf16.mxu0 %v3332
    %7520 = vmatpush1.bf16.msra.mxu0 %v3331
    %7521 = vmatprep.subr.bf16.mxu0 %v3324
    %7522 = vmatpush1.bf16.msra.mxu0 %v3323
    %7523 = vmatprep.subr.bf16.mxu0 %v3316
    %7524 = vmatpush1.bf16.msra.mxu0 %v3315
    %7525 = vmatprep.subr.bf16.mxu0 %v3308
    %7526 = vmatpush1.bf16.msra.mxu0 %v3307
    %7527 = vmatprep.subr.bf16.mxu0 %v3300
    %7528 = vmatpush1.bf16.msra.mxu0 %v3299
    %7529 = vmatprep.subr.bf16.mxu0 %v3292
    %7530 = vmatpush1.bf16.msra.mxu0 %v3291
    %7531 = vmatprep.subr.bf16.mxu0 %v3412
    %7532 = vmatpush2.bf16.msra.mxu0 %v3411
    %7533 = vmatprep.subr.bf16.mxu0 %v3404
    %7534 = vmatpush2.bf16.msra.mxu0 %v3403
    %7535 = vmatprep.subr.bf16.mxu0 %v3396
    %7536 = vmatpush2.bf16.msra.mxu0 %v3395
    %7537 = vmatprep.subr.bf16.mxu0 %v3388
    %7538 = vmatpush2.bf16.msra.mxu0 %v3387
    %7539 = vmatprep.subr.bf16.mxu0 %v3380
    %7540 = vmatpush2.bf16.msra.mxu0 %v3379
    %7541 = vmatprep.subr.bf16.mxu0 %v3372
    %7542 = vmatpush2.bf16.msra.mxu0 %v3371
    %7543 = vmatprep.subr.bf16.mxu0 %v3364
    %7544 = vmatpush2.bf16.msra.mxu0 %v3363
    %7545 = vmatprep.subr.bf16.mxu0 %v3356
    %7546 = vmatpush2.bf16.msra.mxu0 %v3355
    %7547 = vmatprep.mubr.bf16.mxu0 %v7266
    %7548 = vmatmul.mubr.bf16.gmra.mxu0 %v7265
    %v7549 = vpop.f32.mrf.mxu0
    %v7550 = vadd.f32 %v7386, %v7549
    %v7551 = vpop.f32.mrf.mxu0
    %v7552 = vadd.f32 %v7388, %v7551
    %v7553 = vpop.f32.mrf.mxu0
    %v7554 = vpop.f32.mrf.mxu0
    %7555 = vdwg.mxu0
    %7556 = vmatprep.subr.bf16.mxu0 %v3350
    %7557 = vmatpush1.bf16.msra.mxu0 %v3349
    %7558 = vmatprep.subr.bf16.mxu0 %v3342
    %7559 = vmatpush1.bf16.msra.mxu0 %v3341
    %7560 = vmatprep.subr.bf16.mxu0 %v3334
    %7561 = vmatpush1.bf16.msra.mxu0 %v3333
    %7562 = vmatprep.subr.bf16.mxu0 %v3326
    %7563 = vmatpush1.bf16.msra.mxu0 %v3325
    %7564 = vmatprep.subr.bf16.mxu0 %v3318
    %7565 = vmatpush1.bf16.msra.mxu0 %v3317
    %7566 = vmatprep.subr.bf16.mxu0 %v3310
    %7567 = vmatpush1.bf16.msra.mxu0 %v3309
    %7568 = vmatprep.subr.bf16.mxu0 %v3302
    %7569 = vmatpush1.bf16.msra.mxu0 %v3301
    %7570 = vmatprep.subr.bf16.mxu0 %v3294
    %7571 = vmatpush1.bf16.msra.mxu0 %v3293
    %7572 = vmatprep.subr.bf16.mxu0 %v3414
    %7573 = vmatpush2.bf16.msra.mxu0 %v3413
    %7574 = vmatprep.subr.bf16.mxu0 %v3406
    %7575 = vmatpush2.bf16.msra.mxu0 %v3405
    %7576 = vmatprep.subr.bf16.mxu0 %v3398
    %7577 = vmatpush2.bf16.msra.mxu0 %v3397
    %7578 = vmatprep.subr.bf16.mxu0 %v3390
    %7579 = vmatpush2.bf16.msra.mxu0 %v3389
    %7580 = vmatprep.subr.bf16.mxu0 %v3382
    %7581 = vmatpush2.bf16.msra.mxu0 %v3381
    %7582 = vmatprep.subr.bf16.mxu0 %v3374
    %7583 = vmatpush2.bf16.msra.mxu0 %v3373
    %7584 = vmatprep.subr.bf16.mxu0 %v3366
    %7585 = vmatpush2.bf16.msra.mxu0 %v3365
    %7586 = vmatprep.subr.bf16.mxu0 %v3358
    %7587 = vmatpush2.bf16.msra.mxu0 %v3357
    %7588 = vmatprep.mubr.bf16.mxu0 %v7266
    %7589 = vmatmul.mubr.bf16.gmra.mxu0 %v7265
    %v7590 = vpop.f32.mrf.mxu0
    %v7591 = vadd.f32 %v7427, %v7590
    %v7592 = vpop.f32.mrf.mxu0
    %v7593 = vadd.f32 %v7429, %v7592
    %v7594 = vpop.f32.mrf.mxu0
    %v7595 = vpop.f32.mrf.mxu0
    %7596 = vdwg.mxu0
    %v7597 = vadd.f32 %v7468, %v3712
    %v7598 = vadd.f32 %v7470, %v3716
    %v7599 = vadd.f32 %v7509, %v3720
    %v7600 = vadd.f32 %v7511, %v3724
    %v7601 = vadd.f32 %v7550, %v3728
    %v7602 = vadd.f32 %v7552, %v3732
    %v7603 = vadd.f32 %v7591, %v3736
    %v7604 = vadd.f32 %v7593, %v3740
    %v7605 = vxor.u32 %v7597, 2147483648
    %v7606 = vxor.u32 %v7598, 2147483648
    %v7607 = vmul.f32 %v7605, 1.442695
    %v7608 = vpow.pop %v7607
    %v7609 = vmul.f32 %v7606, 1.442695
    %v7610 = vpow.pop %v7609
    %v7611 = vadd.f32 %v7608, 1.0
    %v7612 = vadd.f32 %v7610, 1.0
    %v7613 = vrcp.pop %v7611
    %v7614 = vmul.f32 1.0, %v7613
    %v7615 = vrcp.pop %v7612
    %v7616 = vmul.f32 1.0, %v7615
    %v7617 = vxor.u32 %v7599, 2147483648
    %v7618 = vxor.u32 %v7600, 2147483648
    %v7619 = vmul.f32 %v7617, 1.442695
    %v7620 = vpow.pop %v7619
    %v7621 = vmul.f32 %v7618, 1.442695
    %v7622 = vpow.pop %v7621
    %v7623 = vadd.f32 %v7620, 1.0
    %v7624 = vadd.f32 %v7622, 1.0
    %v7625 = vrcp.pop %v7623
    %v7626 = vmul.f32 1.0, %v7625
    %v7627 = vrcp.pop %v7624
    %v7628 = vmul.f32 1.0, %v7627
    %v7629 = vtanh.pop %v7601
    %v7630 = vtanh.pop %v7602
    %v7631 = vxor.u32 %v7603, 2147483648
    %v7632 = vxor.u32 %v7604, 2147483648
    %v7633 = vmul.f32 %v7631, 1.442695
    %v7634 = vpow.pop %v7633
    %v7635 = vmul.f32 %v7632, 1.442695
    %v7636 = vpow.pop %v7635
    %v7637 = vadd.f32 %v7634, 1.0
    %v7638 = vadd.f32 %v7636, 1.0
    %v7639 = vrcp.pop %v7637
    %v7640 = vmul.f32 1.0, %v7639
    %v7641 = vrcp.pop %v7638
    %v7642 = vmul.f32 1.0, %v7641
    %v7643 = vmul.f32 %v7626, %v7031
    %v7644 = vmul.f32 %v7628, %v7032
    %v7645 = vmul.f32 %v7614, %v7629
    %v7646 = vmul.f32 %v7616, %v7630
    %v7647 = vadd.f32 %v7643, %v7645
    %v7648 = vadd.f32 %v7644, %v7646
    %v7649 = vtanh.pop %v7647
    %v7650 = vtanh.pop %v7648
    %v7651 = vmul.f32 %v7640, %v7649
    %v7652 = vmul.f32 %v7642, %v7650
    %v7653 = vld [vmem:[#allocation2 + $0x180] sm:$0xff]
    %v7654 = vld [vmem:[#allocation2 + $0x188] sm:$0xff]
    %v7655 = vld [vmem:[#allocation2 + $0x190] sm:$0xff]
    %v7656 = vld [vmem:[#allocation2 + $0x198] sm:$0xff]
    %v7657 = vld [vmem:[#allocation2 + $0x1a0] sm:$0xff]
    %v7658 = vld [vmem:[#allocation2 + $0x1a8] sm:$0xff]
    %v7659 = vld [vmem:[#allocation2 + $0x1b0] sm:$0xff]
    %v7660 = vld [vmem:[#allocation2 + $0x1b8] sm:$0xff]
    %7661 = vmatprep.subr.bf16.mxu0 %v4382
    %7662 = vmatpush1.bf16.msra.mxu0 %v4381
    %7663 = vmatprep.subr.bf16.mxu0 %v4374
    %7664 = vmatpush1.bf16.msra.mxu0 %v4373
    %7665 = vmatprep.subr.bf16.mxu0 %v4366
    %7666 = vmatpush1.bf16.msra.mxu0 %v4365
    %7667 = vmatprep.subr.bf16.mxu0 %v4358
    %7668 = vmatpush1.bf16.msra.mxu0 %v4357
    %7669 = vmatprep.subr.bf16.mxu0 %v4350
    %7670 = vmatpush1.bf16.msra.mxu0 %v4349
    %7671 = vmatprep.subr.bf16.mxu0 %v4342
    %7672 = vmatpush1.bf16.msra.mxu0 %v4341
    %7673 = vmatprep.subr.bf16.mxu0 %v4334
    %7674 = vmatpush1.bf16.msra.mxu0 %v4333
    %7675 = vmatprep.subr.bf16.mxu0 %v4326
    %7676 = vmatpush1.bf16.msra.mxu0 %v4325
    %7677 = vmatprep.subr.bf16.mxu0 %v4446
    %7678 = vmatpush2.bf16.msra.mxu0 %v4445
    %7679 = vmatprep.subr.bf16.mxu0 %v4438
    %7680 = vmatpush2.bf16.msra.mxu0 %v4437
    %7681 = vmatprep.subr.bf16.mxu0 %v4430
    %7682 = vmatpush2.bf16.msra.mxu0 %v4429
    %7683 = vmatprep.subr.bf16.mxu0 %v4422
    %7684 = vmatpush2.bf16.msra.mxu0 %v4421
    %7685 = vmatprep.subr.bf16.mxu0 %v4414
    %7686 = vmatpush2.bf16.msra.mxu0 %v4413
    %7687 = vmatprep.subr.bf16.mxu0 %v4406
    %7688 = vmatpush2.bf16.msra.mxu0 %v4405
    %7689 = vmatprep.subr.bf16.mxu0 %v4398
    %7690 = vmatpush2.bf16.msra.mxu0 %v4397
    %7691 = vmatprep.subr.bf16.mxu0 %v4390
    %7692 = vmatpush2.bf16.msra.mxu0 %v4389
    %7693 = vmatprep.mubr.bf16.mxu0 %v7266
    %7694 = vmatmul.mubr.bf16.gmra.mxu0 %v7265
    %v7695 = vpop.f32.mrf.mxu0
    %v7696 = vadd.f32 0.0, %v7695
    %v7697 = vpop.f32.mrf.mxu0
    %v7698 = vadd.f32 0.0, %v7697
    %v7699 = vpop.f32.mrf.mxu0
    %v7700 = vpop.f32.mrf.mxu0
    %7701 = vdwg.mxu0
    %7702 = vmatprep.subr.bf16.mxu0 %v4384
    %7703 = vmatpush1.bf16.msra.mxu0 %v4383
    %7704 = vmatprep.subr.bf16.mxu0 %v4376
    %7705 = vmatpush1.bf16.msra.mxu0 %v4375
    %7706 = vmatprep.subr.bf16.mxu0 %v4368
    %7707 = vmatpush1.bf16.msra.mxu0 %v4367
    %7708 = vmatprep.subr.bf16.mxu0 %v4360
    %7709 = vmatpush1.bf16.msra.mxu0 %v4359
    %7710 = vmatprep.subr.bf16.mxu0 %v4352
    %7711 = vmatpush1.bf16.msra.mxu0 %v4351
    %7712 = vmatprep.subr.bf16.mxu0 %v4344
    %7713 = vmatpush1.bf16.msra.mxu0 %v4343
    %7714 = vmatprep.subr.bf16.mxu0 %v4336
    %7715 = vmatpush1.bf16.msra.mxu0 %v4335
    %7716 = vmatprep.subr.bf16.mxu0 %v4328
    %7717 = vmatpush1.bf16.msra.mxu0 %v4327
    %7718 = vmatprep.subr.bf16.mxu0 %v4448
    %7719 = vmatpush2.bf16.msra.mxu0 %v4447
    %7720 = vmatprep.subr.bf16.mxu0 %v4440
    %7721 = vmatpush2.bf16.msra.mxu0 %v4439
    %7722 = vmatprep.subr.bf16.mxu0 %v4432
    %7723 = vmatpush2.bf16.msra.mxu0 %v4431
    %7724 = vmatprep.subr.bf16.mxu0 %v4424
    %7725 = vmatpush2.bf16.msra.mxu0 %v4423
    %7726 = vmatprep.subr.bf16.mxu0 %v4416
    %7727 = vmatpush2.bf16.msra.mxu0 %v4415
    %7728 = vmatprep.subr.bf16.mxu0 %v4408
    %7729 = vmatpush2.bf16.msra.mxu0 %v4407
    %7730 = vmatprep.subr.bf16.mxu0 %v4400
    %7731 = vmatpush2.bf16.msra.mxu0 %v4399
    %7732 = vmatprep.subr.bf16.mxu0 %v4392
    %7733 = vmatpush2.bf16.msra.mxu0 %v4391
    %7734 = vmatprep.mubr.bf16.mxu0 %v7266
    %7735 = vmatmul.mubr.bf16.gmra.mxu0 %v7265
    %v7736 = vpop.f32.mrf.mxu0
    %v7737 = vadd.f32 0.0, %v7736
    %v7738 = vpop.f32.mrf.mxu0
    %v7739 = vadd.f32 0.0, %v7738
    %v7740 = vpop.f32.mrf.mxu0
    %v7741 = vpop.f32.mrf.mxu0
    %7742 = vdwg.mxu0
    %7743 = vmatprep.subr.bf16.mxu0 %v4386
    %7744 = vmatpush1.bf16.msra.mxu0 %v4385
    %7745 = vmatprep.subr.bf16.mxu0 %v4378
    %7746 = vmatpush1.bf16.msra.mxu0 %v4377
    %7747 = vmatprep.subr.bf16.mxu0 %v4370
    %7748 = vmatpush1.bf16.msra.mxu0 %v4369
    %7749 = vmatprep.subr.bf16.mxu0 %v4362
    %7750 = vmatpush1.bf16.msra.mxu0 %v4361
    %7751 = vmatprep.subr.bf16.mxu0 %v4354
    %7752 = vmatpush1.bf16.msra.mxu0 %v4353
    %7753 = vmatprep.subr.bf16.mxu0 %v4346
    %7754 = vmatpush1.bf16.msra.mxu0 %v4345
    %7755 = vmatprep.subr.bf16.mxu0 %v4338
    %7756 = vmatpush1.bf16.msra.mxu0 %v4337
    %7757 = vmatprep.subr.bf16.mxu0 %v4330
    %7758 = vmatpush1.bf16.msra.mxu0 %v4329
    %7759 = vmatprep.subr.bf16.mxu0 %v4450
    %7760 = vmatpush2.bf16.msra.mxu0 %v4449
    %7761 = vmatprep.subr.bf16.mxu0 %v4442
    %7762 = vmatpush2.bf16.msra.mxu0 %v4441
    %7763 = vmatprep.subr.bf16.mxu0 %v4434
    %7764 = vmatpush2.bf16.msra.mxu0 %v4433
    %7765 = vmatprep.subr.bf16.mxu0 %v4426
    %7766 = vmatpush2.bf16.msra.mxu0 %v4425
    %7767 = vmatprep.subr.bf16.mxu0 %v4418
    %7768 = vmatpush2.bf16.msra.mxu0 %v4417
    %7769 = vmatprep.subr.bf16.mxu0 %v4410
    %7770 = vmatpush2.bf16.msra.mxu0 %v4409
    %7771 = vmatprep.subr.bf16.mxu0 %v4402
    %7772 = vmatpush2.bf16.msra.mxu0 %v4401
    %7773 = vmatprep.subr.bf16.mxu0 %v4394
    %7774 = vmatpush2.bf16.msra.mxu0 %v4393
    %7775 = vmatprep.mubr.bf16.mxu0 %v7266
    %7776 = vmatmul.mubr.bf16.gmra.mxu0 %v7265
    %v7777 = vpop.f32.mrf.mxu0
    %v7778 = vadd.f32 0.0, %v7777
    %v7779 = vpop.f32.mrf.mxu0
    %v7780 = vadd.f32 0.0, %v7779
    %v7781 = vpop.f32.mrf.mxu0
    %v7782 = vpop.f32.mrf.mxu0
    %7783 = vdwg.mxu0
    %7784 = vmatprep.subr.bf16.mxu0 %v4388
    %7785 = vmatpush1.bf16.msra.mxu0 %v4387
    %7786 = vmatprep.subr.bf16.mxu0 %v4380
    %7787 = vmatpush1.bf16.msra.mxu0 %v4379
    %7788 = vmatprep.subr.bf16.mxu0 %v4372
    %7789 = vmatpush1.bf16.msra.mxu0 %v4371
    %7790 = vmatprep.subr.bf16.mxu0 %v4364
    %7791 = vmatpush1.bf16.msra.mxu0 %v4363
    %7792 = vmatprep.subr.bf16.mxu0 %v4356
    %7793 = vmatpush1.bf16.msra.mxu0 %v4355
    %7794 = vmatprep.subr.bf16.mxu0 %v4348
    %7795 = vmatpush1.bf16.msra.mxu0 %v4347
    %7796 = vmatprep.subr.bf16.mxu0 %v4340
    %7797 = vmatpush1.bf16.msra.mxu0 %v4339
    %7798 = vmatprep.subr.bf16.mxu0 %v4332
    %7799 = vmatpush1.bf16.msra.mxu0 %v4331
    %7800 = vmatprep.subr.bf16.mxu0 %v4452
    %7801 = vmatpush2.bf16.msra.mxu0 %v4451
    %7802 = vmatprep.subr.bf16.mxu0 %v4444
    %7803 = vmatpush2.bf16.msra.mxu0 %v4443
    %7804 = vmatprep.subr.bf16.mxu0 %v4436
    %7805 = vmatpush2.bf16.msra.mxu0 %v4435
    %7806 = vmatprep.subr.bf16.mxu0 %v4428
    %7807 = vmatpush2.bf16.msra.mxu0 %v4427
    %7808 = vmatprep.subr.bf16.mxu0 %v4420
    %7809 = vmatpush2.bf16.msra.mxu0 %v4419
    %7810 = vmatprep.subr.bf16.mxu0 %v4412
    %7811 = vmatpush2.bf16.msra.mxu0 %v4411
    %7812 = vmatprep.subr.bf16.mxu0 %v4404
    %7813 = vmatpush2.bf16.msra.mxu0 %v4403
    %7814 = vmatprep.subr.bf16.mxu0 %v4396
    %7815 = vmatpush2.bf16.msra.mxu0 %v4395
    %7816 = vmatprep.mubr.bf16.mxu0 %v7266
    %7817 = vmatmul.mubr.bf16.gmra.mxu0 %v7265
    %v7818 = vpop.f32.mrf.mxu0
    %v7819 = vadd.f32 0.0, %v7818
    %v7820 = vpop.f32.mrf.mxu0
    %v7821 = vadd.f32 0.0, %v7820
    %v7822 = vpop.f32.mrf.mxu0
    %v7823 = vpop.f32.mrf.mxu0
    %7824 = vdwg.mxu0
    %v7825 = vadd.f32 %v7653, %v7696
    %v7826 = vadd.f32 %v7654, %v7698
    %v7827 = vadd.f32 %v7655, %v7737
    %v7828 = vadd.f32 %v7656, %v7739
    %v7829 = vadd.f32 %v7657, %v7778
    %v7830 = vadd.f32 %v7658, %v7780
    %v7831 = vadd.f32 %v7659, %v7819
    %v7832 = vadd.f32 %v7660, %v7821
    %v7833 = vxor.u32 %v7825, 2147483648
    %v7834 = vxor.u32 %v7826, 2147483648
    %v7835 = vmul.f32 %v7833, 1.442695
    %v7836 = vpow.pop %v7835
    %v7837 = vmul.f32 %v7834, 1.442695
    %v7838 = vpow.pop %v7837
    %v7839 = vadd.f32 %v7836, 1.0
    %v7840 = vadd.f32 %v7838, 1.0
    %v7841 = vrcp.pop %v7839
    %v7842 = vmul.f32 1.0, %v7841
    %v7843 = vrcp.pop %v7840
    %v7844 = vmul.f32 1.0, %v7843
    %v7845 = vxor.u32 %v7827, 2147483648
    %v7846 = vxor.u32 %v7828, 2147483648
    %v7847 = vmul.f32 %v7845, 1.442695
    %v7848 = vpow.pop %v7847
    %v7849 = vmul.f32 %v7846, 1.442695
    %v7850 = vpow.pop %v7849
    %v7851 = vadd.f32 %v7848, 1.0
    %v7852 = vadd.f32 %v7850, 1.0
    %v7853 = vrcp.pop %v7851
    %v7854 = vmul.f32 1.0, %v7853
    %v7855 = vrcp.pop %v7852
    %v7856 = vmul.f32 1.0, %v7855
    %v7857 = vtanh.pop %v7829
    %v7858 = vtanh.pop %v7830
    %v7859 = vxor.u32 %v7831, 2147483648
    %v7860 = vxor.u32 %v7832, 2147483648
    %v7861 = vmul.f32 %v7859, 1.442695
    %v7862 = vpow.pop %v7861
    %v7863 = vmul.f32 %v7860, 1.442695
    %v7864 = vpow.pop %v7863
    %v7865 = vadd.f32 %v7862, 1.0
    %v7866 = vadd.f32 %v7864, 1.0
    %v7867 = vrcp.pop %v7865
    %v7868 = vmul.f32 1.0, %v7867
    %v7869 = vrcp.pop %v7866
    %v7870 = vmul.f32 1.0, %v7869
    %v7871 = vmul.f32 %v7854, %v7259
    %v7872 = vmul.f32 %v7856, %v7260
    %v7873 = vmul.f32 %v7842, %v7857
    %v7874 = vmul.f32 %v7844, %v7858
    %v7875 = vadd.f32 %v7871, %v7873
    %v7876 = vadd.f32 %v7872, %v7874
    %v7877 = vtanh.pop %v7875
    %v7878 = vtanh.pop %v7876
    %v7879 = vmul.f32 %v7868, %v7877
    %v7880 = vmul.f32 %v7870, %v7878
    %v7881 = vpack.c.bf16 %v7879, %v7879
    %v7882 = vpack.c.bf16 %v7880, %v7880
    %v7883 = vpack.c.bf16 %v7651, %v7651
    %v7884 = vpack.c.bf16 %v7652, %v7652
    %7885 = vmatprep.subr.bf16.mxu0 %v2540
    %7886 = vmatpush1.bf16.msra.mxu0 %v2539
    %7887 = vmatprep.subr.bf16.mxu0 %v2532
    %7888 = vmatpush1.bf16.msra.mxu0 %v2531
    %7889 = vmatprep.subr.bf16.mxu0 %v2524
    %7890 = vmatpush1.bf16.msra.mxu0 %v2523
    %7891 = vmatprep.subr.bf16.mxu0 %v2516
    %7892 = vmatpush1.bf16.msra.mxu0 %v2515
    %7893 = vmatprep.subr.bf16.mxu0 %v2508
    %7894 = vmatpush1.bf16.msra.mxu0 %v2507
    %7895 = vmatprep.subr.bf16.mxu0 %v2500
    %7896 = vmatpush1.bf16.msra.mxu0 %v2499
    %7897 = vmatprep.subr.bf16.mxu0 %v2492
    %7898 = vmatpush1.bf16.msra.mxu0 %v2491
    %7899 = vmatprep.subr.bf16.mxu0 %v2484
    %7900 = vmatpush1.bf16.msra.mxu0 %v2483
    %7901 = vmatprep.subr.bf16.mxu0 %v2604
    %7902 = vmatpush2.bf16.msra.mxu0 %v2603
    %7903 = vmatprep.subr.bf16.mxu0 %v2596
    %7904 = vmatpush2.bf16.msra.mxu0 %v2595
    %7905 = vmatprep.subr.bf16.mxu0 %v2588
    %7906 = vmatpush2.bf16.msra.mxu0 %v2587
    %7907 = vmatprep.subr.bf16.mxu0 %v2580
    %7908 = vmatpush2.bf16.msra.mxu0 %v2579
    %7909 = vmatprep.subr.bf16.mxu0 %v2572
    %7910 = vmatpush2.bf16.msra.mxu0 %v2571
    %7911 = vmatprep.subr.bf16.mxu0 %v2564
    %7912 = vmatpush2.bf16.msra.mxu0 %v2563
    %7913 = vmatprep.subr.bf16.mxu0 %v2556
    %7914 = vmatpush2.bf16.msra.mxu0 %v2555
    %7915 = vmatprep.subr.bf16.mxu0 %v2548
    %7916 = vmatpush2.bf16.msra.mxu0 %v2547
    %7917 = vmatprep.mubr.bf16.mxu0 %v7884
    %7918 = vmatmul.mubr.bf16.gmra.mxu0 %v7883
    %v7919 = vpop.f32.mrf.mxu0
    %v7920 = vadd.f32 0.0, %v7919
    %v7921 = vpop.f32.mrf.mxu0
    %v7922 = vadd.f32 0.0, %v7921
    %v7923 = vpop.f32.mrf.mxu0
    %v7924 = vpop.f32.mrf.mxu0
    %7925 = vdwg.mxu0
    %7926 = vmatprep.subr.bf16.mxu0 %v2542
    %7927 = vmatpush1.bf16.msra.mxu0 %v2541
    %7928 = vmatprep.subr.bf16.mxu0 %v2534
    %7929 = vmatpush1.bf16.msra.mxu0 %v2533
    %7930 = vmatprep.subr.bf16.mxu0 %v2526
    %7931 = vmatpush1.bf16.msra.mxu0 %v2525
    %7932 = vmatprep.subr.bf16.mxu0 %v2518
    %7933 = vmatpush1.bf16.msra.mxu0 %v2517
    %7934 = vmatprep.subr.bf16.mxu0 %v2510
    %7935 = vmatpush1.bf16.msra.mxu0 %v2509
    %7936 = vmatprep.subr.bf16.mxu0 %v2502
    %7937 = vmatpush1.bf16.msra.mxu0 %v2501
    %7938 = vmatprep.subr.bf16.mxu0 %v2494
    %7939 = vmatpush1.bf16.msra.mxu0 %v2493
    %7940 = vmatprep.subr.bf16.mxu0 %v2486
    %7941 = vmatpush1.bf16.msra.mxu0 %v2485
    %7942 = vmatprep.subr.bf16.mxu0 %v2606
    %7943 = vmatpush2.bf16.msra.mxu0 %v2605
    %7944 = vmatprep.subr.bf16.mxu0 %v2598
    %7945 = vmatpush2.bf16.msra.mxu0 %v2597
    %7946 = vmatprep.subr.bf16.mxu0 %v2590
    %7947 = vmatpush2.bf16.msra.mxu0 %v2589
    %7948 = vmatprep.subr.bf16.mxu0 %v2582
    %7949 = vmatpush2.bf16.msra.mxu0 %v2581
    %7950 = vmatprep.subr.bf16.mxu0 %v2574
    %7951 = vmatpush2.bf16.msra.mxu0 %v2573
    %7952 = vmatprep.subr.bf16.mxu0 %v2566
    %7953 = vmatpush2.bf16.msra.mxu0 %v2565
    %7954 = vmatprep.subr.bf16.mxu0 %v2558
    %7955 = vmatpush2.bf16.msra.mxu0 %v2557
    %7956 = vmatprep.subr.bf16.mxu0 %v2550
    %7957 = vmatpush2.bf16.msra.mxu0 %v2549
    %7958 = vmatprep.mubr.bf16.mxu0 %v7884
    %7959 = vmatmul.mubr.bf16.gmra.mxu0 %v7883
    %v7960 = vpop.f32.mrf.mxu0
    %v7961 = vadd.f32 0.0, %v7960
    %v7962 = vpop.f32.mrf.mxu0
    %v7963 = vadd.f32 0.0, %v7962
    %v7964 = vpop.f32.mrf.mxu0
    %v7965 = vpop.f32.mrf.mxu0
    %7966 = vdwg.mxu0
    %7967 = vmatprep.subr.bf16.mxu0 %v2544
    %7968 = vmatpush1.bf16.msra.mxu0 %v2543
    %7969 = vmatprep.subr.bf16.mxu0 %v2536
    %7970 = vmatpush1.bf16.msra.mxu0 %v2535
    %7971 = vmatprep.subr.bf16.mxu0 %v2528
    %7972 = vmatpush1.bf16.msra.mxu0 %v2527
    %7973 = vmatprep.subr.bf16.mxu0 %v2520
    %7974 = vmatpush1.bf16.msra.mxu0 %v2519
    %7975 = vmatprep.subr.bf16.mxu0 %v2512
    %7976 = vmatpush1.bf16.msra.mxu0 %v2511
    %7977 = vmatprep.subr.bf16.mxu0 %v2504
    %7978 = vmatpush1.bf16.msra.mxu0 %v2503
    %7979 = vmatprep.subr.bf16.mxu0 %v2496
    %7980 = vmatpush1.bf16.msra.mxu0 %v2495
    %7981 = vmatprep.subr.bf16.mxu0 %v2488
    %7982 = vmatpush1.bf16.msra.mxu0 %v2487
    %7983 = vmatprep.subr.bf16.mxu0 %v2608
    %7984 = vmatpush2.bf16.msra.mxu0 %v2607
    %7985 = vmatprep.subr.bf16.mxu0 %v2600
    %7986 = vmatpush2.bf16.msra.mxu0 %v2599
    %7987 = vmatprep.subr.bf16.mxu0 %v2592
    %7988 = vmatpush2.bf16.msra.mxu0 %v2591
    %7989 = vmatprep.subr.bf16.mxu0 %v2584
    %7990 = vmatpush2.bf16.msra.mxu0 %v2583
    %7991 = vmatprep.subr.bf16.mxu0 %v2576
    %7992 = vmatpush2.bf16.msra.mxu0 %v2575
    %7993 = vmatprep.subr.bf16.mxu0 %v2568
    %7994 = vmatpush2.bf16.msra.mxu0 %v2567
    %7995 = vmatprep.subr.bf16.mxu0 %v2560
    %7996 = vmatpush2.bf16.msra.mxu0 %v2559
    %7997 = vmatprep.subr.bf16.mxu0 %v2552
    %7998 = vmatpush2.bf16.msra.mxu0 %v2551
    %7999 = vmatprep.mubr.bf16.mxu0 %v7884
    %8000 = vmatmul.mubr.bf16.gmra.mxu0 %v7883
    %v8001 = vpop.f32.mrf.mxu0
    %v8002 = vadd.f32 0.0, %v8001
    %v8003 = vpop.f32.mrf.mxu0
    %v8004 = vadd.f32 0.0, %v8003
    %v8005 = vpop.f32.mrf.mxu0
    %v8006 = vpop.f32.mrf.mxu0
    %8007 = vdwg.mxu0
    %8008 = vmatprep.subr.bf16.mxu0 %v2546
    %8009 = vmatpush1.bf16.msra.mxu0 %v2545
    %8010 = vmatprep.subr.bf16.mxu0 %v2538
    %8011 = vmatpush1.bf16.msra.mxu0 %v2537
    %8012 = vmatprep.subr.bf16.mxu0 %v2530
    %8013 = vmatpush1.bf16.msra.mxu0 %v2529
    %8014 = vmatprep.subr.bf16.mxu0 %v2522
    %8015 = vmatpush1.bf16.msra.mxu0 %v2521
    %8016 = vmatprep.subr.bf16.mxu0 %v2514
    %8017 = vmatpush1.bf16.msra.mxu0 %v2513
    %8018 = vmatprep.subr.bf16.mxu0 %v2506
    %8019 = vmatpush1.bf16.msra.mxu0 %v2505
    %8020 = vmatprep.subr.bf16.mxu0 %v2498
    %8021 = vmatpush1.bf16.msra.mxu0 %v2497
    %8022 = vmatprep.subr.bf16.mxu0 %v2490
    %8023 = vmatpush1.bf16.msra.mxu0 %v2489
    %8024 = vmatprep.subr.bf16.mxu0 %v2610
    %8025 = vmatpush2.bf16.msra.mxu0 %v2609
    %8026 = vmatprep.subr.bf16.mxu0 %v2602
    %8027 = vmatpush2.bf16.msra.mxu0 %v2601
    %8028 = vmatprep.subr.bf16.mxu0 %v2594
    %8029 = vmatpush2.bf16.msra.mxu0 %v2593
    %8030 = vmatprep.subr.bf16.mxu0 %v2586
    %8031 = vmatpush2.bf16.msra.mxu0 %v2585
    %8032 = vmatprep.subr.bf16.mxu0 %v2578
    %8033 = vmatpush2.bf16.msra.mxu0 %v2577
    %8034 = vmatprep.subr.bf16.mxu0 %v2570
    %8035 = vmatpush2.bf16.msra.mxu0 %v2569
    %8036 = vmatprep.subr.bf16.mxu0 %v2562
    %8037 = vmatpush2.bf16.msra.mxu0 %v2561
    %8038 = vmatprep.subr.bf16.mxu0 %v2554
    %8039 = vmatpush2.bf16.msra.mxu0 %v2553
    %8040 = vmatprep.mubr.bf16.mxu0 %v7884
    %8041 = vmatmul.mubr.bf16.gmra.mxu0 %v7883
    %v8042 = vpop.f32.mrf.mxu0
    %v8043 = vadd.f32 0.0, %v8042
    %v8044 = vpop.f32.mrf.mxu0
    %v8045 = vadd.f32 0.0, %v8044
    %v8046 = vpop.f32.mrf.mxu0
    %v8047 = vpop.f32.mrf.mxu0
    %8048 = vdwg.mxu0
    %8049 = vmatprep.subr.bf16.mxu0 %v3344
    %8050 = vmatpush1.bf16.msra.mxu0 %v3343
    %8051 = vmatprep.subr.bf16.mxu0 %v3336
    %8052 = vmatpush1.bf16.msra.mxu0 %v3335
    %8053 = vmatprep.subr.bf16.mxu0 %v3328
    %8054 = vmatpush1.bf16.msra.mxu0 %v3327
    %8055 = vmatprep.subr.bf16.mxu0 %v3320
    %8056 = vmatpush1.bf16.msra.mxu0 %v3319
    %8057 = vmatprep.subr.bf16.mxu0 %v3312
    %8058 = vmatpush1.bf16.msra.mxu0 %v3311
    %8059 = vmatprep.subr.bf16.mxu0 %v3304
    %8060 = vmatpush1.bf16.msra.mxu0 %v3303
    %8061 = vmatprep.subr.bf16.mxu0 %v3296
    %8062 = vmatpush1.bf16.msra.mxu0 %v3295
    %8063 = vmatprep.subr.bf16.mxu0 %v3288
    %8064 = vmatpush1.bf16.msra.mxu0 %v3287
    %8065 = vmatprep.subr.bf16.mxu0 %v3408
    %8066 = vmatpush2.bf16.msra.mxu0 %v3407
    %8067 = vmatprep.subr.bf16.mxu0 %v3400
    %8068 = vmatpush2.bf16.msra.mxu0 %v3399
    %8069 = vmatprep.subr.bf16.mxu0 %v3392
    %8070 = vmatpush2.bf16.msra.mxu0 %v3391
    %8071 = vmatprep.subr.bf16.mxu0 %v3384
    %8072 = vmatpush2.bf16.msra.mxu0 %v3383
    %8073 = vmatprep.subr.bf16.mxu0 %v3376
    %8074 = vmatpush2.bf16.msra.mxu0 %v3375
    %8075 = vmatprep.subr.bf16.mxu0 %v3368
    %8076 = vmatpush2.bf16.msra.mxu0 %v3367
    %8077 = vmatprep.subr.bf16.mxu0 %v3360
    %8078 = vmatpush2.bf16.msra.mxu0 %v3359
    %8079 = vmatprep.subr.bf16.mxu0 %v3352
    %8080 = vmatpush2.bf16.msra.mxu0 %v3351
    %8081 = vmatprep.mubr.bf16.mxu0 %v7882
    %8082 = vmatmul.mubr.bf16.gmra.mxu0 %v7881
    %v8083 = vpop.f32.mrf.mxu0
    %v8084 = vadd.f32 %v7920, %v8083
    %v8085 = vpop.f32.mrf.mxu0
    %v8086 = vadd.f32 %v7922, %v8085
    %v8087 = vpop.f32.mrf.mxu0
    %v8088 = vpop.f32.mrf.mxu0
    %8089 = vdwg.mxu0
    %8090 = vmatprep.subr.bf16.mxu0 %v3346
    %8091 = vmatpush1.bf16.msra.mxu0 %v3345
    %8092 = vmatprep.subr.bf16.mxu0 %v3338
    %8093 = vmatpush1.bf16.msra.mxu0 %v3337
    %8094 = vmatprep.subr.bf16.mxu0 %v3330
    %8095 = vmatpush1.bf16.msra.mxu0 %v3329
    %8096 = vmatprep.subr.bf16.mxu0 %v3322
    %8097 = vmatpush1.bf16.msra.mxu0 %v3321
    %8098 = vmatprep.subr.bf16.mxu0 %v3314
    %8099 = vmatpush1.bf16.msra.mxu0 %v3313
    %8100 = vmatprep.subr.bf16.mxu0 %v3306
    %8101 = vmatpush1.bf16.msra.mxu0 %v3305
    %8102 = vmatprep.subr.bf16.mxu0 %v3298
    %8103 = vmatpush1.bf16.msra.mxu0 %v3297
    %8104 = vmatprep.subr.bf16.mxu0 %v3290
    %8105 = vmatpush1.bf16.msra.mxu0 %v3289
    %8106 = vmatprep.subr.bf16.mxu0 %v3410
    %8107 = vmatpush2.bf16.msra.mxu0 %v3409
    %8108 = vmatprep.subr.bf16.mxu0 %v3402
    %8109 = vmatpush2.bf16.msra.mxu0 %v3401
    %8110 = vmatprep.subr.bf16.mxu0 %v3394
    %8111 = vmatpush2.bf16.msra.mxu0 %v3393
    %8112 = vmatprep.subr.bf16.mxu0 %v3386
    %8113 = vmatpush2.bf16.msra.mxu0 %v3385
    %8114 = vmatprep.subr.bf16.mxu0 %v3378
    %8115 = vmatpush2.bf16.msra.mxu0 %v3377
    %8116 = vmatprep.subr.bf16.mxu0 %v3370
    %8117 = vmatpush2.bf16.msra.mxu0 %v3369
    %8118 = vmatprep.subr.bf16.mxu0 %v3362
    %8119 = vmatpush2.bf16.msra.mxu0 %v3361
    %8120 = vmatprep.subr.bf16.mxu0 %v3354
    %8121 = vmatpush2.bf16.msra.mxu0 %v3353
    %8122 = vmatprep.mubr.bf16.mxu0 %v7882
    %8123 = vmatmul.mubr.bf16.gmra.mxu0 %v7881
    %v8124 = vpop.f32.mrf.mxu0
    %v8125 = vadd.f32 %v7961, %v8124
    %v8126 = vpop.f32.mrf.mxu0
    %v8127 = vadd.f32 %v7963, %v8126
    %v8128 = vpop.f32.mrf.mxu0
    %v8129 = vpop.f32.mrf.mxu0
    %8130 = vdwg.mxu0
    %8131 = vmatprep.subr.bf16.mxu0 %v3348
    %8132 = vmatpush1.bf16.msra.mxu0 %v3347
    %8133 = vmatprep.subr.bf16.mxu0 %v3340
    %8134 = vmatpush1.bf16.msra.mxu0 %v3339
    %8135 = vmatprep.subr.bf16.mxu0 %v3332
    %8136 = vmatpush1.bf16.msra.mxu0 %v3331
    %8137 = vmatprep.subr.bf16.mxu0 %v3324
    %8138 = vmatpush1.bf16.msra.mxu0 %v3323
    %8139 = vmatprep.subr.bf16.mxu0 %v3316
    %8140 = vmatpush1.bf16.msra.mxu0 %v3315
    %8141 = vmatprep.subr.bf16.mxu0 %v3308
    %8142 = vmatpush1.bf16.msra.mxu0 %v3307
    %8143 = vmatprep.subr.bf16.mxu0 %v3300
    %8144 = vmatpush1.bf16.msra.mxu0 %v3299
    %8145 = vmatprep.subr.bf16.mxu0 %v3292
    %8146 = vmatpush1.bf16.msra.mxu0 %v3291
    %8147 = vmatprep.subr.bf16.mxu0 %v3412
    %8148 = vmatpush2.bf16.msra.mxu0 %v3411
    %8149 = vmatprep.subr.bf16.mxu0 %v3404
    %8150 = vmatpush2.bf16.msra.mxu0 %v3403
    %8151 = vmatprep.subr.bf16.mxu0 %v3396
    %8152 = vmatpush2.bf16.msra.mxu0 %v3395
    %8153 = vmatprep.subr.bf16.mxu0 %v3388
    %8154 = vmatpush2.bf16.msra.mxu0 %v3387
    %8155 = vmatprep.subr.bf16.mxu0 %v3380
    %8156 = vmatpush2.bf16.msra.mxu0 %v3379
    %8157 = vmatprep.subr.bf16.mxu0 %v3372
    %8158 = vmatpush2.bf16.msra.mxu0 %v3371
    %8159 = vmatprep.subr.bf16.mxu0 %v3364
    %8160 = vmatpush2.bf16.msra.mxu0 %v3363
    %8161 = vmatprep.subr.bf16.mxu0 %v3356
    %8162 = vmatpush2.bf16.msra.mxu0 %v3355
    %8163 = vmatprep.mubr.bf16.mxu0 %v7882
    %8164 = vmatmul.mubr.bf16.gmra.mxu0 %v7881
    %v8165 = vpop.f32.mrf.mxu0
    %v8166 = vadd.f32 %v8002, %v8165
    %v8167 = vpop.f32.mrf.mxu0
    %v8168 = vadd.f32 %v8004, %v8167
    %v8169 = vpop.f32.mrf.mxu0
    %v8170 = vpop.f32.mrf.mxu0
    %8171 = vdwg.mxu0
    %8172 = vmatprep.subr.bf16.mxu0 %v3350
    %8173 = vmatpush1.bf16.msra.mxu0 %v3349
    %8174 = vmatprep.subr.bf16.mxu0 %v3342
    %8175 = vmatpush1.bf16.msra.mxu0 %v3341
    %8176 = vmatprep.subr.bf16.mxu0 %v3334
    %8177 = vmatpush1.bf16.msra.mxu0 %v3333
    %8178 = vmatprep.subr.bf16.mxu0 %v3326
    %8179 = vmatpush1.bf16.msra.mxu0 %v3325
    %8180 = vmatprep.subr.bf16.mxu0 %v3318
    %8181 = vmatpush1.bf16.msra.mxu0 %v3317
    %8182 = vmatprep.subr.bf16.mxu0 %v3310
    %8183 = vmatpush1.bf16.msra.mxu0 %v3309
    %8184 = vmatprep.subr.bf16.mxu0 %v3302
    %8185 = vmatpush1.bf16.msra.mxu0 %v3301
    %8186 = vmatprep.subr.bf16.mxu0 %v3294
    %8187 = vmatpush1.bf16.msra.mxu0 %v3293
    %8188 = vmatprep.subr.bf16.mxu0 %v3414
    %8189 = vmatpush2.bf16.msra.mxu0 %v3413
    %8190 = vmatprep.subr.bf16.mxu0 %v3406
    %8191 = vmatpush2.bf16.msra.mxu0 %v3405
    %8192 = vmatprep.subr.bf16.mxu0 %v3398
    %8193 = vmatpush2.bf16.msra.mxu0 %v3397
    %8194 = vmatprep.subr.bf16.mxu0 %v3390
    %8195 = vmatpush2.bf16.msra.mxu0 %v3389
    %8196 = vmatprep.subr.bf16.mxu0 %v3382
    %8197 = vmatpush2.bf16.msra.mxu0 %v3381
    %8198 = vmatprep.subr.bf16.mxu0 %v3374
    %8199 = vmatpush2.bf16.msra.mxu0 %v3373
    %8200 = vmatprep.subr.bf16.mxu0 %v3366
    %8201 = vmatpush2.bf16.msra.mxu0 %v3365
    %8202 = vmatprep.subr.bf16.mxu0 %v3358
    %8203 = vmatpush2.bf16.msra.mxu0 %v3357
    %8204 = vmatprep.mubr.bf16.mxu0 %v7882
    %8205 = vmatmul.mubr.bf16.gmra.mxu0 %v7881
    %v8206 = vpop.f32.mrf.mxu0
    %v8207 = vadd.f32 %v8043, %v8206
    %v8208 = vpop.f32.mrf.mxu0
    %v8209 = vadd.f32 %v8045, %v8208
    %v8210 = vpop.f32.mrf.mxu0
    %v8211 = vpop.f32.mrf.mxu0
    %8212 = vdwg.mxu0
    %v8213 = vadd.f32 %v8084, %v3712
    %v8214 = vadd.f32 %v8086, %v3716
    %v8215 = vadd.f32 %v8125, %v3720
    %v8216 = vadd.f32 %v8127, %v3724
    %v8217 = vadd.f32 %v8166, %v3728
    %v8218 = vadd.f32 %v8168, %v3732
    %v8219 = vadd.f32 %v8207, %v3736
    %v8220 = vadd.f32 %v8209, %v3740
    %v8221 = vxor.u32 %v8213, 2147483648
    %v8222 = vxor.u32 %v8214, 2147483648
    %v8223 = vmul.f32 %v8221, 1.442695
    %v8224 = vpow.pop %v8223
    %v8225 = vmul.f32 %v8222, 1.442695
    %v8226 = vpow.pop %v8225
    %v8227 = vadd.f32 %v8224, 1.0
    %v8228 = vadd.f32 %v8226, 1.0
    %v8229 = vrcp.pop %v8227
    %v8230 = vmul.f32 1.0, %v8229
    %v8231 = vrcp.pop %v8228
    %v8232 = vmul.f32 1.0, %v8231
    %v8233 = vxor.u32 %v8215, 2147483648
    %v8234 = vxor.u32 %v8216, 2147483648
    %v8235 = vmul.f32 %v8233, 1.442695
    %v8236 = vpow.pop %v8235
    %v8237 = vmul.f32 %v8234, 1.442695
    %v8238 = vpow.pop %v8237
    %v8239 = vadd.f32 %v8236, 1.0
    %v8240 = vadd.f32 %v8238, 1.0
    %v8241 = vrcp.pop %v8239
    %v8242 = vmul.f32 1.0, %v8241
    %v8243 = vrcp.pop %v8240
    %v8244 = vmul.f32 1.0, %v8243
    %v8245 = vtanh.pop %v8217
    %v8246 = vtanh.pop %v8218
    %v8247 = vxor.u32 %v8219, 2147483648
    %v8248 = vxor.u32 %v8220, 2147483648
    %v8249 = vmul.f32 %v8247, 1.442695
    %v8250 = vpow.pop %v8249
    %v8251 = vmul.f32 %v8248, 1.442695
    %v8252 = vpow.pop %v8251
    %v8253 = vadd.f32 %v8250, 1.0
    %v8254 = vadd.f32 %v8252, 1.0
    %v8255 = vrcp.pop %v8253
    %v8256 = vmul.f32 1.0, %v8255
    %v8257 = vrcp.pop %v8254
    %v8258 = vmul.f32 1.0, %v8257
    %v8259 = vmul.f32 %v8242, %v7647
    %v8260 = vmul.f32 %v8244, %v7648
    %v8261 = vmul.f32 %v8230, %v8245
    %v8262 = vmul.f32 %v8232, %v8246
    %v8263 = vadd.f32 %v8259, %v8261
    %v8264 = vadd.f32 %v8260, %v8262
    %v8265 = vtanh.pop %v8263
    %v8266 = vtanh.pop %v8264
    %v8267 = vmul.f32 %v8256, %v8265
    %v8268 = vmul.f32 %v8258, %v8266
    %v8269 = vld [vmem:[#allocation2 + $0x1c0] sm:$0xff]
    %v8270 = vld [vmem:[#allocation2 + $0x1c8] sm:$0xff]
    %v8271 = vld [vmem:[#allocation2 + $0x1d0] sm:$0xff]
    %v8272 = vld [vmem:[#allocation2 + $0x1d8] sm:$0xff]
    %v8273 = vld [vmem:[#allocation2 + $0x1e0] sm:$0xff]
    %v8274 = vld [vmem:[#allocation2 + $0x1e8] sm:$0xff]
    %v8275 = vld [vmem:[#allocation2 + $0x1f0] sm:$0xff]
    %v8276 = vld [vmem:[#allocation2 + $0x1f8] sm:$0xff]
    %8277 = vmatprep.subr.bf16.mxu0 %v4382
    %8278 = vmatpush1.bf16.msra.mxu0 %v4381
    %8279 = vmatprep.subr.bf16.mxu0 %v4374
    %8280 = vmatpush1.bf16.msra.mxu0 %v4373
    %8281 = vmatprep.subr.bf16.mxu0 %v4366
    %8282 = vmatpush1.bf16.msra.mxu0 %v4365
    %8283 = vmatprep.subr.bf16.mxu0 %v4358
    %8284 = vmatpush1.bf16.msra.mxu0 %v4357
    %8285 = vmatprep.subr.bf16.mxu0 %v4350
    %8286 = vmatpush1.bf16.msra.mxu0 %v4349
    %8287 = vmatprep.subr.bf16.mxu0 %v4342
    %8288 = vmatpush1.bf16.msra.mxu0 %v4341
    %8289 = vmatprep.subr.bf16.mxu0 %v4334
    %8290 = vmatpush1.bf16.msra.mxu0 %v4333
    %8291 = vmatprep.subr.bf16.mxu0 %v4326
    %8292 = vmatpush1.bf16.msra.mxu0 %v4325
    %8293 = vmatprep.subr.bf16.mxu0 %v4446
    %8294 = vmatpush2.bf16.msra.mxu0 %v4445
    %8295 = vmatprep.subr.bf16.mxu0 %v4438
    %8296 = vmatpush2.bf16.msra.mxu0 %v4437
    %8297 = vmatprep.subr.bf16.mxu0 %v4430
    %8298 = vmatpush2.bf16.msra.mxu0 %v4429
    %8299 = vmatprep.subr.bf16.mxu0 %v4422
    %8300 = vmatpush2.bf16.msra.mxu0 %v4421
    %8301 = vmatprep.subr.bf16.mxu0 %v4414
    %8302 = vmatpush2.bf16.msra.mxu0 %v4413
    %8303 = vmatprep.subr.bf16.mxu0 %v4406
    %8304 = vmatpush2.bf16.msra.mxu0 %v4405
    %8305 = vmatprep.subr.bf16.mxu0 %v4398
    %8306 = vmatpush2.bf16.msra.mxu0 %v4397
    %8307 = vmatprep.subr.bf16.mxu0 %v4390
    %8308 = vmatpush2.bf16.msra.mxu0 %v4389
    %8309 = vmatprep.mubr.bf16.mxu0 %v7882
    %8310 = vmatmul.mubr.bf16.gmra.mxu0 %v7881
    %v8311 = vpop.f32.mrf.mxu0
    %v8312 = vadd.f32 0.0, %v8311
    %v8313 = vpop.f32.mrf.mxu0
    %v8314 = vadd.f32 0.0, %v8313
    %v8315 = vpop.f32.mrf.mxu0
    %v8316 = vpop.f32.mrf.mxu0
    %8317 = vdwg.mxu0
    %8318 = vmatprep.subr.bf16.mxu0 %v4384
    %8319 = vmatpush1.bf16.msra.mxu0 %v4383
    %8320 = vmatprep.subr.bf16.mxu0 %v4376
    %8321 = vmatpush1.bf16.msra.mxu0 %v4375
    %8322 = vmatprep.subr.bf16.mxu0 %v4368
    %8323 = vmatpush1.bf16.msra.mxu0 %v4367
    %8324 = vmatprep.subr.bf16.mxu0 %v4360
    %8325 = vmatpush1.bf16.msra.mxu0 %v4359
    %8326 = vmatprep.subr.bf16.mxu0 %v4352
    %8327 = vmatpush1.bf16.msra.mxu0 %v4351
    %8328 = vmatprep.subr.bf16.mxu0 %v4344
    %8329 = vmatpush1.bf16.msra.mxu0 %v4343
    %8330 = vmatprep.subr.bf16.mxu0 %v4336
    %8331 = vmatpush1.bf16.msra.mxu0 %v4335
    %8332 = vmatprep.subr.bf16.mxu0 %v4328
    %8333 = vmatpush1.bf16.msra.mxu0 %v4327
    %8334 = vmatprep.subr.bf16.mxu0 %v4448
    %8335 = vmatpush2.bf16.msra.mxu0 %v4447
    %8336 = vmatprep.subr.bf16.mxu0 %v4440
    %8337 = vmatpush2.bf16.msra.mxu0 %v4439
    %8338 = vmatprep.subr.bf16.mxu0 %v4432
    %8339 = vmatpush2.bf16.msra.mxu0 %v4431
    %8340 = vmatprep.subr.bf16.mxu0 %v4424
    %8341 = vmatpush2.bf16.msra.mxu0 %v4423
    %8342 = vmatprep.subr.bf16.mxu0 %v4416
    %8343 = vmatpush2.bf16.msra.mxu0 %v4415
    %8344 = vmatprep.subr.bf16.mxu0 %v4408
    %8345 = vmatpush2.bf16.msra.mxu0 %v4407
    %8346 = vmatprep.subr.bf16.mxu0 %v4400
    %8347 = vmatpush2.bf16.msra.mxu0 %v4399
    %8348 = vmatprep.subr.bf16.mxu0 %v4392
    %8349 = vmatpush2.bf16.msra.mxu0 %v4391
    %8350 = vmatprep.mubr.bf16.mxu0 %v7882
    %8351 = vmatmul.mubr.bf16.gmra.mxu0 %v7881
    %v8352 = vpop.f32.mrf.mxu0
    %v8353 = vadd.f32 0.0, %v8352
    %v8354 = vpop.f32.mrf.mxu0
    %v8355 = vadd.f32 0.0, %v8354
    %v8356 = vpop.f32.mrf.mxu0
    %v8357 = vpop.f32.mrf.mxu0
    %8358 = vdwg.mxu0
    %8359 = vmatprep.subr.bf16.mxu0 %v4386
    %8360 = vmatpush1.bf16.msra.mxu0 %v4385
    %8361 = vmatprep.subr.bf16.mxu0 %v4378
    %8362 = vmatpush1.bf16.msra.mxu0 %v4377
    %8363 = vmatprep.subr.bf16.mxu0 %v4370
    %8364 = vmatpush1.bf16.msra.mxu0 %v4369
    %8365 = vmatprep.subr.bf16.mxu0 %v4362
    %8366 = vmatpush1.bf16.msra.mxu0 %v4361
    %8367 = vmatprep.subr.bf16.mxu0 %v4354
    %8368 = vmatpush1.bf16.msra.mxu0 %v4353
    %8369 = vmatprep.subr.bf16.mxu0 %v4346
    %8370 = vmatpush1.bf16.msra.mxu0 %v4345
    %8371 = vmatprep.subr.bf16.mxu0 %v4338
    %8372 = vmatpush1.bf16.msra.mxu0 %v4337
    %8373 = vmatprep.subr.bf16.mxu0 %v4330
    %8374 = vmatpush1.bf16.msra.mxu0 %v4329
    %8375 = vmatprep.subr.bf16.mxu0 %v4450
    %8376 = vmatpush2.bf16.msra.mxu0 %v4449
    %8377 = vmatprep.subr.bf16.mxu0 %v4442
    %8378 = vmatpush2.bf16.msra.mxu0 %v4441
    %8379 = vmatprep.subr.bf16.mxu0 %v4434
    %8380 = vmatpush2.bf16.msra.mxu0 %v4433
    %8381 = vmatprep.subr.bf16.mxu0 %v4426
    %8382 = vmatpush2.bf16.msra.mxu0 %v4425
    %8383 = vmatprep.subr.bf16.mxu0 %v4418
    %8384 = vmatpush2.bf16.msra.mxu0 %v4417
    %8385 = vmatprep.subr.bf16.mxu0 %v4410
    %8386 = vmatpush2.bf16.msra.mxu0 %v4409
    %8387 = vmatprep.subr.bf16.mxu0 %v4402
    %8388 = vmatpush2.bf16.msra.mxu0 %v4401
    %8389 = vmatprep.subr.bf16.mxu0 %v4394
    %8390 = vmatpush2.bf16.msra.mxu0 %v4393
    %8391 = vmatprep.mubr.bf16.mxu0 %v7882
    %8392 = vmatmul.mubr.bf16.gmra.mxu0 %v7881
    %v8393 = vpop.f32.mrf.mxu0
    %v8394 = vadd.f32 0.0, %v8393
    %v8395 = vpop.f32.mrf.mxu0
    %v8396 = vadd.f32 0.0, %v8395
    %v8397 = vpop.f32.mrf.mxu0
    %v8398 = vpop.f32.mrf.mxu0
    %8399 = vdwg.mxu0
    %8400 = vmatprep.subr.bf16.mxu0 %v4388
    %8401 = vmatpush1.bf16.msra.mxu0 %v4387
    %8402 = vmatprep.subr.bf16.mxu0 %v4380
    %8403 = vmatpush1.bf16.msra.mxu0 %v4379
    %8404 = vmatprep.subr.bf16.mxu0 %v4372
    %8405 = vmatpush1.bf16.msra.mxu0 %v4371
    %8406 = vmatprep.subr.bf16.mxu0 %v4364
    %8407 = vmatpush1.bf16.msra.mxu0 %v4363
    %8408 = vmatprep.subr.bf16.mxu0 %v4356
    %8409 = vmatpush1.bf16.msra.mxu0 %v4355
    %8410 = vmatprep.subr.bf16.mxu0 %v4348
    %8411 = vmatpush1.bf16.msra.mxu0 %v4347
    %8412 = vmatprep.subr.bf16.mxu0 %v4340
    %8413 = vmatpush1.bf16.msra.mxu0 %v4339
    %8414 = vmatprep.subr.bf16.mxu0 %v4332
    %8415 = vmatpush1.bf16.msra.mxu0 %v4331
    %8416 = vmatprep.subr.bf16.mxu0 %v4452
    %8417 = vmatpush2.bf16.msra.mxu0 %v4451
    %8418 = vmatprep.subr.bf16.mxu0 %v4444
    %8419 = vmatpush2.bf16.msra.mxu0 %v4443
    %8420 = vmatprep.subr.bf16.mxu0 %v4436
    %8421 = vmatpush2.bf16.msra.mxu0 %v4435
    %8422 = vmatprep.subr.bf16.mxu0 %v4428
    %8423 = vmatpush2.bf16.msra.mxu0 %v4427
    %8424 = vmatprep.subr.bf16.mxu0 %v4420
    %8425 = vmatpush2.bf16.msra.mxu0 %v4419
    %8426 = vmatprep.subr.bf16.mxu0 %v4412
    %8427 = vmatpush2.bf16.msra.mxu0 %v4411
    %8428 = vmatprep.subr.bf16.mxu0 %v4404
    %8429 = vmatpush2.bf16.msra.mxu0 %v4403
    %8430 = vmatprep.subr.bf16.mxu0 %v4396
    %8431 = vmatpush2.bf16.msra.mxu0 %v4395
    %8432 = vmatprep.mubr.bf16.mxu0 %v7882
    %8433 = vmatmul.mubr.bf16.gmra.mxu0 %v7881
    %v8434 = vpop.f32.mrf.mxu0
    %v8435 = vadd.f32 0.0, %v8434
    %v8436 = vpop.f32.mrf.mxu0
    %v8437 = vadd.f32 0.0, %v8436
    %v8438 = vpop.f32.mrf.mxu0
    %v8439 = vpop.f32.mrf.mxu0
    %8440 = vdwg.mxu0
    %v8441 = vadd.f32 %v8269, %v8312
    %v8442 = vadd.f32 %v8270, %v8314
    %v8443 = vadd.f32 %v8271, %v8353
    %v8444 = vadd.f32 %v8272, %v8355
    %v8445 = vadd.f32 %v8273, %v8394
    %v8446 = vadd.f32 %v8274, %v8396
    %v8447 = vadd.f32 %v8275, %v8435
    %v8448 = vadd.f32 %v8276, %v8437
    %v8449 = vxor.u32 %v8441, 2147483648
    %v8450 = vxor.u32 %v8442, 2147483648
    %v8451 = vmul.f32 %v8449, 1.442695
    %v8452 = vpow.pop %v8451
    %v8453 = vmul.f32 %v8450, 1.442695
    %v8454 = vpow.pop %v8453
    %v8455 = vadd.f32 %v8452, 1.0
    %v8456 = vadd.f32 %v8454, 1.0
    %v8457 = vrcp.pop %v8455
    %v8458 = vmul.f32 1.0, %v8457
    %v8459 = vrcp.pop %v8456
    %v8460 = vmul.f32 1.0, %v8459
    %v8461 = vxor.u32 %v8443, 2147483648
    %v8462 = vxor.u32 %v8444, 2147483648
    %v8463 = vmul.f32 %v8461, 1.442695
    %v8464 = vpow.pop %v8463
    %v8465 = vmul.f32 %v8462, 1.442695
    %v8466 = vpow.pop %v8465
    %v8467 = vadd.f32 %v8464, 1.0
    %v8468 = vadd.f32 %v8466, 1.0
    %v8469 = vrcp.pop %v8467
    %v8470 = vmul.f32 1.0, %v8469
    %v8471 = vrcp.pop %v8468
    %v8472 = vmul.f32 1.0, %v8471
    %v8473 = vtanh.pop %v8445
    %v8474 = vtanh.pop %v8446
    %v8475 = vxor.u32 %v8447, 2147483648
    %v8476 = vxor.u32 %v8448, 2147483648
    %v8477 = vmul.f32 %v8475, 1.442695
    %v8478 = vpow.pop %v8477
    %v8479 = vmul.f32 %v8476, 1.442695
    %v8480 = vpow.pop %v8479
    %v8481 = vadd.f32 %v8478, 1.0
    %v8482 = vadd.f32 %v8480, 1.0
    %v8483 = vrcp.pop %v8481
    %v8484 = vmul.f32 1.0, %v8483
    %v8485 = vrcp.pop %v8482
    %v8486 = vmul.f32 1.0, %v8485
    %v8487 = vmul.f32 %v8470, %v7875
    %v8488 = vmul.f32 %v8472, %v7876
    %v8489 = vmul.f32 %v8458, %v8473
    %v8490 = vmul.f32 %v8460, %v8474
    %v8491 = vadd.f32 %v8487, %v8489
    %v8492 = vadd.f32 %v8488, %v8490
    %v8493 = vtanh.pop %v8491
    %v8494 = vtanh.pop %v8492
    %v8495 = vmul.f32 %v8484, %v8493
    %v8496 = vmul.f32 %v8486, %v8494
    %v8497 = vpack.c.bf16 %v8495, %v8495
    %v8498 = vpack.c.bf16 %v8496, %v8496
    %v8499 = vpack.c.bf16 %v8267, %v8267
    %v8500 = vpack.c.bf16 %v8268, %v8268
    %8501 = vmatprep.subr.bf16.mxu0 %v2540
    %8502 = vmatpush1.bf16.msra.mxu0 %v2539
    %8503 = vmatprep.subr.bf16.mxu0 %v2532
    %8504 = vmatpush1.bf16.msra.mxu0 %v2531
    %8505 = vmatprep.subr.bf16.mxu0 %v2524
    %8506 = vmatpush1.bf16.msra.mxu0 %v2523
    %8507 = vmatprep.subr.bf16.mxu0 %v2516
    %8508 = vmatpush1.bf16.msra.mxu0 %v2515
    %8509 = vmatprep.subr.bf16.mxu0 %v2508
    %8510 = vmatpush1.bf16.msra.mxu0 %v2507
    %8511 = vmatprep.subr.bf16.mxu0 %v2500
    %8512 = vmatpush1.bf16.msra.mxu0 %v2499
    %8513 = vmatprep.subr.bf16.mxu0 %v2492
    %8514 = vmatpush1.bf16.msra.mxu0 %v2491
    %8515 = vmatprep.subr.bf16.mxu0 %v2484
    %8516 = vmatpush1.bf16.msra.mxu0 %v2483
    %8517 = vmatprep.subr.bf16.mxu0 %v2604
    %8518 = vmatpush2.bf16.msra.mxu0 %v2603
    %8519 = vmatprep.subr.bf16.mxu0 %v2596
    %8520 = vmatpush2.bf16.msra.mxu0 %v2595
    %8521 = vmatprep.subr.bf16.mxu0 %v2588
    %8522 = vmatpush2.bf16.msra.mxu0 %v2587
    %8523 = vmatprep.subr.bf16.mxu0 %v2580
    %8524 = vmatpush2.bf16.msra.mxu0 %v2579
    %8525 = vmatprep.subr.bf16.mxu0 %v2572
    %8526 = vmatpush2.bf16.msra.mxu0 %v2571
    %8527 = vmatprep.subr.bf16.mxu0 %v2564
    %8528 = vmatpush2.bf16.msra.mxu0 %v2563
    %8529 = vmatprep.subr.bf16.mxu0 %v2556
    %8530 = vmatpush2.bf16.msra.mxu0 %v2555
    %8531 = vmatprep.subr.bf16.mxu0 %v2548
    %8532 = vmatpush2.bf16.msra.mxu0 %v2547
    %8533 = vmatprep.mubr.bf16.mxu0 %v8500
    %8534 = vmatmul.mubr.bf16.gmra.mxu0 %v8499
    %v8535 = vpop.f32.mrf.mxu0
    %v8536 = vadd.f32 0.0, %v8535
    %v8537 = vpop.f32.mrf.mxu0
    %v8538 = vadd.f32 0.0, %v8537
    %v8539 = vpop.f32.mrf.mxu0
    %v8540 = vpop.f32.mrf.mxu0
    %8541 = vdwg.mxu0
    %8542 = vmatprep.subr.bf16.mxu0 %v2542
    %8543 = vmatpush1.bf16.msra.mxu0 %v2541
    %8544 = vmatprep.subr.bf16.mxu0 %v2534
    %8545 = vmatpush1.bf16.msra.mxu0 %v2533
    %8546 = vmatprep.subr.bf16.mxu0 %v2526
    %8547 = vmatpush1.bf16.msra.mxu0 %v2525
    %8548 = vmatprep.subr.bf16.mxu0 %v2518
    %8549 = vmatpush1.bf16.msra.mxu0 %v2517
    %8550 = vmatprep.subr.bf16.mxu0 %v2510
    %8551 = vmatpush1.bf16.msra.mxu0 %v2509
    %8552 = vmatprep.subr.bf16.mxu0 %v2502
    %8553 = vmatpush1.bf16.msra.mxu0 %v2501
    %8554 = vmatprep.subr.bf16.mxu0 %v2494
    %8555 = vmatpush1.bf16.msra.mxu0 %v2493
    %8556 = vmatprep.subr.bf16.mxu0 %v2486
    %8557 = vmatpush1.bf16.msra.mxu0 %v2485
    %8558 = vmatprep.subr.bf16.mxu0 %v2606
    %8559 = vmatpush2.bf16.msra.mxu0 %v2605
    %8560 = vmatprep.subr.bf16.mxu0 %v2598
    %8561 = vmatpush2.bf16.msra.mxu0 %v2597
    %8562 = vmatprep.subr.bf16.mxu0 %v2590
    %8563 = vmatpush2.bf16.msra.mxu0 %v2589
    %8564 = vmatprep.subr.bf16.mxu0 %v2582
    %8565 = vmatpush2.bf16.msra.mxu0 %v2581
    %8566 = vmatprep.subr.bf16.mxu0 %v2574
    %8567 = vmatpush2.bf16.msra.mxu0 %v2573
    %8568 = vmatprep.subr.bf16.mxu0 %v2566
    %8569 = vmatpush2.bf16.msra.mxu0 %v2565
    %8570 = vmatprep.subr.bf16.mxu0 %v2558
    %8571 = vmatpush2.bf16.msra.mxu0 %v2557
    %8572 = vmatprep.subr.bf16.mxu0 %v2550
    %8573 = vmatpush2.bf16.msra.mxu0 %v2549
    %8574 = vmatprep.mubr.bf16.mxu0 %v8500
    %8575 = vmatmul.mubr.bf16.gmra.mxu0 %v8499
    %v8576 = vpop.f32.mrf.mxu0
    %v8577 = vadd.f32 0.0, %v8576
    %v8578 = vpop.f32.mrf.mxu0
    %v8579 = vadd.f32 0.0, %v8578
    %v8580 = vpop.f32.mrf.mxu0
    %v8581 = vpop.f32.mrf.mxu0
    %8582 = vdwg.mxu0
    %8583 = vmatprep.subr.bf16.mxu0 %v2544
    %8584 = vmatpush1.bf16.msra.mxu0 %v2543
    %8585 = vmatprep.subr.bf16.mxu0 %v2536
    %8586 = vmatpush1.bf16.msra.mxu0 %v2535
    %8587 = vmatprep.subr.bf16.mxu0 %v2528
    %8588 = vmatpush1.bf16.msra.mxu0 %v2527
    %8589 = vmatprep.subr.bf16.mxu0 %v2520
    %8590 = vmatpush1.bf16.msra.mxu0 %v2519
    %8591 = vmatprep.subr.bf16.mxu0 %v2512
    %8592 = vmatpush1.bf16.msra.mxu0 %v2511
    %8593 = vmatprep.subr.bf16.mxu0 %v2504
    %8594 = vmatpush1.bf16.msra.mxu0 %v2503
    %8595 = vmatprep.subr.bf16.mxu0 %v2496
    %8596 = vmatpush1.bf16.msra.mxu0 %v2495
    %8597 = vmatprep.subr.bf16.mxu0 %v2488
    %8598 = vmatpush1.bf16.msra.mxu0 %v2487
    %8599 = vmatprep.subr.bf16.mxu0 %v2608
    %8600 = vmatpush2.bf16.msra.mxu0 %v2607
    %8601 = vmatprep.subr.bf16.mxu0 %v2600
    %8602 = vmatpush2.bf16.msra.mxu0 %v2599
    %8603 = vmatprep.subr.bf16.mxu0 %v2592
    %8604 = vmatpush2.bf16.msra.mxu0 %v2591
    %8605 = vmatprep.subr.bf16.mxu0 %v2584
    %8606 = vmatpush2.bf16.msra.mxu0 %v2583
    %8607 = vmatprep.subr.bf16.mxu0 %v2576
    %8608 = vmatpush2.bf16.msra.mxu0 %v2575
    %8609 = vmatprep.subr.bf16.mxu0 %v2568
    %8610 = vmatpush2.bf16.msra.mxu0 %v2567
    %8611 = vmatprep.subr.bf16.mxu0 %v2560
    %8612 = vmatpush2.bf16.msra.mxu0 %v2559
    %8613 = vmatprep.subr.bf16.mxu0 %v2552
    %8614 = vmatpush2.bf16.msra.mxu0 %v2551
    %8615 = vmatprep.mubr.bf16.mxu0 %v8500
    %8616 = vmatmul.mubr.bf16.gmra.mxu0 %v8499
    %v8617 = vpop.f32.mrf.mxu0
    %v8618 = vadd.f32 0.0, %v8617
    %v8619 = vpop.f32.mrf.mxu0
    %v8620 = vadd.f32 0.0, %v8619
    %v8621 = vpop.f32.mrf.mxu0
    %v8622 = vpop.f32.mrf.mxu0
    %8623 = vdwg.mxu0
    %8624 = vmatprep.subr.bf16.mxu0 %v2546
    %8625 = vmatpush1.bf16.msra.mxu0 %v2545
    %8626 = vmatprep.subr.bf16.mxu0 %v2538
    %8627 = vmatpush1.bf16.msra.mxu0 %v2537
    %8628 = vmatprep.subr.bf16.mxu0 %v2530
    %8629 = vmatpush1.bf16.msra.mxu0 %v2529
    %8630 = vmatprep.subr.bf16.mxu0 %v2522
    %8631 = vmatpush1.bf16.msra.mxu0 %v2521
    %8632 = vmatprep.subr.bf16.mxu0 %v2514
    %8633 = vmatpush1.bf16.msra.mxu0 %v2513
    %8634 = vmatprep.subr.bf16.mxu0 %v2506
    %8635 = vmatpush1.bf16.msra.mxu0 %v2505
    %8636 = vmatprep.subr.bf16.mxu0 %v2498
    %8637 = vmatpush1.bf16.msra.mxu0 %v2497
    %8638 = vmatprep.subr.bf16.mxu0 %v2490
    %8639 = vmatpush1.bf16.msra.mxu0 %v2489
    %8640 = vmatprep.subr.bf16.mxu0 %v2610
    %8641 = vmatpush2.bf16.msra.mxu0 %v2609
    %8642 = vmatprep.subr.bf16.mxu0 %v2602
    %8643 = vmatpush2.bf16.msra.mxu0 %v2601
    %8644 = vmatprep.subr.bf16.mxu0 %v2594
    %8645 = vmatpush2.bf16.msra.mxu0 %v2593
    %8646 = vmatprep.subr.bf16.mxu0 %v2586
    %8647 = vmatpush2.bf16.msra.mxu0 %v2585
    %8648 = vmatprep.subr.bf16.mxu0 %v2578
    %8649 = vmatpush2.bf16.msra.mxu0 %v2577
    %8650 = vmatprep.subr.bf16.mxu0 %v2570
    %8651 = vmatpush2.bf16.msra.mxu0 %v2569
    %8652 = vmatprep.subr.bf16.mxu0 %v2562
    %8653 = vmatpush2.bf16.msra.mxu0 %v2561
    %8654 = vmatprep.subr.bf16.mxu0 %v2554
    %8655 = vmatpush2.bf16.msra.mxu0 %v2553
    %8656 = vmatprep.mubr.bf16.mxu0 %v8500
    %8657 = vmatmul.mubr.bf16.gmra.mxu0 %v8499
    %v8658 = vpop.f32.mrf.mxu0
    %v8659 = vadd.f32 0.0, %v8658
    %v8660 = vpop.f32.mrf.mxu0
    %v8661 = vadd.f32 0.0, %v8660
    %v8662 = vpop.f32.mrf.mxu0
    %v8663 = vpop.f32.mrf.mxu0
    %8664 = vdwg.mxu0
    %8665 = vmatprep.subr.bf16.mxu0 %v3344
    %8666 = vmatpush1.bf16.msra.mxu0 %v3343
    %8667 = vmatprep.subr.bf16.mxu0 %v3336
    %8668 = vmatpush1.bf16.msra.mxu0 %v3335
    %8669 = vmatprep.subr.bf16.mxu0 %v3328
    %8670 = vmatpush1.bf16.msra.mxu0 %v3327
    %8671 = vmatprep.subr.bf16.mxu0 %v3320
    %8672 = vmatpush1.bf16.msra.mxu0 %v3319
    %8673 = vmatprep.subr.bf16.mxu0 %v3312
    %8674 = vmatpush1.bf16.msra.mxu0 %v3311
    %8675 = vmatprep.subr.bf16.mxu0 %v3304
    %8676 = vmatpush1.bf16.msra.mxu0 %v3303
    %8677 = vmatprep.subr.bf16.mxu0 %v3296
    %8678 = vmatpush1.bf16.msra.mxu0 %v3295
    %8679 = vmatprep.subr.bf16.mxu0 %v3288
    %8680 = vmatpush1.bf16.msra.mxu0 %v3287
    %8681 = vmatprep.subr.bf16.mxu0 %v3408
    %8682 = vmatpush2.bf16.msra.mxu0 %v3407
    %8683 = vmatprep.subr.bf16.mxu0 %v3400
    %8684 = vmatpush2.bf16.msra.mxu0 %v3399
    %8685 = vmatprep.subr.bf16.mxu0 %v3392
    %8686 = vmatpush2.bf16.msra.mxu0 %v3391
    %8687 = vmatprep.subr.bf16.mxu0 %v3384
    %8688 = vmatpush2.bf16.msra.mxu0 %v3383
    %8689 = vmatprep.subr.bf16.mxu0 %v3376
    %8690 = vmatpush2.bf16.msra.mxu0 %v3375
    %8691 = vmatprep.subr.bf16.mxu0 %v3368
    %8692 = vmatpush2.bf16.msra.mxu0 %v3367
    %8693 = vmatprep.subr.bf16.mxu0 %v3360
    %8694 = vmatpush2.bf16.msra.mxu0 %v3359
    %8695 = vmatprep.subr.bf16.mxu0 %v3352
    %8696 = vmatpush2.bf16.msra.mxu0 %v3351
    %8697 = vmatprep.mubr.bf16.mxu0 %v8498
    %8698 = vmatmul.mubr.bf16.gmra.mxu0 %v8497
    %v8699 = vpop.f32.mrf.mxu0
    %v8700 = vadd.f32 %v8536, %v8699
    %v8701 = vpop.f32.mrf.mxu0
    %v8702 = vadd.f32 %v8538, %v8701
    %v8703 = vpop.f32.mrf.mxu0
    %v8704 = vpop.f32.mrf.mxu0
    %8705 = vdwg.mxu0
    %8706 = vmatprep.subr.bf16.mxu0 %v3346
    %8707 = vmatpush1.bf16.msra.mxu0 %v3345
    %8708 = vmatprep.subr.bf16.mxu0 %v3338
    %8709 = vmatpush1.bf16.msra.mxu0 %v3337
    %8710 = vmatprep.subr.bf16.mxu0 %v3330
    %8711 = vmatpush1.bf16.msra.mxu0 %v3329
    %8712 = vmatprep.subr.bf16.mxu0 %v3322
    %8713 = vmatpush1.bf16.msra.mxu0 %v3321
    %8714 = vmatprep.subr.bf16.mxu0 %v3314
    %8715 = vmatpush1.bf16.msra.mxu0 %v3313
    %8716 = vmatprep.subr.bf16.mxu0 %v3306
    %8717 = vmatpush1.bf16.msra.mxu0 %v3305
    %8718 = vmatprep.subr.bf16.mxu0 %v3298
    %8719 = vmatpush1.bf16.msra.mxu0 %v3297
    %8720 = vmatprep.subr.bf16.mxu0 %v3290
    %8721 = vmatpush1.bf16.msra.mxu0 %v3289
    %8722 = vmatprep.subr.bf16.mxu0 %v3410
    %8723 = vmatpush2.bf16.msra.mxu0 %v3409
    %8724 = vmatprep.subr.bf16.mxu0 %v3402
    %8725 = vmatpush2.bf16.msra.mxu0 %v3401
    %8726 = vmatprep.subr.bf16.mxu0 %v3394
    %8727 = vmatpush2.bf16.msra.mxu0 %v3393
    %8728 = vmatprep.subr.bf16.mxu0 %v3386
    %8729 = vmatpush2.bf16.msra.mxu0 %v3385
    %8730 = vmatprep.subr.bf16.mxu0 %v3378
    %8731 = vmatpush2.bf16.msra.mxu0 %v3377
    %8732 = vmatprep.subr.bf16.mxu0 %v3370
    %8733 = vmatpush2.bf16.msra.mxu0 %v3369
    %8734 = vmatprep.subr.bf16.mxu0 %v3362
    %8735 = vmatpush2.bf16.msra.mxu0 %v3361
    %8736 = vmatprep.subr.bf16.mxu0 %v3354
    %8737 = vmatpush2.bf16.msra.mxu0 %v3353
    %8738 = vmatprep.mubr.bf16.mxu0 %v8498
    %8739 = vmatmul.mubr.bf16.gmra.mxu0 %v8497
    %v8740 = vpop.f32.mrf.mxu0
    %v8741 = vadd.f32 %v8577, %v8740
    %v8742 = vpop.f32.mrf.mxu0
    %v8743 = vadd.f32 %v8579, %v8742
    %v8744 = vpop.f32.mrf.mxu0
    %v8745 = vpop.f32.mrf.mxu0
    %8746 = vdwg.mxu0
    %8747 = vmatprep.subr.bf16.mxu0 %v3348
    %8748 = vmatpush1.bf16.msra.mxu0 %v3347
    %8749 = vmatprep.subr.bf16.mxu0 %v3340
    %8750 = vmatpush1.bf16.msra.mxu0 %v3339
    %8751 = vmatprep.subr.bf16.mxu0 %v3332
    %8752 = vmatpush1.bf16.msra.mxu0 %v3331
    %8753 = vmatprep.subr.bf16.mxu0 %v3324
    %8754 = vmatpush1.bf16.msra.mxu0 %v3323
    %8755 = vmatprep.subr.bf16.mxu0 %v3316
    %8756 = vmatpush1.bf16.msra.mxu0 %v3315
    %8757 = vmatprep.subr.bf16.mxu0 %v3308
    %8758 = vmatpush1.bf16.msra.mxu0 %v3307
    %8759 = vmatprep.subr.bf16.mxu0 %v3300
    %8760 = vmatpush1.bf16.msra.mxu0 %v3299
    %8761 = vmatprep.subr.bf16.mxu0 %v3292
    %8762 = vmatpush1.bf16.msra.mxu0 %v3291
    %8763 = vmatprep.subr.bf16.mxu0 %v3412
    %8764 = vmatpush2.bf16.msra.mxu0 %v3411
    %8765 = vmatprep.subr.bf16.mxu0 %v3404
    %8766 = vmatpush2.bf16.msra.mxu0 %v3403
    %8767 = vmatprep.subr.bf16.mxu0 %v3396
    %8768 = vmatpush2.bf16.msra.mxu0 %v3395
    %8769 = vmatprep.subr.bf16.mxu0 %v3388
    %8770 = vmatpush2.bf16.msra.mxu0 %v3387
    %8771 = vmatprep.subr.bf16.mxu0 %v3380
    %8772 = vmatpush2.bf16.msra.mxu0 %v3379
    %8773 = vmatprep.subr.bf16.mxu0 %v3372
    %8774 = vmatpush2.bf16.msra.mxu0 %v3371
    %8775 = vmatprep.subr.bf16.mxu0 %v3364
    %8776 = vmatpush2.bf16.msra.mxu0 %v3363
    %8777 = vmatprep.subr.bf16.mxu0 %v3356
    %8778 = vmatpush2.bf16.msra.mxu0 %v3355
    %8779 = vmatprep.mubr.bf16.mxu0 %v8498
    %8780 = vmatmul.mubr.bf16.gmra.mxu0 %v8497
    %v8781 = vpop.f32.mrf.mxu0
    %v8782 = vadd.f32 %v8618, %v8781
    %v8783 = vpop.f32.mrf.mxu0
    %v8784 = vadd.f32 %v8620, %v8783
    %v8785 = vpop.f32.mrf.mxu0
    %v8786 = vpop.f32.mrf.mxu0
    %8787 = vdwg.mxu0
    %8788 = vmatprep.subr.bf16.mxu0 %v3350
    %8789 = vmatpush1.bf16.msra.mxu0 %v3349
    %8790 = vmatprep.subr.bf16.mxu0 %v3342
    %8791 = vmatpush1.bf16.msra.mxu0 %v3341
    %8792 = vmatprep.subr.bf16.mxu0 %v3334
    %8793 = vmatpush1.bf16.msra.mxu0 %v3333
    %8794 = vmatprep.subr.bf16.mxu0 %v3326
    %8795 = vmatpush1.bf16.msra.mxu0 %v3325
    %8796 = vmatprep.subr.bf16.mxu0 %v3318
    %8797 = vmatpush1.bf16.msra.mxu0 %v3317
    %8798 = vmatprep.subr.bf16.mxu0 %v3310
    %8799 = vmatpush1.bf16.msra.mxu0 %v3309
    %8800 = vmatprep.subr.bf16.mxu0 %v3302
    %8801 = vmatpush1.bf16.msra.mxu0 %v3301
    %8802 = vmatprep.subr.bf16.mxu0 %v3294
    %8803 = vmatpush1.bf16.msra.mxu0 %v3293
    %8804 = vmatprep.subr.bf16.mxu0 %v3414
    %8805 = vmatpush2.bf16.msra.mxu0 %v3413
    %8806 = vmatprep.subr.bf16.mxu0 %v3406
    %8807 = vmatpush2.bf16.msra.mxu0 %v3405
    %8808 = vmatprep.subr.bf16.mxu0 %v3398
    %8809 = vmatpush2.bf16.msra.mxu0 %v3397
    %8810 = vmatprep.subr.bf16.mxu0 %v3390
    %8811 = vmatpush2.bf16.msra.mxu0 %v3389
    %8812 = vmatprep.subr.bf16.mxu0 %v3382
    %8813 = vmatpush2.bf16.msra.mxu0 %v3381
    %8814 = vmatprep.subr.bf16.mxu0 %v3374
    %8815 = vmatpush2.bf16.msra.mxu0 %v3373
    %8816 = vmatprep.subr.bf16.mxu0 %v3366
    %8817 = vmatpush2.bf16.msra.mxu0 %v3365
    %8818 = vmatprep.subr.bf16.mxu0 %v3358
    %8819 = vmatpush2.bf16.msra.mxu0 %v3357
    %8820 = vmatprep.mubr.bf16.mxu0 %v8498
    %8821 = vmatmul.mubr.bf16.gmra.mxu0 %v8497
    %v8822 = vpop.f32.mrf.mxu0
    %v8823 = vadd.f32 %v8659, %v8822
    %v8824 = vpop.f32.mrf.mxu0
    %v8825 = vadd.f32 %v8661, %v8824
    %v8826 = vpop.f32.mrf.mxu0
    %v8827 = vpop.f32.mrf.mxu0
    %8828 = vdwg.mxu0
    %v8829 = vadd.f32 %v8700, %v3712
    %v8830 = vadd.f32 %v8702, %v3716
    %v8831 = vadd.f32 %v8741, %v3720
    %v8832 = vadd.f32 %v8743, %v3724
    %v8833 = vadd.f32 %v8782, %v3728
    %v8834 = vadd.f32 %v8784, %v3732
    %v8835 = vadd.f32 %v8823, %v3736
    %v8836 = vadd.f32 %v8825, %v3740
    %v8837 = vxor.u32 %v8829, 2147483648
    %v8838 = vxor.u32 %v8830, 2147483648
    %v8839 = vmul.f32 %v8837, 1.442695
    %v8840 = vpow.pop %v8839
    %v8841 = vmul.f32 %v8838, 1.442695
    %v8842 = vpow.pop %v8841
    %v8843 = vadd.f32 %v8840, 1.0
    %v8844 = vadd.f32 %v8842, 1.0
    %v8845 = vrcp.pop %v8843
    %v8846 = vmul.f32 1.0, %v8845
    %v8847 = vrcp.pop %v8844
    %v8848 = vmul.f32 1.0, %v8847
    %v8849 = vxor.u32 %v8831, 2147483648
    %v8850 = vxor.u32 %v8832, 2147483648
    %v8851 = vmul.f32 %v8849, 1.442695
    %v8852 = vpow.pop %v8851
    %v8853 = vmul.f32 %v8850, 1.442695
    %v8854 = vpow.pop %v8853
    %v8855 = vadd.f32 %v8852, 1.0
    %v8856 = vadd.f32 %v8854, 1.0
    %v8857 = vrcp.pop %v8855
    %v8858 = vmul.f32 1.0, %v8857
    %v8859 = vrcp.pop %v8856
    %v8860 = vmul.f32 1.0, %v8859
    %v8861 = vtanh.pop %v8833
    %v8862 = vtanh.pop %v8834
    %v8863 = vxor.u32 %v8835, 2147483648
    %v8864 = vxor.u32 %v8836, 2147483648
    %v8865 = vmul.f32 %v8863, 1.442695
    %v8866 = vpow.pop %v8865
    %v8867 = vmul.f32 %v8864, 1.442695
    %v8868 = vpow.pop %v8867
    %v8869 = vadd.f32 %v8866, 1.0
    %v8870 = vadd.f32 %v8868, 1.0
    %v8871 = vrcp.pop %v8869
    %v8872 = vmul.f32 1.0, %v8871
    %v8873 = vrcp.pop %v8870
    %v8874 = vmul.f32 1.0, %v8873
    %v8875 = vmul.f32 %v8858, %v8263
    %v8876 = vmul.f32 %v8860, %v8264
    %v8877 = vmul.f32 %v8846, %v8861
    %v8878 = vmul.f32 %v8848, %v8862
    %v8879 = vadd.f32 %v8875, %v8877
    %v8880 = vadd.f32 %v8876, %v8878
    %v8881 = vtanh.pop %v8879
    %v8882 = vtanh.pop %v8880
    %v8883 = vmul.f32 %v8872, %v8881
    %v8884 = vmul.f32 %v8874, %v8882
    %8885 = vst [vmem:[#allocation24] sm:$0xff] %v8495
    %8886 = vst [vmem:[#allocation24 + $0x8] sm:$0xff] %v8496
    %8887 = vst [vmem:[#allocation26] sm:$0xff] %v8491
    %8888 = vst [vmem:[#allocation26 + $0x8] sm:$0xff] %v8492
    %8889 = vst [vmem:[#allocation27] sm:$0xff] %v8883
    %8890 = vst [vmem:[#allocation27 + $0x8] sm:$0xff] %v8884
    %8891 = vst [vmem:[#allocation29] sm:$0xff] %v8879
    %8892 = vst [vmem:[#allocation29 + $0x8] sm:$0xff] %v8880
    %v8893 = vpack.c.bf16 %v8883, %v8883
    %v8894 = vpack.c.bf16 %v8884, %v8884
    %v8895 = vld [vmem:[#allocation15] sm:$0xf]
    %v8896 = vld [vmem:[#allocation15 + $0x4] sm:$0xf]
    %v8897 = vld [vmem:[#allocation15 + $0x8] sm:$0xf]
    %v8898 = vld [vmem:[#allocation15 + $0xc] sm:$0xf]
    %v8899 = vld [vmem:[#allocation15 + $0x10] sm:$0xf]
    %v8900 = vld [vmem:[#allocation15 + $0x14] sm:$0xf]
    %v8901 = vld [vmem:[#allocation15 + $0x18] sm:$0xf]
    %v8902 = vld [vmem:[#allocation15 + $0x1c] sm:$0xf]
    %v8903 = vld [vmem:[#allocation15 + $0x20] sm:$0xf]
    %v8904 = vld [vmem:[#allocation15 + $0x24] sm:$0xf]
    %v8905 = vld [vmem:[#allocation15 + $0x28] sm:$0xf]
    %v8906 = vld [vmem:[#allocation15 + $0x2c] sm:$0xf]
    %v8907 = vld [vmem:[#allocation15 + $0x30] sm:$0xf]
    %v8908 = vld [vmem:[#allocation15 + $0x34] sm:$0xf]
    %v8909 = vld [vmem:[#allocation15 + $0x38] sm:$0xf]
    %v8910 = vld [vmem:[#allocation15 + $0x3c] sm:$0xf]
    %v8911 = vld [vmem:[#allocation15 + $0x40] sm:$0xf]
    %v8912 = vld [vmem:[#allocation15 + $0x44] sm:$0xf]
    %v8913 = vld [vmem:[#allocation15 + $0x48] sm:$0xf]
    %v8914 = vld [vmem:[#allocation15 + $0x4c] sm:$0xf]
    %v8915 = vld [vmem:[#allocation15 + $0x50] sm:$0xf]
    %v8916 = vld [vmem:[#allocation15 + $0x54] sm:$0xf]
    %v8917 = vld [vmem:[#allocation15 + $0x58] sm:$0xf]
    %v8918 = vld [vmem:[#allocation15 + $0x5c] sm:$0xf]
    %v8919 = vld [vmem:[#allocation15 + $0x60] sm:$0xf]
    %v8920 = vld [vmem:[#allocation15 + $0x64] sm:$0xf]
    %v8921 = vld [vmem:[#allocation15 + $0x68] sm:$0xf]
    %v8922 = vld [vmem:[#allocation15 + $0x6c] sm:$0xf]
    %v8923 = vld [vmem:[#allocation15 + $0x70] sm:$0xf]
    %v8924 = vld [vmem:[#allocation15 + $0x74] sm:$0xf]
    %v8925 = vld [vmem:[#allocation15 + $0x78] sm:$0xf]
    %v8926 = vld [vmem:[#allocation15 + $0x7c] sm:$0xf]
    %v8927 = vld [vmem:[#allocation17] sm:$0x1]
    %v8929 = vlaneseq
    %v8930 = vshrl.u32 %v8929, 7
    %v8931 = vsub.s32 0, %v8930
    %v8932 = vrot.slane %v8927, %v8931
    %v8966 = vunpack.c.l.b16 %v8895
    %v8967 = vunpack.c.l.b16 %v8896
    %v8968 = vunpack.c.l.b16 %v8897
    %v8969 = vunpack.c.l.b16 %v8898
    %v8970 = vunpack.c.l.b16 %v8899
    %v8971 = vunpack.c.l.b16 %v8900
    %v8972 = vunpack.c.l.b16 %v8901
    %v8973 = vunpack.c.l.b16 %v8902
    %v8974 = vunpack.c.l.b16 %v8903
    %v8975 = vunpack.c.l.b16 %v8904
    %v8976 = vunpack.c.l.b16 %v8905
    %v8977 = vunpack.c.l.b16 %v8906
    %v8978 = vunpack.c.l.b16 %v8907
    %v8979 = vunpack.c.l.b16 %v8908
    %v8980 = vunpack.c.l.b16 %v8909
    %v8981 = vunpack.c.l.b16 %v8910
    %v8982 = vunpack.c.l.b16 %v8911
    %v8983 = vunpack.c.l.b16 %v8912
    %v8984 = vunpack.c.l.b16 %v8913
    %v8985 = vunpack.c.l.b16 %v8914
    %v8986 = vunpack.c.l.b16 %v8915
    %v8987 = vunpack.c.l.b16 %v8916
    %v8988 = vunpack.c.l.b16 %v8917
    %v8989 = vunpack.c.l.b16 %v8918
    %v8990 = vunpack.c.l.b16 %v8919
    %v8991 = vunpack.c.l.b16 %v8920
    %v8992 = vunpack.c.l.b16 %v8921
    %v8993 = vunpack.c.l.b16 %v8922
    %v8994 = vunpack.c.l.b16 %v8923
    %v8995 = vunpack.c.l.b16 %v8924
    %v8996 = vunpack.c.l.b16 %v8925
    %v8997 = vunpack.c.l.b16 %v8926
    %v8998 = vpack.c.b16 %v8967, %v8966
    %v8999 = vpack.c.b16 %v8969, %v8968
    %v9000 = vpack.c.b16 %v8971, %v8970
    %v9001 = vpack.c.b16 %v8973, %v8972
    %v9002 = vpack.c.b16 %v8975, %v8974
    %v9003 = vpack.c.b16 %v8977, %v8976
    %v9004 = vpack.c.b16 %v8979, %v8978
    %v9005 = vpack.c.b16 %v8981, %v8980
    %v9006 = vpack.c.b16 %v8983, %v8982
    %v9007 = vpack.c.b16 %v8985, %v8984
    %v9008 = vpack.c.b16 %v8987, %v8986
    %v9009 = vpack.c.b16 %v8989, %v8988
    %v9010 = vpack.c.b16 %v8991, %v8990
    %v9011 = vpack.c.b16 %v8993, %v8992
    %v9012 = vpack.c.b16 %v8995, %v8994
    %v9013 = vpack.c.b16 %v8997, %v8996
    %9030 = vmatprep.subr.bf16.mxu0 0
    %9031 = vmatpush1.bf16.msra.mxu0 %v9005
    %9032 = vmatprep.subr.bf16.mxu0 0
    %9033 = vmatpush1.bf16.msra.mxu0 %v9004
    %9034 = vmatprep.subr.bf16.mxu0 0
    %9035 = vmatpush1.bf16.msra.mxu0 %v9003
    %9036 = vmatprep.subr.bf16.mxu0 0
    %9037 = vmatpush1.bf16.msra.mxu0 %v9002
    %9038 = vmatprep.subr.bf16.mxu0 0
    %9039 = vmatpush1.bf16.msra.mxu0 %v9001
    %9040 = vmatprep.subr.bf16.mxu0 0
    %9041 = vmatpush1.bf16.msra.mxu0 %v9000
    %9042 = vmatprep.subr.bf16.mxu0 0
    %9043 = vmatpush1.bf16.msra.mxu0 %v8999
    %9044 = vmatprep.subr.bf16.mxu0 0
    %9045 = vmatpush1.bf16.msra.mxu0 %v8998
    %9046 = vmatprep.subr.bf16.mxu0 0
    %9047 = vmatpush2.bf16.msra.mxu0 %v9013
    %9048 = vmatprep.subr.bf16.mxu0 0
    %9049 = vmatpush2.bf16.msra.mxu0 %v9012
    %9050 = vmatprep.subr.bf16.mxu0 0
    %9051 = vmatpush2.bf16.msra.mxu0 %v9011
    %9052 = vmatprep.subr.bf16.mxu0 0
    %9053 = vmatpush2.bf16.msra.mxu0 %v9010
    %9054 = vmatprep.subr.bf16.mxu0 0
    %9055 = vmatpush2.bf16.msra.mxu0 %v9009
    %9056 = vmatprep.subr.bf16.mxu0 0
    %9057 = vmatpush2.bf16.msra.mxu0 %v9008
    %9058 = vmatprep.subr.bf16.mxu0 0
    %9059 = vmatpush2.bf16.msra.mxu0 %v9007
    %9060 = vmatprep.subr.bf16.mxu0 0
    %9061 = vmatpush2.bf16.msra.mxu0 %v9006
    %9062 = vmatprep.mubr.bf16.mxu0 %v8894
    %9063 = vmatmul.mubr.bf16.gmra.mxu0 %v8893
    %v9064 = vpop.f32.mrf.mxu0
    %v9065 = vadd.f32 %v8932, %v9064
    %v9066 = vpop.f32.mrf.mxu0
    %v9067 = vpop.f32.mrf.mxu0
    %v9068 = vpop.f32.mrf.mxu0
    %9069 = vdwg.mxu0
    %9070 = vst [vmem:[#allocation23] sm:$0xff] %v9065
    // Predicated region
    $region94: #{tpu_custom_call.1} parent=1 // pred_check
      _
    $region95: #{tpu_custom_call.1} parent=1 // pred_check_branch
      %9072 = sbr.rel (0) target = $region97
    $region96: #{tpu_custom_call.1} parent=1 // pred_region
      %s9074 = ssub.s32 128, 128
      %9075 = vsyncadd [#allocation8], %s9074
      %s9077 = sshll.u32 [#allocation23], 4
      %s9078 = int_to_ptr.vmem [resolvable:$true] %s9077
      %9080 = dma.vmem_to_hbm [thread:$0]  %s9078, 128, %s13, [#allocation8]
    $region97: #{tpu_custom_call.1} parent=1 // pred_fallthru
      _
    // Predicated region
    $region98: #{tpu_custom_call.1} parent=1 // pred_check
      _
    $region99: #{tpu_custom_call.1} parent=1 // pred_check_branch
      %9082 = sbr.rel (0) target = $region101
    $region100: #{tpu_custom_call.1} parent=1 // pred_region
      %s9084 = ssub.s32 256, 256
      %9085 = vsyncadd [#allocation25], %s9084
      %s9087 = sshll.u32 [#allocation24], 4
      %s9088 = int_to_ptr.vmem [resolvable:$true] %s9087
      %9090 = dma.vmem_to_hbm [thread:$0]  %s9088, 256, %s14, [#allocation25]
    $region101: #{tpu_custom_call.1} parent=1 // pred_fallthru
      _
    // Predicated region
    $region102: #{tpu_custom_call.1} parent=1 // pred_check
      _
    $region103: #{tpu_custom_call.1} parent=1 // pred_check_branch
      %9092 = sbr.rel (0) target = $region105
    $region104: #{tpu_custom_call.1} parent=1 // pred_region
      %s9094 = ssub.s32 256, 256
      %9095 = vsyncadd [#allocation25], %s9094
      %s9097 = sshll.u32 [#allocation26], 4
      %s9098 = int_to_ptr.vmem [resolvable:$true] %s9097
      %9100 = dma.vmem_to_hbm [thread:$0]  %s9098, 256, %s15, [#allocation25]
    $region105: #{tpu_custom_call.1} parent=1 // pred_fallthru
      _
    // Predicated region
    $region106: #{tpu_custom_call.1} parent=1 // pred_check
      _
    $region107: #{tpu_custom_call.1} parent=1 // pred_check_branch
      %9102 = sbr.rel (0) target = $region109
    $region108: #{tpu_custom_call.1} parent=1 // pred_region
      %s9104 = ssub.s32 256, 256
      %9105 = vsyncadd [#allocation28], %s9104
      %s9107 = sshll.u32 [#allocation27], 4
      %s9108 = int_to_ptr.vmem [resolvable:$true] %s9107
      %9110 = dma.vmem_to_hbm [thread:$0]  %s9108, 256, %s16, [#allocation28]
    $region109: #{tpu_custom_call.1} parent=1 // pred_fallthru
      _
    // Predicated region
    $region110: #{tpu_custom_call.1} parent=1 // pred_check
      _
    $region111: #{tpu_custom_call.1} parent=1 // pred_check_branch
      %9112 = sbr.rel (0) target = $region113
    $region112: #{tpu_custom_call.1} parent=1 // pred_region
      %s9114 = ssub.s32 256, 256
      %9115 = vsyncadd [#allocation28], %s9114
      %s9117 = sshll.u32 [#allocation29], 4
      %s9118 = int_to_ptr.vmem [resolvable:$true] %s9117
      %9120 = dma.vmem_to_hbm [thread:$0]  %s9118, 256, %s17, [#allocation28]
    $region113: #{tpu_custom_call.1} parent=1 // pred_fallthru
      _
    // Predicated region
    $region114: #{tpu_custom_call.1} parent=1 // pred_check
      _
    $region115: #{tpu_custom_call.1} parent=1 // pred_check_branch
      %9122 = sbr.rel (0) target = $region117
    $region116: #{tpu_custom_call.1} parent=1 // pred_region
      %9123 = dma.done [#allocation8], 128
    $region117: #{tpu_custom_call.1} parent=1 // pred_fallthru
      _
    // Predicated region
    $region118: #{tpu_custom_call.1} parent=1 // pred_check
      _
    $region119: #{tpu_custom_call.1} parent=1 // pred_check_branch
      %9125 = sbr.rel (0) target = $region121
    $region120: #{tpu_custom_call.1} parent=1 // pred_region
      %9126 = dma.done [#allocation25], 256
    $region121: #{tpu_custom_call.1} parent=1 // pred_fallthru
      _
    // Predicated region
    $region122: #{tpu_custom_call.1} parent=1 // pred_check
      _
    $region123: #{tpu_custom_call.1} parent=1 // pred_check_branch
      %9128 = sbr.rel (0) target = $region125
    $region124: #{tpu_custom_call.1} parent=1 // pred_region
      %9129 = dma.done [#allocation25], 256
    $region125: #{tpu_custom_call.1} parent=1 // pred_fallthru
      _
    // Predicated region
    $region126: #{tpu_custom_call.1} parent=1 // pred_check
      _
    $region127: #{tpu_custom_call.1} parent=1 // pred_check_branch
      %9131 = sbr.rel (0) target = $region129
    $region128: #{tpu_custom_call.1} parent=1 // pred_region
      %9132 = dma.done [#allocation28], 256
    $region129: #{tpu_custom_call.1} parent=1 // pred_fallthru
      _
    // Predicated region
    $region130: #{tpu_custom_call.1} parent=1 // pred_check
      _
    $region131: #{tpu_custom_call.1} parent=1 // pred_check_branch
      %9134 = sbr.rel (0) target = $region133
    $region132: #{tpu_custom_call.1} parent=1 // pred_region
      %9135 = dma.done [#allocation28], 256
    $region133: #{tpu_custom_call.1} parent=1 // pred_fallthru
      _
    %9136 = vsyncpa [#allocation7], 1
    %9137 = vsyncpa [#allocation10], 1
    %9138 = vsyncpa [#allocation13], 1
    %9139 = vsyncpa [#allocation16], 1
    %9140 = vsyncpa [#allocation19], 1
    %9141 = vsyncpa [#allocation22], 1
    %9142 = vsyncpa [#allocation8], 1
    %9143 = vsyncpa [#allocation25], 1
    %9144 = vsyncpa [#allocation28], 1
  %9145 = vsyncmov [#allocation5]
  %s9146 = vpop.sfrf %9145
  %p9147 = scmp.eq.s32.totalorder %s9146, 0
  %p9148 = pneg %p9147
  %9150 = shalt.err (%p9148)
  %s9151 = scalar_lea.sflag [#allocation5], 1
  %9152 = vsyncmov %s9151
  %s9153 = vpop.sfrf %9152
  %p9154 = scmp.eq.s32.totalorder %s9153, 0
  %p9155 = pneg %p9154
  %9157 = shalt.err (%p9155)

</llo_original>
